<compile_context>
chip_gen: v7x
topology: tpu7x:2x2x1
jax: 0.10.0
libtpu: 0.0.40
codegen_flags: <defaults>
</compile_context>

<pallas_src>
import jax
import jax.numpy as jnp
from jax.experimental import pallas as pl
from jax.experimental.pallas import tpu as pltpu

LEAKY_SLOPE = 0.01   # nn.LeakyReLU() default negative_slope
BN_EPS = 1e-5        # nn.BatchNorm2d default eps

STAGE_HW = (32, 32, 16, 16)            # spatial size seen by each conv stage
POOLS = (False, True, False, True)     # MaxPool2d(2) after conv_1 and conv_3


# --------------------------------------------------------------------------
# Fused kernel: conv_0..conv_3 (+pools) + fc1, BT batch elements per grid step
# --------------------------------------------------------------------------
def _fused_cnn_kernel(x_ref,
                      wt0_ref, wt1_ref, wt2_ref, wt3_ref,
                      p0_ref, p1_ref, p2_ref, p3_ref,
                      ph1_ref, pw1_ref, ph3_ref, pw3_ref,
                      selb_ref, fcw_ref, fcb_ref,
                      o_ref):
    f32 = jnp.float32
    bf16 = jnp.bfloat16

    def edge_masks(rows, h):
        # (rows, 1) masks zeroing the rolled-in row at each batch element's
        # top / bottom edge (== the conv's zero padding in H).
        r = jax.lax.broadcasted_iota(jnp.int32, (rows, 1), 0) % h
        top = (r != 0).astype(f32)
        bot = (r != h - 1).astype(f32)
        return top, bot

    def conv_stage(x, wt_ref, prm_ref, top, bot):
        # x: (BT*H, W*Cin) f32 lane-dense slab.  Conv2d(3x3, padding=1) is
        # ONE matmul: LHS = [x(h-1) | x(h) | x(h+1)] (lane concat, bf16),
        # RHS = kh-stacked block-Toeplitz weights (3*W*Cin, W*Cout) that fold
        # the kw taps and the W zero padding; H padding comes from the masks.
        rows = x.shape[0]
        x_m1 = (pltpu.roll(x, 1, 0) * top).astype(bf16)           # row h <- x[h-1]
        x_p1 = (pltpu.roll(x, rows - 1, 0) * bot).astype(bf16)    # row h <- x[h+1]
        lhs = jnp.concatenate([x_m1, x.astype(bf16), x_p1], axis=1)
        acc = jnp.dot(lhs, wt_ref[...], preferred_element_type=f32)
        y = acc + prm_ref[0:1, :]                       # conv bias (tiled to W*Cout)
        y = jnp.where(y >= 0, y, LEAKY_SLOPE * y)       # LeakyReLU
        return y * prm_ref[1:2, :] + prm_ref[2:3, :]    # BatchNorm (folded, tiled)

    def maxpool2(y, ph_ref, pw_ref, c):
        # Exact MaxPool2d(2):
        #  rows:  max(y[r], y[r+1]) via sublane roll, then even-row selector;
        #  lanes: max over W pairs via lane roll by C, then even-W-block selector.
        # The wrapped row/lane only lands at odd (never-selected) positions.
        rows, lanes = y.shape
        ymax = jnp.maximum(y, pltpu.roll(y, rows - 1, 0))
        yh = jnp.dot(ph_ref[...], ymax.astype(bf16), preferred_element_type=f32)
        lmax = jnp.maximum(yh, pltpu.roll(yh, lanes - c, 1))
        return jnp.dot(lmax.astype(bf16), pw_ref[...], preferred_element_type=f32)

    bt, h0, wc0 = x_ref.shape
    x = x_ref[...].reshape(bt * h0, wc0)                 # (BT*32, 32*Cin)

    top32, bot32 = edge_masks(bt * 32, 32)
    top16, bot16 = edge_masks(bt * 16, 16)

    y = conv_stage(x, wt0_ref, p0_ref, top32, bot32)     # (BT*32, 256)
    y = conv_stage(y, wt1_ref, p1_ref, top32, bot32)     # (BT*32, 512)
    y = maxpool2(y, ph1_ref, pw1_ref, 16)                # (BT*16, 256)
    y = conv_stage(y, wt2_ref, p2_ref, top16, bot16)     # (BT*16, 256)
    y = conv_stage(y, wt3_ref, p3_ref, top16, bot16)     # (BT*16, 128)
    y = maxpool2(y, ph3_ref, pw3_ref, 8)                 # (BT*8, 64)

    # fc1: Linear(8*8*8, 1) fused: elementwise multiply with the pre-permuted
    # (and BT-tiled) fc weight, per-batch-element row sum via a 0/1 selector
    # matmul, then a lane reduction.
    prod = y * fcw_ref[...]                              # (BT*8, 64) f32
    per = jnp.dot(selb_ref[...], prod, preferred_element_type=f32)   # (BT, 64)
    o_ref[...] = jnp.sum(per, axis=1, keepdims=True) + fcb_ref[...]  # (BT, 1)


def cnn_encoder_decoder_forward(x_nchw, kp, bt=8):
    """x_nchw: (B, windowSize, 32, 32) like the PyTorch module. bt: batch tile."""
    B, Cin, H, W = x_nchw.shape
    # One-time NCHW -> lane-dense (B, H, W*Cin) layout conversion of the input.
    x2 = jnp.transpose(x_nchw, (0, 2, 3, 1)).reshape(B, H, W * Cin)
    x2 = x2.astype(jnp.float32)

    grid = -(-B // bt)
    b_pad = grid * bt
    if b_pad != B:
        x2 = jnp.concatenate(
            [x2, jnp.zeros((b_pad - B, H, W * Cin), jnp.float32)], axis=0)

    operands = [x2,
                kp["wt0"], kp["wt1"], kp["wt2"], kp["wt3"],
                kp["p0"], kp["p1"], kp["p2"], kp["p3"],
                kp["ph1"], kp["pw1"], kp["ph3"], kp["pw3"],
                kp["selb"], kp["fcw"], kp["fcb"]]

    def _full_spec(a):
        nd = a.ndim
        return pl.BlockSpec(a.shape, lambda *_: (0,) * nd)   # whole array, VMEM-resident

    in_specs = ([pl.BlockSpec((bt, H, W * Cin), lambda b: (b, 0, 0))]
                + [_full_spec(a) for a in operands[1:]])

    out = pl.pallas_call(
        _fused_cnn_kernel,
        out_shape=jax.ShapeDtypeStruct((b_pad, 1), jnp.float32),
        grid_spec=pltpu.PrefetchScalarGridSpec(
            num_scalar_prefetch=0,
            grid=(grid,),
            in_specs=in_specs,
            out_specs=pl.BlockSpec((bt, 1), lambda b: (b, 0)),
        ),
        compiler_params=pltpu.CompilerParams(
            dimension_semantics=("parallel",)),   # keep both v7x TCs busy (grid >= 2)
    )(*operands)
    return out[:B]


# --------------------------------------------------------------------------
# Parameter preparation (wrapper-side, one-time precompute)
# --------------------------------------------------------------------------
def _toeplitz_conv_weights(w_oihw, W):
    """Torch (Cout, Cin, 3, 3) weight -> (3*W*Cin, W*Cout) kh-stacked block-
    Toeplitz matrix folding the kw taps and the W zero padding."""
    Cout, Cin, _, _ = w_oihw.shape
    w_hwio = jnp.transpose(w_oihw, (2, 3, 1, 0)).astype(jnp.float32)  # (3,3,Cin,Cout)
    w_idx = jnp.arange(W)
    mats = []
    for kh in range(3):
        m = jnp.zeros((W, Cin, W, Cout), jnp.float32)
        for kw in range(3):
            wi = w_idx + (kw - 1)
            valid = (wi >= 0) & (wi < W)
            wic = jnp.clip(wi, 0, W - 1)
            add = jnp.where(valid[:, None, None], w_hwio[kh, kw][None, :, :], 0.0)
            m = m.at[wic, :, w_idx, :].add(add)
        mats.append(m.reshape(W * Cin, W * Cout))
    return jnp.concatenate(mats, axis=0)     # kh outermost along K


def _even_row_select(rows):
    """(rows//2, rows) 0/1 selector picking the even rows of a batch-stacked slab."""
    return jnp.eye(rows, dtype=jnp.float32)[0::2]


def _even_lane_select(W, C):
    """(W*C, (W//2)*C) 0/1 selector picking even W blocks in the lane layout."""
    eye = jnp.eye(W * C, dtype=jnp.float32)
    j = jnp.arange((W // 2) * C)
    base = 2 * (j // C) * C + (j % C)
    return eye[:, base]


def init_params(key, window_size):
    """Deterministic synthetic torch-like parameters (OIHW conv, BN stats, fc)."""
    layer_io = [(window_size, 8), (8, 16), (16, 16), (16, 8)]
    conv = []
    for i, (cin, cout) in enumerate(layer_io):
        k = jax.random.fold_in(key, i)
        kw_, kb, kg, kbe, km, kv = jax.random.split(k, 6)
        conv.append(dict(
            w=0.1 * jax.random.normal(kw_, (cout, cin, 3, 3), jnp.float32),
            b=0.1 * jax.random.normal(kb, (cout,), jnp.float32),
            gamma=1.0 + 0.1 * jax.random.normal(kg, (cout,), jnp.float32),
            beta=0.1 * jax.random.normal(kbe, (cout,), jnp.float32),
            mean=0.1 * jax.random.normal(km, (cout,), jnp.float32),
            var=1.0 + 0.1 * jnp.abs(jax.random.normal(kv, (cout,), jnp.float32)),
        ))
    kf = jax.random.fold_in(key, 100)
    kfw, kfb = jax.random.split(kf)
    fc_w = 0.05 * jax.random.normal(kfw, (1, 8 * 8 * 8), jnp.float32)  # torch (out, C*H*W)
    fc_b = 0.05 * jax.random.normal(kfb, (1,), jnp.float32)
    return dict(conv=conv, fc_w=fc_w, fc_b=fc_b)


def prepare_kernel_params(raw, bt):
    kp = {}
    for i, layer in enumerate(raw["conv"]):
        W = STAGE_HW[i]
        scale = layer["gamma"] / jnp.sqrt(layer["var"] + BN_EPS)
        shift = layer["beta"] - layer["mean"] * scale
        kp[f"wt{i}"] = _toeplitz_conv_weights(layer["w"], W).astype(jnp.bfloat16)
        # bias / BN scale / BN shift tiled to the lane-dense (W*Cout) layout (f32)
        kp[f"p{i}"] = jnp.stack([jnp.tile(layer["b"], W),
                                 jnp.tile(scale, W),
                                 jnp.tile(shift, W)], axis=0)
    kp["ph1"] = _even_row_select(bt * 32).astype(jnp.bfloat16)   # (bt*16, bt*32)
    kp["pw1"] = _even_lane_select(32, 16).astype(jnp.bfloat16)   # (512, 256)
    kp["ph3"] = _even_row_select(bt * 16).astype(jnp.bfloat16)   # (bt*8, bt*16)
    kp["pw3"] = _even_lane_select(16, 8).astype(jnp.bfloat16)    # (128, 64)
    # fc: per-batch-element row-sum selector + fc weight permuted from the
    # NCHW-flatten (c*64 + h*8 + w) order to the (h, w*8 + c) layout, BT-tiled.
    kp["selb"] = jnp.repeat(jnp.eye(bt, dtype=jnp.float32), 8, axis=1)   # (bt, bt*8)
    fcw = raw["fc_w"].reshape(8, 8, 8).transpose(1, 2, 0).reshape(8, 64)
    kp["fcw"] = jnp.tile(fcw, (bt, 1)).astype(jnp.float32)               # (bt*8, 64)
    kp["fcb"] = raw["fc_b"].reshape(1, 1).astype(jnp.float32)
    return kp


# --------------------------------------------------------------------------
# Plain-JAX reference (original module semantics, inference-mode BN)
# --------------------------------------------------------------------------
def _reference_forward(x_nchw, raw):
    x = jnp.transpose(x_nchw, (0, 2, 3, 1)).astype(jnp.float32)   # NHWC
    for i, layer in enumerate(raw["conv"]):
        w_hwio = jnp.transpose(layer["w"], (2, 3, 1, 0))
        y = jax.lax.conv_general_dilated(
            x, w_hwio, window_strides=(1, 1), padding="SAME",
            dimension_numbers=("NHWC", "HWIO", "NHWC"),
            precision=jax.lax.Precision.HIGHEST)
        y = y + layer["b"]
        y = jnp.where(y >= 0, y, LEAKY_SLOPE * y)
        scale = layer["gamma"] / jnp.sqrt(layer["var"] + BN_EPS)
        shift = layer["beta"] - layer["mean"] * scale
        y = y * scale + shift
        if POOLS[i]:
            B, H, W, C = y.shape
            y = y.reshape(B, H // 2, 2, W // 2, 2, C).max(axis=(2, 4))
        x = y
    # PyTorch .view(-1, 8*8*8) flattens in NCHW (C, H, W) order
    feats = jnp.transpose(x, (0, 3, 1, 2)).reshape(x.shape[0], -1)
    return feats @ raw["fc_w"].T + raw["fc_b"]


if __name__ == "__main__":
    window_size = 4              # windowSize -> input channels
    B, H, W = 16, 32, 32         # 32x32 spatial so fc1 sees 8*8*8 after two MaxPool2d(2)
    BT = 8                       # batch elements per grid step (use 4 on v5e)

    key = jax.random.PRNGKey(0)
    kx, kparam = jax.random.split(key)
    x = jax.random.normal(kx, (B, window_size, H, W), jnp.float32)   # NCHW, like PyTorch
    raw = init_params(kparam, window_size)
    kp = prepare_kernel_params(raw, BT)

    fwd = jax.jit(cnn_encoder_decoder_forward, static_argnames=("bt",))
    out = jax.block_until_ready(fwd(x, kp, bt=BT))
    assert out.shape == (B, 1), out.shape

    ref = jax.block_until_ready(_reference_forward(x, raw))
    assert jnp.allclose(out, ref, atol=3e-2, rtol=3e-2), (out, ref)

    print("KERNEL_OK")
</pallas_src>

<mosaic_0001>
module attributes {stable_mosaic.version = 11 : i64} {
  func.func @_fused_cnn_kernel(%arg0: i32, %arg1: memref<8x32x128xf32, #tpu.memory_space<vmem>>, %arg2: memref<384x256xbf16, #tpu.memory_space<vmem>>, %arg3: memref<768x512xbf16, #tpu.memory_space<vmem>>, %arg4: memref<768x256xbf16, #tpu.memory_space<vmem>>, %arg5: memref<768x128xbf16, #tpu.memory_space<vmem>>, %arg6: memref<3x256xf32, #tpu.memory_space<vmem>>, %arg7: memref<3x512xf32, #tpu.memory_space<vmem>>, %arg8: memref<3x256xf32, #tpu.memory_space<vmem>>, %arg9: memref<3x128xf32, #tpu.memory_space<vmem>>, %arg10: memref<128x256xbf16, #tpu.memory_space<vmem>>, %arg11: memref<512x256xbf16, #tpu.memory_space<vmem>>, %arg12: memref<64x128xbf16, #tpu.memory_space<vmem>>, %arg13: memref<128x64xbf16, #tpu.memory_space<vmem>>, %arg14: memref<8x64xf32, #tpu.memory_space<vmem>>, %arg15: memref<64x64xf32, #tpu.memory_space<vmem>>, %arg16: memref<1x1xf32, #tpu.memory_space<vmem>>, %arg17: memref<8x1xf32, #tpu.memory_space<vmem>>) attributes {dimension_semantics = [#tpu.dimension_semantics<parallel>], iteration_bounds = array<i64: 2>, scalar_prefetch = 0 : i64, scratch_operands = 0 : i64, tpu.core_type = #tpu.core_type<tc>, window_params = [{transform_indices = @transform_0, window_bounds = array<i64: 8, 32, 128>}, {pipeline_mode = #tpu.pipeline_mode<synchronous>, transform_indices = @transform_1, window_bounds = array<i64: 384, 256>}, {pipeline_mode = #tpu.pipeline_mode<synchronous>, transform_indices = @transform_2, window_bounds = array<i64: 768, 512>}, {pipeline_mode = #tpu.pipeline_mode<synchronous>, transform_indices = @transform_3, window_bounds = array<i64: 768, 256>}, {pipeline_mode = #tpu.pipeline_mode<synchronous>, transform_indices = @transform_4, window_bounds = array<i64: 768, 128>}, {pipeline_mode = #tpu.pipeline_mode<synchronous>, transform_indices = @transform_5, window_bounds = array<i64: 3, 256>}, {pipeline_mode = #tpu.pipeline_mode<synchronous>, transform_indices = @transform_6, window_bounds = array<i64: 3, 512>}, {pipeline_mode = #tpu.pipeline_mode<synchronous>, transform_indices = @transform_7, window_bounds = array<i64: 3, 256>}, {pipeline_mode = #tpu.pipeline_mode<synchronous>, transform_indices = @transform_8, window_bounds = array<i64: 3, 128>}, {pipeline_mode = #tpu.pipeline_mode<synchronous>, transform_indices = @transform_9, window_bounds = array<i64: 128, 256>}, {pipeline_mode = #tpu.pipeline_mode<synchronous>, transform_indices = @transform_10, window_bounds = array<i64: 512, 256>}, {pipeline_mode = #tpu.pipeline_mode<synchronous>, transform_indices = @transform_11, window_bounds = array<i64: 64, 128>}, {pipeline_mode = #tpu.pipeline_mode<synchronous>, transform_indices = @transform_12, window_bounds = array<i64: 128, 64>}, {pipeline_mode = #tpu.pipeline_mode<synchronous>, transform_indices = @transform_13, window_bounds = array<i64: 8, 64>}, {pipeline_mode = #tpu.pipeline_mode<synchronous>, transform_indices = @transform_14, window_bounds = array<i64: 64, 64>}, {pipeline_mode = #tpu.pipeline_mode<synchronous>, transform_indices = @transform_15, window_bounds = array<i64: 1, 1>}, {transform_indices = @transform_16, window_bounds = array<i64: 8, 1>}]} {
    %c0 = arith.constant 0 : index
    %c0_0 = arith.constant 0 : index
    %c0_1 = arith.constant 0 : index
    %0 = vector.load %arg1[%c0, %c0_0, %c0_1] : memref<8x32x128xf32, #tpu.memory_space<vmem>>, vector<8x32x128xf32>
    %1 = vector.shape_cast %0 : vector<8x32x128xf32> to vector<256x128xf32>
    %2 = tpu.iota {dimensions = array<i32: 0>} : vector<256x1xi32>
    %c32_i32 = arith.constant 32 : i32
    %c0_i32 = arith.constant 0 : i32
    %3 = arith.cmpi eq, %c32_i32, %c0_i32 : i32
    %c1_i32 = arith.constant 1 : i32
    %4 = arith.select %3, %c1_i32, %c32_i32 : i32
    %5 = vector.broadcast %4 : i32 to vector<256x1xi32>
    %6 = arith.remsi %2, %5 : vector<256x1xi32>
    %c0_i32_2 = arith.constant 0 : i32
    %7 = vector.broadcast %c0_i32_2 : i32 to vector<256x1xi32>
    %8 = arith.cmpi ne, %6, %7 : vector<256x1xi32>
    %c0_i32_3 = arith.constant 0 : i32
    %9 = vector.broadcast %c0_i32_3 : i32 to vector<256x1xi32>
    %10 = arith.cmpi slt, %6, %9 : vector<256x1xi32>
    %c0_i32_4 = arith.constant 0 : i32
    %11 = arith.cmpi slt, %4, %c0_i32_4 : i32
    %12 = vector.broadcast %11 : i1 to vector<256x1xi1>
    %13 = vector.broadcast %12 : vector<256x1xi1> to vector<256x1xi1>
    %14 = arith.xori %10, %13 : vector<256x1xi1>
    %15 = arith.andi %14, %8 : vector<256x1xi1>
    %16 = vector.broadcast %4 : i32 to vector<256x1xi32>
    %17 = arith.addi %6, %16 : vector<256x1xi32>
    %18 = arith.select %15, %17, %6 : vector<256x1xi1>, vector<256x1xi32>
    %c0_i32_5 = arith.constant 0 : i32
    %19 = vector.broadcast %c0_i32_5 : i32 to vector<256x1xi32>
    %20 = arith.cmpi ne, %18, %19 : vector<256x1xi32>
    %21 = arith.extui %20 : vector<256x1xi1> to vector<256x1xi32>
    %22 = arith.sitofp %21 : vector<256x1xi32> to vector<256x1xf32>
    %c31_i32 = arith.constant 31 : i32
    %23 = vector.broadcast %c31_i32 : i32 to vector<256x1xi32>
    %24 = arith.cmpi ne, %18, %23 : vector<256x1xi32>
    %25 = arith.extui %24 : vector<256x1xi1> to vector<256x1xi32>
    %26 = arith.sitofp %25 : vector<256x1xi32> to vector<256x1xf32>
    %27 = tpu.iota {dimensions = array<i32: 0>} : vector<128x1xi32>
    %c16_i32 = arith.constant 16 : i32
    %c0_i32_6 = arith.constant 0 : i32
    %28 = arith.cmpi eq, %c16_i32, %c0_i32_6 : i32
    %c1_i32_7 = arith.constant 1 : i32
    %29 = arith.select %28, %c1_i32_7, %c16_i32 : i32
    %30 = vector.broadcast %29 : i32 to vector<128x1xi32>
    %31 = arith.remsi %27, %30 : vector<128x1xi32>
    %c0_i32_8 = arith.constant 0 : i32
    %32 = vector.broadcast %c0_i32_8 : i32 to vector<128x1xi32>
    %33 = arith.cmpi ne, %31, %32 : vector<128x1xi32>
    %c0_i32_9 = arith.constant 0 : i32
    %34 = vector.broadcast %c0_i32_9 : i32 to vector<128x1xi32>
    %35 = arith.cmpi slt, %31, %34 : vector<128x1xi32>
    %c0_i32_10 = arith.constant 0 : i32
    %36 = arith.cmpi slt, %29, %c0_i32_10 : i32
    %37 = vector.broadcast %36 : i1 to vector<128x1xi1>
    %38 = vector.broadcast %37 : vector<128x1xi1> to vector<128x1xi1>
    %39 = arith.xori %35, %38 : vector<128x1xi1>
    %40 = arith.andi %39, %33 : vector<128x1xi1>
    %41 = vector.broadcast %29 : i32 to vector<128x1xi32>
    %42 = arith.addi %31, %41 : vector<128x1xi32>
    %43 = arith.select %40, %42, %31 : vector<128x1xi1>, vector<128x1xi32>
    %c0_i32_11 = arith.constant 0 : i32
    %44 = vector.broadcast %c0_i32_11 : i32 to vector<128x1xi32>
    %45 = arith.cmpi ne, %43, %44 : vector<128x1xi32>
    %46 = arith.extui %45 : vector<128x1xi1> to vector<128x1xi32>
    %47 = arith.sitofp %46 : vector<128x1xi32> to vector<128x1xf32>
    %c15_i32 = arith.constant 15 : i32
    %48 = vector.broadcast %c15_i32 : i32 to vector<128x1xi32>
    %49 = arith.cmpi ne, %43, %48 : vector<128x1xi32>
    %50 = arith.extui %49 : vector<128x1xi1> to vector<128x1xi32>
    %51 = arith.sitofp %50 : vector<128x1xi32> to vector<128x1xf32>
    %c1_i32_12 = arith.constant 1 : i32
    %52 = tpu.dynamic_rotate %1 by %c1_i32_12 dim 0 : vector<256x128xf32>, i32 -> vector<256x128xf32>
    %53 = vector.broadcast %22 : vector<256x1xf32> to vector<256x128xf32>
    %54 = arith.mulf %52, %53 : vector<256x128xf32>
    %55 = arith.truncf %54 : vector<256x128xf32> to vector<256x128xbf16>
    %c255_i32 = arith.constant 255 : i32
    %56 = tpu.dynamic_rotate %1 by %c255_i32 dim 0 : vector<256x128xf32>, i32 -> vector<256x128xf32>
    %57 = vector.broadcast %26 : vector<256x1xf32> to vector<256x128xf32>
    %58 = arith.mulf %56, %57 : vector<256x128xf32>
    %59 = arith.truncf %58 : vector<256x128xf32> to vector<256x128xbf16>
    %60 = arith.truncf %1 : vector<256x128xf32> to vector<256x128xbf16>
    %61 = tpu.concatenate %55, %60, %59 in 1 : vector<256x128xbf16>, vector<256x128xbf16>, vector<256x128xbf16> -> vector<256x384xbf16>
    %c0_13 = arith.constant 0 : index
    %c0_14 = arith.constant 0 : index
    %62 = vector.load %arg2[%c0_13, %c0_14] : memref<384x256xbf16, #tpu.memory_space<vmem>>, vector<384x256xbf16>
    %cst = arith.constant dense<0.000000e+00> : vector<256x256xf32>
    %63 = tpu.matmul %61, %62, %cst {dimension_numbers = #tpu.dot_dimension_numbers<[1], [0], [0], [1], [0, 0, 1, 1], [], []>} : vector<256x384xbf16>, vector<384x256xbf16>, vector<256x256xf32> -> vector<256x256xf32>
    %c0_15 = arith.constant 0 : index
    %c0_16 = arith.constant 0 : index
    %64 = vector.load %arg6[%c0_15, %c0_16] : memref<3x256xf32, #tpu.memory_space<vmem>>, vector<1x256xf32>
    %65 = vector.broadcast %64 : vector<1x256xf32> to vector<256x256xf32>
    %66 = arith.addf %63, %65 : vector<256x256xf32>
    %cst_17 = arith.constant 0.000000e+00 : f32
    %67 = vector.broadcast %cst_17 : f32 to vector<256x256xf32>
    %68 = arith.cmpf oge, %66, %67 : vector<256x256xf32>
    %cst_18 = arith.constant 0.00999999977 : f32
    %69 = vector.broadcast %cst_18 : f32 to vector<256x256xf32>
    %70 = arith.mulf %69, %66 : vector<256x256xf32>
    %71 = arith.select %68, %66, %70 : vector<256x256xi1>, vector<256x256xf32>
    %c1 = arith.constant 1 : index
    %c0_19 = arith.constant 0 : index
    %72 = vector.load %arg6[%c1, %c0_19] : memref<3x256xf32, #tpu.memory_space<vmem>>, vector<1x256xf32>
    %73 = vector.broadcast %72 : vector<1x256xf32> to vector<256x256xf32>
    %74 = arith.mulf %71, %73 : vector<256x256xf32>
    %c2 = arith.constant 2 : index
    %c0_20 = arith.constant 0 : index
    %75 = vector.load %arg6[%c2, %c0_20] : memref<3x256xf32, #tpu.memory_space<vmem>>, vector<1x256xf32>
    %76 = vector.broadcast %75 : vector<1x256xf32> to vector<256x256xf32>
    %77 = arith.addf %74, %76 : vector<256x256xf32>
    %c1_i32_21 = arith.constant 1 : i32
    %78 = tpu.dynamic_rotate %77 by %c1_i32_21 dim 0 : vector<256x256xf32>, i32 -> vector<256x256xf32>
    %79 = vector.broadcast %22 : vector<256x1xf32> to vector<256x256xf32>
    %80 = arith.mulf %78, %79 : vector<256x256xf32>
    %81 = arith.truncf %80 : vector<256x256xf32> to vector<256x256xbf16>
    %c255_i32_22 = arith.constant 255 : i32
    %82 = tpu.dynamic_rotate %77 by %c255_i32_22 dim 0 : vector<256x256xf32>, i32 -> vector<256x256xf32>
    %83 = vector.broadcast %26 : vector<256x1xf32> to vector<256x256xf32>
    %84 = arith.mulf %82, %83 : vector<256x256xf32>
    %85 = arith.truncf %84 : vector<256x256xf32> to vector<256x256xbf16>
    %86 = arith.truncf %77 : vector<256x256xf32> to vector<256x256xbf16>
    %87 = tpu.concatenate %81, %86, %85 in 1 : vector<256x256xbf16>, vector<256x256xbf16>, vector<256x256xbf16> -> vector<256x768xbf16>
    %c0_23 = arith.constant 0 : index
    %c0_24 = arith.constant 0 : index
    %88 = vector.load %arg3[%c0_23, %c0_24] : memref<768x512xbf16, #tpu.memory_space<vmem>>, vector<768x512xbf16>
    %cst_25 = arith.constant dense<0.000000e+00> : vector<256x512xf32>
    %89 = tpu.matmul %87, %88, %cst_25 {dimension_numbers = #tpu.dot_dimension_numbers<[1], [0], [0], [1], [0, 0, 1, 1], [], []>} : vector<256x768xbf16>, vector<768x512xbf16>, vector<256x512xf32> -> vector<256x512xf32>
    %c0_26 = arith.constant 0 : index
    %c0_27 = arith.constant 0 : index
    %90 = vector.load %arg7[%c0_26, %c0_27] : memref<3x512xf32, #tpu.memory_space<vmem>>, vector<1x512xf32>
    %91 = vector.broadcast %90 : vector<1x512xf32> to vector<256x512xf32>
    %92 = arith.addf %89, %91 : vector<256x512xf32>
    %cst_28 = arith.constant 0.000000e+00 : f32
    %93 = vector.broadcast %cst_28 : f32 to vector<256x512xf32>
    %94 = arith.cmpf oge, %92, %93 : vector<256x512xf32>
    %cst_29 = arith.constant 0.00999999977 : f32
    %95 = vector.broadcast %cst_29 : f32 to vector<256x512xf32>
    %96 = arith.mulf %95, %92 : vector<256x512xf32>
    %97 = arith.select %94, %92, %96 : vector<256x512xi1>, vector<256x512xf32>
    %c1_30 = arith.constant 1 : index
    %c0_31 = arith.constant 0 : index
    %98 = vector.load %arg7[%c1_30, %c0_31] : memref<3x512xf32, #tpu.memory_space<vmem>>, vector<1x512xf32>
    %99 = vector.broadcast %98 : vector<1x512xf32> to vector<256x512xf32>
    %100 = arith.mulf %97, %99 : vector<256x512xf32>
    %c2_32 = arith.constant 2 : index
    %c0_33 = arith.constant 0 : index
    %101 = vector.load %arg7[%c2_32, %c0_33] : memref<3x512xf32, #tpu.memory_space<vmem>>, vector<1x512xf32>
    %102 = vector.broadcast %101 : vector<1x512xf32> to vector<256x512xf32>
    %103 = arith.addf %100, %102 : vector<256x512xf32>
    %c255_i32_34 = arith.constant 255 : i32
    %104 = tpu.dynamic_rotate %103 by %c255_i32_34 dim 0 : vector<256x512xf32>, i32 -> vector<256x512xf32>
    %105 = arith.maximumf %103, %104 : vector<256x512xf32>
    %c0_35 = arith.constant 0 : index
    %c0_36 = arith.constant 0 : index
    %106 = vector.load %arg10[%c0_35, %c0_36] : memref<128x256xbf16, #tpu.memory_space<vmem>>, vector<128x256xbf16>
    %107 = arith.truncf %105 : vector<256x512xf32> to vector<256x512xbf16>
    %cst_37 = arith.constant dense<0.000000e+00> : vector<128x512xf32>
    %108 = tpu.matmul %106, %107, %cst_37 {dimension_numbers = #tpu.dot_dimension_numbers<[1], [0], [0], [1], [0, 0, 1, 1], [], []>} : vector<128x256xbf16>, vector<256x512xbf16>, vector<128x512xf32> -> vector<128x512xf32>
    %c496_i32 = arith.constant 496 : i32
    %109 = tpu.dynamic_rotate %108 by %c496_i32 dim 1 : vector<128x512xf32>, i32 -> vector<128x512xf32>
    %110 = arith.maximumf %108, %109 : vector<128x512xf32>
    %111 = arith.truncf %110 : vector<128x512xf32> to vector<128x512xbf16>
    %c0_38 = arith.constant 0 : index
    %c0_39 = arith.constant 0 : index
    %112 = vector.load %arg11[%c0_38, %c0_39] : memref<512x256xbf16, #tpu.memory_space<vmem>>, vector<512x256xbf16>
    %cst_40 = arith.constant dense<0.000000e+00> : vector<128x256xf32>
    %113 = tpu.matmul %111, %112, %cst_40 {dimension_numbers = #tpu.dot_dimension_numbers<[1], [0], [0], [1], [0, 0, 1, 1], [], []>} : vector<128x512xbf16>, vector<512x256xbf16>, vector<128x256xf32> -> vector<128x256xf32>
    %c1_i32_41 = arith.constant 1 : i32
    %114 = tpu.dynamic_rotate %113 by %c1_i32_41 dim 0 : vector<128x256xf32>, i32 -> vector<128x256xf32>
    %115 = vector.broadcast %47 : vector<128x1xf32> to vector<128x256xf32>
    %116 = arith.mulf %114, %115 : vector<128x256xf32>
    %117 = arith.truncf %116 : vector<128x256xf32> to vector<128x256xbf16>
    %c127_i32 = arith.constant 127 : i32
    %118 = tpu.dynamic_rotate %113 by %c127_i32 dim 0 : vector<128x256xf32>, i32 -> vector<128x256xf32>
    %119 = vector.broadcast %51 : vector<128x1xf32> to vector<128x256xf32>
    %120 = arith.mulf %118, %119 : vector<128x256xf32>
    %121 = arith.truncf %120 : vector<128x256xf32> to vector<128x256xbf16>
    %122 = arith.truncf %113 : vector<128x256xf32> to vector<128x256xbf16>
    %123 = tpu.concatenate %117, %122, %121 in 1 : vector<128x256xbf16>, vector<128x256xbf16>, vector<128x256xbf16> -> vector<128x768xbf16>
    %c0_42 = arith.constant 0 : index
    %c0_43 = arith.constant 0 : index
    %124 = vector.load %arg4[%c0_42, %c0_43] : memref<768x256xbf16, #tpu.memory_space<vmem>>, vector<768x256xbf16>
    %cst_44 = arith.constant dense<0.000000e+00> : vector<128x256xf32>
    %125 = tpu.matmul %123, %124, %cst_44 {dimension_numbers = #tpu.dot_dimension_numbers<[1], [0], [0], [1], [0, 0, 1, 1], [], []>} : vector<128x768xbf16>, vector<768x256xbf16>, vector<128x256xf32> -> vector<128x256xf32>
    %c0_45 = arith.constant 0 : index
    %c0_46 = arith.constant 0 : index
    %126 = vector.load %arg8[%c0_45, %c0_46] : memref<3x256xf32, #tpu.memory_space<vmem>>, vector<1x256xf32>
    %127 = vector.broadcast %126 : vector<1x256xf32> to vector<128x256xf32>
    %128 = arith.addf %125, %127 : vector<128x256xf32>
    %cst_47 = arith.constant 0.000000e+00 : f32
    %129 = vector.broadcast %cst_47 : f32 to vector<128x256xf32>
    %130 = arith.cmpf oge, %128, %129 : vector<128x256xf32>
    %cst_48 = arith.constant 0.00999999977 : f32
    %131 = vector.broadcast %cst_48 : f32 to vector<128x256xf32>
    %132 = arith.mulf %131, %128 : vector<128x256xf32>
    %133 = arith.select %130, %128, %132 : vector<128x256xi1>, vector<128x256xf32>
    %c1_49 = arith.constant 1 : index
    %c0_50 = arith.constant 0 : index
    %134 = vector.load %arg8[%c1_49, %c0_50] : memref<3x256xf32, #tpu.memory_space<vmem>>, vector<1x256xf32>
    %135 = vector.broadcast %134 : vector<1x256xf32> to vector<128x256xf32>
    %136 = arith.mulf %133, %135 : vector<128x256xf32>
    %c2_51 = arith.constant 2 : index
    %c0_52 = arith.constant 0 : index
    %137 = vector.load %arg8[%c2_51, %c0_52] : memref<3x256xf32, #tpu.memory_space<vmem>>, vector<1x256xf32>
    %138 = vector.broadcast %137 : vector<1x256xf32> to vector<128x256xf32>
    %139 = arith.addf %136, %138 : vector<128x256xf32>
    %c1_i32_53 = arith.constant 1 : i32
    %140 = tpu.dynamic_rotate %139 by %c1_i32_53 dim 0 : vector<128x256xf32>, i32 -> vector<128x256xf32>
    %141 = vector.broadcast %47 : vector<128x1xf32> to vector<128x256xf32>
    %142 = arith.mulf %140, %141 : vector<128x256xf32>
    %143 = arith.truncf %142 : vector<128x256xf32> to vector<128x256xbf16>
    %c127_i32_54 = arith.constant 127 : i32
    %144 = tpu.dynamic_rotate %139 by %c127_i32_54 dim 0 : vector<128x256xf32>, i32 -> vector<128x256xf32>
    %145 = vector.broadcast %51 : vector<128x1xf32> to vector<128x256xf32>
    %146 = arith.mulf %144, %145 : vector<128x256xf32>
    %147 = arith.truncf %146 : vector<128x256xf32> to vector<128x256xbf16>
    %148 = arith.truncf %139 : vector<128x256xf32> to vector<128x256xbf16>
    %149 = tpu.concatenate %143, %148, %147 in 1 : vector<128x256xbf16>, vector<128x256xbf16>, vector<128x256xbf16> -> vector<128x768xbf16>
    %c0_55 = arith.constant 0 : index
    %c0_56 = arith.constant 0 : index
    %150 = vector.load %arg5[%c0_55, %c0_56] : memref<768x128xbf16, #tpu.memory_space<vmem>>, vector<768x128xbf16>
    %cst_57 = arith.constant dense<0.000000e+00> : vector<128x128xf32>
    %151 = tpu.matmul %149, %150, %cst_57 {dimension_numbers = #tpu.dot_dimension_numbers<[1], [0], [0], [1], [0, 0, 1, 1], [], []>} : vector<128x768xbf16>, vector<768x128xbf16>, vector<128x128xf32> -> vector<128x128xf32>
    %c0_58 = arith.constant 0 : index
    %c0_59 = arith.constant 0 : index
    %152 = vector.load %arg9[%c0_58, %c0_59] : memref<3x128xf32, #tpu.memory_space<vmem>>, vector<1x128xf32>
    %153 = vector.broadcast %152 : vector<1x128xf32> to vector<128x128xf32>
    %154 = arith.addf %151, %153 : vector<128x128xf32>
    %cst_60 = arith.constant 0.000000e+00 : f32
    %155 = vector.broadcast %cst_60 : f32 to vector<128x128xf32>
    %156 = arith.cmpf oge, %154, %155 : vector<128x128xf32>
    %cst_61 = arith.constant 0.00999999977 : f32
    %157 = vector.broadcast %cst_61 : f32 to vector<128x128xf32>
    %158 = arith.mulf %157, %154 : vector<128x128xf32>
    %159 = arith.select %156, %154, %158 : vector<128x128xi1>, vector<128x128xf32>
    %c1_62 = arith.constant 1 : index
    %c0_63 = arith.constant 0 : index
    %160 = vector.load %arg9[%c1_62, %c0_63] : memref<3x128xf32, #tpu.memory_space<vmem>>, vector<1x128xf32>
    %161 = vector.broadcast %160 : vector<1x128xf32> to vector<128x128xf32>
    %162 = arith.mulf %159, %161 : vector<128x128xf32>
    %c2_64 = arith.constant 2 : index
    %c0_65 = arith.constant 0 : index
    %163 = vector.load %arg9[%c2_64, %c0_65] : memref<3x128xf32, #tpu.memory_space<vmem>>, vector<1x128xf32>
    %164 = vector.broadcast %163 : vector<1x128xf32> to vector<128x128xf32>
    %165 = arith.addf %162, %164 : vector<128x128xf32>
    %c127_i32_66 = arith.constant 127 : i32
    %166 = tpu.dynamic_rotate %165 by %c127_i32_66 dim 0 : vector<128x128xf32>, i32 -> vector<128x128xf32>
    %167 = arith.maximumf %165, %166 : vector<128x128xf32>
    %c0_67 = arith.constant 0 : index
    %c0_68 = arith.constant 0 : index
    %168 = vector.load %arg12[%c0_67, %c0_68] : memref<64x128xbf16, #tpu.memory_space<vmem>>, vector<64x128xbf16>
    %169 = arith.truncf %167 : vector<128x128xf32> to vector<128x128xbf16>
    %cst_69 = arith.constant dense<0.000000e+00> : vector<64x128xf32>
    %170 = tpu.matmul %168, %169, %cst_69 {dimension_numbers = #tpu.dot_dimension_numbers<[1], [0], [0], [1], [0, 0, 1, 1], [], []>} : vector<64x128xbf16>, vector<128x128xbf16>, vector<64x128xf32> -> vector<64x128xf32>
    %c120_i32 = arith.constant 120 : i32
    %171 = tpu.dynamic_rotate %170 by %c120_i32 dim 1 : vector<64x128xf32>, i32 -> vector<64x128xf32>
    %172 = arith.maximumf %170, %171 : vector<64x128xf32>
    %173 = arith.truncf %172 : vector<64x128xf32> to vector<64x128xbf16>
    %c0_70 = arith.constant 0 : index
    %c0_71 = arith.constant 0 : index
    %174 = vector.load %arg13[%c0_70, %c0_71] : memref<128x64xbf16, #tpu.memory_space<vmem>>, vector<128x64xbf16>
    %cst_72 = arith.constant dense<0.000000e+00> : vector<64x64xf32>
    %175 = tpu.matmul %173, %174, %cst_72 {dimension_numbers = #tpu.dot_dimension_numbers<[1], [0], [0], [1], [0, 0, 1, 1], [], []>} : vector<64x128xbf16>, vector<128x64xbf16>, vector<64x64xf32> -> vector<64x64xf32>
    %c0_73 = arith.constant 0 : index
    %c0_74 = arith.constant 0 : index
    %176 = vector.load %arg15[%c0_73, %c0_74] : memref<64x64xf32, #tpu.memory_space<vmem>>, vector<64x64xf32>
    %177 = arith.mulf %175, %176 : vector<64x64xf32>
    %c0_75 = arith.constant 0 : index
    %c0_76 = arith.constant 0 : index
    %178 = vector.load %arg14[%c0_75, %c0_76] : memref<8x64xf32, #tpu.memory_space<vmem>>, vector<8x64xf32>
    %cst_77 = arith.constant dense<0.000000e+00> : vector<8x64xf32>
    %179 = tpu.matmul %178, %177, %cst_77 {dimension_numbers = #tpu.dot_dimension_numbers<[1], [0], [0], [1], [0, 0, 1, 1], [], []>} : vector<8x64xf32>, vector<64x64xf32>, vector<8x64xf32> -> vector<8x64xf32>
    %cst_78 = arith.constant dense<0.000000e+00> : vector<8xf32>
    %180 = vector.multi_reduction <add>, %179, %cst_78 [1] : vector<8x64xf32> to vector<8xf32>
    %181 = vector.shape_cast %180 : vector<8xf32> to vector<8x1xf32>
    %c0_79 = arith.constant 0 : index
    %c0_80 = arith.constant 0 : index
    %182 = vector.load %arg16[%c0_79, %c0_80] : memref<1x1xf32, #tpu.memory_space<vmem>>, vector<1x1xf32>
    %183 = vector.broadcast %182 : vector<1x1xf32> to vector<8x1xf32>
    %184 = arith.addf %181, %183 : vector<8x1xf32>
    %c0_81 = arith.constant 0 : index
    %c0_82 = arith.constant 0 : index
    %185 = vector.load %arg17[%c0_81, %c0_82] : memref<8x1xf32, #tpu.memory_space<vmem>>, vector<8x1xf32>
    tpu.vector_store %arg17[%c0_81, %c0_82], %184 {strides = array<i32>} : memref<8x1xf32, #tpu.memory_space<vmem>>, vector<8x1xf32>,
    return
  }
  func.func @transform_0(%arg0: i32) -> (i32, i32, i32) {
    %c0_i32 = arith.constant 0 : i32
    %c0_i32_0 = arith.constant 0 : i32
    %c0_i32_1 = arith.constant 0 : i32
    return %arg0, %c0_i32, %c0_i32_0 : i32, i32, i32
  }
  func.func @transform_1(%arg0: i32) -> (i32, i32) {
    %c0_i32 = arith.constant 0 : i32
    %c0_i32_0 = arith.constant 0 : i32
    %c0_i32_1 = arith.constant 0 : i32
    return %c0_i32, %c0_i32_0 : i32, i32
  }
  func.func @transform_2(%arg0: i32) -> (i32, i32) {
    %c0_i32 = arith.constant 0 : i32
    %c0_i32_0 = arith.constant 0 : i32
    %c0_i32_1 = arith.constant 0 : i32
    return %c0_i32, %c0_i32_0 : i32, i32
  }
  func.func @transform_3(%arg0: i32) -> (i32, i32) {
    %c0_i32 = arith.constant 0 : i32
    %c0_i32_0 = arith.constant 0 : i32
    %c0_i32_1 = arith.constant 0 : i32
    return %c0_i32, %c0_i32_0 : i32, i32
  }
  func.func @transform_4(%arg0: i32) -> (i32, i32) {
    %c0_i32 = arith.constant 0 : i32
    %c0_i32_0 = arith.constant 0 : i32
    %c0_i32_1 = arith.constant 0 : i32
    return %c0_i32, %c0_i32_0 : i32, i32
  }
  func.func @transform_5(%arg0: i32) -> (i32, i32) {
    %c0_i32 = arith.constant 0 : i32
    %c0_i32_0 = arith.constant 0 : i32
    %c0_i32_1 = arith.constant 0 : i32
    return %c0_i32, %c0_i32_0 : i32, i32
  }
  func.func @transform_6(%arg0: i32) -> (i32, i32) {
    %c0_i32 = arith.constant 0 : i32
    %c0_i32_0 = arith.constant 0 : i32
    %c0_i32_1 = arith.constant 0 : i32
    return %c0_i32, %c0_i32_0 : i32, i32
  }
  func.func @transform_7(%arg0: i32) -> (i32, i32) {
    %c0_i32 = arith.constant 0 : i32
    %c0_i32_0 = arith.constant 0 : i32
    %c0_i32_1 = arith.constant 0 : i32
    return %c0_i32, %c0_i32_0 : i32, i32
  }
  func.func @transform_8(%arg0: i32) -> (i32, i32) {
    %c0_i32 = arith.constant 0 : i32
    %c0_i32_0 = arith.constant 0 : i32
    %c0_i32_1 = arith.constant 0 : i32
    return %c0_i32, %c0_i32_0 : i32, i32
  }
  func.func @transform_9(%arg0: i32) -> (i32, i32) {
    %c0_i32 = arith.constant 0 : i32
    %c0_i32_0 = arith.constant 0 : i32
    %c0_i32_1 = arith.constant 0 : i32
    return %c0_i32, %c0_i32_0 : i32, i32
  }
  func.func @transform_10(%arg0: i32) -> (i32, i32) {
    %c0_i32 = arith.constant 0 : i32
    %c0_i32_0 = arith.constant 0 : i32
    %c0_i32_1 = arith.constant 0 : i32
    return %c0_i32, %c0_i32_0 : i32, i32
  }
  func.func @transform_11(%arg0: i32) -> (i32, i32) {
    %c0_i32 = arith.constant 0 : i32
    %c0_i32_0 = arith.constant 0 : i32
    %c0_i32_1 = arith.constant 0 : i32
    return %c0_i32, %c0_i32_0 : i32, i32
  }
  func.func @transform_12(%arg0: i32) -> (i32, i32) {
    %c0_i32 = arith.constant 0 : i32
    %c0_i32_0 = arith.constant 0 : i32
    %c0_i32_1 = arith.constant 0 : i32
    return %c0_i32, %c0_i32_0 : i32, i32
  }
  func.func @transform_13(%arg0: i32) -> (i32, i32) {
    %c0_i32 = arith.constant 0 : i32
    %c0_i32_0 = arith.constant 0 : i32
    %c0_i32_1 = arith.constant 0 : i32
    return %c0_i32, %c0_i32_0 : i32, i32
  }
  func.func @transform_14(%arg0: i32) -> (i32, i32) {
    %c0_i32 = arith.constant 0 : i32
    %c0_i32_0 = arith.constant 0 : i32
    %c0_i32_1 = arith.constant 0 : i32
    return %c0_i32, %c0_i32_0 : i32, i32
  }
  func.func @transform_15(%arg0: i32) -> (i32, i32) {
    %c0_i32 = arith.constant 0 : i32
    %c0_i32_0 = arith.constant 0 : i32
    %c0_i32_1 = arith.constant 0 : i32
    return %c0_i32, %c0_i32_0 : i32, i32
  }
  func.func @transform_16(%arg0: i32) -> (i32, i32) {
    %c0_i32 = arith.constant 0 : i32
    %c0_i32_0 = arith.constant 0 : i32
    return %arg0, %c0_i32 : i32, i32
  }
}

</mosaic_0001>

<llo_original>
// kernel: cnn_encoder_decoder_forward.1
$region0: #{cnn_encoder_decoder_forward.1}
  #allocation0 [shape = 'u32[]', space=smem, size = 0x4, offset = 0x4, fixed_abs, tag = 'smem constant byte address 0x4 - core index']
  #allocation1 [shape = 'u32[144,128]{1,0:T(1,128)}', space=vmem, size = 0x12000, scoped, tag = 'internal scratch']
  #allocation2 [shape = 'f32[1,1]{1,0:T(1,128)S(1)}', space=vmem, size = 0x200, scoped, tag = 'scoped memory for cnn_encoder_decoder_forward.1']
  %s0 = inlined_call_operand.vmem [shape: f32[16,32,128], index: 0, kind: input, shape index: {}]
  %s1 = inlined_call_operand.vmem [shape: bf16[384,256], index: 1, kind: input, shape index: {}]
  %s2 = inlined_call_operand.vmem [shape: bf16[768,512], index: 2, kind: input, shape index: {}]
  %s3 = inlined_call_operand.vmem [shape: bf16[768,256], index: 3, kind: input, shape index: {}]
  %s4 = inlined_call_operand.vmem [shape: bf16[768,128], index: 4, kind: input, shape index: {}]
  %s5 = inlined_call_operand.vmem [shape: f32[3,256], index: 5, kind: input, shape index: {}]
  %s6 = inlined_call_operand.vmem [shape: f32[3,512], index: 6, kind: input, shape index: {}]
  %s7 = inlined_call_operand.vmem [shape: f32[3,256], index: 7, kind: input, shape index: {}]
  %s8 = inlined_call_operand.vmem [shape: f32[3,128], index: 8, kind: input, shape index: {}]
  %s9 = inlined_call_operand.vmem [shape: bf16[128,256], index: 9, kind: input, shape index: {}]
  %s10 = inlined_call_operand.vmem [shape: bf16[512,256], index: 10, kind: input, shape index: {}]
  %s11 = inlined_call_operand.vmem [shape: bf16[64,128], index: 11, kind: input, shape index: {}]
  %s12 = inlined_call_operand.vmem [shape: bf16[128,64], index: 12, kind: input, shape index: {}]
  %s13 = inlined_call_operand.vmem [shape: f32[8,64], index: 13, kind: input, shape index: {}]
  %s14 = inlined_call_operand.vmem [shape: f32[64,64], index: 14, kind: input, shape index: {}]
  %s15 = inlined_call_operand.<no memory space> [shape: f32[1,1], index: 15, kind: input, shape index: {}]
  %s16 = inlined_call_operand.vmem [shape: f32[16,1], index: 16, kind: output, shape index: {}]
  %s17 = sld [smem:[#allocation0]]
  $region97: #{cnn_encoder_decoder_forward.1} parent=0
    _
  %s19 = ssub.s32 1, %s17
  %s20 = scalar_select 0, %s19, %s17
  %v21 = vstv %s15
  %22 = vst [vmem:[#allocation2] sm:$0x1] %v21
  loop: start=0, step=1, limit=4
  $region2: #{cnn_encoder_decoder_forward.1} parent=0 // loop_pre_header
    _
  $region3: #{cnn_encoder_decoder_forward.1} parent=0 // loop_header
    %s24 = sphi 0, %s28
    %p25 = scmp.ge.s32.totalorder %s24, 4
    %s34 = sphi 0, %s36
    %s37 = sphi 0, %s34
    %s38 = sphi 0, %s37
    %s54 = sphi 0, %s38
    %s58 = sphi 0, %s58
    %s60 = sphi 0, %s58
    %s61 = sphi 0, %s60
    %s75 = sphi 0, %s61
    %s79 = sphi 0, %s79
    %s81 = sphi 0, %s79
    %s82 = sphi 0, %s81
    %s96 = sphi 0, %s82
    %s100 = sphi 0, %s100
    %s102 = sphi 0, %s100
    %s103 = sphi 0, %s102
    %s117 = sphi 0, %s103
    %s121 = sphi 0, %s121
    %s123 = sphi 0, %s121
    %s124 = sphi 0, %s123
    %s138 = sphi 0, %s124
    %s142 = sphi 0, %s142
    %s144 = sphi 0, %s142
    %s145 = sphi 0, %s144
    %s159 = sphi 0, %s145
    %s163 = sphi 0, %s163
    %s165 = sphi 0, %s163
    %s166 = sphi 0, %s165
    %s180 = sphi 0, %s166
    %s184 = sphi 0, %s184
    %s186 = sphi 0, %s184
    %s187 = sphi 0, %s186
    %s201 = sphi 0, %s187
    %s205 = sphi 0, %s205
    %s207 = sphi 0, %s205
    %s208 = sphi 0, %s207
    %s222 = sphi 0, %s208
    %s226 = sphi 0, %s226
    %s228 = sphi 0, %s226
    %s229 = sphi 0, %s228
    %s243 = sphi 0, %s229
    %s247 = sphi 0, %s247
    %s249 = sphi 0, %s247
    %s250 = sphi 0, %s249
    %s264 = sphi 0, %s250
    %s268 = sphi 0, %s268
    %s270 = sphi 0, %s268
    %s271 = sphi 0, %s270
    %s285 = sphi 0, %s271
    %s289 = sphi 0, %s289
    %s291 = sphi 0, %s289
    %s292 = sphi 0, %s291
    %s306 = sphi 0, %s292
    %s310 = sphi 0, %s310
    %s312 = sphi 0, %s310
    %s313 = sphi 0, %s312
    %s327 = sphi 0, %s313
    %s331 = sphi 0, %s331
    %s333 = sphi 0, %s331
    %s334 = sphi 0, %s333
    %s348 = sphi 0, %s334
    %s352 = sphi 0, %s352
    %s354 = sphi 0, %s352
    %s355 = sphi 0, %s354
    %s369 = sphi 0, %s355
    %s375 = sphi 0, %s377
    %s378 = sphi 0, %s375
    %s379 = sphi 0, %s378
    %s395 = sphi 0, %s379
  $region4: #{cnn_encoder_decoder_forward.1} parent=0 // loop_header_branch
    %27 = sbr.rel (%p25) target = $region8
  $region5: #{cnn_encoder_decoder_forward.1} parent=0 // loop_body
    %s29 = ssub.s32 %s24, 1
    %s30 = ssub.s32 %s24, 2
    %s31 = sadd.s32 %s24, 1
    %s32 = ssub.s32 %s24, %s31
    %p33 = scmp.eq.s32.totalorder %s32, 0
    %s35 = sadd.s32 %s34, 1
    %s36 = scalar_select %p33, %s34, %s35
    %p39 = pneg %p33
    %p40 = scmp.eq.s32.totalorder %s24, 1
    %p41 = por %p39, %p40
    %p42 = scmp.ne.s32.totalorder %s34, %s37
    %p43 = scmp.eq.s32.totalorder %s24, 0
    %p44 = por %p42, %p43
    %p45 = scmp.ne.s32.totalorder %s34, %s37
    %p46 = scmp.eq.s32.totalorder %s29, 1
    %p47 = por %p45, %p46
    %p48 = scmp.ne.s32.totalorder %s37, %s38
    %p49 = scmp.eq.s32.totalorder %s29, 0
    %p50 = por %p48, %p49
    %p51 = scmp.ne.s32.totalorder %s37, %s38
    %p52 = scmp.eq.s32.totalorder %s30, 1
    %p53 = por %p51, %p52
    %p55 = scmp.ne.s32.totalorder %s38, %s54
    %p56 = scmp.eq.s32.totalorder %s30, 0
    %p57 = por %p55, %p56
    %s59 = sadd.s32 %s58, 1
    %p62 = scmp.eq.s32.totalorder %s24, 1
    %p63 = scmp.ne.s32.totalorder %s58, %s60
    %p64 = scmp.eq.s32.totalorder %s24, 0
    %p65 = por %p63, %p64
    %p66 = scmp.ne.s32.totalorder %s58, %s60
    %p67 = scmp.eq.s32.totalorder %s29, 1
    %p68 = por %p66, %p67
    %p69 = scmp.ne.s32.totalorder %s60, %s61
    %p70 = scmp.eq.s32.totalorder %s29, 0
    %p71 = por %p69, %p70
    %p72 = scmp.ne.s32.totalorder %s60, %s61
    %p73 = scmp.eq.s32.totalorder %s30, 1
    %p74 = por %p72, %p73
    %p76 = scmp.ne.s32.totalorder %s61, %s75
    %p77 = scmp.eq.s32.totalorder %s30, 0
    %p78 = por %p76, %p77
    %s80 = sadd.s32 %s79, 1
    %p83 = scmp.eq.s32.totalorder %s24, 1
    %p84 = scmp.ne.s32.totalorder %s79, %s81
    %p85 = scmp.eq.s32.totalorder %s24, 0
    %p86 = por %p84, %p85
    %p87 = scmp.ne.s32.totalorder %s79, %s81
    %p88 = scmp.eq.s32.totalorder %s29, 1
    %p89 = por %p87, %p88
    %p90 = scmp.ne.s32.totalorder %s81, %s82
    %p91 = scmp.eq.s32.totalorder %s29, 0
    %p92 = por %p90, %p91
    %p93 = scmp.ne.s32.totalorder %s81, %s82
    %p94 = scmp.eq.s32.totalorder %s30, 1
    %p95 = por %p93, %p94
    %p97 = scmp.ne.s32.totalorder %s82, %s96
    %p98 = scmp.eq.s32.totalorder %s30, 0
    %p99 = por %p97, %p98
    %s101 = sadd.s32 %s100, 1
    %p104 = scmp.eq.s32.totalorder %s24, 1
    %p105 = scmp.ne.s32.totalorder %s100, %s102
    %p106 = scmp.eq.s32.totalorder %s24, 0
    %p107 = por %p105, %p106
    %p108 = scmp.ne.s32.totalorder %s100, %s102
    %p109 = scmp.eq.s32.totalorder %s29, 1
    %p110 = por %p108, %p109
    %p111 = scmp.ne.s32.totalorder %s102, %s103
    %p112 = scmp.eq.s32.totalorder %s29, 0
    %p113 = por %p111, %p112
    %p114 = scmp.ne.s32.totalorder %s102, %s103
    %p115 = scmp.eq.s32.totalorder %s30, 1
    %p116 = por %p114, %p115
    %p118 = scmp.ne.s32.totalorder %s103, %s117
    %p119 = scmp.eq.s32.totalorder %s30, 0
    %p120 = por %p118, %p119
    %s122 = sadd.s32 %s121, 1
    %p125 = scmp.eq.s32.totalorder %s24, 1
    %p126 = scmp.ne.s32.totalorder %s121, %s123
    %p127 = scmp.eq.s32.totalorder %s24, 0
    %p128 = por %p126, %p127
    %p129 = scmp.ne.s32.totalorder %s121, %s123
    %p130 = scmp.eq.s32.totalorder %s29, 1
    %p131 = por %p129, %p130
    %p132 = scmp.ne.s32.totalorder %s123, %s124
    %p133 = scmp.eq.s32.totalorder %s29, 0
    %p134 = por %p132, %p133
    %p135 = scmp.ne.s32.totalorder %s123, %s124
    %p136 = scmp.eq.s32.totalorder %s30, 1
    %p137 = por %p135, %p136
    %p139 = scmp.ne.s32.totalorder %s124, %s138
    %p140 = scmp.eq.s32.totalorder %s30, 0
    %p141 = por %p139, %p140
    %s143 = sadd.s32 %s142, 1
    %p146 = scmp.eq.s32.totalorder %s24, 1
    %p147 = scmp.ne.s32.totalorder %s142, %s144
    %p148 = scmp.eq.s32.totalorder %s24, 0
    %p149 = por %p147, %p148
    %p150 = scmp.ne.s32.totalorder %s142, %s144
    %p151 = scmp.eq.s32.totalorder %s29, 1
    %p152 = por %p150, %p151
    %p153 = scmp.ne.s32.totalorder %s144, %s145
    %p154 = scmp.eq.s32.totalorder %s29, 0
    %p155 = por %p153, %p154
    %p156 = scmp.ne.s32.totalorder %s144, %s145
    %p157 = scmp.eq.s32.totalorder %s30, 1
    %p158 = por %p156, %p157
    %p160 = scmp.ne.s32.totalorder %s145, %s159
    %p161 = scmp.eq.s32.totalorder %s30, 0
    %p162 = por %p160, %p161
    %s164 = sadd.s32 %s163, 1
    %p167 = scmp.eq.s32.totalorder %s24, 1
    %p168 = scmp.ne.s32.totalorder %s163, %s165
    %p169 = scmp.eq.s32.totalorder %s24, 0
    %p170 = por %p168, %p169
    %p171 = scmp.ne.s32.totalorder %s163, %s165
    %p172 = scmp.eq.s32.totalorder %s29, 1
    %p173 = por %p171, %p172
    %p174 = scmp.ne.s32.totalorder %s165, %s166
    %p175 = scmp.eq.s32.totalorder %s29, 0
    %p176 = por %p174, %p175
    %p177 = scmp.ne.s32.totalorder %s165, %s166
    %p178 = scmp.eq.s32.totalorder %s30, 1
    %p179 = por %p177, %p178
    %p181 = scmp.ne.s32.totalorder %s166, %s180
    %p182 = scmp.eq.s32.totalorder %s30, 0
    %p183 = por %p181, %p182
    %s185 = sadd.s32 %s184, 1
    %p188 = scmp.eq.s32.totalorder %s24, 1
    %p189 = scmp.ne.s32.totalorder %s184, %s186
    %p190 = scmp.eq.s32.totalorder %s24, 0
    %p191 = por %p189, %p190
    %p192 = scmp.ne.s32.totalorder %s184, %s186
    %p193 = scmp.eq.s32.totalorder %s29, 1
    %p194 = por %p192, %p193
    %p195 = scmp.ne.s32.totalorder %s186, %s187
    %p196 = scmp.eq.s32.totalorder %s29, 0
    %p197 = por %p195, %p196
    %p198 = scmp.ne.s32.totalorder %s186, %s187
    %p199 = scmp.eq.s32.totalorder %s30, 1
    %p200 = por %p198, %p199
    %p202 = scmp.ne.s32.totalorder %s187, %s201
    %p203 = scmp.eq.s32.totalorder %s30, 0
    %p204 = por %p202, %p203
    %s206 = sadd.s32 %s205, 1
    %p209 = scmp.eq.s32.totalorder %s24, 1
    %p210 = scmp.ne.s32.totalorder %s205, %s207
    %p211 = scmp.eq.s32.totalorder %s24, 0
    %p212 = por %p210, %p211
    %p213 = scmp.ne.s32.totalorder %s205, %s207
    %p214 = scmp.eq.s32.totalorder %s29, 1
    %p215 = por %p213, %p214
    %p216 = scmp.ne.s32.totalorder %s207, %s208
    %p217 = scmp.eq.s32.totalorder %s29, 0
    %p218 = por %p216, %p217
    %p219 = scmp.ne.s32.totalorder %s207, %s208
    %p220 = scmp.eq.s32.totalorder %s30, 1
    %p221 = por %p219, %p220
    %p223 = scmp.ne.s32.totalorder %s208, %s222
    %p224 = scmp.eq.s32.totalorder %s30, 0
    %p225 = por %p223, %p224
    %s227 = sadd.s32 %s226, 1
    %p230 = scmp.eq.s32.totalorder %s24, 1
    %p231 = scmp.ne.s32.totalorder %s226, %s228
    %p232 = scmp.eq.s32.totalorder %s24, 0
    %p233 = por %p231, %p232
    %p234 = scmp.ne.s32.totalorder %s226, %s228
    %p235 = scmp.eq.s32.totalorder %s29, 1
    %p236 = por %p234, %p235
    %p237 = scmp.ne.s32.totalorder %s228, %s229
    %p238 = scmp.eq.s32.totalorder %s29, 0
    %p239 = por %p237, %p238
    %p240 = scmp.ne.s32.totalorder %s228, %s229
    %p241 = scmp.eq.s32.totalorder %s30, 1
    %p242 = por %p240, %p241
    %p244 = scmp.ne.s32.totalorder %s229, %s243
    %p245 = scmp.eq.s32.totalorder %s30, 0
    %p246 = por %p244, %p245
    %s248 = sadd.s32 %s247, 1
    %p251 = scmp.eq.s32.totalorder %s24, 1
    %p252 = scmp.ne.s32.totalorder %s247, %s249
    %p253 = scmp.eq.s32.totalorder %s24, 0
    %p254 = por %p252, %p253
    %p255 = scmp.ne.s32.totalorder %s247, %s249
    %p256 = scmp.eq.s32.totalorder %s29, 1
    %p257 = por %p255, %p256
    %p258 = scmp.ne.s32.totalorder %s249, %s250
    %p259 = scmp.eq.s32.totalorder %s29, 0
    %p260 = por %p258, %p259
    %p261 = scmp.ne.s32.totalorder %s249, %s250
    %p262 = scmp.eq.s32.totalorder %s30, 1
    %p263 = por %p261, %p262
    %p265 = scmp.ne.s32.totalorder %s250, %s264
    %p266 = scmp.eq.s32.totalorder %s30, 0
    %p267 = por %p265, %p266
    %s269 = sadd.s32 %s268, 1
    %p272 = scmp.eq.s32.totalorder %s24, 1
    %p273 = scmp.ne.s32.totalorder %s268, %s270
    %p274 = scmp.eq.s32.totalorder %s24, 0
    %p275 = por %p273, %p274
    %p276 = scmp.ne.s32.totalorder %s268, %s270
    %p277 = scmp.eq.s32.totalorder %s29, 1
    %p278 = por %p276, %p277
    %p279 = scmp.ne.s32.totalorder %s270, %s271
    %p280 = scmp.eq.s32.totalorder %s29, 0
    %p281 = por %p279, %p280
    %p282 = scmp.ne.s32.totalorder %s270, %s271
    %p283 = scmp.eq.s32.totalorder %s30, 1
    %p284 = por %p282, %p283
    %p286 = scmp.ne.s32.totalorder %s271, %s285
    %p287 = scmp.eq.s32.totalorder %s30, 0
    %p288 = por %p286, %p287
    %s290 = sadd.s32 %s289, 1
    %p293 = scmp.eq.s32.totalorder %s24, 1
    %p294 = scmp.ne.s32.totalorder %s289, %s291
    %p295 = scmp.eq.s32.totalorder %s24, 0
    %p296 = por %p294, %p295
    %p297 = scmp.ne.s32.totalorder %s289, %s291
    %p298 = scmp.eq.s32.totalorder %s29, 1
    %p299 = por %p297, %p298
    %p300 = scmp.ne.s32.totalorder %s291, %s292
    %p301 = scmp.eq.s32.totalorder %s29, 0
    %p302 = por %p300, %p301
    %p303 = scmp.ne.s32.totalorder %s291, %s292
    %p304 = scmp.eq.s32.totalorder %s30, 1
    %p305 = por %p303, %p304
    %p307 = scmp.ne.s32.totalorder %s292, %s306
    %p308 = scmp.eq.s32.totalorder %s30, 0
    %p309 = por %p307, %p308
    %s311 = sadd.s32 %s310, 1
    %p314 = scmp.eq.s32.totalorder %s24, 1
    %p315 = scmp.ne.s32.totalorder %s310, %s312
    %p316 = scmp.eq.s32.totalorder %s24, 0
    %p317 = por %p315, %p316
    %p318 = scmp.ne.s32.totalorder %s310, %s312
    %p319 = scmp.eq.s32.totalorder %s29, 1
    %p320 = por %p318, %p319
    %p321 = scmp.ne.s32.totalorder %s312, %s313
    %p322 = scmp.eq.s32.totalorder %s29, 0
    %p323 = por %p321, %p322
    %p324 = scmp.ne.s32.totalorder %s312, %s313
    %p325 = scmp.eq.s32.totalorder %s30, 1
    %p326 = por %p324, %p325
    %p328 = scmp.ne.s32.totalorder %s313, %s327
    %p329 = scmp.eq.s32.totalorder %s30, 0
    %p330 = por %p328, %p329
    %s332 = sadd.s32 %s331, 1
    %p335 = scmp.eq.s32.totalorder %s24, 1
    %p336 = scmp.ne.s32.totalorder %s331, %s333
    %p337 = scmp.eq.s32.totalorder %s24, 0
    %p338 = por %p336, %p337
    %p339 = scmp.ne.s32.totalorder %s331, %s333
    %p340 = scmp.eq.s32.totalorder %s29, 1
    %p341 = por %p339, %p340
    %p342 = scmp.ne.s32.totalorder %s333, %s334
    %p343 = scmp.eq.s32.totalorder %s29, 0
    %p344 = por %p342, %p343
    %p345 = scmp.ne.s32.totalorder %s333, %s334
    %p346 = scmp.eq.s32.totalorder %s30, 1
    %p347 = por %p345, %p346
    %p349 = scmp.ne.s32.totalorder %s334, %s348
    %p350 = scmp.eq.s32.totalorder %s30, 0
    %p351 = por %p349, %p350
    %s353 = sadd.s32 %s352, 1
    %p356 = scmp.eq.s32.totalorder %s24, 1
    %p357 = scmp.ne.s32.totalorder %s352, %s354
    %p358 = scmp.eq.s32.totalorder %s24, 0
    %p359 = por %p357, %p358
    %p360 = scmp.ne.s32.totalorder %s352, %s354
    %p361 = scmp.eq.s32.totalorder %s29, 1
    %p362 = por %p360, %p361
    %p363 = scmp.ne.s32.totalorder %s354, %s355
    %p364 = scmp.eq.s32.totalorder %s29, 0
    %p365 = por %p363, %p364
    %p366 = scmp.ne.s32.totalorder %s354, %s355
    %p367 = scmp.eq.s32.totalorder %s30, 1
    %p368 = por %p366, %p367
    %p370 = scmp.ne.s32.totalorder %s355, %s369
    %p371 = scmp.eq.s32.totalorder %s30, 0
    %p372 = por %p370, %p371
    %s373 = ssub.s32 %s24, %s31
    %p374 = scmp.eq.s32.totalorder %s373, 0
    %s376 = sadd.s32 %s375, 1
    %s377 = scalar_select %p374, %s375, %s376
    %p380 = pneg %p374
    %p381 = scmp.eq.s32.totalorder %s24, 1
    %p382 = por %p380, %p381
    %p383 = scmp.ne.s32.totalorder %s375, %s378
    %p384 = scmp.eq.s32.totalorder %s24, 0
    %p385 = por %p383, %p384
    %p386 = scmp.ne.s32.totalorder %s375, %s378
    %p387 = scmp.eq.s32.totalorder %s29, 1
    %p388 = por %p386, %p387
    %p389 = scmp.ne.s32.totalorder %s378, %s379
    %p390 = scmp.eq.s32.totalorder %s29, 0
    %p391 = por %p389, %p390
    %p392 = scmp.ne.s32.totalorder %s378, %s379
    %p393 = scmp.eq.s32.totalorder %s30, 1
    %p394 = por %p392, %p393
    %p396 = scmp.ne.s32.totalorder %s379, %s395
    %p397 = scmp.eq.s32.totalorder %s30, 0
    %p398 = por %p396, %p397
    %p399 = scmp.le.s32.totalorder 1, %s24
    %p400 = scmp.lt.s32.totalorder %s24, 3
    %p401 = pnand %p399, %p400
    %p402 = pneg %p401
    // Predicated region
    $region9: #{cnn_encoder_decoder_forward.1} parent=5 // pred_check
      _
    $region10: #{cnn_encoder_decoder_forward.1} parent=5 // pred_check_branch
      %404 = sbr.rel (%p401) target = $region12
    $region11: #{cnn_encoder_decoder_forward.1} parent=5 // pred_region
      %s405 = ssub.s32 %s24, 1
      // Predicated region
      $region13: #{cnn_encoder_decoder_forward.1} parent=11 // pred_check
        %p406 = pneg %p71
      $region14: #{cnn_encoder_decoder_forward.1} parent=11 // pred_check_branch
        %408 = sbr.rel (%p406) target = $region16
      $region15: #{cnn_encoder_decoder_forward.1} parent=11 // pred_region
        _
      $region16: #{cnn_encoder_decoder_forward.1} parent=11 // pred_fallthru
        _
      // Predicated region
      $region17: #{cnn_encoder_decoder_forward.1} parent=11 // pred_check
        %p409 = pneg %p92
      $region18: #{cnn_encoder_decoder_forward.1} parent=11 // pred_check_branch
        %411 = sbr.rel (%p409) target = $region20
      $region19: #{cnn_encoder_decoder_forward.1} parent=11 // pred_region
        _
      $region20: #{cnn_encoder_decoder_forward.1} parent=11 // pred_fallthru
        _
      // Predicated region
      $region21: #{cnn_encoder_decoder_forward.1} parent=11 // pred_check
        %p412 = pneg %p113
      $region22: #{cnn_encoder_decoder_forward.1} parent=11 // pred_check_branch
        %414 = sbr.rel (%p412) target = $region24
      $region23: #{cnn_encoder_decoder_forward.1} parent=11 // pred_region
        _
      $region24: #{cnn_encoder_decoder_forward.1} parent=11 // pred_fallthru
        _
      // Predicated region
      $region25: #{cnn_encoder_decoder_forward.1} parent=11 // pred_check
        %p415 = pneg %p134
      $region26: #{cnn_encoder_decoder_forward.1} parent=11 // pred_check_branch
        %417 = sbr.rel (%p415) target = $region28
      $region27: #{cnn_encoder_decoder_forward.1} parent=11 // pred_region
        _
      $region28: #{cnn_encoder_decoder_forward.1} parent=11 // pred_fallthru
        _
      // Predicated region
      $region29: #{cnn_encoder_decoder_forward.1} parent=11 // pred_check
        %p418 = pneg %p155
      $region30: #{cnn_encoder_decoder_forward.1} parent=11 // pred_check_branch
        %420 = sbr.rel (%p418) target = $region32
      $region31: #{cnn_encoder_decoder_forward.1} parent=11 // pred_region
        _
      $region32: #{cnn_encoder_decoder_forward.1} parent=11 // pred_fallthru
        _
      // Predicated region
      $region33: #{cnn_encoder_decoder_forward.1} parent=11 // pred_check
        %p421 = pneg %p176
      $region34: #{cnn_encoder_decoder_forward.1} parent=11 // pred_check_branch
        %423 = sbr.rel (%p421) target = $region36
      $region35: #{cnn_encoder_decoder_forward.1} parent=11 // pred_region
        _
      $region36: #{cnn_encoder_decoder_forward.1} parent=11 // pred_fallthru
        _
      // Predicated region
      $region37: #{cnn_encoder_decoder_forward.1} parent=11 // pred_check
        %p424 = pneg %p197
      $region38: #{cnn_encoder_decoder_forward.1} parent=11 // pred_check_branch
        %426 = sbr.rel (%p424) target = $region40
      $region39: #{cnn_encoder_decoder_forward.1} parent=11 // pred_region
        _
      $region40: #{cnn_encoder_decoder_forward.1} parent=11 // pred_fallthru
        _
      // Predicated region
      $region41: #{cnn_encoder_decoder_forward.1} parent=11 // pred_check
        %p427 = pneg %p218
      $region42: #{cnn_encoder_decoder_forward.1} parent=11 // pred_check_branch
        %429 = sbr.rel (%p427) target = $region44
      $region43: #{cnn_encoder_decoder_forward.1} parent=11 // pred_region
        _
      $region44: #{cnn_encoder_decoder_forward.1} parent=11 // pred_fallthru
        _
      // Predicated region
      $region45: #{cnn_encoder_decoder_forward.1} parent=11 // pred_check
        %p430 = pneg %p239
      $region46: #{cnn_encoder_decoder_forward.1} parent=11 // pred_check_branch
        %432 = sbr.rel (%p430) target = $region48
      $region47: #{cnn_encoder_decoder_forward.1} parent=11 // pred_region
        _
      $region48: #{cnn_encoder_decoder_forward.1} parent=11 // pred_fallthru
        _
      // Predicated region
      $region49: #{cnn_encoder_decoder_forward.1} parent=11 // pred_check
        %p433 = pneg %p260
      $region50: #{cnn_encoder_decoder_forward.1} parent=11 // pred_check_branch
        %435 = sbr.rel (%p433) target = $region52
      $region51: #{cnn_encoder_decoder_forward.1} parent=11 // pred_region
        _
      $region52: #{cnn_encoder_decoder_forward.1} parent=11 // pred_fallthru
        _
      // Predicated region
      $region53: #{cnn_encoder_decoder_forward.1} parent=11 // pred_check
        %p436 = pneg %p281
      $region54: #{cnn_encoder_decoder_forward.1} parent=11 // pred_check_branch
        %438 = sbr.rel (%p436) target = $region56
      $region55: #{cnn_encoder_decoder_forward.1} parent=11 // pred_region
        _
      $region56: #{cnn_encoder_decoder_forward.1} parent=11 // pred_fallthru
        _
      // Predicated region
      $region57: #{cnn_encoder_decoder_forward.1} parent=11 // pred_check
        %p439 = pneg %p302
      $region58: #{cnn_encoder_decoder_forward.1} parent=11 // pred_check_branch
        %441 = sbr.rel (%p439) target = $region60
      $region59: #{cnn_encoder_decoder_forward.1} parent=11 // pred_region
        _
      $region60: #{cnn_encoder_decoder_forward.1} parent=11 // pred_fallthru
        _
      // Predicated region
      $region61: #{cnn_encoder_decoder_forward.1} parent=11 // pred_check
        %p442 = pneg %p323
      $region62: #{cnn_encoder_decoder_forward.1} parent=11 // pred_check_branch
        %444 = sbr.rel (%p442) target = $region64
      $region63: #{cnn_encoder_decoder_forward.1} parent=11 // pred_region
        _
      $region64: #{cnn_encoder_decoder_forward.1} parent=11 // pred_fallthru
        _
      // Predicated region
      $region65: #{cnn_encoder_decoder_forward.1} parent=11 // pred_check
        %p445 = pneg %p344
      $region66: #{cnn_encoder_decoder_forward.1} parent=11 // pred_check_branch
        %447 = sbr.rel (%p445) target = $region68
      $region67: #{cnn_encoder_decoder_forward.1} parent=11 // pred_region
        _
      $region68: #{cnn_encoder_decoder_forward.1} parent=11 // pred_fallthru
        _
      // Predicated region
      $region69: #{cnn_encoder_decoder_forward.1} parent=11 // pred_check
        %p448 = pneg %p365
      $region70: #{cnn_encoder_decoder_forward.1} parent=11 // pred_check_branch
        %450 = sbr.rel (%p448) target = $region72
      $region71: #{cnn_encoder_decoder_forward.1} parent=11 // pred_region
        _
      $region72: #{cnn_encoder_decoder_forward.1} parent=11 // pred_fallthru
        _
    $region12: #{cnn_encoder_decoder_forward.1} parent=5 // pred_fallthru
      _
    %p451 = scmp.lt.s32.totalorder %s24, 2
    // Predicated region
    $region73: #{cnn_encoder_decoder_forward.1} parent=5 // pred_check
      %p452 = pneg %p451
    $region74: #{cnn_encoder_decoder_forward.1} parent=5 // pred_check_branch
      %454 = sbr.rel (%p452) target = $region76
    $region75: #{cnn_encoder_decoder_forward.1} parent=5 // pred_region
      // Predicated region
      $region77: #{cnn_encoder_decoder_forward.1} parent=75 // pred_check
        %p455 = pneg %p44
      $region78: #{cnn_encoder_decoder_forward.1} parent=75 // pred_check_branch
        %457 = sbr.rel (%p455) target = $region80
      $region79: #{cnn_encoder_decoder_forward.1} parent=75 // pred_region
        %s458 = smul.u32 8, %s24
        %p459 = scmp.lt.s32.totalorder %s458, 15
        %s460 = scalar_select %p459, %s458, 15
        %s461 = smul.addr %s460, 4
        %s462 = smul.addr %s461, 8
        %s463 = scalar_lea.vmem %s0, %s462
        %s464 = smul.u32 8, %s24
      $region80: #{cnn_encoder_decoder_forward.1} parent=75 // pred_fallthru
        _
    $region76: #{cnn_encoder_decoder_forward.1} parent=5 // pred_fallthru
      _
    %p465 = scmp.le.s32.totalorder 1, %s24
    %p466 = scmp.lt.s32.totalorder %s24, 3
    %p467 = pnand %p465, %p466
    %p468 = pneg %p467
    // Predicated region
    $region81: #{cnn_encoder_decoder_forward.1} parent=5 // pred_check
      _
    $region82: #{cnn_encoder_decoder_forward.1} parent=5 // pred_check_branch
      %470 = sbr.rel (%p467) target = $region84
    $region83: #{cnn_encoder_decoder_forward.1} parent=5 // pred_region
      %s471 = ssub.s32 %s24, 1
      %s472 = smul.u32 8, %s29
      %p473 = scmp.lt.s32.totalorder %s472, 15
      %s474 = scalar_select %p473, %s472, 15
      %s475 = smul.addr %s474, 4
      %s476 = smul.addr %s475, 8
      %s477 = scalar_lea.vmem %s0, %s476
      %p478 = pneg %p50
      %p479 = pneg %p47
      %p480 = pneg %p71
      %p481 = pneg %p68
      %p482 = pneg %p92
      %p483 = pneg %p89
      %p484 = pneg %p113
      %p485 = pneg %p110
      %p486 = pneg %p134
      %p487 = pneg %p131
      %p488 = pneg %p155
      %p489 = pneg %p152
      %p490 = pneg %p176
      %p491 = pneg %p173
      %p492 = pneg %p197
      %p493 = pneg %p194
      %p494 = pneg %p218
      %p495 = pneg %p215
      %p496 = pneg %p239
      %p497 = pneg %p236
      %p498 = pneg %p260
      %p499 = pneg %p257
      %p500 = pneg %p281
      %p501 = pneg %p278
      %p502 = pneg %p302
      %p503 = pneg %p299
      %p504 = pneg %p323
      %p505 = pneg %p320
      %p506 = pneg %p344
      %p507 = pneg %p341
      %p508 = pneg %p365
      %p509 = pneg %p362
      %p510 = pneg %p391
      %p511 = pneg %p388
      %p512 = scmp.lt.s32.totalorder %s29, 1
      %s513 = scalar_select %p512, %s29, 1
      %s514 = smul.addr %s513, 8
      %s515 = scalar_lea.vmem %s16, %s514
      %s516 = smul.u32 8, %s29
      %p517 = scmp.lt.s32.totalorder %s516, 15
      %s518 = scalar_select %p517, %s516, 15
      %s519 = smul.addr %s518, 4
      %s520 = smul.addr %s519, 8
      %s521 = scalar_lea.vmem %s0, %s520
      %s522 = smul.u32 8, %s29
      %p523 = scmp.lt.s32.totalorder %s29, 1
      %s524 = scalar_select %p523, %s29, 1
      %s525 = smul.addr %s524, 8
      %s526 = scalar_lea.vmem %s16, %s525
      %v528 = vld [vmem:[%s521] sm:$0xff]
      %v529 = vld [vmem:[%s521 + $0x8] sm:$0xff]
      %v530 = vld [vmem:[%s521 + $0x10] sm:$0xff]
      %v531 = vld [vmem:[%s521 + $0x18] sm:$0xff]
      %v532 = vld [vmem:[%s521 + $0x20] sm:$0xff]
      %v533 = vld [vmem:[%s521 + $0x28] sm:$0xff]
      %v534 = vld [vmem:[%s521 + $0x30] sm:$0xff]
      %v535 = vld [vmem:[%s521 + $0x38] sm:$0xff]
      %v536 = vld [vmem:[%s521 + $0x40] sm:$0xff]
      %v537 = vld [vmem:[%s521 + $0x48] sm:$0xff]
      %v538 = vld [vmem:[%s521 + $0x50] sm:$0xff]
      %v539 = vld [vmem:[%s521 + $0x58] sm:$0xff]
      %v540 = vld [vmem:[%s521 + $0x60] sm:$0xff]
      %v541 = vld [vmem:[%s521 + $0x68] sm:$0xff]
      %v542 = vld [vmem:[%s521 + $0x70] sm:$0xff]
      %v543 = vld [vmem:[%s521 + $0x78] sm:$0xff]
      %v544 = vld [vmem:[%s521 + $0x80] sm:$0xff]
      %v545 = vld [vmem:[%s521 + $0x88] sm:$0xff]
      %v546 = vld [vmem:[%s521 + $0x90] sm:$0xff]
      %v547 = vld [vmem:[%s521 + $0x98] sm:$0xff]
      %v548 = vld [vmem:[%s521 + $0xa0] sm:$0xff]
      %v549 = vld [vmem:[%s521 + $0xa8] sm:$0xff]
      %v550 = vld [vmem:[%s521 + $0xb0] sm:$0xff]
      %v551 = vld [vmem:[%s521 + $0xb8] sm:$0xff]
      %v552 = vld [vmem:[%s521 + $0xc0] sm:$0xff]
      %v553 = vld [vmem:[%s521 + $0xc8] sm:$0xff]
      %v554 = vld [vmem:[%s521 + $0xd0] sm:$0xff]
      %v555 = vld [vmem:[%s521 + $0xd8] sm:$0xff]
      %v556 = vld [vmem:[%s521 + $0xe0] sm:$0xff]
      %v557 = vld [vmem:[%s521 + $0xe8] sm:$0xff]
      %v558 = vld [vmem:[%s521 + $0xf0] sm:$0xff]
      %v559 = vld [vmem:[%s521 + $0xf8] sm:$0xff]
      %v560 = vlaneseq
      %v561 = vshrl.u32 %v560, 7
      %v562 = vadd.s32 %v561, 8
      %v563 = vadd.s32 %v561, 16
      %v564 = vadd.s32 %v561, 24
      %v565 = vadd.s32 %v561, 32
      %v566 = vadd.s32 %v561, 40
      %v567 = vadd.s32 %v561, 48
      %v568 = vadd.s32 %v561, 56
      %v569 = vadd.s32 %v561, 64
      %v570 = vadd.s32 %v561, 72
      %v571 = vadd.s32 %v561, 80
      %v572 = vadd.s32 %v561, 88
      %v573 = vadd.s32 %v561, 96
      %v574 = vadd.s32 %v561, 104
      %v575 = vadd.s32 %v561, 112
      %v576 = vadd.s32 %v561, 120
      %v577 = vadd.s32 %v561, 128
      %v578 = vadd.s32 %v561, 136
      %v579 = vadd.s32 %v561, 144
      %v580 = vadd.s32 %v561, 152
      %v581 = vadd.s32 %v561, 160
      %v582 = vadd.s32 %v561, 168
      %v583 = vadd.s32 %v561, 176
      %v584 = vadd.s32 %v561, 184
      %v585 = vadd.s32 %v561, 192
      %v586 = vadd.s32 %v561, 200
      %v587 = vadd.s32 %v561, 208
      %v588 = vadd.s32 %v561, 216
      %v589 = vadd.s32 %v561, 224
      %v590 = vadd.s32 %v561, 232
      %v591 = vadd.s32 %v561, 240
      %v592 = vadd.s32 %v561, 248
      %vm593 = vcmp.lt.s32.totalorder %v561, 0
      %v594 = vsub.s32 0, %v561
      %v595 = vsel %vm593, %v594, %v561
      %v596 = vshrl.u32 %v595, 5
      %v597 = vand.u32 %v595, 31
      %v598 = vsub.s32 0, %v597
      %v599 = vsel %vm593, %v598, %v597
      %vm600 = vcmp.lt.s32.totalorder %v562, 0
      %v601 = vsub.s32 0, %v562
      %v602 = vsel %vm600, %v601, %v562
      %v603 = vshrl.u32 %v602, 5
      %v604 = vand.u32 %v602, 31
      %v605 = vsub.s32 0, %v604
      %v606 = vsel %vm600, %v605, %v604
      %vm607 = vcmp.lt.s32.totalorder %v563, 0
      %v608 = vsub.s32 0, %v563
      %v609 = vsel %vm607, %v608, %v563
      %v610 = vshrl.u32 %v609, 5
      %v611 = vand.u32 %v609, 31
      %v612 = vsub.s32 0, %v611
      %v613 = vsel %vm607, %v612, %v611
      %vm614 = vcmp.lt.s32.totalorder %v564, 0
      %v615 = vsub.s32 0, %v564
      %v616 = vsel %vm614, %v615, %v564
      %v617 = vshrl.u32 %v616, 5
      %v618 = vand.u32 %v616, 31
      %v619 = vsub.s32 0, %v618
      %v620 = vsel %vm614, %v619, %v618
      %vm621 = vcmp.lt.s32.totalorder %v565, 0
      %v622 = vsub.s32 0, %v565
      %v623 = vsel %vm621, %v622, %v565
      %v624 = vshrl.u32 %v623, 5
      %v625 = vand.u32 %v623, 31
      %v626 = vsub.s32 0, %v625
      %v627 = vsel %vm621, %v626, %v625
      %vm628 = vcmp.lt.s32.totalorder %v566, 0
      %v629 = vsub.s32 0, %v566
      %v630 = vsel %vm628, %v629, %v566
      %v631 = vshrl.u32 %v630, 5
      %v632 = vand.u32 %v630, 31
      %v633 = vsub.s32 0, %v632
      %v634 = vsel %vm628, %v633, %v632
      %vm635 = vcmp.lt.s32.totalorder %v567, 0
      %v636 = vsub.s32 0, %v567
      %v637 = vsel %vm635, %v636, %v567
      %v638 = vshrl.u32 %v637, 5
      %v639 = vand.u32 %v637, 31
      %v640 = vsub.s32 0, %v639
      %v641 = vsel %vm635, %v640, %v639
      %vm642 = vcmp.lt.s32.totalorder %v568, 0
      %v643 = vsub.s32 0, %v568
      %v644 = vsel %vm642, %v643, %v568
      %v645 = vshrl.u32 %v644, 5
      %v646 = vand.u32 %v644, 31
      %v647 = vsub.s32 0, %v646
      %v648 = vsel %vm642, %v647, %v646
      %vm649 = vcmp.lt.s32.totalorder %v569, 0
      %v650 = vsub.s32 0, %v569
      %v651 = vsel %vm649, %v650, %v569
      %v652 = vshrl.u32 %v651, 5
      %v653 = vand.u32 %v651, 31
      %v654 = vsub.s32 0, %v653
      %v655 = vsel %vm649, %v654, %v653
      %vm656 = vcmp.lt.s32.totalorder %v570, 0
      %v657 = vsub.s32 0, %v570
      %v658 = vsel %vm656, %v657, %v570
      %v659 = vshrl.u32 %v658, 5
      %v660 = vand.u32 %v658, 31
      %v661 = vsub.s32 0, %v660
      %v662 = vsel %vm656, %v661, %v660
      %vm663 = vcmp.lt.s32.totalorder %v571, 0
      %v664 = vsub.s32 0, %v571
      %v665 = vsel %vm663, %v664, %v571
      %v666 = vshrl.u32 %v665, 5
      %v667 = vand.u32 %v665, 31
      %v668 = vsub.s32 0, %v667
      %v669 = vsel %vm663, %v668, %v667
      %vm670 = vcmp.lt.s32.totalorder %v572, 0
      %v671 = vsub.s32 0, %v572
      %v672 = vsel %vm670, %v671, %v572
      %v673 = vshrl.u32 %v672, 5
      %v674 = vand.u32 %v672, 31
      %v675 = vsub.s32 0, %v674
      %v676 = vsel %vm670, %v675, %v674
      %vm677 = vcmp.lt.s32.totalorder %v573, 0
      %v678 = vsub.s32 0, %v573
      %v679 = vsel %vm677, %v678, %v573
      %v680 = vshrl.u32 %v679, 5
      %v681 = vand.u32 %v679, 31
      %v682 = vsub.s32 0, %v681
      %v683 = vsel %vm677, %v682, %v681
      %vm684 = vcmp.lt.s32.totalorder %v574, 0
      %v685 = vsub.s32 0, %v574
      %v686 = vsel %vm684, %v685, %v574
      %v687 = vshrl.u32 %v686, 5
      %v688 = vand.u32 %v686, 31
      %v689 = vsub.s32 0, %v688
      %v690 = vsel %vm684, %v689, %v688
      %vm691 = vcmp.lt.s32.totalorder %v575, 0
      %v692 = vsub.s32 0, %v575
      %v693 = vsel %vm691, %v692, %v575
      %v694 = vshrl.u32 %v693, 5
      %v695 = vand.u32 %v693, 31
      %v696 = vsub.s32 0, %v695
      %v697 = vsel %vm691, %v696, %v695
      %vm698 = vcmp.lt.s32.totalorder %v576, 0
      %v699 = vsub.s32 0, %v576
      %v700 = vsel %vm698, %v699, %v576
      %v701 = vshrl.u32 %v700, 5
      %v702 = vand.u32 %v700, 31
      %v703 = vsub.s32 0, %v702
      %v704 = vsel %vm698, %v703, %v702
      %vm705 = vcmp.lt.s32.totalorder %v577, 0
      %v706 = vsub.s32 0, %v577
      %v707 = vsel %vm705, %v706, %v577
      %v708 = vshrl.u32 %v707, 5
      %v709 = vand.u32 %v707, 31
      %v710 = vsub.s32 0, %v709
      %v711 = vsel %vm705, %v710, %v709
      %vm712 = vcmp.lt.s32.totalorder %v578, 0
      %v713 = vsub.s32 0, %v578
      %v714 = vsel %vm712, %v713, %v578
      %v715 = vshrl.u32 %v714, 5
      %v716 = vand.u32 %v714, 31
      %v717 = vsub.s32 0, %v716
      %v718 = vsel %vm712, %v717, %v716
      %vm719 = vcmp.lt.s32.totalorder %v579, 0
      %v720 = vsub.s32 0, %v579
      %v721 = vsel %vm719, %v720, %v579
      %v722 = vshrl.u32 %v721, 5
      %v723 = vand.u32 %v721, 31
      %v724 = vsub.s32 0, %v723
      %v725 = vsel %vm719, %v724, %v723
      %vm726 = vcmp.lt.s32.totalorder %v580, 0
      %v727 = vsub.s32 0, %v580
      %v728 = vsel %vm726, %v727, %v580
      %v729 = vshrl.u32 %v728, 5
      %v730 = vand.u32 %v728, 31
      %v731 = vsub.s32 0, %v730
      %v732 = vsel %vm726, %v731, %v730
      %vm733 = vcmp.lt.s32.totalorder %v581, 0
      %v734 = vsub.s32 0, %v581
      %v735 = vsel %vm733, %v734, %v581
      %v736 = vshrl.u32 %v735, 5
      %v737 = vand.u32 %v735, 31
      %v738 = vsub.s32 0, %v737
      %v739 = vsel %vm733, %v738, %v737
      %vm740 = vcmp.lt.s32.totalorder %v582, 0
      %v741 = vsub.s32 0, %v582
      %v742 = vsel %vm740, %v741, %v582
      %v743 = vshrl.u32 %v742, 5
      %v744 = vand.u32 %v742, 31
      %v745 = vsub.s32 0, %v744
      %v746 = vsel %vm740, %v745, %v744
      %vm747 = vcmp.lt.s32.totalorder %v583, 0
      %v748 = vsub.s32 0, %v583
      %v749 = vsel %vm747, %v748, %v583
      %v750 = vshrl.u32 %v749, 5
      %v751 = vand.u32 %v749, 31
      %v752 = vsub.s32 0, %v751
      %v753 = vsel %vm747, %v752, %v751
      %vm754 = vcmp.lt.s32.totalorder %v584, 0
      %v755 = vsub.s32 0, %v584
      %v756 = vsel %vm754, %v755, %v584
      %v757 = vshrl.u32 %v756, 5
      %v758 = vand.u32 %v756, 31
      %v759 = vsub.s32 0, %v758
      %v760 = vsel %vm754, %v759, %v758
      %vm761 = vcmp.lt.s32.totalorder %v585, 0
      %v762 = vsub.s32 0, %v585
      %v763 = vsel %vm761, %v762, %v585
      %v764 = vshrl.u32 %v763, 5
      %v765 = vand.u32 %v763, 31
      %v766 = vsub.s32 0, %v765
      %v767 = vsel %vm761, %v766, %v765
      %vm768 = vcmp.lt.s32.totalorder %v586, 0
      %v769 = vsub.s32 0, %v586
      %v770 = vsel %vm768, %v769, %v586
      %v771 = vshrl.u32 %v770, 5
      %v772 = vand.u32 %v770, 31
      %v773 = vsub.s32 0, %v772
      %v774 = vsel %vm768, %v773, %v772
      %vm775 = vcmp.lt.s32.totalorder %v587, 0
      %v776 = vsub.s32 0, %v587
      %v777 = vsel %vm775, %v776, %v587
      %v778 = vshrl.u32 %v777, 5
      %v779 = vand.u32 %v777, 31
      %v780 = vsub.s32 0, %v779
      %v781 = vsel %vm775, %v780, %v779
      %vm782 = vcmp.lt.s32.totalorder %v588, 0
      %v783 = vsub.s32 0, %v588
      %v784 = vsel %vm782, %v783, %v588
      %v785 = vshrl.u32 %v784, 5
      %v786 = vand.u32 %v784, 31
      %v787 = vsub.s32 0, %v786
      %v788 = vsel %vm782, %v787, %v786
      %vm789 = vcmp.lt.s32.totalorder %v589, 0
      %v790 = vsub.s32 0, %v589
      %v791 = vsel %vm789, %v790, %v589
      %v792 = vshrl.u32 %v791, 5
      %v793 = vand.u32 %v791, 31
      %v794 = vsub.s32 0, %v793
      %v795 = vsel %vm789, %v794, %v793
      %vm796 = vcmp.lt.s32.totalorder %v590, 0
      %v797 = vsub.s32 0, %v590
      %v798 = vsel %vm796, %v797, %v590
      %v799 = vshrl.u32 %v798, 5
      %v800 = vand.u32 %v798, 31
      %v801 = vsub.s32 0, %v800
      %v802 = vsel %vm796, %v801, %v800
      %vm803 = vcmp.lt.s32.totalorder %v591, 0
      %v804 = vsub.s32 0, %v591
      %v805 = vsel %vm803, %v804, %v591
      %v806 = vshrl.u32 %v805, 5
      %v807 = vand.u32 %v805, 31
      %v808 = vsub.s32 0, %v807
      %v809 = vsel %vm803, %v808, %v807
      %vm810 = vcmp.lt.s32.totalorder %v592, 0
      %v811 = vsub.s32 0, %v592
      %v812 = vsel %vm810, %v811, %v592
      %v813 = vshrl.u32 %v812, 5
      %v814 = vand.u32 %v812, 31
      %v815 = vsub.s32 0, %v814
      %v816 = vsel %vm810, %v815, %v814
      %vm817 = vcmp.ne.s32.totalorder %v599, 0
      %vm818 = vcmp.ne.s32.totalorder %v606, 0
      %vm819 = vcmp.ne.s32.totalorder %v613, 0
      %vm820 = vcmp.ne.s32.totalorder %v620, 0
      %vm821 = vcmp.ne.s32.totalorder %v627, 0
      %vm822 = vcmp.ne.s32.totalorder %v634, 0
      %vm823 = vcmp.ne.s32.totalorder %v641, 0
      %vm824 = vcmp.ne.s32.totalorder %v648, 0
      %vm825 = vcmp.ne.s32.totalorder %v655, 0
      %vm826 = vcmp.ne.s32.totalorder %v662, 0
      %vm827 = vcmp.ne.s32.totalorder %v669, 0
      %vm828 = vcmp.ne.s32.totalorder %v676, 0
      %vm829 = vcmp.ne.s32.totalorder %v683, 0
      %vm830 = vcmp.ne.s32.totalorder %v690, 0
      %vm831 = vcmp.ne.s32.totalorder %v697, 0
      %vm832 = vcmp.ne.s32.totalorder %v704, 0
      %vm833 = vcmp.ne.s32.totalorder %v711, 0
      %vm834 = vcmp.ne.s32.totalorder %v718, 0
      %vm835 = vcmp.ne.s32.totalorder %v725, 0
      %vm836 = vcmp.ne.s32.totalorder %v732, 0
      %vm837 = vcmp.ne.s32.totalorder %v739, 0
      %vm838 = vcmp.ne.s32.totalorder %v746, 0
      %vm839 = vcmp.ne.s32.totalorder %v753, 0
      %vm840 = vcmp.ne.s32.totalorder %v760, 0
      %vm841 = vcmp.ne.s32.totalorder %v767, 0
      %vm842 = vcmp.ne.s32.totalorder %v774, 0
      %vm843 = vcmp.ne.s32.totalorder %v781, 0
      %vm844 = vcmp.ne.s32.totalorder %v788, 0
      %vm845 = vcmp.ne.s32.totalorder %v795, 0
      %vm846 = vcmp.ne.s32.totalorder %v802, 0
      %vm847 = vcmp.ne.s32.totalorder %v809, 0
      %vm848 = vcmp.ne.s32.totalorder %v816, 0
      %vm849 = vcmp.lt.s32.totalorder %v599, 0
      %vm850 = vcmp.lt.s32.totalorder %v606, 0
      %vm851 = vcmp.lt.s32.totalorder %v613, 0
      %vm852 = vcmp.lt.s32.totalorder %v620, 0
      %vm853 = vcmp.lt.s32.totalorder %v627, 0
      %vm854 = vcmp.lt.s32.totalorder %v634, 0
      %vm855 = vcmp.lt.s32.totalorder %v641, 0
      %vm856 = vcmp.lt.s32.totalorder %v648, 0
      %vm857 = vcmp.lt.s32.totalorder %v655, 0
      %vm858 = vcmp.lt.s32.totalorder %v662, 0
      %vm859 = vcmp.lt.s32.totalorder %v669, 0
      %vm860 = vcmp.lt.s32.totalorder %v676, 0
      %vm861 = vcmp.lt.s32.totalorder %v683, 0
      %vm862 = vcmp.lt.s32.totalorder %v690, 0
      %vm863 = vcmp.lt.s32.totalorder %v697, 0
      %vm864 = vcmp.lt.s32.totalorder %v704, 0
      %vm865 = vcmp.lt.s32.totalorder %v711, 0
      %vm866 = vcmp.lt.s32.totalorder %v718, 0
      %vm867 = vcmp.lt.s32.totalorder %v725, 0
      %vm868 = vcmp.lt.s32.totalorder %v732, 0
      %vm869 = vcmp.lt.s32.totalorder %v739, 0
      %vm870 = vcmp.lt.s32.totalorder %v746, 0
      %vm871 = vcmp.lt.s32.totalorder %v753, 0
      %vm872 = vcmp.lt.s32.totalorder %v760, 0
      %vm873 = vcmp.lt.s32.totalorder %v767, 0
      %vm874 = vcmp.lt.s32.totalorder %v774, 0
      %vm875 = vcmp.lt.s32.totalorder %v781, 0
      %vm876 = vcmp.lt.s32.totalorder %v788, 0
      %vm877 = vcmp.lt.s32.totalorder %v795, 0
      %vm878 = vcmp.lt.s32.totalorder %v802, 0
      %vm879 = vcmp.lt.s32.totalorder %v809, 0
      %vm880 = vcmp.lt.s32.totalorder %v816, 0
      %vm881 = vmand %vm849, %vm817
      %vm882 = vmand %vm850, %vm818
      %vm883 = vmand %vm851, %vm819
      %vm884 = vmand %vm852, %vm820
      %vm885 = vmand %vm853, %vm821
      %vm886 = vmand %vm854, %vm822
      %vm887 = vmand %vm855, %vm823
      %vm888 = vmand %vm856, %vm824
      %vm889 = vmand %vm857, %vm825
      %vm890 = vmand %vm858, %vm826
      %vm891 = vmand %vm859, %vm827
      %vm892 = vmand %vm860, %vm828
      %vm893 = vmand %vm861, %vm829
      %vm894 = vmand %vm862, %vm830
      %vm895 = vmand %vm863, %vm831
      %vm896 = vmand %vm864, %vm832
      %vm897 = vmand %vm865, %vm833
      %vm898 = vmand %vm866, %vm834
      %vm899 = vmand %vm867, %vm835
      %vm900 = vmand %vm868, %vm836
      %vm901 = vmand %vm869, %vm837
      %vm902 = vmand %vm870, %vm838
      %vm903 = vmand %vm871, %vm839
      %vm904 = vmand %vm872, %vm840
      %vm905 = vmand %vm873, %vm841
      %vm906 = vmand %vm874, %vm842
      %vm907 = vmand %vm875, %vm843
      %vm908 = vmand %vm876, %vm844
      %vm909 = vmand %vm877, %vm845
      %vm910 = vmand %vm878, %vm846
      %vm911 = vmand %vm879, %vm847
      %vm912 = vmand %vm880, %vm848
      %v913 = vadd.s32 %v599, 32
      %v914 = vadd.s32 %v606, 32
      %v915 = vadd.s32 %v613, 32
      %v916 = vadd.s32 %v620, 32
      %v917 = vadd.s32 %v627, 32
      %v918 = vadd.s32 %v634, 32
      %v919 = vadd.s32 %v641, 32
      %v920 = vadd.s32 %v648, 32
      %v921 = vadd.s32 %v655, 32
      %v922 = vadd.s32 %v662, 32
      %v923 = vadd.s32 %v669, 32
      %v924 = vadd.s32 %v676, 32
      %v925 = vadd.s32 %v683, 32
      %v926 = vadd.s32 %v690, 32
      %v927 = vadd.s32 %v697, 32
      %v928 = vadd.s32 %v704, 32
      %v929 = vadd.s32 %v711, 32
      %v930 = vadd.s32 %v718, 32
      %v931 = vadd.s32 %v725, 32
      %v932 = vadd.s32 %v732, 32
      %v933 = vadd.s32 %v739, 32
      %v934 = vadd.s32 %v746, 32
      %v935 = vadd.s32 %v753, 32
      %v936 = vadd.s32 %v760, 32
      %v937 = vadd.s32 %v767, 32
      %v938 = vadd.s32 %v774, 32
      %v939 = vadd.s32 %v781, 32
      %v940 = vadd.s32 %v788, 32
      %v941 = vadd.s32 %v795, 32
      %v942 = vadd.s32 %v802, 32
      %v943 = vadd.s32 %v809, 32
      %v944 = vadd.s32 %v816, 32
      %v945 = vsel %vm881, %v913, %v599
      %v946 = vsel %vm882, %v914, %v606
      %v947 = vsel %vm883, %v915, %v613
      %v948 = vsel %vm884, %v916, %v620
      %v949 = vsel %vm885, %v917, %v627
      %v950 = vsel %vm886, %v918, %v634
      %v951 = vsel %vm887, %v919, %v641
      %v952 = vsel %vm888, %v920, %v648
      %v953 = vsel %vm889, %v921, %v655
      %v954 = vsel %vm890, %v922, %v662
      %v955 = vsel %vm891, %v923, %v669
      %v956 = vsel %vm892, %v924, %v676
      %v957 = vsel %vm893, %v925, %v683
      %v958 = vsel %vm894, %v926, %v690
      %v959 = vsel %vm895, %v927, %v697
      %v960 = vsel %vm896, %v928, %v704
      %v961 = vsel %vm897, %v929, %v711
      %v962 = vsel %vm898, %v930, %v718
      %v963 = vsel %vm899, %v931, %v725
      %v964 = vsel %vm900, %v932, %v732
      %v965 = vsel %vm901, %v933, %v739
      %v966 = vsel %vm902, %v934, %v746
      %v967 = vsel %vm903, %v935, %v753
      %v968 = vsel %vm904, %v936, %v760
      %v969 = vsel %vm905, %v937, %v767
      %v970 = vsel %vm906, %v938, %v774
      %v971 = vsel %vm907, %v939, %v781
      %v972 = vsel %vm908, %v940, %v788
      %v973 = vsel %vm909, %v941, %v795
      %v974 = vsel %vm910, %v942, %v802
      %v975 = vsel %vm911, %v943, %v809
      %v976 = vsel %vm912, %v944, %v816
      %vm977 = vcmp.ne.s32.totalorder %v945, 0
      %vm978 = vcmp.ne.s32.totalorder %v946, 0
      %vm979 = vcmp.ne.s32.totalorder %v947, 0
      %vm980 = vcmp.ne.s32.totalorder %v948, 0
      %vm981 = vcmp.ne.s32.totalorder %v949, 0
      %vm982 = vcmp.ne.s32.totalorder %v950, 0
      %vm983 = vcmp.ne.s32.totalorder %v951, 0
      %vm984 = vcmp.ne.s32.totalorder %v952, 0
      %vm985 = vcmp.ne.s32.totalorder %v953, 0
      %vm986 = vcmp.ne.s32.totalorder %v954, 0
      %vm987 = vcmp.ne.s32.totalorder %v955, 0
      %vm988 = vcmp.ne.s32.totalorder %v956, 0
      %vm989 = vcmp.ne.s32.totalorder %v957, 0
      %vm990 = vcmp.ne.s32.totalorder %v958, 0
      %vm991 = vcmp.ne.s32.totalorder %v959, 0
      %vm992 = vcmp.ne.s32.totalorder %v960, 0
      %vm993 = vcmp.ne.s32.totalorder %v961, 0
      %vm994 = vcmp.ne.s32.totalorder %v962, 0
      %vm995 = vcmp.ne.s32.totalorder %v963, 0
      %vm996 = vcmp.ne.s32.totalorder %v964, 0
      %vm997 = vcmp.ne.s32.totalorder %v965, 0
      %vm998 = vcmp.ne.s32.totalorder %v966, 0
      %vm999 = vcmp.ne.s32.totalorder %v967, 0
      %vm1000 = vcmp.ne.s32.totalorder %v968, 0
      %vm1001 = vcmp.ne.s32.totalorder %v969, 0
      %vm1002 = vcmp.ne.s32.totalorder %v970, 0
      %vm1003 = vcmp.ne.s32.totalorder %v971, 0
      %vm1004 = vcmp.ne.s32.totalorder %v972, 0
      %vm1005 = vcmp.ne.s32.totalorder %v973, 0
      %vm1006 = vcmp.ne.s32.totalorder %v974, 0
      %vm1007 = vcmp.ne.s32.totalorder %v975, 0
      %vm1008 = vcmp.ne.s32.totalorder %v976, 0
      %v1009 = vsel %vm977, 1, 0
      %v1010 = vsel %vm978, 1, 0
      %v1011 = vsel %vm979, 1, 0
      %v1012 = vsel %vm980, 1, 0
      %v1013 = vsel %vm981, 1, 0
      %v1014 = vsel %vm982, 1, 0
      %v1015 = vsel %vm983, 1, 0
      %v1016 = vsel %vm984, 1, 0
      %v1017 = vsel %vm985, 1, 0
      %v1018 = vsel %vm986, 1, 0
      %v1019 = vsel %vm987, 1, 0
      %v1020 = vsel %vm988, 1, 0
      %v1021 = vsel %vm989, 1, 0
      %v1022 = vsel %vm990, 1, 0
      %v1023 = vsel %vm991, 1, 0
      %v1024 = vsel %vm992, 1, 0
      %v1025 = vsel %vm993, 1, 0
      %v1026 = vsel %vm994, 1, 0
      %v1027 = vsel %vm995, 1, 0
      %v1028 = vsel %vm996, 1, 0
      %v1029 = vsel %vm997, 1, 0
      %v1030 = vsel %vm998, 1, 0
      %v1031 = vsel %vm999, 1, 0
      %v1032 = vsel %vm1000, 1, 0
      %v1033 = vsel %vm1001, 1, 0
      %v1034 = vsel %vm1002, 1, 0
      %v1035 = vsel %vm1003, 1, 0
      %v1036 = vsel %vm1004, 1, 0
      %v1037 = vsel %vm1005, 1, 0
      %v1038 = vsel %vm1006, 1, 0
      %v1039 = vsel %vm1007, 1, 0
      %v1040 = vsel %vm1008, 1, 0
      %v1041 = vcvt.s32.f32 %v1009
      %v1042 = vcvt.s32.f32 %v1010
      %v1043 = vcvt.s32.f32 %v1011
      %v1044 = vcvt.s32.f32 %v1012
      %v1045 = vcvt.s32.f32 %v1013
      %v1046 = vcvt.s32.f32 %v1014
      %v1047 = vcvt.s32.f32 %v1015
      %v1048 = vcvt.s32.f32 %v1016
      %v1049 = vcvt.s32.f32 %v1017
      %v1050 = vcvt.s32.f32 %v1018
      %v1051 = vcvt.s32.f32 %v1019
      %v1052 = vcvt.s32.f32 %v1020
      %v1053 = vcvt.s32.f32 %v1021
      %v1054 = vcvt.s32.f32 %v1022
      %v1055 = vcvt.s32.f32 %v1023
      %v1056 = vcvt.s32.f32 %v1024
      %v1057 = vcvt.s32.f32 %v1025
      %v1058 = vcvt.s32.f32 %v1026
      %v1059 = vcvt.s32.f32 %v1027
      %v1060 = vcvt.s32.f32 %v1028
      %v1061 = vcvt.s32.f32 %v1029
      %v1062 = vcvt.s32.f32 %v1030
      %v1063 = vcvt.s32.f32 %v1031
      %v1064 = vcvt.s32.f32 %v1032
      %v1065 = vcvt.s32.f32 %v1033
      %v1066 = vcvt.s32.f32 %v1034
      %v1067 = vcvt.s32.f32 %v1035
      %v1068 = vcvt.s32.f32 %v1036
      %v1069 = vcvt.s32.f32 %v1037
      %v1070 = vcvt.s32.f32 %v1038
      %v1071 = vcvt.s32.f32 %v1039
      %v1072 = vcvt.s32.f32 %v1040
      %vm1073 = vcmp.ne.s32.totalorder %v945, 31
      %vm1074 = vcmp.ne.s32.totalorder %v946, 31
      %vm1075 = vcmp.ne.s32.totalorder %v947, 31
      %vm1076 = vcmp.ne.s32.totalorder %v948, 31
      %vm1077 = vcmp.ne.s32.totalorder %v949, 31
      %vm1078 = vcmp.ne.s32.totalorder %v950, 31
      %vm1079 = vcmp.ne.s32.totalorder %v951, 31
      %vm1080 = vcmp.ne.s32.totalorder %v952, 31
      %vm1081 = vcmp.ne.s32.totalorder %v953, 31
      %vm1082 = vcmp.ne.s32.totalorder %v954, 31
      %vm1083 = vcmp.ne.s32.totalorder %v955, 31
      %vm1084 = vcmp.ne.s32.totalorder %v956, 31
      %vm1085 = vcmp.ne.s32.totalorder %v957, 31
      %vm1086 = vcmp.ne.s32.totalorder %v958, 31
      %vm1087 = vcmp.ne.s32.totalorder %v959, 31
      %vm1088 = vcmp.ne.s32.totalorder %v960, 31
      %vm1089 = vcmp.ne.s32.totalorder %v961, 31
      %vm1090 = vcmp.ne.s32.totalorder %v962, 31
      %vm1091 = vcmp.ne.s32.totalorder %v963, 31
      %vm1092 = vcmp.ne.s32.totalorder %v964, 31
      %vm1093 = vcmp.ne.s32.totalorder %v965, 31
      %vm1094 = vcmp.ne.s32.totalorder %v966, 31
      %vm1095 = vcmp.ne.s32.totalorder %v967, 31
      %vm1096 = vcmp.ne.s32.totalorder %v968, 31
      %vm1097 = vcmp.ne.s32.totalorder %v969, 31
      %vm1098 = vcmp.ne.s32.totalorder %v970, 31
      %vm1099 = vcmp.ne.s32.totalorder %v971, 31
      %vm1100 = vcmp.ne.s32.totalorder %v972, 31
      %vm1101 = vcmp.ne.s32.totalorder %v973, 31
      %vm1102 = vcmp.ne.s32.totalorder %v974, 31
      %vm1103 = vcmp.ne.s32.totalorder %v975, 31
      %vm1104 = vcmp.ne.s32.totalorder %v976, 31
      %v1105 = vsel %vm1073, 1, 0
      %v1106 = vsel %vm1074, 1, 0
      %v1107 = vsel %vm1075, 1, 0
      %v1108 = vsel %vm1076, 1, 0
      %v1109 = vsel %vm1077, 1, 0
      %v1110 = vsel %vm1078, 1, 0
      %v1111 = vsel %vm1079, 1, 0
      %v1112 = vsel %vm1080, 1, 0
      %v1113 = vsel %vm1081, 1, 0
      %v1114 = vsel %vm1082, 1, 0
      %v1115 = vsel %vm1083, 1, 0
      %v1116 = vsel %vm1084, 1, 0
      %v1117 = vsel %vm1085, 1, 0
      %v1118 = vsel %vm1086, 1, 0
      %v1119 = vsel %vm1087, 1, 0
      %v1120 = vsel %vm1088, 1, 0
      %v1121 = vsel %vm1089, 1, 0
      %v1122 = vsel %vm1090, 1, 0
      %v1123 = vsel %vm1091, 1, 0
      %v1124 = vsel %vm1092, 1, 0
      %v1125 = vsel %vm1093, 1, 0
      %v1126 = vsel %vm1094, 1, 0
      %v1127 = vsel %vm1095, 1, 0
      %v1128 = vsel %vm1096, 1, 0
      %v1129 = vsel %vm1097, 1, 0
      %v1130 = vsel %vm1098, 1, 0
      %v1131 = vsel %vm1099, 1, 0
      %v1132 = vsel %vm1100, 1, 0
      %v1133 = vsel %vm1101, 1, 0
      %v1134 = vsel %vm1102, 1, 0
      %v1135 = vsel %vm1103, 1, 0
      %v1136 = vsel %vm1104, 1, 0
      %v1137 = vcvt.s32.f32 %v1105
      %v1138 = vcvt.s32.f32 %v1106
      %v1139 = vcvt.s32.f32 %v1107
      %v1140 = vcvt.s32.f32 %v1108
      %v1141 = vcvt.s32.f32 %v1109
      %v1142 = vcvt.s32.f32 %v1110
      %v1143 = vcvt.s32.f32 %v1111
      %v1144 = vcvt.s32.f32 %v1112
      %v1145 = vcvt.s32.f32 %v1113
      %v1146 = vcvt.s32.f32 %v1114
      %v1147 = vcvt.s32.f32 %v1115
      %v1148 = vcvt.s32.f32 %v1116
      %v1149 = vcvt.s32.f32 %v1117
      %v1150 = vcvt.s32.f32 %v1118
      %v1151 = vcvt.s32.f32 %v1119
      %v1152 = vcvt.s32.f32 %v1120
      %v1153 = vcvt.s32.f32 %v1121
      %v1154 = vcvt.s32.f32 %v1122
      %v1155 = vcvt.s32.f32 %v1123
      %v1156 = vcvt.s32.f32 %v1124
      %v1157 = vcvt.s32.f32 %v1125
      %v1158 = vcvt.s32.f32 %v1126
      %v1159 = vcvt.s32.f32 %v1127
      %v1160 = vcvt.s32.f32 %v1128
      %v1161 = vcvt.s32.f32 %v1129
      %v1162 = vcvt.s32.f32 %v1130
      %v1163 = vcvt.s32.f32 %v1131
      %v1164 = vcvt.s32.f32 %v1132
      %v1165 = vcvt.s32.f32 %v1133
      %v1166 = vcvt.s32.f32 %v1134
      %v1167 = vcvt.s32.f32 %v1135
      %v1168 = vcvt.s32.f32 %v1136
      %vm1169 = vcmp.lt.s32.totalorder %v561, 0
      %v1170 = vsub.s32 0, %v561
      %v1171 = vsel %vm1169, %v1170, %v561
      %v1172 = vshrl.u32 %v1171, 4
      %v1173 = vand.u32 %v1171, 15
      %v1174 = vsub.s32 0, %v1173
      %v1175 = vsel %vm1169, %v1174, %v1173
      %vm1176 = vcmp.lt.s32.totalorder %v562, 0
      %v1177 = vsub.s32 0, %v562
      %v1178 = vsel %vm1176, %v1177, %v562
      %v1179 = vshrl.u32 %v1178, 4
      %v1180 = vand.u32 %v1178, 15
      %v1181 = vsub.s32 0, %v1180
      %v1182 = vsel %vm1176, %v1181, %v1180
      %vm1183 = vcmp.lt.s32.totalorder %v563, 0
      %v1184 = vsub.s32 0, %v563
      %v1185 = vsel %vm1183, %v1184, %v563
      %v1186 = vshrl.u32 %v1185, 4
      %v1187 = vand.u32 %v1185, 15
      %v1188 = vsub.s32 0, %v1187
      %v1189 = vsel %vm1183, %v1188, %v1187
      %vm1190 = vcmp.lt.s32.totalorder %v564, 0
      %v1191 = vsub.s32 0, %v564
      %v1192 = vsel %vm1190, %v1191, %v564
      %v1193 = vshrl.u32 %v1192, 4
      %v1194 = vand.u32 %v1192, 15
      %v1195 = vsub.s32 0, %v1194
      %v1196 = vsel %vm1190, %v1195, %v1194
      %vm1197 = vcmp.lt.s32.totalorder %v565, 0
      %v1198 = vsub.s32 0, %v565
      %v1199 = vsel %vm1197, %v1198, %v565
      %v1200 = vshrl.u32 %v1199, 4
      %v1201 = vand.u32 %v1199, 15
      %v1202 = vsub.s32 0, %v1201
      %v1203 = vsel %vm1197, %v1202, %v1201
      %vm1204 = vcmp.lt.s32.totalorder %v566, 0
      %v1205 = vsub.s32 0, %v566
      %v1206 = vsel %vm1204, %v1205, %v566
      %v1207 = vshrl.u32 %v1206, 4
      %v1208 = vand.u32 %v1206, 15
      %v1209 = vsub.s32 0, %v1208
      %v1210 = vsel %vm1204, %v1209, %v1208
      %vm1211 = vcmp.lt.s32.totalorder %v567, 0
      %v1212 = vsub.s32 0, %v567
      %v1213 = vsel %vm1211, %v1212, %v567
      %v1214 = vshrl.u32 %v1213, 4
      %v1215 = vand.u32 %v1213, 15
      %v1216 = vsub.s32 0, %v1215
      %v1217 = vsel %vm1211, %v1216, %v1215
      %vm1218 = vcmp.lt.s32.totalorder %v568, 0
      %v1219 = vsub.s32 0, %v568
      %v1220 = vsel %vm1218, %v1219, %v568
      %v1221 = vshrl.u32 %v1220, 4
      %v1222 = vand.u32 %v1220, 15
      %v1223 = vsub.s32 0, %v1222
      %v1224 = vsel %vm1218, %v1223, %v1222
      %vm1225 = vcmp.lt.s32.totalorder %v569, 0
      %v1226 = vsub.s32 0, %v569
      %v1227 = vsel %vm1225, %v1226, %v569
      %v1228 = vshrl.u32 %v1227, 4
      %v1229 = vand.u32 %v1227, 15
      %v1230 = vsub.s32 0, %v1229
      %v1231 = vsel %vm1225, %v1230, %v1229
      %vm1232 = vcmp.lt.s32.totalorder %v570, 0
      %v1233 = vsub.s32 0, %v570
      %v1234 = vsel %vm1232, %v1233, %v570
      %v1235 = vshrl.u32 %v1234, 4
      %v1236 = vand.u32 %v1234, 15
      %v1237 = vsub.s32 0, %v1236
      %v1238 = vsel %vm1232, %v1237, %v1236
      %vm1239 = vcmp.lt.s32.totalorder %v571, 0
      %v1240 = vsub.s32 0, %v571
      %v1241 = vsel %vm1239, %v1240, %v571
      %v1242 = vshrl.u32 %v1241, 4
      %v1243 = vand.u32 %v1241, 15
      %v1244 = vsub.s32 0, %v1243
      %v1245 = vsel %vm1239, %v1244, %v1243
      %vm1246 = vcmp.lt.s32.totalorder %v572, 0
      %v1247 = vsub.s32 0, %v572
      %v1248 = vsel %vm1246, %v1247, %v572
      %v1249 = vshrl.u32 %v1248, 4
      %v1250 = vand.u32 %v1248, 15
      %v1251 = vsub.s32 0, %v1250
      %v1252 = vsel %vm1246, %v1251, %v1250
      %vm1253 = vcmp.lt.s32.totalorder %v573, 0
      %v1254 = vsub.s32 0, %v573
      %v1255 = vsel %vm1253, %v1254, %v573
      %v1256 = vshrl.u32 %v1255, 4
      %v1257 = vand.u32 %v1255, 15
      %v1258 = vsub.s32 0, %v1257
      %v1259 = vsel %vm1253, %v1258, %v1257
      %vm1260 = vcmp.lt.s32.totalorder %v574, 0
      %v1261 = vsub.s32 0, %v574
      %v1262 = vsel %vm1260, %v1261, %v574
      %v1263 = vshrl.u32 %v1262, 4
      %v1264 = vand.u32 %v1262, 15
      %v1265 = vsub.s32 0, %v1264
      %v1266 = vsel %vm1260, %v1265, %v1264
      %vm1267 = vcmp.lt.s32.totalorder %v575, 0
      %v1268 = vsub.s32 0, %v575
      %v1269 = vsel %vm1267, %v1268, %v575
      %v1270 = vshrl.u32 %v1269, 4
      %v1271 = vand.u32 %v1269, 15
      %v1272 = vsub.s32 0, %v1271
      %v1273 = vsel %vm1267, %v1272, %v1271
      %vm1274 = vcmp.lt.s32.totalorder %v576, 0
      %v1275 = vsub.s32 0, %v576
      %v1276 = vsel %vm1274, %v1275, %v576
      %v1277 = vshrl.u32 %v1276, 4
      %v1278 = vand.u32 %v1276, 15
      %v1279 = vsub.s32 0, %v1278
      %v1280 = vsel %vm1274, %v1279, %v1278
      %vm1281 = vcmp.ne.s32.totalorder %v1175, 0
      %vm1282 = vcmp.ne.s32.totalorder %v1182, 0
      %vm1283 = vcmp.ne.s32.totalorder %v1189, 0
      %vm1284 = vcmp.ne.s32.totalorder %v1196, 0
      %vm1285 = vcmp.ne.s32.totalorder %v1203, 0
      %vm1286 = vcmp.ne.s32.totalorder %v1210, 0
      %vm1287 = vcmp.ne.s32.totalorder %v1217, 0
      %vm1288 = vcmp.ne.s32.totalorder %v1224, 0
      %vm1289 = vcmp.ne.s32.totalorder %v1231, 0
      %vm1290 = vcmp.ne.s32.totalorder %v1238, 0
      %vm1291 = vcmp.ne.s32.totalorder %v1245, 0
      %vm1292 = vcmp.ne.s32.totalorder %v1252, 0
      %vm1293 = vcmp.ne.s32.totalorder %v1259, 0
      %vm1294 = vcmp.ne.s32.totalorder %v1266, 0
      %vm1295 = vcmp.ne.s32.totalorder %v1273, 0
      %vm1296 = vcmp.ne.s32.totalorder %v1280, 0
      %vm1297 = vcmp.lt.s32.totalorder %v1175, 0
      %vm1298 = vcmp.lt.s32.totalorder %v1182, 0
      %vm1299 = vcmp.lt.s32.totalorder %v1189, 0
      %vm1300 = vcmp.lt.s32.totalorder %v1196, 0
      %vm1301 = vcmp.lt.s32.totalorder %v1203, 0
      %vm1302 = vcmp.lt.s32.totalorder %v1210, 0
      %vm1303 = vcmp.lt.s32.totalorder %v1217, 0
      %vm1304 = vcmp.lt.s32.totalorder %v1224, 0
      %vm1305 = vcmp.lt.s32.totalorder %v1231, 0
      %vm1306 = vcmp.lt.s32.totalorder %v1238, 0
      %vm1307 = vcmp.lt.s32.totalorder %v1245, 0
      %vm1308 = vcmp.lt.s32.totalorder %v1252, 0
      %vm1309 = vcmp.lt.s32.totalorder %v1259, 0
      %vm1310 = vcmp.lt.s32.totalorder %v1266, 0
      %vm1311 = vcmp.lt.s32.totalorder %v1273, 0
      %vm1312 = vcmp.lt.s32.totalorder %v1280, 0
      %vm1313 = vmand %vm1297, %vm1281
      %vm1314 = vmand %vm1298, %vm1282
      %vm1315 = vmand %vm1299, %vm1283
      %vm1316 = vmand %vm1300, %vm1284
      %vm1317 = vmand %vm1301, %vm1285
      %vm1318 = vmand %vm1302, %vm1286
      %vm1319 = vmand %vm1303, %vm1287
      %vm1320 = vmand %vm1304, %vm1288
      %vm1321 = vmand %vm1305, %vm1289
      %vm1322 = vmand %vm1306, %vm1290
      %vm1323 = vmand %vm1307, %vm1291
      %vm1324 = vmand %vm1308, %vm1292
      %vm1325 = vmand %vm1309, %vm1293
      %vm1326 = vmand %vm1310, %vm1294
      %vm1327 = vmand %vm1311, %vm1295
      %vm1328 = vmand %vm1312, %vm1296
      %v1329 = vadd.s32 %v1175, 16
      %v1330 = vadd.s32 %v1182, 16
      %v1331 = vadd.s32 %v1189, 16
      %v1332 = vadd.s32 %v1196, 16
      %v1333 = vadd.s32 %v1203, 16
      %v1334 = vadd.s32 %v1210, 16
      %v1335 = vadd.s32 %v1217, 16
      %v1336 = vadd.s32 %v1224, 16
      %v1337 = vadd.s32 %v1231, 16
      %v1338 = vadd.s32 %v1238, 16
      %v1339 = vadd.s32 %v1245, 16
      %v1340 = vadd.s32 %v1252, 16
      %v1341 = vadd.s32 %v1259, 16
      %v1342 = vadd.s32 %v1266, 16
      %v1343 = vadd.s32 %v1273, 16
      %v1344 = vadd.s32 %v1280, 16
      %v1345 = vsel %vm1313, %v1329, %v1175
      %v1346 = vsel %vm1314, %v1330, %v1182
      %v1347 = vsel %vm1315, %v1331, %v1189
      %v1348 = vsel %vm1316, %v1332, %v1196
      %v1349 = vsel %vm1317, %v1333, %v1203
      %v1350 = vsel %vm1318, %v1334, %v1210
      %v1351 = vsel %vm1319, %v1335, %v1217
      %v1352 = vsel %vm1320, %v1336, %v1224
      %v1353 = vsel %vm1321, %v1337, %v1231
      %v1354 = vsel %vm1322, %v1338, %v1238
      %v1355 = vsel %vm1323, %v1339, %v1245
      %v1356 = vsel %vm1324, %v1340, %v1252
      %v1357 = vsel %vm1325, %v1341, %v1259
      %v1358 = vsel %vm1326, %v1342, %v1266
      %v1359 = vsel %vm1327, %v1343, %v1273
      %v1360 = vsel %vm1328, %v1344, %v1280
      %vm1361 = vcmp.ne.s32.totalorder %v1345, 0
      %vm1362 = vcmp.ne.s32.totalorder %v1346, 0
      %vm1363 = vcmp.ne.s32.totalorder %v1347, 0
      %vm1364 = vcmp.ne.s32.totalorder %v1348, 0
      %vm1365 = vcmp.ne.s32.totalorder %v1349, 0
      %vm1366 = vcmp.ne.s32.totalorder %v1350, 0
      %vm1367 = vcmp.ne.s32.totalorder %v1351, 0
      %vm1368 = vcmp.ne.s32.totalorder %v1352, 0
      %vm1369 = vcmp.ne.s32.totalorder %v1353, 0
      %vm1370 = vcmp.ne.s32.totalorder %v1354, 0
      %vm1371 = vcmp.ne.s32.totalorder %v1355, 0
      %vm1372 = vcmp.ne.s32.totalorder %v1356, 0
      %vm1373 = vcmp.ne.s32.totalorder %v1357, 0
      %vm1374 = vcmp.ne.s32.totalorder %v1358, 0
      %vm1375 = vcmp.ne.s32.totalorder %v1359, 0
      %vm1376 = vcmp.ne.s32.totalorder %v1360, 0
      %v1377 = vsel %vm1361, 1, 0
      %v1378 = vsel %vm1362, 1, 0
      %v1379 = vsel %vm1363, 1, 0
      %v1380 = vsel %vm1364, 1, 0
      %v1381 = vsel %vm1365, 1, 0
      %v1382 = vsel %vm1366, 1, 0
      %v1383 = vsel %vm1367, 1, 0
      %v1384 = vsel %vm1368, 1, 0
      %v1385 = vsel %vm1369, 1, 0
      %v1386 = vsel %vm1370, 1, 0
      %v1387 = vsel %vm1371, 1, 0
      %v1388 = vsel %vm1372, 1, 0
      %v1389 = vsel %vm1373, 1, 0
      %v1390 = vsel %vm1374, 1, 0
      %v1391 = vsel %vm1375, 1, 0
      %v1392 = vsel %vm1376, 1, 0
      %v1393 = vcvt.s32.f32 %v1377
      %v1394 = vcvt.s32.f32 %v1378
      %v1395 = vcvt.s32.f32 %v1379
      %v1396 = vcvt.s32.f32 %v1380
      %v1397 = vcvt.s32.f32 %v1381
      %v1398 = vcvt.s32.f32 %v1382
      %v1399 = vcvt.s32.f32 %v1383
      %v1400 = vcvt.s32.f32 %v1384
      %v1401 = vcvt.s32.f32 %v1385
      %v1402 = vcvt.s32.f32 %v1386
      %v1403 = vcvt.s32.f32 %v1387
      %v1404 = vcvt.s32.f32 %v1388
      %v1405 = vcvt.s32.f32 %v1389
      %v1406 = vcvt.s32.f32 %v1390
      %v1407 = vcvt.s32.f32 %v1391
      %v1408 = vcvt.s32.f32 %v1392
      %vm1409 = vcmp.ne.s32.totalorder %v1345, 15
      %vm1410 = vcmp.ne.s32.totalorder %v1346, 15
      %vm1411 = vcmp.ne.s32.totalorder %v1347, 15
      %vm1412 = vcmp.ne.s32.totalorder %v1348, 15
      %vm1413 = vcmp.ne.s32.totalorder %v1349, 15
      %vm1414 = vcmp.ne.s32.totalorder %v1350, 15
      %vm1415 = vcmp.ne.s32.totalorder %v1351, 15
      %vm1416 = vcmp.ne.s32.totalorder %v1352, 15
      %vm1417 = vcmp.ne.s32.totalorder %v1353, 15
      %vm1418 = vcmp.ne.s32.totalorder %v1354, 15
      %vm1419 = vcmp.ne.s32.totalorder %v1355, 15
      %vm1420 = vcmp.ne.s32.totalorder %v1356, 15
      %vm1421 = vcmp.ne.s32.totalorder %v1357, 15
      %vm1422 = vcmp.ne.s32.totalorder %v1358, 15
      %vm1423 = vcmp.ne.s32.totalorder %v1359, 15
      %vm1424 = vcmp.ne.s32.totalorder %v1360, 15
      %v1425 = vsel %vm1409, 1, 0
      %v1426 = vsel %vm1410, 1, 0
      %v1427 = vsel %vm1411, 1, 0
      %v1428 = vsel %vm1412, 1, 0
      %v1429 = vsel %vm1413, 1, 0
      %v1430 = vsel %vm1414, 1, 0
      %v1431 = vsel %vm1415, 1, 0
      %v1432 = vsel %vm1416, 1, 0
      %v1433 = vsel %vm1417, 1, 0
      %v1434 = vsel %vm1418, 1, 0
      %v1435 = vsel %vm1419, 1, 0
      %v1436 = vsel %vm1420, 1, 0
      %v1437 = vsel %vm1421, 1, 0
      %v1438 = vsel %vm1422, 1, 0
      %v1439 = vsel %vm1423, 1, 0
      %v1440 = vsel %vm1424, 1, 0
      %v1441 = vcvt.s32.f32 %v1425
      %v1442 = vcvt.s32.f32 %v1426
      %v1443 = vcvt.s32.f32 %v1427
      %v1444 = vcvt.s32.f32 %v1428
      %v1445 = vcvt.s32.f32 %v1429
      %v1446 = vcvt.s32.f32 %v1430
      %v1447 = vcvt.s32.f32 %v1431
      %v1448 = vcvt.s32.f32 %v1432
      %v1449 = vcvt.s32.f32 %v1433
      %v1450 = vcvt.s32.f32 %v1434
      %v1451 = vcvt.s32.f32 %v1435
      %v1452 = vcvt.s32.f32 %v1436
      %v1453 = vcvt.s32.f32 %v1437
      %v1454 = vcvt.s32.f32 %v1438
      %v1455 = vcvt.s32.f32 %v1439
      %v1456 = vcvt.s32.f32 %v1440
      %v1457 = vrot.slane %v528, 7
      %v1458 = vrot.slane %v529, 7
      %v1459 = vrot.slane %v530, 7
      %v1460 = vrot.slane %v531, 7
      %v1461 = vrot.slane %v532, 7
      %v1462 = vrot.slane %v533, 7
      %v1463 = vrot.slane %v534, 7
      %v1464 = vrot.slane %v535, 7
      %v1465 = vrot.slane %v536, 7
      %v1466 = vrot.slane %v537, 7
      %v1467 = vrot.slane %v538, 7
      %v1468 = vrot.slane %v539, 7
      %v1469 = vrot.slane %v540, 7
      %v1470 = vrot.slane %v541, 7
      %v1471 = vrot.slane %v542, 7
      %v1472 = vrot.slane %v543, 7
      %v1473 = vrot.slane %v544, 7
      %v1474 = vrot.slane %v545, 7
      %v1475 = vrot.slane %v546, 7
      %v1476 = vrot.slane %v547, 7
      %v1477 = vrot.slane %v548, 7
      %v1478 = vrot.slane %v549, 7
      %v1479 = vrot.slane %v550, 7
      %v1480 = vrot.slane %v551, 7
      %v1481 = vrot.slane %v552, 7
      %v1482 = vrot.slane %v553, 7
      %v1483 = vrot.slane %v554, 7
      %v1484 = vrot.slane %v555, 7
      %v1485 = vrot.slane %v556, 7
      %v1486 = vrot.slane %v557, 7
      %v1487 = vrot.slane %v558, 7
      %v1488 = vrot.slane %v559, 7
      %vm1489 = vcmp.lt.s32.totalorder %v561, 1
      %v1490 = vsel %vm1489, %v1487, %v1488
      %v1491 = vsel %vm1489, %v1486, %v1487
      %v1492 = vsel %vm1489, %v1485, %v1486
      %v1493 = vsel %vm1489, %v1484, %v1485
      %v1494 = vsel %vm1489, %v1483, %v1484
      %v1495 = vsel %vm1489, %v1482, %v1483
      %v1496 = vsel %vm1489, %v1481, %v1482
      %v1497 = vsel %vm1489, %v1480, %v1481
      %v1498 = vsel %vm1489, %v1479, %v1480
      %v1499 = vsel %vm1489, %v1478, %v1479
      %v1500 = vsel %vm1489, %v1477, %v1478
      %v1501 = vsel %vm1489, %v1476, %v1477
      %v1502 = vsel %vm1489, %v1475, %v1476
      %v1503 = vsel %vm1489, %v1474, %v1475
      %v1504 = vsel %vm1489, %v1473, %v1474
      %v1505 = vsel %vm1489, %v1472, %v1473
      %v1506 = vsel %vm1489, %v1471, %v1472
      %v1507 = vsel %vm1489, %v1470, %v1471
      %v1508 = vsel %vm1489, %v1469, %v1470
      %v1509 = vsel %vm1489, %v1468, %v1469
      %v1510 = vsel %vm1489, %v1467, %v1468
      %v1511 = vsel %vm1489, %v1466, %v1467
      %v1512 = vsel %vm1489, %v1465, %v1466
      %v1513 = vsel %vm1489, %v1464, %v1465
      %v1514 = vsel %vm1489, %v1463, %v1464
      %v1515 = vsel %vm1489, %v1462, %v1463
      %v1516 = vsel %vm1489, %v1461, %v1462
      %v1517 = vsel %vm1489, %v1460, %v1461
      %v1518 = vsel %vm1489, %v1459, %v1460
      %v1519 = vsel %vm1489, %v1458, %v1459
      %v1520 = vsel %vm1489, %v1457, %v1458
      %v1521 = vsel %vm1489, %v1488, %v1457
      %v1522 = vmul.f32 %v1521, %v1041
      %v1523 = vmul.f32 %v1520, %v1042
      %v1524 = vmul.f32 %v1519, %v1043
      %v1525 = vmul.f32 %v1518, %v1044
      %v1526 = vmul.f32 %v1517, %v1045
      %v1527 = vmul.f32 %v1516, %v1046
      %v1528 = vmul.f32 %v1515, %v1047
      %v1529 = vmul.f32 %v1514, %v1048
      %v1530 = vmul.f32 %v1513, %v1049
      %v1531 = vmul.f32 %v1512, %v1050
      %v1532 = vmul.f32 %v1511, %v1051
      %v1533 = vmul.f32 %v1510, %v1052
      %v1534 = vmul.f32 %v1509, %v1053
      %v1535 = vmul.f32 %v1508, %v1054
      %v1536 = vmul.f32 %v1507, %v1055
      %v1537 = vmul.f32 %v1506, %v1056
      %v1538 = vmul.f32 %v1505, %v1057
      %v1539 = vmul.f32 %v1504, %v1058
      %v1540 = vmul.f32 %v1503, %v1059
      %v1541 = vmul.f32 %v1502, %v1060
      %v1542 = vmul.f32 %v1501, %v1061
      %v1543 = vmul.f32 %v1500, %v1062
      %v1544 = vmul.f32 %v1499, %v1063
      %v1545 = vmul.f32 %v1498, %v1064
      %v1546 = vmul.f32 %v1497, %v1065
      %v1547 = vmul.f32 %v1496, %v1066
      %v1548 = vmul.f32 %v1495, %v1067
      %v1549 = vmul.f32 %v1494, %v1068
      %v1550 = vmul.f32 %v1493, %v1069
      %v1551 = vmul.f32 %v1492, %v1070
      %v1552 = vmul.f32 %v1491, %v1071
      %v1553 = vmul.f32 %v1490, %v1072
      %v1554 = vpack.c.bf16 %v1523, %v1522
      %v1555 = vpack.c.bf16 %v1525, %v1524
      %v1556 = vpack.c.bf16 %v1527, %v1526
      %v1557 = vpack.c.bf16 %v1529, %v1528
      %v1558 = vpack.c.bf16 %v1531, %v1530
      %v1559 = vpack.c.bf16 %v1533, %v1532
      %v1560 = vpack.c.bf16 %v1535, %v1534
      %v1561 = vpack.c.bf16 %v1537, %v1536
      %v1562 = vpack.c.bf16 %v1539, %v1538
      %v1563 = vpack.c.bf16 %v1541, %v1540
      %v1564 = vpack.c.bf16 %v1543, %v1542
      %v1565 = vpack.c.bf16 %v1545, %v1544
      %v1566 = vpack.c.bf16 %v1547, %v1546
      %v1567 = vpack.c.bf16 %v1549, %v1548
      %v1568 = vpack.c.bf16 %v1551, %v1550
      %v1569 = vpack.c.bf16 %v1553, %v1552
      %v1570 = vrot.slane %v528, 1
      %v1571 = vrot.slane %v529, 1
      %v1572 = vrot.slane %v530, 1
      %v1573 = vrot.slane %v531, 1
      %v1574 = vrot.slane %v532, 1
      %v1575 = vrot.slane %v533, 1
      %v1576 = vrot.slane %v534, 1
      %v1577 = vrot.slane %v535, 1
      %v1578 = vrot.slane %v536, 1
      %v1579 = vrot.slane %v537, 1
      %v1580 = vrot.slane %v538, 1
      %v1581 = vrot.slane %v539, 1
      %v1582 = vrot.slane %v540, 1
      %v1583 = vrot.slane %v541, 1
      %v1584 = vrot.slane %v542, 1
      %v1585 = vrot.slane %v543, 1
      %v1586 = vrot.slane %v544, 1
      %v1587 = vrot.slane %v545, 1
      %v1588 = vrot.slane %v546, 1
      %v1589 = vrot.slane %v547, 1
      %v1590 = vrot.slane %v548, 1
      %v1591 = vrot.slane %v549, 1
      %v1592 = vrot.slane %v550, 1
      %v1593 = vrot.slane %v551, 1
      %v1594 = vrot.slane %v552, 1
      %v1595 = vrot.slane %v553, 1
      %v1596 = vrot.slane %v554, 1
      %v1597 = vrot.slane %v555, 1
      %v1598 = vrot.slane %v556, 1
      %v1599 = vrot.slane %v557, 1
      %v1600 = vrot.slane %v558, 1
      %v1601 = vrot.slane %v559, 1
      %vm1602 = vcmp.lt.s32.totalorder %v561, 7
      %v1603 = vsel %vm1602, %v1600, %v1601
      %v1604 = vsel %vm1602, %v1599, %v1600
      %v1605 = vsel %vm1602, %v1598, %v1599
      %v1606 = vsel %vm1602, %v1597, %v1598
      %v1607 = vsel %vm1602, %v1596, %v1597
      %v1608 = vsel %vm1602, %v1595, %v1596
      %v1609 = vsel %vm1602, %v1594, %v1595
      %v1610 = vsel %vm1602, %v1593, %v1594
      %v1611 = vsel %vm1602, %v1592, %v1593
      %v1612 = vsel %vm1602, %v1591, %v1592
      %v1613 = vsel %vm1602, %v1590, %v1591
      %v1614 = vsel %vm1602, %v1589, %v1590
      %v1615 = vsel %vm1602, %v1588, %v1589
      %v1616 = vsel %vm1602, %v1587, %v1588
      %v1617 = vsel %vm1602, %v1586, %v1587
      %v1618 = vsel %vm1602, %v1585, %v1586
      %v1619 = vsel %vm1602, %v1584, %v1585
      %v1620 = vsel %vm1602, %v1583, %v1584
      %v1621 = vsel %vm1602, %v1582, %v1583
      %v1622 = vsel %vm1602, %v1581, %v1582
      %v1623 = vsel %vm1602, %v1580, %v1581
      %v1624 = vsel %vm1602, %v1579, %v1580
      %v1625 = vsel %vm1602, %v1578, %v1579
      %v1626 = vsel %vm1602, %v1577, %v1578
      %v1627 = vsel %vm1602, %v1576, %v1577
      %v1628 = vsel %vm1602, %v1575, %v1576
      %v1629 = vsel %vm1602, %v1574, %v1575
      %v1630 = vsel %vm1602, %v1573, %v1574
      %v1631 = vsel %vm1602, %v1572, %v1573
      %v1632 = vsel %vm1602, %v1571, %v1572
      %v1633 = vsel %vm1602, %v1570, %v1571
      %v1634 = vsel %vm1602, %v1601, %v1570
      %v1635 = vmul.f32 %v1633, %v1137
      %v1636 = vmul.f32 %v1632, %v1138
      %v1637 = vmul.f32 %v1631, %v1139
      %v1638 = vmul.f32 %v1630, %v1140
      %v1639 = vmul.f32 %v1629, %v1141
      %v1640 = vmul.f32 %v1628, %v1142
      %v1641 = vmul.f32 %v1627, %v1143
      %v1642 = vmul.f32 %v1626, %v1144
      %v1643 = vmul.f32 %v1625, %v1145
      %v1644 = vmul.f32 %v1624, %v1146
      %v1645 = vmul.f32 %v1623, %v1147
      %v1646 = vmul.f32 %v1622, %v1148
      %v1647 = vmul.f32 %v1621, %v1149
      %v1648 = vmul.f32 %v1620, %v1150
      %v1649 = vmul.f32 %v1619, %v1151
      %v1650 = vmul.f32 %v1618, %v1152
      %v1651 = vmul.f32 %v1617, %v1153
      %v1652 = vmul.f32 %v1616, %v1154
      %v1653 = vmul.f32 %v1615, %v1155
      %v1654 = vmul.f32 %v1614, %v1156
      %v1655 = vmul.f32 %v1613, %v1157
      %v1656 = vmul.f32 %v1612, %v1158
      %v1657 = vmul.f32 %v1611, %v1159
      %v1658 = vmul.f32 %v1610, %v1160
      %v1659 = vmul.f32 %v1609, %v1161
      %v1660 = vmul.f32 %v1608, %v1162
      %v1661 = vmul.f32 %v1607, %v1163
      %v1662 = vmul.f32 %v1606, %v1164
      %v1663 = vmul.f32 %v1605, %v1165
      %v1664 = vmul.f32 %v1604, %v1166
      %v1665 = vmul.f32 %v1603, %v1167
      %v1666 = vmul.f32 %v1634, %v1168
      %v1667 = vpack.c.bf16 %v1636, %v1635
      %v1668 = vpack.c.bf16 %v1638, %v1637
      %v1669 = vpack.c.bf16 %v1640, %v1639
      %v1670 = vpack.c.bf16 %v1642, %v1641
      %v1671 = vpack.c.bf16 %v1644, %v1643
      %v1672 = vpack.c.bf16 %v1646, %v1645
      %v1673 = vpack.c.bf16 %v1648, %v1647
      %v1674 = vpack.c.bf16 %v1650, %v1649
      %v1675 = vpack.c.bf16 %v1652, %v1651
      %v1676 = vpack.c.bf16 %v1654, %v1653
      %v1677 = vpack.c.bf16 %v1656, %v1655
      %v1678 = vpack.c.bf16 %v1658, %v1657
      %v1679 = vpack.c.bf16 %v1660, %v1659
      %v1680 = vpack.c.bf16 %v1662, %v1661
      %v1681 = vpack.c.bf16 %v1664, %v1663
      %v1682 = vpack.c.bf16 %v1666, %v1665
      %v1683 = vpack.c.bf16 %v529, %v528
      %v1684 = vpack.c.bf16 %v531, %v530
      %v1685 = vpack.c.bf16 %v533, %v532
      %v1686 = vpack.c.bf16 %v535, %v534
      %v1687 = vpack.c.bf16 %v537, %v536
      %v1688 = vpack.c.bf16 %v539, %v538
      %v1689 = vpack.c.bf16 %v541, %v540
      %v1690 = vpack.c.bf16 %v543, %v542
      %v1691 = vpack.c.bf16 %v545, %v544
      %v1692 = vpack.c.bf16 %v547, %v546
      %v1693 = vpack.c.bf16 %v549, %v548
      %v1694 = vpack.c.bf16 %v551, %v550
      %v1695 = vpack.c.bf16 %v553, %v552
      %v1696 = vpack.c.bf16 %v555, %v554
      %v1697 = vpack.c.bf16 %v557, %v556
      %v1698 = vpack.c.bf16 %v559, %v558
      %v1699 = vld [vmem:[%s1] sm:$0xff]
      %v1700 = vld [vmem:[%s1 + $0x8] sm:$0xff]
      %v1701 = vld [vmem:[%s1 + $0x10] sm:$0xff]
      %v1702 = vld [vmem:[%s1 + $0x18] sm:$0xff]
      %v1703 = vld [vmem:[%s1 + $0x20] sm:$0xff]
      %v1704 = vld [vmem:[%s1 + $0x28] sm:$0xff]
      %v1705 = vld [vmem:[%s1 + $0x30] sm:$0xff]
      %v1706 = vld [vmem:[%s1 + $0x38] sm:$0xff]
      %v1707 = vld [vmem:[%s1 + $0x40] sm:$0xff]
      %v1708 = vld [vmem:[%s1 + $0x48] sm:$0xff]
      %v1709 = vld [vmem:[%s1 + $0x50] sm:$0xff]
      %v1710 = vld [vmem:[%s1 + $0x58] sm:$0xff]
      %v1711 = vld [vmem:[%s1 + $0x60] sm:$0xff]
      %v1712 = vld [vmem:[%s1 + $0x68] sm:$0xff]
      %v1713 = vld [vmem:[%s1 + $0x70] sm:$0xff]
      %v1714 = vld [vmem:[%s1 + $0x78] sm:$0xff]
      %v1715 = vld [vmem:[%s1 + $0x80] sm:$0xff]
      %v1716 = vld [vmem:[%s1 + $0x88] sm:$0xff]
      %v1717 = vld [vmem:[%s1 + $0x90] sm:$0xff]
      %v1718 = vld [vmem:[%s1 + $0x98] sm:$0xff]
      %v1719 = vld [vmem:[%s1 + $0xa0] sm:$0xff]
      %v1720 = vld [vmem:[%s1 + $0xa8] sm:$0xff]
      %v1721 = vld [vmem:[%s1 + $0xb0] sm:$0xff]
      %v1722 = vld [vmem:[%s1 + $0xb8] sm:$0xff]
      %v1723 = vld [vmem:[%s1 + $0xc0] sm:$0xff]
      %v1724 = vld [vmem:[%s1 + $0xc8] sm:$0xff]
      %v1725 = vld [vmem:[%s1 + $0xd0] sm:$0xff]
      %v1726 = vld [vmem:[%s1 + $0xd8] sm:$0xff]
      %v1727 = vld [vmem:[%s1 + $0xe0] sm:$0xff]
      %v1728 = vld [vmem:[%s1 + $0xe8] sm:$0xff]
      %v1729 = vld [vmem:[%s1 + $0xf0] sm:$0xff]
      %v1730 = vld [vmem:[%s1 + $0xf8] sm:$0xff]
      %v1731 = vld [vmem:[%s1 + $0x100] sm:$0xff]
      %v1732 = vld [vmem:[%s1 + $0x108] sm:$0xff]
      %v1733 = vld [vmem:[%s1 + $0x110] sm:$0xff]
      %v1734 = vld [vmem:[%s1 + $0x118] sm:$0xff]
      %v1735 = vld [vmem:[%s1 + $0x120] sm:$0xff]
      %v1736 = vld [vmem:[%s1 + $0x128] sm:$0xff]
      %v1737 = vld [vmem:[%s1 + $0x130] sm:$0xff]
      %v1738 = vld [vmem:[%s1 + $0x138] sm:$0xff]
      %v1739 = vld [vmem:[%s1 + $0x140] sm:$0xff]
      %v1740 = vld [vmem:[%s1 + $0x148] sm:$0xff]
      %v1741 = vld [vmem:[%s1 + $0x150] sm:$0xff]
      %v1742 = vld [vmem:[%s1 + $0x158] sm:$0xff]
      %v1743 = vld [vmem:[%s1 + $0x160] sm:$0xff]
      %v1744 = vld [vmem:[%s1 + $0x168] sm:$0xff]
      %v1745 = vld [vmem:[%s1 + $0x170] sm:$0xff]
      %v1746 = vld [vmem:[%s1 + $0x178] sm:$0xff]
      %v1747 = vld [vmem:[%s5] ss:$4 sm:$0x3]
      %v1749 = vlaneseq
      %v1750 = vshrl.u32 %v1749, 7
      %v1751 = vsub.s32 0, %v1750
      %v1752 = vrot.slane %v1747, %v1751
      %v1753 = vlaneseq
      %v1754 = vshrl.u32 %v1753, 7
      %v1755 = vsub.s32 1, %v1754
      %v1756 = vrot.slane %v1747, %v1755
      %v1807 = vunpack.c.l.b16 %v1699
      %v1808 = vunpack.c.h.b16 %v1699
      %v1809 = vunpack.c.l.b16 %v1700
      %v1810 = vunpack.c.h.b16 %v1700
      %v1811 = vunpack.c.l.b16 %v1701
      %v1812 = vunpack.c.h.b16 %v1701
      %v1813 = vunpack.c.l.b16 %v1702
      %v1814 = vunpack.c.h.b16 %v1702
      %v1815 = vunpack.c.l.b16 %v1703
      %v1816 = vunpack.c.h.b16 %v1703
      %v1817 = vunpack.c.l.b16 %v1704
      %v1818 = vunpack.c.h.b16 %v1704
      %v1819 = vunpack.c.l.b16 %v1705
      %v1820 = vunpack.c.h.b16 %v1705
      %v1821 = vunpack.c.l.b16 %v1706
      %v1822 = vunpack.c.h.b16 %v1706
      %v1823 = vunpack.c.l.b16 %v1707
      %v1824 = vunpack.c.h.b16 %v1707
      %v1825 = vunpack.c.l.b16 %v1708
      %v1826 = vunpack.c.h.b16 %v1708
      %v1827 = vunpack.c.l.b16 %v1709
      %v1828 = vunpack.c.h.b16 %v1709
      %v1829 = vunpack.c.l.b16 %v1710
      %v1830 = vunpack.c.h.b16 %v1710
      %v1831 = vunpack.c.l.b16 %v1711
      %v1832 = vunpack.c.h.b16 %v1711
      %v1833 = vunpack.c.l.b16 %v1712
      %v1834 = vunpack.c.h.b16 %v1712
      %v1835 = vunpack.c.l.b16 %v1713
      %v1836 = vunpack.c.h.b16 %v1713
      %v1837 = vunpack.c.l.b16 %v1714
      %v1838 = vunpack.c.h.b16 %v1714
      %v1839 = vunpack.c.l.b16 %v1715
      %v1840 = vunpack.c.h.b16 %v1715
      %v1841 = vunpack.c.l.b16 %v1716
      %v1842 = vunpack.c.h.b16 %v1716
      %v1843 = vunpack.c.l.b16 %v1717
      %v1844 = vunpack.c.h.b16 %v1717
      %v1845 = vunpack.c.l.b16 %v1718
      %v1846 = vunpack.c.h.b16 %v1718
      %v1847 = vunpack.c.l.b16 %v1719
      %v1848 = vunpack.c.h.b16 %v1719
      %v1849 = vunpack.c.l.b16 %v1720
      %v1850 = vunpack.c.h.b16 %v1720
      %v1851 = vunpack.c.l.b16 %v1721
      %v1852 = vunpack.c.h.b16 %v1721
      %v1853 = vunpack.c.l.b16 %v1722
      %v1854 = vunpack.c.h.b16 %v1722
      %v1855 = vunpack.c.l.b16 %v1723
      %v1856 = vunpack.c.h.b16 %v1723
      %v1857 = vunpack.c.l.b16 %v1724
      %v1858 = vunpack.c.h.b16 %v1724
      %v1859 = vunpack.c.l.b16 %v1725
      %v1860 = vunpack.c.h.b16 %v1725
      %v1861 = vunpack.c.l.b16 %v1726
      %v1862 = vunpack.c.h.b16 %v1726
      %v1863 = vunpack.c.l.b16 %v1727
      %v1864 = vunpack.c.h.b16 %v1727
      %v1865 = vunpack.c.l.b16 %v1728
      %v1866 = vunpack.c.h.b16 %v1728
      %v1867 = vunpack.c.l.b16 %v1729
      %v1868 = vunpack.c.h.b16 %v1729
      %v1869 = vunpack.c.l.b16 %v1730
      %v1870 = vunpack.c.h.b16 %v1730
      %v1871 = vunpack.c.l.b16 %v1731
      %v1872 = vunpack.c.h.b16 %v1731
      %v1873 = vunpack.c.l.b16 %v1732
      %v1874 = vunpack.c.h.b16 %v1732
      %v1875 = vunpack.c.l.b16 %v1733
      %v1876 = vunpack.c.h.b16 %v1733
      %v1877 = vunpack.c.l.b16 %v1734
      %v1878 = vunpack.c.h.b16 %v1734
      %v1879 = vunpack.c.l.b16 %v1735
      %v1880 = vunpack.c.h.b16 %v1735
      %v1881 = vunpack.c.l.b16 %v1736
      %v1882 = vunpack.c.h.b16 %v1736
      %v1883 = vunpack.c.l.b16 %v1737
      %v1884 = vunpack.c.h.b16 %v1737
      %v1885 = vunpack.c.l.b16 %v1738
      %v1886 = vunpack.c.h.b16 %v1738
      %v1887 = vunpack.c.l.b16 %v1739
      %v1888 = vunpack.c.h.b16 %v1739
      %v1889 = vunpack.c.l.b16 %v1740
      %v1890 = vunpack.c.h.b16 %v1740
      %v1891 = vunpack.c.l.b16 %v1741
      %v1892 = vunpack.c.h.b16 %v1741
      %v1893 = vunpack.c.l.b16 %v1742
      %v1894 = vunpack.c.h.b16 %v1742
      %v1895 = vunpack.c.l.b16 %v1743
      %v1896 = vunpack.c.h.b16 %v1743
      %v1897 = vunpack.c.l.b16 %v1744
      %v1898 = vunpack.c.h.b16 %v1744
      %v1899 = vunpack.c.l.b16 %v1745
      %v1900 = vunpack.c.h.b16 %v1745
      %v1901 = vunpack.c.l.b16 %v1746
      %v1902 = vunpack.c.h.b16 %v1746
      %v1903 = vpack.c.b16 %v1809, %v1807
      %v1904 = vpack.c.b16 %v1810, %v1808
      %v1905 = vpack.c.b16 %v1813, %v1811
      %v1906 = vpack.c.b16 %v1814, %v1812
      %v1907 = vpack.c.b16 %v1817, %v1815
      %v1908 = vpack.c.b16 %v1818, %v1816
      %v1909 = vpack.c.b16 %v1821, %v1819
      %v1910 = vpack.c.b16 %v1822, %v1820
      %v1911 = vpack.c.b16 %v1825, %v1823
      %v1912 = vpack.c.b16 %v1826, %v1824
      %v1913 = vpack.c.b16 %v1829, %v1827
      %v1914 = vpack.c.b16 %v1830, %v1828
      %v1915 = vpack.c.b16 %v1833, %v1831
      %v1916 = vpack.c.b16 %v1834, %v1832
      %v1917 = vpack.c.b16 %v1837, %v1835
      %v1918 = vpack.c.b16 %v1838, %v1836
      %v1919 = vpack.c.b16 %v1841, %v1839
      %v1920 = vpack.c.b16 %v1842, %v1840
      %v1921 = vpack.c.b16 %v1845, %v1843
      %v1922 = vpack.c.b16 %v1846, %v1844
      %v1923 = vpack.c.b16 %v1849, %v1847
      %v1924 = vpack.c.b16 %v1850, %v1848
      %v1925 = vpack.c.b16 %v1853, %v1851
      %v1926 = vpack.c.b16 %v1854, %v1852
      %v1927 = vpack.c.b16 %v1857, %v1855
      %v1928 = vpack.c.b16 %v1858, %v1856
      %v1929 = vpack.c.b16 %v1861, %v1859
      %v1930 = vpack.c.b16 %v1862, %v1860
      %v1931 = vpack.c.b16 %v1865, %v1863
      %v1932 = vpack.c.b16 %v1866, %v1864
      %v1933 = vpack.c.b16 %v1869, %v1867
      %v1934 = vpack.c.b16 %v1870, %v1868
      %v1935 = vpack.c.b16 %v1873, %v1871
      %v1936 = vpack.c.b16 %v1874, %v1872
      %v1937 = vpack.c.b16 %v1877, %v1875
      %v1938 = vpack.c.b16 %v1878, %v1876
      %v1939 = vpack.c.b16 %v1881, %v1879
      %v1940 = vpack.c.b16 %v1882, %v1880
      %v1941 = vpack.c.b16 %v1885, %v1883
      %v1942 = vpack.c.b16 %v1886, %v1884
      %v1943 = vpack.c.b16 %v1889, %v1887
      %v1944 = vpack.c.b16 %v1890, %v1888
      %v1945 = vpack.c.b16 %v1893, %v1891
      %v1946 = vpack.c.b16 %v1894, %v1892
      %v1947 = vpack.c.b16 %v1897, %v1895
      %v1948 = vpack.c.b16 %v1898, %v1896
      %v1949 = vpack.c.b16 %v1901, %v1899
      %v1950 = vpack.c.b16 %v1902, %v1900
      %1999 = vmatprep.subr.bf16.mxu0 %v1904
      %2000 = vmatpush1.bf16.msra.mxu0 %v1903
      %2001 = vmatprep.subr.bf16.mxu0 %v1906
      %2002 = vmatpush1.bf16.msra.mxu0 %v1905
      %2003 = vmatprep.subr.bf16.mxu0 %v1908
      %2004 = vmatpush1.bf16.msra.mxu0 %v1907
      %2005 = vmatprep.subr.bf16.mxu0 %v1910
      %2006 = vmatpush1.bf16.msra.mxu0 %v1909
      %2007 = vmatprep.subr.bf16.mxu0 %v1912
      %2008 = vmatpush1.bf16.msra.mxu0 %v1911
      %2009 = vmatprep.subr.bf16.mxu0 %v1914
      %2010 = vmatpush1.bf16.msra.mxu0 %v1913
      %2011 = vmatprep.subr.bf16.mxu0 %v1916
      %2012 = vmatpush1.bf16.msra.mxu0 %v1915
      %2013 = vmatprep.subr.bf16.mxu0 %v1918
      %2014 = vmatpush1.bf16.msra.mxu0 %v1917
      %2015 = vmatprep.subr.bf16.mxu0 %v1920
      %2016 = vmatpush1.bf16.msra.mxu0 %v1919
      %2017 = vmatprep.subr.bf16.mxu0 %v1922
      %2018 = vmatpush1.bf16.msra.mxu0 %v1921
      %2019 = vmatprep.subr.bf16.mxu0 %v1924
      %2020 = vmatpush1.bf16.msra.mxu0 %v1923
      %2021 = vmatprep.subr.bf16.mxu0 %v1926
      %2022 = vmatpush1.bf16.msra.mxu0 %v1925
      %2023 = vmatprep.subr.bf16.mxu0 %v1928
      %2024 = vmatpush1.bf16.msra.mxu0 %v1927
      %2025 = vmatprep.subr.bf16.mxu0 %v1930
      %2026 = vmatpush1.bf16.msra.mxu0 %v1929
      %2027 = vmatprep.subr.bf16.mxu0 %v1932
      %2028 = vmatpush1.bf16.msra.mxu0 %v1931
      %2029 = vmatprep.subr.bf16.mxu0 %v1934
      %2030 = vmatpush1.bf16.msra.mxu0 %v1933
      %2031 = vmatprep.mubr.bf16.mxu0 %v1683
      %2032 = vmatmul.mubr.bf16.gmra.mrb[0].mxu0 %v1554
      %v2033 = vpop.f32.mrb[0].mxu0
      %v2034 = vadd.f32 %v1752, %v2033
      %v2035 = vpop.f32.mrb[0].mxu0
      %v2036 = vadd.f32 %v1756, %v2035
      %v2037 = vpop.f32.mrb[0].mxu0
      %v2038 = vadd.f32 %v1752, %v2037
      %v2039 = vpop.f32.mrb[0].mxu0
      %v2040 = vadd.f32 %v1756, %v2039
      %2041 = vmatprep.mubr.bf16.mxu0 %v1684
      %2042 = vmatmul.mubr.bf16.gmra.mrb[0].mxu0 %v1555
      %v2043 = vpop.f32.mrb[0].mxu0
      %v2044 = vadd.f32 %v1752, %v2043
      %v2045 = vpop.f32.mrb[0].mxu0
      %v2046 = vadd.f32 %v1756, %v2045
      %v2047 = vpop.f32.mrb[0].mxu0
      %v2048 = vadd.f32 %v1752, %v2047
      %v2049 = vpop.f32.mrb[0].mxu0
      %v2050 = vadd.f32 %v1756, %v2049
      %2051 = vmatprep.mubr.bf16.mxu0 %v1685
      %2052 = vmatmul.mubr.bf16.gmra.mrb[0].mxu0 %v1556
      %v2053 = vpop.f32.mrb[0].mxu0
      %v2054 = vadd.f32 %v1752, %v2053
      %v2055 = vpop.f32.mrb[0].mxu0
      %v2056 = vadd.f32 %v1756, %v2055
      %v2057 = vpop.f32.mrb[0].mxu0
      %v2058 = vadd.f32 %v1752, %v2057
      %v2059 = vpop.f32.mrb[0].mxu0
      %v2060 = vadd.f32 %v1756, %v2059
      %2061 = vmatprep.mubr.bf16.mxu0 %v1686
      %2062 = vmatmul.mubr.bf16.gmra.mrb[0].mxu0 %v1557
      %v2063 = vpop.f32.mrb[0].mxu0
      %v2064 = vadd.f32 %v1752, %v2063
      %v2065 = vpop.f32.mrb[0].mxu0
      %v2066 = vadd.f32 %v1756, %v2065
      %v2067 = vpop.f32.mrb[0].mxu0
      %v2068 = vadd.f32 %v1752, %v2067
      %v2069 = vpop.f32.mrb[0].mxu0
      %v2070 = vadd.f32 %v1756, %v2069
      %2071 = vmatprep.mubr.bf16.mxu0 %v1687
      %2072 = vmatmul.mubr.bf16.gmra.mrb[0].mxu0 %v1558
      %v2073 = vpop.f32.mrb[0].mxu0
      %v2074 = vadd.f32 %v1752, %v2073
      %v2075 = vpop.f32.mrb[0].mxu0
      %v2076 = vadd.f32 %v1756, %v2075
      %v2077 = vpop.f32.mrb[0].mxu0
      %v2078 = vadd.f32 %v1752, %v2077
      %v2079 = vpop.f32.mrb[0].mxu0
      %v2080 = vadd.f32 %v1756, %v2079
      %2081 = vmatprep.mubr.bf16.mxu0 %v1688
      %2082 = vmatmul.mubr.bf16.gmra.mrb[0].mxu0 %v1559
      %v2083 = vpop.f32.mrb[0].mxu0
      %v2084 = vadd.f32 %v1752, %v2083
      %v2085 = vpop.f32.mrb[0].mxu0
      %v2086 = vadd.f32 %v1756, %v2085
      %v2087 = vpop.f32.mrb[0].mxu0
      %v2088 = vadd.f32 %v1752, %v2087
      %v2089 = vpop.f32.mrb[0].mxu0
      %v2090 = vadd.f32 %v1756, %v2089
      %2091 = vmatprep.mubr.bf16.mxu0 %v1689
      %2092 = vmatmul.mubr.bf16.gmra.mrb[0].mxu0 %v1560
      %v2093 = vpop.f32.mrb[0].mxu0
      %v2094 = vadd.f32 %v1752, %v2093
      %v2095 = vpop.f32.mrb[0].mxu0
      %v2096 = vadd.f32 %v1756, %v2095
      %v2097 = vpop.f32.mrb[0].mxu0
      %v2098 = vadd.f32 %v1752, %v2097
      %v2099 = vpop.f32.mrb[0].mxu0
      %v2100 = vadd.f32 %v1756, %v2099
      %2101 = vmatprep.mubr.bf16.mxu0 %v1690
      %2102 = vmatmul.mubr.bf16.gmra.mrb[0].mxu0 %v1561
      %v2103 = vpop.f32.mrb[0].mxu0
      %v2104 = vadd.f32 %v1752, %v2103
      %v2105 = vpop.f32.mrb[0].mxu0
      %v2106 = vadd.f32 %v1756, %v2105
      %v2107 = vpop.f32.mrb[0].mxu0
      %v2108 = vadd.f32 %v1752, %v2107
      %v2109 = vpop.f32.mrb[0].mxu0
      %v2110 = vadd.f32 %v1756, %v2109
      %2111 = vmatprep.mubr.bf16.mxu0 %v1691
      %2112 = vmatmul.mubr.bf16.gmra.mrb[0].mxu0 %v1562
      %v2113 = vpop.f32.mrb[0].mxu0
      %v2114 = vadd.f32 %v1752, %v2113
      %v2115 = vpop.f32.mrb[0].mxu0
      %v2116 = vadd.f32 %v1756, %v2115
      %v2117 = vpop.f32.mrb[0].mxu0
      %v2118 = vadd.f32 %v1752, %v2117
      %v2119 = vpop.f32.mrb[0].mxu0
      %v2120 = vadd.f32 %v1756, %v2119
      %2121 = vmatprep.mubr.bf16.mxu0 %v1692
      %2122 = vmatmul.mubr.bf16.gmra.mrb[0].mxu0 %v1563
      %v2123 = vpop.f32.mrb[0].mxu0
      %v2124 = vadd.f32 %v1752, %v2123
      %v2125 = vpop.f32.mrb[0].mxu0
      %v2126 = vadd.f32 %v1756, %v2125
      %v2127 = vpop.f32.mrb[0].mxu0
      %v2128 = vadd.f32 %v1752, %v2127
      %v2129 = vpop.f32.mrb[0].mxu0
      %v2130 = vadd.f32 %v1756, %v2129
      %2131 = vmatprep.mubr.bf16.mxu0 %v1693
      %2132 = vmatmul.mubr.bf16.gmra.mrb[0].mxu0 %v1564
      %v2133 = vpop.f32.mrb[0].mxu0
      %v2134 = vadd.f32 %v1752, %v2133
      %v2135 = vpop.f32.mrb[0].mxu0
      %v2136 = vadd.f32 %v1756, %v2135
      %v2137 = vpop.f32.mrb[0].mxu0
      %v2138 = vadd.f32 %v1752, %v2137
      %v2139 = vpop.f32.mrb[0].mxu0
      %v2140 = vadd.f32 %v1756, %v2139
      %2141 = vmatprep.mubr.bf16.mxu0 %v1694
      %2142 = vmatmul.mubr.bf16.gmra.mrb[0].mxu0 %v1565
      %v2143 = vpop.f32.mrb[0].mxu0
      %v2144 = vadd.f32 %v1752, %v2143
      %v2145 = vpop.f32.mrb[0].mxu0
      %v2146 = vadd.f32 %v1756, %v2145
      %v2147 = vpop.f32.mrb[0].mxu0
      %v2148 = vadd.f32 %v1752, %v2147
      %v2149 = vpop.f32.mrb[0].mxu0
      %v2150 = vadd.f32 %v1756, %v2149
      %2151 = vmatprep.mubr.bf16.mxu0 %v1695
      %2152 = vmatmul.mubr.bf16.gmra.mrb[0].mxu0 %v1566
      %v2153 = vpop.f32.mrb[0].mxu0
      %v2154 = vadd.f32 %v1752, %v2153
      %v2155 = vpop.f32.mrb[0].mxu0
      %v2156 = vadd.f32 %v1756, %v2155
      %v2157 = vpop.f32.mrb[0].mxu0
      %v2158 = vadd.f32 %v1752, %v2157
      %v2159 = vpop.f32.mrb[0].mxu0
      %v2160 = vadd.f32 %v1756, %v2159
      %2161 = vmatprep.mubr.bf16.mxu0 %v1696
      %2162 = vmatmul.mubr.bf16.gmra.mrb[0].mxu0 %v1567
      %v2163 = vpop.f32.mrb[0].mxu0
      %v2164 = vadd.f32 %v1752, %v2163
      %v2165 = vpop.f32.mrb[0].mxu0
      %v2166 = vadd.f32 %v1756, %v2165
      %v2167 = vpop.f32.mrb[0].mxu0
      %v2168 = vadd.f32 %v1752, %v2167
      %v2169 = vpop.f32.mrb[0].mxu0
      %v2170 = vadd.f32 %v1756, %v2169
      %2171 = vmatprep.mubr.bf16.mxu0 %v1697
      %2172 = vmatmul.mubr.bf16.gmra.mrb[0].mxu0 %v1568
      %v2173 = vpop.f32.mrb[0].mxu0
      %v2174 = vadd.f32 %v1752, %v2173
      %v2175 = vpop.f32.mrb[0].mxu0
      %v2176 = vadd.f32 %v1756, %v2175
      %v2177 = vpop.f32.mrb[0].mxu0
      %v2178 = vadd.f32 %v1752, %v2177
      %v2179 = vpop.f32.mrb[0].mxu0
      %v2180 = vadd.f32 %v1756, %v2179
      %2181 = vmatprep.mubr.bf16.mxu0 %v1698
      %2182 = vmatmul.mubr.bf16.gmra.mrb[0].mxu0 %v1569
      %v2183 = vpop.f32.mrb[0].mxu0
      %v2184 = vadd.f32 %v1752, %v2183
      %v2185 = vpop.f32.mrb[0].mxu0
      %v2186 = vadd.f32 %v1756, %v2185
      %v2187 = vpop.f32.mrb[0].mxu0
      %v2188 = vadd.f32 %v1752, %v2187
      %v2189 = vpop.f32.mrb[0].mxu0
      %v2190 = vadd.f32 %v1756, %v2189
      %2191 = vdwg.mxu0
      %2192 = vmatprep.subr.bf16.mxu0 %v1936
      %2193 = vmatpush1.bf16.msra.mxu0 %v1935
      %2194 = vmatprep.subr.bf16.mxu0 %v1938
      %2195 = vmatpush1.bf16.msra.mxu0 %v1937
      %2196 = vmatprep.subr.bf16.mxu0 %v1940
      %2197 = vmatpush1.bf16.msra.mxu0 %v1939
      %2198 = vmatprep.subr.bf16.mxu0 %v1942
      %2199 = vmatpush1.bf16.msra.mxu0 %v1941
      %2200 = vmatprep.subr.bf16.mxu0 %v1944
      %2201 = vmatpush1.bf16.msra.mxu0 %v1943
      %2202 = vmatprep.subr.bf16.mxu0 %v1946
      %2203 = vmatpush1.bf16.msra.mxu0 %v1945
      %2204 = vmatprep.subr.bf16.mxu0 %v1948
      %2205 = vmatpush1.bf16.msra.mxu0 %v1947
      %2206 = vmatprep.subr.bf16.mxu0 %v1950
      %2207 = vmatpush1.bf16.msra.mxu0 %v1949
      %2208 = vmatprep.subr.bf16.mxu0 0
      %2209 = vmatpush1.bf16.msra.mxu0 0
      %2210 = vmatprep.subr.bf16.mxu0 0
      %2211 = vmatpush1.bf16.msra.mxu0 0
      %2212 = vmatprep.subr.bf16.mxu0 0
      %2213 = vmatpush1.bf16.msra.mxu0 0
      %2214 = vmatprep.subr.bf16.mxu0 0
      %2215 = vmatpush1.bf16.msra.mxu0 0
      %2216 = vmatprep.subr.bf16.mxu0 0
      %2217 = vmatpush1.bf16.msra.mxu0 0
      %2218 = vmatprep.subr.bf16.mxu0 0
      %2219 = vmatpush1.bf16.msra.mxu0 0
      %2220 = vmatprep.subr.bf16.mxu0 0
      %2221 = vmatpush1.bf16.msra.mxu0 0
      %2222 = vmatprep.subr.bf16.mxu0 0
      %2223 = vmatpush1.bf16.msra.mxu0 0
      %2224 = vmatprep.mubr.bf16.mxu0 0
      %2225 = vmatmul.mubr.bf16.gmra.mrb[0].mxu0 %v1667
      %v2226 = vpop.f32.mrb[0].mxu0
      %v2227 = vadd.f32 %v2034, %v2226
      %v2228 = vpop.f32.mrb[0].mxu0
      %v2229 = vadd.f32 %v2036, %v2228
      %v2230 = vpop.f32.mrb[0].mxu0
      %v2231 = vadd.f32 %v2038, %v2230
      %v2232 = vpop.f32.mrb[0].mxu0
      %v2233 = vadd.f32 %v2040, %v2232
      %2234 = vmatprep.mubr.bf16.mxu0 0
      %2235 = vmatmul.mubr.bf16.gmra.mrb[0].mxu0 %v1668
      %v2236 = vpop.f32.mrb[0].mxu0
      %v2237 = vadd.f32 %v2044, %v2236
      %v2238 = vpop.f32.mrb[0].mxu0
      %v2239 = vadd.f32 %v2046, %v2238
      %v2240 = vpop.f32.mrb[0].mxu0
      %v2241 = vadd.f32 %v2048, %v2240
      %v2242 = vpop.f32.mrb[0].mxu0
      %v2243 = vadd.f32 %v2050, %v2242
      %2244 = vmatprep.mubr.bf16.mxu0 0
      %2245 = vmatmul.mubr.bf16.gmra.mrb[0].mxu0 %v1669
      %v2246 = vpop.f32.mrb[0].mxu0
      %v2247 = vadd.f32 %v2054, %v2246
      %v2248 = vpop.f32.mrb[0].mxu0
      %v2249 = vadd.f32 %v2056, %v2248
      %v2250 = vpop.f32.mrb[0].mxu0
      %v2251 = vadd.f32 %v2058, %v2250
      %v2252 = vpop.f32.mrb[0].mxu0
      %v2253 = vadd.f32 %v2060, %v2252
      %2254 = vmatprep.mubr.bf16.mxu0 0
      %2255 = vmatmul.mubr.bf16.gmra.mrb[0].mxu0 %v1670
      %v2256 = vpop.f32.mrb[0].mxu0
      %v2257 = vadd.f32 %v2064, %v2256
      %v2258 = vpop.f32.mrb[0].mxu0
      %v2259 = vadd.f32 %v2066, %v2258
      %v2260 = vpop.f32.mrb[0].mxu0
      %v2261 = vadd.f32 %v2068, %v2260
      %v2262 = vpop.f32.mrb[0].mxu0
      %v2263 = vadd.f32 %v2070, %v2262
      %2264 = vmatprep.mubr.bf16.mxu0 0
      %2265 = vmatmul.mubr.bf16.gmra.mrb[0].mxu0 %v1671
      %v2266 = vpop.f32.mrb[0].mxu0
      %v2267 = vadd.f32 %v2074, %v2266
      %v2268 = vpop.f32.mrb[0].mxu0
      %v2269 = vadd.f32 %v2076, %v2268
      %v2270 = vpop.f32.mrb[0].mxu0
      %v2271 = vadd.f32 %v2078, %v2270
      %v2272 = vpop.f32.mrb[0].mxu0
      %v2273 = vadd.f32 %v2080, %v2272
      %2274 = vmatprep.mubr.bf16.mxu0 0
      %2275 = vmatmul.mubr.bf16.gmra.mrb[0].mxu0 %v1672
      %v2276 = vpop.f32.mrb[0].mxu0
      %v2277 = vadd.f32 %v2084, %v2276
      %v2278 = vpop.f32.mrb[0].mxu0
      %v2279 = vadd.f32 %v2086, %v2278
      %v2280 = vpop.f32.mrb[0].mxu0
      %v2281 = vadd.f32 %v2088, %v2280
      %v2282 = vpop.f32.mrb[0].mxu0
      %v2283 = vadd.f32 %v2090, %v2282
      %2284 = vmatprep.mubr.bf16.mxu0 0
      %2285 = vmatmul.mubr.bf16.gmra.mrb[0].mxu0 %v1673
      %v2286 = vpop.f32.mrb[0].mxu0
      %v2287 = vadd.f32 %v2094, %v2286
      %v2288 = vpop.f32.mrb[0].mxu0
      %v2289 = vadd.f32 %v2096, %v2288
      %v2290 = vpop.f32.mrb[0].mxu0
      %v2291 = vadd.f32 %v2098, %v2290
      %v2292 = vpop.f32.mrb[0].mxu0
      %v2293 = vadd.f32 %v2100, %v2292
      %2294 = vmatprep.mubr.bf16.mxu0 0
      %2295 = vmatmul.mubr.bf16.gmra.mrb[0].mxu0 %v1674
      %v2296 = vpop.f32.mrb[0].mxu0
      %v2297 = vadd.f32 %v2104, %v2296
      %v2298 = vpop.f32.mrb[0].mxu0
      %v2299 = vadd.f32 %v2106, %v2298
      %v2300 = vpop.f32.mrb[0].mxu0
      %v2301 = vadd.f32 %v2108, %v2300
      %v2302 = vpop.f32.mrb[0].mxu0
      %v2303 = vadd.f32 %v2110, %v2302
      %2304 = vmatprep.mubr.bf16.mxu0 0
      %2305 = vmatmul.mubr.bf16.gmra.mrb[0].mxu0 %v1675
      %v2306 = vpop.f32.mrb[0].mxu0
      %v2307 = vadd.f32 %v2114, %v2306
      %v2308 = vpop.f32.mrb[0].mxu0
      %v2309 = vadd.f32 %v2116, %v2308
      %v2310 = vpop.f32.mrb[0].mxu0
      %v2311 = vadd.f32 %v2118, %v2310
      %v2312 = vpop.f32.mrb[0].mxu0
      %v2313 = vadd.f32 %v2120, %v2312
      %2314 = vmatprep.mubr.bf16.mxu0 0
      %2315 = vmatmul.mubr.bf16.gmra.mrb[0].mxu0 %v1676
      %v2316 = vpop.f32.mrb[0].mxu0
      %v2317 = vadd.f32 %v2124, %v2316
      %v2318 = vpop.f32.mrb[0].mxu0
      %v2319 = vadd.f32 %v2126, %v2318
      %v2320 = vpop.f32.mrb[0].mxu0
      %v2321 = vadd.f32 %v2128, %v2320
      %v2322 = vpop.f32.mrb[0].mxu0
      %v2323 = vadd.f32 %v2130, %v2322
      %2324 = vmatprep.mubr.bf16.mxu0 0
      %2325 = vmatmul.mubr.bf16.gmra.mrb[0].mxu0 %v1677
      %v2326 = vpop.f32.mrb[0].mxu0
      %v2327 = vadd.f32 %v2134, %v2326
      %v2328 = vpop.f32.mrb[0].mxu0
      %v2329 = vadd.f32 %v2136, %v2328
      %v2330 = vpop.f32.mrb[0].mxu0
      %v2331 = vadd.f32 %v2138, %v2330
      %v2332 = vpop.f32.mrb[0].mxu0
      %v2333 = vadd.f32 %v2140, %v2332
      %2334 = vmatprep.mubr.bf16.mxu0 0
      %2335 = vmatmul.mubr.bf16.gmra.mrb[0].mxu0 %v1678
      %v2336 = vpop.f32.mrb[0].mxu0
      %v2337 = vadd.f32 %v2144, %v2336
      %v2338 = vpop.f32.mrb[0].mxu0
      %v2339 = vadd.f32 %v2146, %v2338
      %v2340 = vpop.f32.mrb[0].mxu0
      %v2341 = vadd.f32 %v2148, %v2340
      %v2342 = vpop.f32.mrb[0].mxu0
      %v2343 = vadd.f32 %v2150, %v2342
      %2344 = vmatprep.mubr.bf16.mxu0 0
      %2345 = vmatmul.mubr.bf16.gmra.mrb[0].mxu0 %v1679
      %v2346 = vpop.f32.mrb[0].mxu0
      %v2347 = vadd.f32 %v2154, %v2346
      %v2348 = vpop.f32.mrb[0].mxu0
      %v2349 = vadd.f32 %v2156, %v2348
      %v2350 = vpop.f32.mrb[0].mxu0
      %v2351 = vadd.f32 %v2158, %v2350
      %v2352 = vpop.f32.mrb[0].mxu0
      %v2353 = vadd.f32 %v2160, %v2352
      %2354 = vmatprep.mubr.bf16.mxu0 0
      %2355 = vmatmul.mubr.bf16.gmra.mrb[0].mxu0 %v1680
      %v2356 = vpop.f32.mrb[0].mxu0
      %v2357 = vadd.f32 %v2164, %v2356
      %v2358 = vpop.f32.mrb[0].mxu0
      %v2359 = vadd.f32 %v2166, %v2358
      %v2360 = vpop.f32.mrb[0].mxu0
      %v2361 = vadd.f32 %v2168, %v2360
      %v2362 = vpop.f32.mrb[0].mxu0
      %v2363 = vadd.f32 %v2170, %v2362
      %2364 = vmatprep.mubr.bf16.mxu0 0
      %2365 = vmatmul.mubr.bf16.gmra.mrb[0].mxu0 %v1681
      %v2366 = vpop.f32.mrb[0].mxu0
      %v2367 = vadd.f32 %v2174, %v2366
      %v2368 = vpop.f32.mrb[0].mxu0
      %v2369 = vadd.f32 %v2176, %v2368
      %v2370 = vpop.f32.mrb[0].mxu0
      %v2371 = vadd.f32 %v2178, %v2370
      %v2372 = vpop.f32.mrb[0].mxu0
      %v2373 = vadd.f32 %v2180, %v2372
      %2374 = vmatprep.mubr.bf16.mxu0 0
      %2375 = vmatmul.mubr.bf16.gmra.mrb[0].mxu0 %v1682
      %v2376 = vpop.f32.mrb[0].mxu0
      %v2377 = vadd.f32 %v2184, %v2376
      %v2378 = vpop.f32.mrb[0].mxu0
      %v2379 = vadd.f32 %v2186, %v2378
      %v2380 = vpop.f32.mrb[0].mxu0
      %v2381 = vadd.f32 %v2188, %v2380
      %v2382 = vpop.f32.mrb[0].mxu0
      %v2383 = vadd.f32 %v2190, %v2382
      %2384 = vdwg.mxu0
      %vm2385 = vcmp.ge.f32.partialorder %v2227, 0.0
      %vm2386 = vcmp.ge.f32.partialorder %v2229, 0.0
      %vm2387 = vcmp.ge.f32.partialorder %v2231, 0.0
      %vm2388 = vcmp.ge.f32.partialorder %v2233, 0.0
      %vm2389 = vcmp.ge.f32.partialorder %v2237, 0.0
      %vm2390 = vcmp.ge.f32.partialorder %v2239, 0.0
      %vm2391 = vcmp.ge.f32.partialorder %v2241, 0.0
      %vm2392 = vcmp.ge.f32.partialorder %v2243, 0.0
      %vm2393 = vcmp.ge.f32.partialorder %v2247, 0.0
      %vm2394 = vcmp.ge.f32.partialorder %v2249, 0.0
      %vm2395 = vcmp.ge.f32.partialorder %v2251, 0.0
      %vm2396 = vcmp.ge.f32.partialorder %v2253, 0.0
      %vm2397 = vcmp.ge.f32.partialorder %v2257, 0.0
      %vm2398 = vcmp.ge.f32.partialorder %v2259, 0.0
      %vm2399 = vcmp.ge.f32.partialorder %v2261, 0.0
      %vm2400 = vcmp.ge.f32.partialorder %v2263, 0.0
      %vm2401 = vcmp.ge.f32.partialorder %v2267, 0.0
      %vm2402 = vcmp.ge.f32.partialorder %v2269, 0.0
      %vm2403 = vcmp.ge.f32.partialorder %v2271, 0.0
      %vm2404 = vcmp.ge.f32.partialorder %v2273, 0.0
      %vm2405 = vcmp.ge.f32.partialorder %v2277, 0.0
      %vm2406 = vcmp.ge.f32.partialorder %v2279, 0.0
      %vm2407 = vcmp.ge.f32.partialorder %v2281, 0.0
      %vm2408 = vcmp.ge.f32.partialorder %v2283, 0.0
      %vm2409 = vcmp.ge.f32.partialorder %v2287, 0.0
      %vm2410 = vcmp.ge.f32.partialorder %v2289, 0.0
      %vm2411 = vcmp.ge.f32.partialorder %v2291, 0.0
      %vm2412 = vcmp.ge.f32.partialorder %v2293, 0.0
      %vm2413 = vcmp.ge.f32.partialorder %v2297, 0.0
      %vm2414 = vcmp.ge.f32.partialorder %v2299, 0.0
      %vm2415 = vcmp.ge.f32.partialorder %v2301, 0.0
      %vm2416 = vcmp.ge.f32.partialorder %v2303, 0.0
      %vm2417 = vcmp.ge.f32.partialorder %v2307, 0.0
      %vm2418 = vcmp.ge.f32.partialorder %v2309, 0.0
      %vm2419 = vcmp.ge.f32.partialorder %v2311, 0.0
      %vm2420 = vcmp.ge.f32.partialorder %v2313, 0.0
      %vm2421 = vcmp.ge.f32.partialorder %v2317, 0.0
      %vm2422 = vcmp.ge.f32.partialorder %v2319, 0.0
      %vm2423 = vcmp.ge.f32.partialorder %v2321, 0.0
      %vm2424 = vcmp.ge.f32.partialorder %v2323, 0.0
      %vm2425 = vcmp.ge.f32.partialorder %v2327, 0.0
      %vm2426 = vcmp.ge.f32.partialorder %v2329, 0.0
      %vm2427 = vcmp.ge.f32.partialorder %v2331, 0.0
      %vm2428 = vcmp.ge.f32.partialorder %v2333, 0.0
      %vm2429 = vcmp.ge.f32.partialorder %v2337, 0.0
      %vm2430 = vcmp.ge.f32.partialorder %v2339, 0.0
      %vm2431 = vcmp.ge.f32.partialorder %v2341, 0.0
      %vm2432 = vcmp.ge.f32.partialorder %v2343, 0.0
      %vm2433 = vcmp.ge.f32.partialorder %v2347, 0.0
      %vm2434 = vcmp.ge.f32.partialorder %v2349, 0.0
      %vm2435 = vcmp.ge.f32.partialorder %v2351, 0.0
      %vm2436 = vcmp.ge.f32.partialorder %v2353, 0.0
      %vm2437 = vcmp.ge.f32.partialorder %v2357, 0.0
      %vm2438 = vcmp.ge.f32.partialorder %v2359, 0.0
      %vm2439 = vcmp.ge.f32.partialorder %v2361, 0.0
      %vm2440 = vcmp.ge.f32.partialorder %v2363, 0.0
      %vm2441 = vcmp.ge.f32.partialorder %v2367, 0.0
      %vm2442 = vcmp.ge.f32.partialorder %v2369, 0.0
      %vm2443 = vcmp.ge.f32.partialorder %v2371, 0.0
      %vm2444 = vcmp.ge.f32.partialorder %v2373, 0.0
      %vm2445 = vcmp.ge.f32.partialorder %v2377, 0.0
      %vm2446 = vcmp.ge.f32.partialorder %v2379, 0.0
      %vm2447 = vcmp.ge.f32.partialorder %v2381, 0.0
      %vm2448 = vcmp.ge.f32.partialorder %v2383, 0.0
      %v2449 = vmul.f32 %v2227, 0.01
      %v2450 = vmul.f32 %v2229, 0.01
      %v2451 = vmul.f32 %v2231, 0.01
      %v2452 = vmul.f32 %v2233, 0.01
      %v2453 = vmul.f32 %v2237, 0.01
      %v2454 = vmul.f32 %v2239, 0.01
      %v2455 = vmul.f32 %v2241, 0.01
      %v2456 = vmul.f32 %v2243, 0.01
      %v2457 = vmul.f32 %v2247, 0.01
      %v2458 = vmul.f32 %v2249, 0.01
      %v2459 = vmul.f32 %v2251, 0.01
      %v2460 = vmul.f32 %v2253, 0.01
      %v2461 = vmul.f32 %v2257, 0.01
      %v2462 = vmul.f32 %v2259, 0.01
      %v2463 = vmul.f32 %v2261, 0.01
      %v2464 = vmul.f32 %v2263, 0.01
      %v2465 = vmul.f32 %v2267, 0.01
      %v2466 = vmul.f32 %v2269, 0.01
      %v2467 = vmul.f32 %v2271, 0.01
      %v2468 = vmul.f32 %v2273, 0.01
      %v2469 = vmul.f32 %v2277, 0.01
      %v2470 = vmul.f32 %v2279, 0.01
      %v2471 = vmul.f32 %v2281, 0.01
      %v2472 = vmul.f32 %v2283, 0.01
      %v2473 = vmul.f32 %v2287, 0.01
      %v2474 = vmul.f32 %v2289, 0.01
      %v2475 = vmul.f32 %v2291, 0.01
      %v2476 = vmul.f32 %v2293, 0.01
      %v2477 = vmul.f32 %v2297, 0.01
      %v2478 = vmul.f32 %v2299, 0.01
      %v2479 = vmul.f32 %v2301, 0.01
      %v2480 = vmul.f32 %v2303, 0.01
      %v2481 = vmul.f32 %v2307, 0.01
      %v2482 = vmul.f32 %v2309, 0.01
      %v2483 = vmul.f32 %v2311, 0.01
      %v2484 = vmul.f32 %v2313, 0.01
      %v2485 = vmul.f32 %v2317, 0.01
      %v2486 = vmul.f32 %v2319, 0.01
      %v2487 = vmul.f32 %v2321, 0.01
      %v2488 = vmul.f32 %v2323, 0.01
      %v2489 = vmul.f32 %v2327, 0.01
      %v2490 = vmul.f32 %v2329, 0.01
      %v2491 = vmul.f32 %v2331, 0.01
      %v2492 = vmul.f32 %v2333, 0.01
      %v2493 = vmul.f32 %v2337, 0.01
      %v2494 = vmul.f32 %v2339, 0.01
      %v2495 = vmul.f32 %v2341, 0.01
      %v2496 = vmul.f32 %v2343, 0.01
      %v2497 = vmul.f32 %v2347, 0.01
      %v2498 = vmul.f32 %v2349, 0.01
      %v2499 = vmul.f32 %v2351, 0.01
      %v2500 = vmul.f32 %v2353, 0.01
      %v2501 = vmul.f32 %v2357, 0.01
      %v2502 = vmul.f32 %v2359, 0.01
      %v2503 = vmul.f32 %v2361, 0.01
      %v2504 = vmul.f32 %v2363, 0.01
      %v2505 = vmul.f32 %v2367, 0.01
      %v2506 = vmul.f32 %v2369, 0.01
      %v2507 = vmul.f32 %v2371, 0.01
      %v2508 = vmul.f32 %v2373, 0.01
      %v2509 = vmul.f32 %v2377, 0.01
      %v2510 = vmul.f32 %v2379, 0.01
      %v2511 = vmul.f32 %v2381, 0.01
      %v2512 = vmul.f32 %v2383, 0.01
      %v2513 = vsel %vm2385, %v2227, %v2449
      %v2514 = vsel %vm2386, %v2229, %v2450
      %v2515 = vsel %vm2387, %v2231, %v2451
      %v2516 = vsel %vm2388, %v2233, %v2452
      %v2517 = vsel %vm2389, %v2237, %v2453
      %v2518 = vsel %vm2390, %v2239, %v2454
      %v2519 = vsel %vm2391, %v2241, %v2455
      %v2520 = vsel %vm2392, %v2243, %v2456
      %v2521 = vsel %vm2393, %v2247, %v2457
      %v2522 = vsel %vm2394, %v2249, %v2458
      %v2523 = vsel %vm2395, %v2251, %v2459
      %v2524 = vsel %vm2396, %v2253, %v2460
      %v2525 = vsel %vm2397, %v2257, %v2461
      %v2526 = vsel %vm2398, %v2259, %v2462
      %v2527 = vsel %vm2399, %v2261, %v2463
      %v2528 = vsel %vm2400, %v2263, %v2464
      %v2529 = vsel %vm2401, %v2267, %v2465
      %v2530 = vsel %vm2402, %v2269, %v2466
      %v2531 = vsel %vm2403, %v2271, %v2467
      %v2532 = vsel %vm2404, %v2273, %v2468
      %v2533 = vsel %vm2405, %v2277, %v2469
      %v2534 = vsel %vm2406, %v2279, %v2470
      %v2535 = vsel %vm2407, %v2281, %v2471
      %v2536 = vsel %vm2408, %v2283, %v2472
      %v2537 = vsel %vm2409, %v2287, %v2473
      %v2538 = vsel %vm2410, %v2289, %v2474
      %v2539 = vsel %vm2411, %v2291, %v2475
      %v2540 = vsel %vm2412, %v2293, %v2476
      %v2541 = vsel %vm2413, %v2297, %v2477
      %v2542 = vsel %vm2414, %v2299, %v2478
      %v2543 = vsel %vm2415, %v2301, %v2479
      %v2544 = vsel %vm2416, %v2303, %v2480
      %v2545 = vsel %vm2417, %v2307, %v2481
      %v2546 = vsel %vm2418, %v2309, %v2482
      %v2547 = vsel %vm2419, %v2311, %v2483
      %v2548 = vsel %vm2420, %v2313, %v2484
      %v2549 = vsel %vm2421, %v2317, %v2485
      %v2550 = vsel %vm2422, %v2319, %v2486
      %v2551 = vsel %vm2423, %v2321, %v2487
      %v2552 = vsel %vm2424, %v2323, %v2488
      %v2553 = vsel %vm2425, %v2327, %v2489
      %v2554 = vsel %vm2426, %v2329, %v2490
      %v2555 = vsel %vm2427, %v2331, %v2491
      %v2556 = vsel %vm2428, %v2333, %v2492
      %v2557 = vsel %vm2429, %v2337, %v2493
      %v2558 = vsel %vm2430, %v2339, %v2494
      %v2559 = vsel %vm2431, %v2341, %v2495
      %v2560 = vsel %vm2432, %v2343, %v2496
      %v2561 = vsel %vm2433, %v2347, %v2497
      %v2562 = vsel %vm2434, %v2349, %v2498
      %v2563 = vsel %vm2435, %v2351, %v2499
      %v2564 = vsel %vm2436, %v2353, %v2500
      %v2565 = vsel %vm2437, %v2357, %v2501
      %v2566 = vsel %vm2438, %v2359, %v2502
      %v2567 = vsel %vm2439, %v2361, %v2503
      %v2568 = vsel %vm2440, %v2363, %v2504
      %v2569 = vsel %vm2441, %v2367, %v2505
      %v2570 = vsel %vm2442, %v2369, %v2506
      %v2571 = vsel %vm2443, %v2371, %v2507
      %v2572 = vsel %vm2444, %v2373, %v2508
      %v2573 = vsel %vm2445, %v2377, %v2509
      %v2574 = vsel %vm2446, %v2379, %v2510
      %v2575 = vsel %vm2447, %v2381, %v2511
      %v2576 = vsel %vm2448, %v2383, %v2512
      %s2577 = scalar_lea.vmem %s5, 1
      %v2578 = vld [vmem:[%s2577] ss:$4 sm:$0x3]
      %v2580 = vlaneseq
      %v2581 = vshrl.u32 %v2580, 7
      %v2582 = vsub.s32 0, %v2581
      %v2583 = vrot.slane %v2578, %v2582
      %v2584 = vlaneseq
      %v2585 = vshrl.u32 %v2584, 7
      %v2586 = vsub.s32 1, %v2585
      %v2587 = vrot.slane %v2578, %v2586
      %v2590 = vmul.f32 %v2513, %v2583
      %v2591 = vmul.f32 %v2514, %v2587
      %v2592 = vmul.f32 %v2515, %v2583
      %v2593 = vmul.f32 %v2516, %v2587
      %v2594 = vmul.f32 %v2517, %v2583
      %v2595 = vmul.f32 %v2518, %v2587
      %v2596 = vmul.f32 %v2519, %v2583
      %v2597 = vmul.f32 %v2520, %v2587
      %v2598 = vmul.f32 %v2521, %v2583
      %v2599 = vmul.f32 %v2522, %v2587
      %v2600 = vmul.f32 %v2523, %v2583
      %v2601 = vmul.f32 %v2524, %v2587
      %v2602 = vmul.f32 %v2525, %v2583
      %v2603 = vmul.f32 %v2526, %v2587
      %v2604 = vmul.f32 %v2527, %v2583
      %v2605 = vmul.f32 %v2528, %v2587
      %v2606 = vmul.f32 %v2529, %v2583
      %v2607 = vmul.f32 %v2530, %v2587
      %v2608 = vmul.f32 %v2531, %v2583
      %v2609 = vmul.f32 %v2532, %v2587
      %v2610 = vmul.f32 %v2533, %v2583
      %v2611 = vmul.f32 %v2534, %v2587
      %v2612 = vmul.f32 %v2535, %v2583
      %v2613 = vmul.f32 %v2536, %v2587
      %v2614 = vmul.f32 %v2537, %v2583
      %v2615 = vmul.f32 %v2538, %v2587
      %v2616 = vmul.f32 %v2539, %v2583
      %v2617 = vmul.f32 %v2540, %v2587
      %v2618 = vmul.f32 %v2541, %v2583
      %v2619 = vmul.f32 %v2542, %v2587
      %v2620 = vmul.f32 %v2543, %v2583
      %v2621 = vmul.f32 %v2544, %v2587
      %v2622 = vmul.f32 %v2545, %v2583
      %v2623 = vmul.f32 %v2546, %v2587
      %v2624 = vmul.f32 %v2547, %v2583
      %v2625 = vmul.f32 %v2548, %v2587
      %v2626 = vmul.f32 %v2549, %v2583
      %v2627 = vmul.f32 %v2550, %v2587
      %v2628 = vmul.f32 %v2551, %v2583
      %v2629 = vmul.f32 %v2552, %v2587
      %v2630 = vmul.f32 %v2553, %v2583
      %v2631 = vmul.f32 %v2554, %v2587
      %v2632 = vmul.f32 %v2555, %v2583
      %v2633 = vmul.f32 %v2556, %v2587
      %v2634 = vmul.f32 %v2557, %v2583
      %v2635 = vmul.f32 %v2558, %v2587
      %v2636 = vmul.f32 %v2559, %v2583
      %v2637 = vmul.f32 %v2560, %v2587
      %v2638 = vmul.f32 %v2561, %v2583
      %v2639 = vmul.f32 %v2562, %v2587
      %v2640 = vmul.f32 %v2563, %v2583
      %v2641 = vmul.f32 %v2564, %v2587
      %v2642 = vmul.f32 %v2565, %v2583
      %v2643 = vmul.f32 %v2566, %v2587
      %v2644 = vmul.f32 %v2567, %v2583
      %v2645 = vmul.f32 %v2568, %v2587
      %v2646 = vmul.f32 %v2569, %v2583
      %v2647 = vmul.f32 %v2570, %v2587
      %v2648 = vmul.f32 %v2571, %v2583
      %v2649 = vmul.f32 %v2572, %v2587
      %v2650 = vmul.f32 %v2573, %v2583
      %v2651 = vmul.f32 %v2574, %v2587
      %v2652 = vmul.f32 %v2575, %v2583
      %v2653 = vmul.f32 %v2576, %v2587
      %s2654 = scalar_lea.vmem %s5, 2
      %v2655 = vld [vmem:[%s2654] ss:$4 sm:$0x3]
      %v2657 = vlaneseq
      %v2658 = vshrl.u32 %v2657, 7
      %v2659 = vsub.s32 0, %v2658
      %v2660 = vrot.slane %v2655, %v2659
      %v2661 = vlaneseq
      %v2662 = vshrl.u32 %v2661, 7
      %v2663 = vsub.s32 1, %v2662
      %v2664 = vrot.slane %v2655, %v2663
      %v2667 = vadd.f32 %v2590, %v2660
      %v2668 = vadd.f32 %v2591, %v2664
      %v2669 = vadd.f32 %v2592, %v2660
      %v2670 = vadd.f32 %v2593, %v2664
      %v2671 = vadd.f32 %v2594, %v2660
      %v2672 = vadd.f32 %v2595, %v2664
      %v2673 = vadd.f32 %v2596, %v2660
      %v2674 = vadd.f32 %v2597, %v2664
      %v2675 = vadd.f32 %v2598, %v2660
      %v2676 = vadd.f32 %v2599, %v2664
      %v2677 = vadd.f32 %v2600, %v2660
      %v2678 = vadd.f32 %v2601, %v2664
      %v2679 = vadd.f32 %v2602, %v2660
      %v2680 = vadd.f32 %v2603, %v2664
      %v2681 = vadd.f32 %v2604, %v2660
      %v2682 = vadd.f32 %v2605, %v2664
      %v2683 = vadd.f32 %v2606, %v2660
      %v2684 = vadd.f32 %v2607, %v2664
      %v2685 = vadd.f32 %v2608, %v2660
      %v2686 = vadd.f32 %v2609, %v2664
      %v2687 = vadd.f32 %v2610, %v2660
      %v2688 = vadd.f32 %v2611, %v2664
      %v2689 = vadd.f32 %v2612, %v2660
      %v2690 = vadd.f32 %v2613, %v2664
      %v2691 = vadd.f32 %v2614, %v2660
      %v2692 = vadd.f32 %v2615, %v2664
      %v2693 = vadd.f32 %v2616, %v2660
      %v2694 = vadd.f32 %v2617, %v2664
      %v2695 = vadd.f32 %v2618, %v2660
      %v2696 = vadd.f32 %v2619, %v2664
      %v2697 = vadd.f32 %v2620, %v2660
      %v2698 = vadd.f32 %v2621, %v2664
      %v2699 = vadd.f32 %v2622, %v2660
      %v2700 = vadd.f32 %v2623, %v2664
      %v2701 = vadd.f32 %v2624, %v2660
      %v2702 = vadd.f32 %v2625, %v2664
      %v2703 = vadd.f32 %v2626, %v2660
      %v2704 = vadd.f32 %v2627, %v2664
      %v2705 = vadd.f32 %v2628, %v2660
      %v2706 = vadd.f32 %v2629, %v2664
      %v2707 = vadd.f32 %v2630, %v2660
      %v2708 = vadd.f32 %v2631, %v2664
      %v2709 = vadd.f32 %v2632, %v2660
      %v2710 = vadd.f32 %v2633, %v2664
      %v2711 = vadd.f32 %v2634, %v2660
      %v2712 = vadd.f32 %v2635, %v2664
      %v2713 = vadd.f32 %v2636, %v2660
      %v2714 = vadd.f32 %v2637, %v2664
      %v2715 = vadd.f32 %v2638, %v2660
      %v2716 = vadd.f32 %v2639, %v2664
      %v2717 = vadd.f32 %v2640, %v2660
      %v2718 = vadd.f32 %v2641, %v2664
      %v2719 = vadd.f32 %v2642, %v2660
      %v2720 = vadd.f32 %v2643, %v2664
      %v2721 = vadd.f32 %v2644, %v2660
      %v2722 = vadd.f32 %v2645, %v2664
      %v2723 = vadd.f32 %v2646, %v2660
      %v2724 = vadd.f32 %v2647, %v2664
      %v2725 = vadd.f32 %v2648, %v2660
      %v2726 = vadd.f32 %v2649, %v2664
      %v2727 = vadd.f32 %v2650, %v2660
      %v2728 = vadd.f32 %v2651, %v2664
      %v2729 = vadd.f32 %v2652, %v2660
      %v2730 = vadd.f32 %v2653, %v2664
      %v2731 = vrot.slane %v2667, 7
      %v2732 = vrot.slane %v2668, 7
      %v2733 = vrot.slane %v2669, 7
      %v2734 = vrot.slane %v2670, 7
      %v2735 = vrot.slane %v2671, 7
      %v2736 = vrot.slane %v2672, 7
      %v2737 = vrot.slane %v2673, 7
      %v2738 = vrot.slane %v2674, 7
      %v2739 = vrot.slane %v2675, 7
      %v2740 = vrot.slane %v2676, 7
      %v2741 = vrot.slane %v2677, 7
      %v2742 = vrot.slane %v2678, 7
      %v2743 = vrot.slane %v2679, 7
      %v2744 = vrot.slane %v2680, 7
      %v2745 = vrot.slane %v2681, 7
      %v2746 = vrot.slane %v2682, 7
      %v2747 = vrot.slane %v2683, 7
      %v2748 = vrot.slane %v2684, 7
      %v2749 = vrot.slane %v2685, 7
      %v2750 = vrot.slane %v2686, 7
      %v2751 = vrot.slane %v2687, 7
      %v2752 = vrot.slane %v2688, 7
      %v2753 = vrot.slane %v2689, 7
      %v2754 = vrot.slane %v2690, 7
      %v2755 = vrot.slane %v2691, 7
      %v2756 = vrot.slane %v2692, 7
      %v2757 = vrot.slane %v2693, 7
      %v2758 = vrot.slane %v2694, 7
      %v2759 = vrot.slane %v2695, 7
      %v2760 = vrot.slane %v2696, 7
      %v2761 = vrot.slane %v2697, 7
      %v2762 = vrot.slane %v2698, 7
      %v2763 = vrot.slane %v2699, 7
      %v2764 = vrot.slane %v2700, 7
      %v2765 = vrot.slane %v2701, 7
      %v2766 = vrot.slane %v2702, 7
      %v2767 = vrot.slane %v2703, 7
      %v2768 = vrot.slane %v2704, 7
      %v2769 = vrot.slane %v2705, 7
      %v2770 = vrot.slane %v2706, 7
      %v2771 = vrot.slane %v2707, 7
      %v2772 = vrot.slane %v2708, 7
      %v2773 = vrot.slane %v2709, 7
      %v2774 = vrot.slane %v2710, 7
      %v2775 = vrot.slane %v2711, 7
      %v2776 = vrot.slane %v2712, 7
      %v2777 = vrot.slane %v2713, 7
      %v2778 = vrot.slane %v2714, 7
      %v2779 = vrot.slane %v2715, 7
      %v2780 = vrot.slane %v2716, 7
      %v2781 = vrot.slane %v2717, 7
      %v2782 = vrot.slane %v2718, 7
      %v2783 = vrot.slane %v2719, 7
      %v2784 = vrot.slane %v2720, 7
      %v2785 = vrot.slane %v2721, 7
      %v2786 = vrot.slane %v2722, 7
      %v2787 = vrot.slane %v2723, 7
      %v2788 = vrot.slane %v2724, 7
      %v2789 = vrot.slane %v2725, 7
      %v2790 = vrot.slane %v2726, 7
      %v2791 = vrot.slane %v2727, 7
      %v2792 = vrot.slane %v2728, 7
      %v2793 = vrot.slane %v2729, 7
      %v2794 = vrot.slane %v2730, 7
      %v2795 = vsel %vm1489, %v2791, %v2793
      %v2796 = vsel %vm1489, %v2792, %v2794
      %v2797 = vsel %vm1489, %v2789, %v2791
      %v2798 = vsel %vm1489, %v2790, %v2792
      %v2799 = vsel %vm1489, %v2787, %v2789
      %v2800 = vsel %vm1489, %v2788, %v2790
      %v2801 = vsel %vm1489, %v2785, %v2787
      %v2802 = vsel %vm1489, %v2786, %v2788
      %v2803 = vsel %vm1489, %v2783, %v2785
      %v2804 = vsel %vm1489, %v2784, %v2786
      %v2805 = vsel %vm1489, %v2781, %v2783
      %v2806 = vsel %vm1489, %v2782, %v2784
      %v2807 = vsel %vm1489, %v2779, %v2781
      %v2808 = vsel %vm1489, %v2780, %v2782
      %v2809 = vsel %vm1489, %v2777, %v2779
      %v2810 = vsel %vm1489, %v2778, %v2780
      %v2811 = vsel %vm1489, %v2775, %v2777
      %v2812 = vsel %vm1489, %v2776, %v2778
      %v2813 = vsel %vm1489, %v2773, %v2775
      %v2814 = vsel %vm1489, %v2774, %v2776
      %v2815 = vsel %vm1489, %v2771, %v2773
      %v2816 = vsel %vm1489, %v2772, %v2774
      %v2817 = vsel %vm1489, %v2769, %v2771
      %v2818 = vsel %vm1489, %v2770, %v2772
      %v2819 = vsel %vm1489, %v2767, %v2769
      %v2820 = vsel %vm1489, %v2768, %v2770
      %v2821 = vsel %vm1489, %v2765, %v2767
      %v2822 = vsel %vm1489, %v2766, %v2768
      %v2823 = vsel %vm1489, %v2763, %v2765
      %v2824 = vsel %vm1489, %v2764, %v2766
      %v2825 = vsel %vm1489, %v2761, %v2763
      %v2826 = vsel %vm1489, %v2762, %v2764
      %v2827 = vsel %vm1489, %v2759, %v2761
      %v2828 = vsel %vm1489, %v2760, %v2762
      %v2829 = vsel %vm1489, %v2757, %v2759
      %v2830 = vsel %vm1489, %v2758, %v2760
      %v2831 = vsel %vm1489, %v2755, %v2757
      %v2832 = vsel %vm1489, %v2756, %v2758
      %v2833 = vsel %vm1489, %v2753, %v2755
      %v2834 = vsel %vm1489, %v2754, %v2756
      %v2835 = vsel %vm1489, %v2751, %v2753
      %v2836 = vsel %vm1489, %v2752, %v2754
      %v2837 = vsel %vm1489, %v2749, %v2751
      %v2838 = vsel %vm1489, %v2750, %v2752
      %v2839 = vsel %vm1489, %v2747, %v2749
      %v2840 = vsel %vm1489, %v2748, %v2750
      %v2841 = vsel %vm1489, %v2745, %v2747
      %v2842 = vsel %vm1489, %v2746, %v2748
      %v2843 = vsel %vm1489, %v2743, %v2745
      %v2844 = vsel %vm1489, %v2744, %v2746
      %v2845 = vsel %vm1489, %v2741, %v2743
      %v2846 = vsel %vm1489, %v2742, %v2744
      %v2847 = vsel %vm1489, %v2739, %v2741
      %v2848 = vsel %vm1489, %v2740, %v2742
      %v2849 = vsel %vm1489, %v2737, %v2739
      %v2850 = vsel %vm1489, %v2738, %v2740
      %v2851 = vsel %vm1489, %v2735, %v2737
      %v2852 = vsel %vm1489, %v2736, %v2738
      %v2853 = vsel %vm1489, %v2733, %v2735
      %v2854 = vsel %vm1489, %v2734, %v2736
      %v2855 = vsel %vm1489, %v2731, %v2733
      %v2856 = vsel %vm1489, %v2732, %v2734
      %v2857 = vsel %vm1489, %v2793, %v2731
      %v2858 = vsel %vm1489, %v2794, %v2732
      %v2859 = vmul.f32 %v2857, %v1041
      %v2860 = vmul.f32 %v2858, %v1041
      %v2861 = vmul.f32 %v2855, %v1042
      %v2862 = vmul.f32 %v2856, %v1042
      %v2863 = vmul.f32 %v2853, %v1043
      %v2864 = vmul.f32 %v2854, %v1043
      %v2865 = vmul.f32 %v2851, %v1044
      %v2866 = vmul.f32 %v2852, %v1044
      %v2867 = vmul.f32 %v2849, %v1045
      %v2868 = vmul.f32 %v2850, %v1045
      %v2869 = vmul.f32 %v2847, %v1046
      %v2870 = vmul.f32 %v2848, %v1046
      %v2871 = vmul.f32 %v2845, %v1047
      %v2872 = vmul.f32 %v2846, %v1047
      %v2873 = vmul.f32 %v2843, %v1048
      %v2874 = vmul.f32 %v2844, %v1048
      %v2875 = vmul.f32 %v2841, %v1049
      %v2876 = vmul.f32 %v2842, %v1049
      %v2877 = vmul.f32 %v2839, %v1050
      %v2878 = vmul.f32 %v2840, %v1050
      %v2879 = vmul.f32 %v2837, %v1051
      %v2880 = vmul.f32 %v2838, %v1051
      %v2881 = vmul.f32 %v2835, %v1052
      %v2882 = vmul.f32 %v2836, %v1052
      %v2883 = vmul.f32 %v2833, %v1053
      %v2884 = vmul.f32 %v2834, %v1053
      %v2885 = vmul.f32 %v2831, %v1054
      %v2886 = vmul.f32 %v2832, %v1054
      %v2887 = vmul.f32 %v2829, %v1055
      %v2888 = vmul.f32 %v2830, %v1055
      %v2889 = vmul.f32 %v2827, %v1056
      %v2890 = vmul.f32 %v2828, %v1056
      %v2891 = vmul.f32 %v2825, %v1057
      %v2892 = vmul.f32 %v2826, %v1057
      %v2893 = vmul.f32 %v2823, %v1058
      %v2894 = vmul.f32 %v2824, %v1058
      %v2895 = vmul.f32 %v2821, %v1059
      %v2896 = vmul.f32 %v2822, %v1059
      %v2897 = vmul.f32 %v2819, %v1060
      %v2898 = vmul.f32 %v2820, %v1060
      %v2899 = vmul.f32 %v2817, %v1061
      %v2900 = vmul.f32 %v2818, %v1061
      %v2901 = vmul.f32 %v2815, %v1062
      %v2902 = vmul.f32 %v2816, %v1062
      %v2903 = vmul.f32 %v2813, %v1063
      %v2904 = vmul.f32 %v2814, %v1063
      %v2905 = vmul.f32 %v2811, %v1064
      %v2906 = vmul.f32 %v2812, %v1064
      %v2907 = vmul.f32 %v2809, %v1065
      %v2908 = vmul.f32 %v2810, %v1065
      %v2909 = vmul.f32 %v2807, %v1066
      %v2910 = vmul.f32 %v2808, %v1066
      %v2911 = vmul.f32 %v2805, %v1067
      %v2912 = vmul.f32 %v2806, %v1067
      %v2913 = vmul.f32 %v2803, %v1068
      %v2914 = vmul.f32 %v2804, %v1068
      %v2915 = vmul.f32 %v2801, %v1069
      %v2916 = vmul.f32 %v2802, %v1069
      %v2917 = vmul.f32 %v2799, %v1070
      %v2918 = vmul.f32 %v2800, %v1070
      %v2919 = vmul.f32 %v2797, %v1071
      %v2920 = vmul.f32 %v2798, %v1071
      %v2921 = vmul.f32 %v2795, %v1072
      %v2922 = vmul.f32 %v2796, %v1072
      %v2923 = vpack.c.bf16 %v2861, %v2859
      %v2924 = vpack.c.bf16 %v2862, %v2860
      %v2925 = vpack.c.bf16 %v2865, %v2863
      %v2926 = vpack.c.bf16 %v2866, %v2864
      %v2927 = vpack.c.bf16 %v2869, %v2867
      %v2928 = vpack.c.bf16 %v2870, %v2868
      %v2929 = vpack.c.bf16 %v2873, %v2871
      %v2930 = vpack.c.bf16 %v2874, %v2872
      %v2931 = vpack.c.bf16 %v2877, %v2875
      %v2932 = vpack.c.bf16 %v2878, %v2876
      %v2933 = vpack.c.bf16 %v2881, %v2879
      %v2934 = vpack.c.bf16 %v2882, %v2880
      %v2935 = vpack.c.bf16 %v2885, %v2883
      %v2936 = vpack.c.bf16 %v2886, %v2884
      %v2937 = vpack.c.bf16 %v2889, %v2887
      %v2938 = vpack.c.bf16 %v2890, %v2888
      %v2939 = vpack.c.bf16 %v2893, %v2891
      %v2940 = vpack.c.bf16 %v2894, %v2892
      %v2941 = vpack.c.bf16 %v2897, %v2895
      %v2942 = vpack.c.bf16 %v2898, %v2896
      %v2943 = vpack.c.bf16 %v2901, %v2899
      %v2944 = vpack.c.bf16 %v2902, %v2900
      %v2945 = vpack.c.bf16 %v2905, %v2903
      %v2946 = vpack.c.bf16 %v2906, %v2904
      %v2947 = vpack.c.bf16 %v2909, %v2907
      %v2948 = vpack.c.bf16 %v2910, %v2908
      %v2949 = vpack.c.bf16 %v2913, %v2911
      %v2950 = vpack.c.bf16 %v2914, %v2912
      %v2951 = vpack.c.bf16 %v2917, %v2915
      %v2952 = vpack.c.bf16 %v2918, %v2916
      %v2953 = vpack.c.bf16 %v2921, %v2919
      %v2954 = vpack.c.bf16 %v2922, %v2920
      %v2955 = vrot.slane %v2667, 1
      %v2956 = vrot.slane %v2668, 1
      %v2957 = vrot.slane %v2669, 1
      %v2958 = vrot.slane %v2670, 1
      %v2959 = vrot.slane %v2671, 1
      %v2960 = vrot.slane %v2672, 1
      %v2961 = vrot.slane %v2673, 1
      %v2962 = vrot.slane %v2674, 1
      %v2963 = vrot.slane %v2675, 1
      %v2964 = vrot.slane %v2676, 1
      %v2965 = vrot.slane %v2677, 1
      %v2966 = vrot.slane %v2678, 1
      %v2967 = vrot.slane %v2679, 1
      %v2968 = vrot.slane %v2680, 1
      %v2969 = vrot.slane %v2681, 1
      %v2970 = vrot.slane %v2682, 1
      %v2971 = vrot.slane %v2683, 1
      %v2972 = vrot.slane %v2684, 1
      %v2973 = vrot.slane %v2685, 1
      %v2974 = vrot.slane %v2686, 1
      %v2975 = vrot.slane %v2687, 1
      %v2976 = vrot.slane %v2688, 1
      %v2977 = vrot.slane %v2689, 1
      %v2978 = vrot.slane %v2690, 1
      %v2979 = vrot.slane %v2691, 1
      %v2980 = vrot.slane %v2692, 1
      %v2981 = vrot.slane %v2693, 1
      %v2982 = vrot.slane %v2694, 1
      %v2983 = vrot.slane %v2695, 1
      %v2984 = vrot.slane %v2696, 1
      %v2985 = vrot.slane %v2697, 1
      %v2986 = vrot.slane %v2698, 1
      %v2987 = vrot.slane %v2699, 1
      %v2988 = vrot.slane %v2700, 1
      %v2989 = vrot.slane %v2701, 1
      %v2990 = vrot.slane %v2702, 1
      %v2991 = vrot.slane %v2703, 1
      %v2992 = vrot.slane %v2704, 1
      %v2993 = vrot.slane %v2705, 1
      %v2994 = vrot.slane %v2706, 1
      %v2995 = vrot.slane %v2707, 1
      %v2996 = vrot.slane %v2708, 1
      %v2997 = vrot.slane %v2709, 1
      %v2998 = vrot.slane %v2710, 1
      %v2999 = vrot.slane %v2711, 1
      %v3000 = vrot.slane %v2712, 1
      %v3001 = vrot.slane %v2713, 1
      %v3002 = vrot.slane %v2714, 1
      %v3003 = vrot.slane %v2715, 1
      %v3004 = vrot.slane %v2716, 1
      %v3005 = vrot.slane %v2717, 1
      %v3006 = vrot.slane %v2718, 1
      %v3007 = vrot.slane %v2719, 1
      %v3008 = vrot.slane %v2720, 1
      %v3009 = vrot.slane %v2721, 1
      %v3010 = vrot.slane %v2722, 1
      %v3011 = vrot.slane %v2723, 1
      %v3012 = vrot.slane %v2724, 1
      %v3013 = vrot.slane %v2725, 1
      %v3014 = vrot.slane %v2726, 1
      %v3015 = vrot.slane %v2727, 1
      %v3016 = vrot.slane %v2728, 1
      %v3017 = vrot.slane %v2729, 1
      %v3018 = vrot.slane %v2730, 1
      %v3019 = vsel %vm1602, %v3015, %v3017
      %v3020 = vsel %vm1602, %v3016, %v3018
      %v3021 = vsel %vm1602, %v3013, %v3015
      %v3022 = vsel %vm1602, %v3014, %v3016
      %v3023 = vsel %vm1602, %v3011, %v3013
      %v3024 = vsel %vm1602, %v3012, %v3014
      %v3025 = vsel %vm1602, %v3009, %v3011
      %v3026 = vsel %vm1602, %v3010, %v3012
      %v3027 = vsel %vm1602, %v3007, %v3009
      %v3028 = vsel %vm1602, %v3008, %v3010
      %v3029 = vsel %vm1602, %v3005, %v3007
      %v3030 = vsel %vm1602, %v3006, %v3008
      %v3031 = vsel %vm1602, %v3003, %v3005
      %v3032 = vsel %vm1602, %v3004, %v3006
      %v3033 = vsel %vm1602, %v3001, %v3003
      %v3034 = vsel %vm1602, %v3002, %v3004
      %v3035 = vsel %vm1602, %v2999, %v3001
      %v3036 = vsel %vm1602, %v3000, %v3002
      %v3037 = vsel %vm1602, %v2997, %v2999
      %v3038 = vsel %vm1602, %v2998, %v3000
      %v3039 = vsel %vm1602, %v2995, %v2997
      %v3040 = vsel %vm1602, %v2996, %v2998
      %v3041 = vsel %vm1602, %v2993, %v2995
      %v3042 = vsel %vm1602, %v2994, %v2996
      %v3043 = vsel %vm1602, %v2991, %v2993
      %v3044 = vsel %vm1602, %v2992, %v2994
      %v3045 = vsel %vm1602, %v2989, %v2991
      %v3046 = vsel %vm1602, %v2990, %v2992
      %v3047 = vsel %vm1602, %v2987, %v2989
      %v3048 = vsel %vm1602, %v2988, %v2990
      %v3049 = vsel %vm1602, %v2985, %v2987
      %v3050 = vsel %vm1602, %v2986, %v2988
      %v3051 = vsel %vm1602, %v2983, %v2985
      %v3052 = vsel %vm1602, %v2984, %v2986
      %v3053 = vsel %vm1602, %v2981, %v2983
      %v3054 = vsel %vm1602, %v2982, %v2984
      %v3055 = vsel %vm1602, %v2979, %v2981
      %v3056 = vsel %vm1602, %v2980, %v2982
      %v3057 = vsel %vm1602, %v2977, %v2979
      %v3058 = vsel %vm1602, %v2978, %v2980
      %v3059 = vsel %vm1602, %v2975, %v2977
      %v3060 = vsel %vm1602, %v2976, %v2978
      %v3061 = vsel %vm1602, %v2973, %v2975
      %v3062 = vsel %vm1602, %v2974, %v2976
      %v3063 = vsel %vm1602, %v2971, %v2973
      %v3064 = vsel %vm1602, %v2972, %v2974
      %v3065 = vsel %vm1602, %v2969, %v2971
      %v3066 = vsel %vm1602, %v2970, %v2972
      %v3067 = vsel %vm1602, %v2967, %v2969
      %v3068 = vsel %vm1602, %v2968, %v2970
      %v3069 = vsel %vm1602, %v2965, %v2967
      %v3070 = vsel %vm1602, %v2966, %v2968
      %v3071 = vsel %vm1602, %v2963, %v2965
      %v3072 = vsel %vm1602, %v2964, %v2966
      %v3073 = vsel %vm1602, %v2961, %v2963
      %v3074 = vsel %vm1602, %v2962, %v2964
      %v3075 = vsel %vm1602, %v2959, %v2961
      %v3076 = vsel %vm1602, %v2960, %v2962
      %v3077 = vsel %vm1602, %v2957, %v2959
      %v3078 = vsel %vm1602, %v2958, %v2960
      %v3079 = vsel %vm1602, %v2955, %v2957
      %v3080 = vsel %vm1602, %v2956, %v2958
      %v3081 = vsel %vm1602, %v3017, %v2955
      %v3082 = vsel %vm1602, %v3018, %v2956
      %v3083 = vmul.f32 %v3079, %v1137
      %v3084 = vmul.f32 %v3080, %v1137
      %v3085 = vmul.f32 %v3077, %v1138
      %v3086 = vmul.f32 %v3078, %v1138
      %v3087 = vmul.f32 %v3075, %v1139
      %v3088 = vmul.f32 %v3076, %v1139
      %v3089 = vmul.f32 %v3073, %v1140
      %v3090 = vmul.f32 %v3074, %v1140
      %v3091 = vmul.f32 %v3071, %v1141
      %v3092 = vmul.f32 %v3072, %v1141
      %v3093 = vmul.f32 %v3069, %v1142
      %v3094 = vmul.f32 %v3070, %v1142
      %v3095 = vmul.f32 %v3067, %v1143
      %v3096 = vmul.f32 %v3068, %v1143
      %v3097 = vmul.f32 %v3065, %v1144
      %v3098 = vmul.f32 %v3066, %v1144
      %v3099 = vmul.f32 %v3063, %v1145
      %v3100 = vmul.f32 %v3064, %v1145
      %v3101 = vmul.f32 %v3061, %v1146
      %v3102 = vmul.f32 %v3062, %v1146
      %v3103 = vmul.f32 %v3059, %v1147
      %v3104 = vmul.f32 %v3060, %v1147
      %v3105 = vmul.f32 %v3057, %v1148
      %v3106 = vmul.f32 %v3058, %v1148
      %v3107 = vmul.f32 %v3055, %v1149
      %v3108 = vmul.f32 %v3056, %v1149
      %v3109 = vmul.f32 %v3053, %v1150
      %v3110 = vmul.f32 %v3054, %v1150
      %v3111 = vmul.f32 %v3051, %v1151
      %v3112 = vmul.f32 %v3052, %v1151
      %v3113 = vmul.f32 %v3049, %v1152
      %v3114 = vmul.f32 %v3050, %v1152
      %v3115 = vmul.f32 %v3047, %v1153
      %v3116 = vmul.f32 %v3048, %v1153
      %v3117 = vmul.f32 %v3045, %v1154
      %v3118 = vmul.f32 %v3046, %v1154
      %v3119 = vmul.f32 %v3043, %v1155
      %v3120 = vmul.f32 %v3044, %v1155
      %v3121 = vmul.f32 %v3041, %v1156
      %v3122 = vmul.f32 %v3042, %v1156
      %v3123 = vmul.f32 %v3039, %v1157
      %v3124 = vmul.f32 %v3040, %v1157
      %v3125 = vmul.f32 %v3037, %v1158
      %v3126 = vmul.f32 %v3038, %v1158
      %v3127 = vmul.f32 %v3035, %v1159
      %v3128 = vmul.f32 %v3036, %v1159
      %v3129 = vmul.f32 %v3033, %v1160
      %v3130 = vmul.f32 %v3034, %v1160
      %v3131 = vmul.f32 %v3031, %v1161
      %v3132 = vmul.f32 %v3032, %v1161
      %v3133 = vmul.f32 %v3029, %v1162
      %v3134 = vmul.f32 %v3030, %v1162
      %v3135 = vmul.f32 %v3027, %v1163
      %v3136 = vmul.f32 %v3028, %v1163
      %v3137 = vmul.f32 %v3025, %v1164
      %v3138 = vmul.f32 %v3026, %v1164
      %v3139 = vmul.f32 %v3023, %v1165
      %v3140 = vmul.f32 %v3024, %v1165
      %v3141 = vmul.f32 %v3021, %v1166
      %v3142 = vmul.f32 %v3022, %v1166
      %v3143 = vmul.f32 %v3019, %v1167
      %v3144 = vmul.f32 %v3020, %v1167
      %v3145 = vmul.f32 %v3081, %v1168
      %v3146 = vmul.f32 %v3082, %v1168
      %v3147 = vpack.c.bf16 %v3085, %v3083
      %v3148 = vpack.c.bf16 %v3086, %v3084
      %v3149 = vpack.c.bf16 %v3089, %v3087
      %v3150 = vpack.c.bf16 %v3090, %v3088
      %v3151 = vpack.c.bf16 %v3093, %v3091
      %v3152 = vpack.c.bf16 %v3094, %v3092
      %v3153 = vpack.c.bf16 %v3097, %v3095
      %v3154 = vpack.c.bf16 %v3098, %v3096
      %v3155 = vpack.c.bf16 %v3101, %v3099
      %v3156 = vpack.c.bf16 %v3102, %v3100
      %v3157 = vpack.c.bf16 %v3105, %v3103
      %v3158 = vpack.c.bf16 %v3106, %v3104
      %v3159 = vpack.c.bf16 %v3109, %v3107
      %v3160 = vpack.c.bf16 %v3110, %v3108
      %v3161 = vpack.c.bf16 %v3113, %v3111
      %v3162 = vpack.c.bf16 %v3114, %v3112
      %v3163 = vpack.c.bf16 %v3117, %v3115
      %v3164 = vpack.c.bf16 %v3118, %v3116
      %v3165 = vpack.c.bf16 %v3121, %v3119
      %v3166 = vpack.c.bf16 %v3122, %v3120
      %v3167 = vpack.c.bf16 %v3125, %v3123
      %v3168 = vpack.c.bf16 %v3126, %v3124
      %v3169 = vpack.c.bf16 %v3129, %v3127
      %v3170 = vpack.c.bf16 %v3130, %v3128
      %v3171 = vpack.c.bf16 %v3133, %v3131
      %v3172 = vpack.c.bf16 %v3134, %v3132
      %v3173 = vpack.c.bf16 %v3137, %v3135
      %v3174 = vpack.c.bf16 %v3138, %v3136
      %v3175 = vpack.c.bf16 %v3141, %v3139
      %v3176 = vpack.c.bf16 %v3142, %v3140
      %v3177 = vpack.c.bf16 %v3145, %v3143
      %v3178 = vpack.c.bf16 %v3146, %v3144
      %v3179 = vpack.c.bf16 %v2669, %v2667
      %v3180 = vpack.c.bf16 %v2670, %v2668
      %v3181 = vpack.c.bf16 %v2673, %v2671
      %v3182 = vpack.c.bf16 %v2674, %v2672
      %v3183 = vpack.c.bf16 %v2677, %v2675
      %v3184 = vpack.c.bf16 %v2678, %v2676
      %v3185 = vpack.c.bf16 %v2681, %v2679
      %v3186 = vpack.c.bf16 %v2682, %v2680
      %v3187 = vpack.c.bf16 %v2685, %v2683
      %v3188 = vpack.c.bf16 %v2686, %v2684
      %v3189 = vpack.c.bf16 %v2689, %v2687
      %v3190 = vpack.c.bf16 %v2690, %v2688
      %v3191 = vpack.c.bf16 %v2693, %v2691
      %v3192 = vpack.c.bf16 %v2694, %v2692
      %v3193 = vpack.c.bf16 %v2697, %v2695
      %v3194 = vpack.c.bf16 %v2698, %v2696
      %v3195 = vpack.c.bf16 %v2701, %v2699
      %v3196 = vpack.c.bf16 %v2702, %v2700
      %v3197 = vpack.c.bf16 %v2705, %v2703
      %v3198 = vpack.c.bf16 %v2706, %v2704
      %v3199 = vpack.c.bf16 %v2709, %v2707
      %v3200 = vpack.c.bf16 %v2710, %v2708
      %v3201 = vpack.c.bf16 %v2713, %v2711
      %v3202 = vpack.c.bf16 %v2714, %v2712
      %v3203 = vpack.c.bf16 %v2717, %v2715
      %v3204 = vpack.c.bf16 %v2718, %v2716
      %v3205 = vpack.c.bf16 %v2721, %v2719
      %v3206 = vpack.c.bf16 %v2722, %v2720
      %v3207 = vpack.c.bf16 %v2725, %v2723
      %v3208 = vpack.c.bf16 %v2726, %v2724
      %v3209 = vpack.c.bf16 %v2729, %v2727
      %v3210 = vpack.c.bf16 %v2730, %v2728
      %v3211 = vld [vmem:[%s2] sm:$0xff]
      %v3212 = vld [vmem:[%s2 + $0x8] sm:$0xff]
      %v3213 = vld [vmem:[%s2 + $0x10] sm:$0xff]
      %v3214 = vld [vmem:[%s2 + $0x18] sm:$0xff]
      %v3215 = vld [vmem:[%s2 + $0x20] sm:$0xff]
      %v3216 = vld [vmem:[%s2 + $0x28] sm:$0xff]
      %v3217 = vld [vmem:[%s2 + $0x30] sm:$0xff]
      %v3218 = vld [vmem:[%s2 + $0x38] sm:$0xff]
      %v3219 = vld [vmem:[%s2 + $0x40] sm:$0xff]
      %v3220 = vld [vmem:[%s2 + $0x48] sm:$0xff]
      %v3221 = vld [vmem:[%s2 + $0x50] sm:$0xff]
      %v3222 = vld [vmem:[%s2 + $0x58] sm:$0xff]
      %v3223 = vld [vmem:[%s2 + $0x60] sm:$0xff]
      %v3224 = vld [vmem:[%s2 + $0x68] sm:$0xff]
      %v3225 = vld [vmem:[%s2 + $0x70] sm:$0xff]
      %v3226 = vld [vmem:[%s2 + $0x78] sm:$0xff]
      %v3227 = vld [vmem:[%s2 + $0x80] sm:$0xff]
      %v3228 = vld [vmem:[%s2 + $0x88] sm:$0xff]
      %v3229 = vld [vmem:[%s2 + $0x90] sm:$0xff]
      %v3230 = vld [vmem:[%s2 + $0x98] sm:$0xff]
      %v3231 = vld [vmem:[%s2 + $0xa0] sm:$0xff]
      %v3232 = vld [vmem:[%s2 + $0xa8] sm:$0xff]
      %v3233 = vld [vmem:[%s2 + $0xb0] sm:$0xff]
      %v3234 = vld [vmem:[%s2 + $0xb8] sm:$0xff]
      %v3235 = vld [vmem:[%s2 + $0xc0] sm:$0xff]
      %v3236 = vld [vmem:[%s2 + $0xc8] sm:$0xff]
      %v3237 = vld [vmem:[%s2 + $0xd0] sm:$0xff]
      %v3238 = vld [vmem:[%s2 + $0xd8] sm:$0xff]
      %v3239 = vld [vmem:[%s2 + $0xe0] sm:$0xff]
      %v3240 = vld [vmem:[%s2 + $0xe8] sm:$0xff]
      %v3241 = vld [vmem:[%s2 + $0xf0] sm:$0xff]
      %v3242 = vld [vmem:[%s2 + $0xf8] sm:$0xff]
      %v3243 = vld [vmem:[%s2 + $0x100] sm:$0xff]
      %v3244 = vld [vmem:[%s2 + $0x108] sm:$0xff]
      %v3245 = vld [vmem:[%s2 + $0x110] sm:$0xff]
      %v3246 = vld [vmem:[%s2 + $0x118] sm:$0xff]
      %v3247 = vld [vmem:[%s2 + $0x120] sm:$0xff]
      %v3248 = vld [vmem:[%s2 + $0x128] sm:$0xff]
      %v3249 = vld [vmem:[%s2 + $0x130] sm:$0xff]
      %v3250 = vld [vmem:[%s2 + $0x138] sm:$0xff]
      %v3251 = vld [vmem:[%s2 + $0x140] sm:$0xff]
      %v3252 = vld [vmem:[%s2 + $0x148] sm:$0xff]
      %v3253 = vld [vmem:[%s2 + $0x150] sm:$0xff]
      %v3254 = vld [vmem:[%s2 + $0x158] sm:$0xff]
      %v3255 = vld [vmem:[%s2 + $0x160] sm:$0xff]
      %v3256 = vld [vmem:[%s2 + $0x168] sm:$0xff]
      %v3257 = vld [vmem:[%s2 + $0x170] sm:$0xff]
      %v3258 = vld [vmem:[%s2 + $0x178] sm:$0xff]
      %v3259 = vld [vmem:[%s2 + $0x180] sm:$0xff]
      %v3260 = vld [vmem:[%s2 + $0x188] sm:$0xff]
      %v3261 = vld [vmem:[%s2 + $0x190] sm:$0xff]
      %v3262 = vld [vmem:[%s2 + $0x198] sm:$0xff]
      %v3263 = vld [vmem:[%s2 + $0x1a0] sm:$0xff]
      %v3264 = vld [vmem:[%s2 + $0x1a8] sm:$0xff]
      %v3265 = vld [vmem:[%s2 + $0x1b0] sm:$0xff]
      %v3266 = vld [vmem:[%s2 + $0x1b8] sm:$0xff]
      %v3267 = vld [vmem:[%s2 + $0x1c0] sm:$0xff]
      %v3268 = vld [vmem:[%s2 + $0x1c8] sm:$0xff]
      %v3269 = vld [vmem:[%s2 + $0x1d0] sm:$0xff]
      %v3270 = vld [vmem:[%s2 + $0x1d8] sm:$0xff]
      %v3271 = vld [vmem:[%s2 + $0x1e0] sm:$0xff]
      %v3272 = vld [vmem:[%s2 + $0x1e8] sm:$0xff]
      %v3273 = vld [vmem:[%s2 + $0x1f0] sm:$0xff]
      %v3274 = vld [vmem:[%s2 + $0x1f8] sm:$0xff]
      %v3275 = vld [vmem:[%s2 + $0x200] sm:$0xff]
      %v3276 = vld [vmem:[%s2 + $0x208] sm:$0xff]
      %v3277 = vld [vmem:[%s2 + $0x210] sm:$0xff]
      %v3278 = vld [vmem:[%s2 + $0x218] sm:$0xff]
      %v3279 = vld [vmem:[%s2 + $0x220] sm:$0xff]
      %v3280 = vld [vmem:[%s2 + $0x228] sm:$0xff]
      %v3281 = vld [vmem:[%s2 + $0x230] sm:$0xff]
      %v3282 = vld [vmem:[%s2 + $0x238] sm:$0xff]
      %v3283 = vld [vmem:[%s2 + $0x240] sm:$0xff]
      %v3284 = vld [vmem:[%s2 + $0x248] sm:$0xff]
      %v3285 = vld [vmem:[%s2 + $0x250] sm:$0xff]
      %v3286 = vld [vmem:[%s2 + $0x258] sm:$0xff]
      %v3287 = vld [vmem:[%s2 + $0x260] sm:$0xff]
      %v3288 = vld [vmem:[%s2 + $0x268] sm:$0xff]
      %v3289 = vld [vmem:[%s2 + $0x270] sm:$0xff]
      %v3290 = vld [vmem:[%s2 + $0x278] sm:$0xff]
      %v3291 = vld [vmem:[%s2 + $0x280] sm:$0xff]
      %v3292 = vld [vmem:[%s2 + $0x288] sm:$0xff]
      %v3293 = vld [vmem:[%s2 + $0x290] sm:$0xff]
      %v3294 = vld [vmem:[%s2 + $0x298] sm:$0xff]
      %v3295 = vld [vmem:[%s2 + $0x2a0] sm:$0xff]
      %v3296 = vld [vmem:[%s2 + $0x2a8] sm:$0xff]
      %v3297 = vld [vmem:[%s2 + $0x2b0] sm:$0xff]
      %v3298 = vld [vmem:[%s2 + $0x2b8] sm:$0xff]
      %v3299 = vld [vmem:[%s2 + $0x2c0] sm:$0xff]
      %v3300 = vld [vmem:[%s2 + $0x2c8] sm:$0xff]
      %v3301 = vld [vmem:[%s2 + $0x2d0] sm:$0xff]
      %v3302 = vld [vmem:[%s2 + $0x2d8] sm:$0xff]
      %v3303 = vld [vmem:[%s2 + $0x2e0] sm:$0xff]
      %v3304 = vld [vmem:[%s2 + $0x2e8] sm:$0xff]
      %v3305 = vld [vmem:[%s2 + $0x2f0] sm:$0xff]
      %v3306 = vld [vmem:[%s2 + $0x2f8] sm:$0xff]
      %v3307 = vld [vmem:[%s2 + $0x300] sm:$0xff]
      %v3308 = vld [vmem:[%s2 + $0x308] sm:$0xff]
      %v3309 = vld [vmem:[%s2 + $0x310] sm:$0xff]
      %v3310 = vld [vmem:[%s2 + $0x318] sm:$0xff]
      %v3311 = vld [vmem:[%s2 + $0x320] sm:$0xff]
      %v3312 = vld [vmem:[%s2 + $0x328] sm:$0xff]
      %v3313 = vld [vmem:[%s2 + $0x330] sm:$0xff]
      %v3314 = vld [vmem:[%s2 + $0x338] sm:$0xff]
      %v3315 = vld [vmem:[%s2 + $0x340] sm:$0xff]
      %v3316 = vld [vmem:[%s2 + $0x348] sm:$0xff]
      %v3317 = vld [vmem:[%s2 + $0x350] sm:$0xff]
      %v3318 = vld [vmem:[%s2 + $0x358] sm:$0xff]
      %v3319 = vld [vmem:[%s2 + $0x360] sm:$0xff]
      %v3320 = vld [vmem:[%s2 + $0x368] sm:$0xff]
      %v3321 = vld [vmem:[%s2 + $0x370] sm:$0xff]
      %v3322 = vld [vmem:[%s2 + $0x378] sm:$0xff]
      %v3323 = vld [vmem:[%s2 + $0x380] sm:$0xff]
      %v3324 = vld [vmem:[%s2 + $0x388] sm:$0xff]
      %v3325 = vld [vmem:[%s2 + $0x390] sm:$0xff]
      %v3326 = vld [vmem:[%s2 + $0x398] sm:$0xff]
      %v3327 = vld [vmem:[%s2 + $0x3a0] sm:$0xff]
      %v3328 = vld [vmem:[%s2 + $0x3a8] sm:$0xff]
      %v3329 = vld [vmem:[%s2 + $0x3b0] sm:$0xff]
      %v3330 = vld [vmem:[%s2 + $0x3b8] sm:$0xff]
      %v3331 = vld [vmem:[%s2 + $0x3c0] sm:$0xff]
      %v3332 = vld [vmem:[%s2 + $0x3c8] sm:$0xff]
      %v3333 = vld [vmem:[%s2 + $0x3d0] sm:$0xff]
      %v3334 = vld [vmem:[%s2 + $0x3d8] sm:$0xff]
      %v3335 = vld [vmem:[%s2 + $0x3e0] sm:$0xff]
      %v3336 = vld [vmem:[%s2 + $0x3e8] sm:$0xff]
      %v3337 = vld [vmem:[%s2 + $0x3f0] sm:$0xff]
      %v3338 = vld [vmem:[%s2 + $0x3f8] sm:$0xff]
      %v3339 = vld [vmem:[%s2 + $0x400] sm:$0xff]
      %v3340 = vld [vmem:[%s2 + $0x408] sm:$0xff]
      %v3341 = vld [vmem:[%s2 + $0x410] sm:$0xff]
      %v3342 = vld [vmem:[%s2 + $0x418] sm:$0xff]
      %v3343 = vld [vmem:[%s2 + $0x420] sm:$0xff]
      %v3344 = vld [vmem:[%s2 + $0x428] sm:$0xff]
      %v3345 = vld [vmem:[%s2 + $0x430] sm:$0xff]
      %v3346 = vld [vmem:[%s2 + $0x438] sm:$0xff]
      %v3347 = vld [vmem:[%s2 + $0x440] sm:$0xff]
      %v3348 = vld [vmem:[%s2 + $0x448] sm:$0xff]
      %v3349 = vld [vmem:[%s2 + $0x450] sm:$0xff]
      %v3350 = vld [vmem:[%s2 + $0x458] sm:$0xff]
      %v3351 = vld [vmem:[%s2 + $0x460] sm:$0xff]
      %v3352 = vld [vmem:[%s2 + $0x468] sm:$0xff]
      %v3353 = vld [vmem:[%s2 + $0x470] sm:$0xff]
      %v3354 = vld [vmem:[%s2 + $0x478] sm:$0xff]
      %v3355 = vld [vmem:[%s2 + $0x480] sm:$0xff]
      %v3356 = vld [vmem:[%s2 + $0x488] sm:$0xff]
      %v3357 = vld [vmem:[%s2 + $0x490] sm:$0xff]
      %v3358 = vld [vmem:[%s2 + $0x498] sm:$0xff]
      %v3359 = vld [vmem:[%s2 + $0x4a0] sm:$0xff]
      %v3360 = vld [vmem:[%s2 + $0x4a8] sm:$0xff]
      %v3361 = vld [vmem:[%s2 + $0x4b0] sm:$0xff]
      %v3362 = vld [vmem:[%s2 + $0x4b8] sm:$0xff]
      %v3363 = vld [vmem:[%s2 + $0x4c0] sm:$0xff]
      %v3364 = vld [vmem:[%s2 + $0x4c8] sm:$0xff]
      %v3365 = vld [vmem:[%s2 + $0x4d0] sm:$0xff]
      %v3366 = vld [vmem:[%s2 + $0x4d8] sm:$0xff]
      %v3367 = vld [vmem:[%s2 + $0x4e0] sm:$0xff]
      %v3368 = vld [vmem:[%s2 + $0x4e8] sm:$0xff]
      %v3369 = vld [vmem:[%s2 + $0x4f0] sm:$0xff]
      %v3370 = vld [vmem:[%s2 + $0x4f8] sm:$0xff]
      %v3371 = vld [vmem:[%s2 + $0x500] sm:$0xff]
      %v3372 = vld [vmem:[%s2 + $0x508] sm:$0xff]
      %v3373 = vld [vmem:[%s2 + $0x510] sm:$0xff]
      %v3374 = vld [vmem:[%s2 + $0x518] sm:$0xff]
      %v3375 = vld [vmem:[%s2 + $0x520] sm:$0xff]
      %v3376 = vld [vmem:[%s2 + $0x528] sm:$0xff]
      %v3377 = vld [vmem:[%s2 + $0x530] sm:$0xff]
      %v3378 = vld [vmem:[%s2 + $0x538] sm:$0xff]
      %v3379 = vld [vmem:[%s2 + $0x540] sm:$0xff]
      %v3380 = vld [vmem:[%s2 + $0x548] sm:$0xff]
      %v3381 = vld [vmem:[%s2 + $0x550] sm:$0xff]
      %v3382 = vld [vmem:[%s2 + $0x558] sm:$0xff]
      %v3383 = vld [vmem:[%s2 + $0x560] sm:$0xff]
      %v3384 = vld [vmem:[%s2 + $0x568] sm:$0xff]
      %v3385 = vld [vmem:[%s2 + $0x570] sm:$0xff]
      %v3386 = vld [vmem:[%s2 + $0x578] sm:$0xff]
      %v3387 = vld [vmem:[%s2 + $0x580] sm:$0xff]
      %v3388 = vld [vmem:[%s2 + $0x588] sm:$0xff]
      %v3389 = vld [vmem:[%s2 + $0x590] sm:$0xff]
      %v3390 = vld [vmem:[%s2 + $0x598] sm:$0xff]
      %v3391 = vld [vmem:[%s2 + $0x5a0] sm:$0xff]
      %v3392 = vld [vmem:[%s2 + $0x5a8] sm:$0xff]
      %v3393 = vld [vmem:[%s2 + $0x5b0] sm:$0xff]
      %v3394 = vld [vmem:[%s2 + $0x5b8] sm:$0xff]
      %v3395 = vld [vmem:[%s2 + $0x5c0] sm:$0xff]
      %v3396 = vld [vmem:[%s2 + $0x5c8] sm:$0xff]
      %v3397 = vld [vmem:[%s2 + $0x5d0] sm:$0xff]
      %v3398 = vld [vmem:[%s2 + $0x5d8] sm:$0xff]
      %v3399 = vld [vmem:[%s2 + $0x5e0] sm:$0xff]
      %v3400 = vld [vmem:[%s2 + $0x5e8] sm:$0xff]
      %v3401 = vld [vmem:[%s2 + $0x5f0] sm:$0xff]
      %v3402 = vld [vmem:[%s2 + $0x5f8] sm:$0xff]
      %v3403 = vld [vmem:[%s6] ss:$4 sm:$0xf]
      %v3405 = vlaneseq
      %v3406 = vshrl.u32 %v3405, 7
      %v3407 = vsub.s32 0, %v3406
      %v3408 = vrot.slane %v3403, %v3407
      %v3409 = vlaneseq
      %v3410 = vshrl.u32 %v3409, 7
      %v3411 = vsub.s32 1, %v3410
      %v3412 = vrot.slane %v3403, %v3411
      %v3413 = vlaneseq
      %v3414 = vshrl.u32 %v3413, 7
      %v3415 = vsub.s32 2, %v3414
      %v3416 = vrot.slane %v3403, %v3415
      %v3417 = vlaneseq
      %v3418 = vshrl.u32 %v3417, 7
      %v3419 = vsub.s32 3, %v3418
      %v3420 = vrot.slane %v3403, %v3419
      %v3617 = vunpack.c.l.b16 %v3211
      %v3618 = vunpack.c.h.b16 %v3211
      %v3619 = vunpack.c.l.b16 %v3212
      %v3620 = vunpack.c.h.b16 %v3212
      %v3621 = vunpack.c.l.b16 %v3213
      %v3622 = vunpack.c.h.b16 %v3213
      %v3623 = vunpack.c.l.b16 %v3214
      %v3624 = vunpack.c.h.b16 %v3214
      %v3625 = vunpack.c.l.b16 %v3215
      %v3626 = vunpack.c.h.b16 %v3215
      %v3627 = vunpack.c.l.b16 %v3216
      %v3628 = vunpack.c.h.b16 %v3216
      %v3629 = vunpack.c.l.b16 %v3217
      %v3630 = vunpack.c.h.b16 %v3217
      %v3631 = vunpack.c.l.b16 %v3218
      %v3632 = vunpack.c.h.b16 %v3218
      %v3633 = vunpack.c.l.b16 %v3219
      %v3634 = vunpack.c.h.b16 %v3219
      %v3635 = vunpack.c.l.b16 %v3220
      %v3636 = vunpack.c.h.b16 %v3220
      %v3637 = vunpack.c.l.b16 %v3221
      %v3638 = vunpack.c.h.b16 %v3221
      %v3639 = vunpack.c.l.b16 %v3222
      %v3640 = vunpack.c.h.b16 %v3222
      %v3641 = vunpack.c.l.b16 %v3223
      %v3642 = vunpack.c.h.b16 %v3223
      %v3643 = vunpack.c.l.b16 %v3224
      %v3644 = vunpack.c.h.b16 %v3224
      %v3645 = vunpack.c.l.b16 %v3225
      %v3646 = vunpack.c.h.b16 %v3225
      %v3647 = vunpack.c.l.b16 %v3226
      %v3648 = vunpack.c.h.b16 %v3226
      %v3649 = vunpack.c.l.b16 %v3227
      %v3650 = vunpack.c.h.b16 %v3227
      %v3651 = vunpack.c.l.b16 %v3228
      %v3652 = vunpack.c.h.b16 %v3228
      %v3653 = vunpack.c.l.b16 %v3229
      %v3654 = vunpack.c.h.b16 %v3229
      %v3655 = vunpack.c.l.b16 %v3230
      %v3656 = vunpack.c.h.b16 %v3230
      %v3657 = vunpack.c.l.b16 %v3231
      %v3658 = vunpack.c.h.b16 %v3231
      %v3659 = vunpack.c.l.b16 %v3232
      %v3660 = vunpack.c.h.b16 %v3232
      %v3661 = vunpack.c.l.b16 %v3233
      %v3662 = vunpack.c.h.b16 %v3233
      %v3663 = vunpack.c.l.b16 %v3234
      %v3664 = vunpack.c.h.b16 %v3234
      %v3665 = vunpack.c.l.b16 %v3235
      %v3666 = vunpack.c.h.b16 %v3235
      %v3667 = vunpack.c.l.b16 %v3236
      %v3668 = vunpack.c.h.b16 %v3236
      %v3669 = vunpack.c.l.b16 %v3237
      %v3670 = vunpack.c.h.b16 %v3237
      %v3671 = vunpack.c.l.b16 %v3238
      %v3672 = vunpack.c.h.b16 %v3238
      %v3673 = vunpack.c.l.b16 %v3239
      %v3674 = vunpack.c.h.b16 %v3239
      %v3675 = vunpack.c.l.b16 %v3240
      %v3676 = vunpack.c.h.b16 %v3240
      %v3677 = vunpack.c.l.b16 %v3241
      %v3678 = vunpack.c.h.b16 %v3241
      %v3679 = vunpack.c.l.b16 %v3242
      %v3680 = vunpack.c.h.b16 %v3242
      %v3681 = vunpack.c.l.b16 %v3243
      %v3682 = vunpack.c.h.b16 %v3243
      %v3683 = vunpack.c.l.b16 %v3244
      %v3684 = vunpack.c.h.b16 %v3244
      %v3685 = vunpack.c.l.b16 %v3245
      %v3686 = vunpack.c.h.b16 %v3245
      %v3687 = vunpack.c.l.b16 %v3246
      %v3688 = vunpack.c.h.b16 %v3246
      %v3689 = vunpack.c.l.b16 %v3247
      %v3690 = vunpack.c.h.b16 %v3247
      %v3691 = vunpack.c.l.b16 %v3248
      %v3692 = vunpack.c.h.b16 %v3248
      %v3693 = vunpack.c.l.b16 %v3249
      %v3694 = vunpack.c.h.b16 %v3249
      %v3695 = vunpack.c.l.b16 %v3250
      %v3696 = vunpack.c.h.b16 %v3250
      %v3697 = vunpack.c.l.b16 %v3251
      %v3698 = vunpack.c.h.b16 %v3251
      %v3699 = vunpack.c.l.b16 %v3252
      %v3700 = vunpack.c.h.b16 %v3252
      %v3701 = vunpack.c.l.b16 %v3253
      %v3702 = vunpack.c.h.b16 %v3253
      %v3703 = vunpack.c.l.b16 %v3254
      %v3704 = vunpack.c.h.b16 %v3254
      %v3705 = vunpack.c.l.b16 %v3255
      %v3706 = vunpack.c.h.b16 %v3255
      %v3707 = vunpack.c.l.b16 %v3256
      %v3708 = vunpack.c.h.b16 %v3256
      %v3709 = vunpack.c.l.b16 %v3257
      %v3710 = vunpack.c.h.b16 %v3257
      %v3711 = vunpack.c.l.b16 %v3258
      %v3712 = vunpack.c.h.b16 %v3258
      %v3713 = vunpack.c.l.b16 %v3259
      %v3714 = vunpack.c.h.b16 %v3259
      %v3715 = vunpack.c.l.b16 %v3260
      %v3716 = vunpack.c.h.b16 %v3260
      %v3717 = vunpack.c.l.b16 %v3261
      %v3718 = vunpack.c.h.b16 %v3261
      %v3719 = vunpack.c.l.b16 %v3262
      %v3720 = vunpack.c.h.b16 %v3262
      %v3721 = vunpack.c.l.b16 %v3263
      %v3722 = vunpack.c.h.b16 %v3263
      %v3723 = vunpack.c.l.b16 %v3264
      %v3724 = vunpack.c.h.b16 %v3264
      %v3725 = vunpack.c.l.b16 %v3265
      %v3726 = vunpack.c.h.b16 %v3265
      %v3727 = vunpack.c.l.b16 %v3266
      %v3728 = vunpack.c.h.b16 %v3266
      %v3729 = vunpack.c.l.b16 %v3267
      %v3730 = vunpack.c.h.b16 %v3267
      %v3731 = vunpack.c.l.b16 %v3268
      %v3732 = vunpack.c.h.b16 %v3268
      %v3733 = vunpack.c.l.b16 %v3269
      %v3734 = vunpack.c.h.b16 %v3269
      %v3735 = vunpack.c.l.b16 %v3270
      %v3736 = vunpack.c.h.b16 %v3270
      %v3737 = vunpack.c.l.b16 %v3271
      %v3738 = vunpack.c.h.b16 %v3271
      %v3739 = vunpack.c.l.b16 %v3272
      %v3740 = vunpack.c.h.b16 %v3272
      %v3741 = vunpack.c.l.b16 %v3273
      %v3742 = vunpack.c.h.b16 %v3273
      %v3743 = vunpack.c.l.b16 %v3274
      %v3744 = vunpack.c.h.b16 %v3274
      %v3745 = vunpack.c.l.b16 %v3275
      %v3746 = vunpack.c.h.b16 %v3275
      %v3747 = vunpack.c.l.b16 %v3276
      %v3748 = vunpack.c.h.b16 %v3276
      %v3749 = vunpack.c.l.b16 %v3277
      %v3750 = vunpack.c.h.b16 %v3277
      %v3751 = vunpack.c.l.b16 %v3278
      %v3752 = vunpack.c.h.b16 %v3278
      %v3753 = vunpack.c.l.b16 %v3279
      %v3754 = vunpack.c.h.b16 %v3279
      %v3755 = vunpack.c.l.b16 %v3280
      %v3756 = vunpack.c.h.b16 %v3280
      %v3757 = vunpack.c.l.b16 %v3281
      %v3758 = vunpack.c.h.b16 %v3281
      %v3759 = vunpack.c.l.b16 %v3282
      %v3760 = vunpack.c.h.b16 %v3282
      %v3761 = vunpack.c.l.b16 %v3283
      %v3762 = vunpack.c.h.b16 %v3283
      %v3763 = vunpack.c.l.b16 %v3284
      %v3764 = vunpack.c.h.b16 %v3284
      %v3765 = vunpack.c.l.b16 %v3285
      %v3766 = vunpack.c.h.b16 %v3285
      %v3767 = vunpack.c.l.b16 %v3286
      %v3768 = vunpack.c.h.b16 %v3286
      %v3769 = vunpack.c.l.b16 %v3287
      %v3770 = vunpack.c.h.b16 %v3287
      %v3771 = vunpack.c.l.b16 %v3288
      %v3772 = vunpack.c.h.b16 %v3288
      %v3773 = vunpack.c.l.b16 %v3289
      %v3774 = vunpack.c.h.b16 %v3289
      %v3775 = vunpack.c.l.b16 %v3290
      %v3776 = vunpack.c.h.b16 %v3290
      %v3777 = vunpack.c.l.b16 %v3291
      %v3778 = vunpack.c.h.b16 %v3291
      %v3779 = vunpack.c.l.b16 %v3292
      %v3780 = vunpack.c.h.b16 %v3292
      %v3781 = vunpack.c.l.b16 %v3293
      %v3782 = vunpack.c.h.b16 %v3293
      %v3783 = vunpack.c.l.b16 %v3294
      %v3784 = vunpack.c.h.b16 %v3294
      %v3785 = vunpack.c.l.b16 %v3295
      %v3786 = vunpack.c.h.b16 %v3295
      %v3787 = vunpack.c.l.b16 %v3296
      %v3788 = vunpack.c.h.b16 %v3296
      %v3789 = vunpack.c.l.b16 %v3297
      %v3790 = vunpack.c.h.b16 %v3297
      %v3791 = vunpack.c.l.b16 %v3298
      %v3792 = vunpack.c.h.b16 %v3298
      %v3793 = vunpack.c.l.b16 %v3299
      %v3794 = vunpack.c.h.b16 %v3299
      %v3795 = vunpack.c.l.b16 %v3300
      %v3796 = vunpack.c.h.b16 %v3300
      %v3797 = vunpack.c.l.b16 %v3301
      %v3798 = vunpack.c.h.b16 %v3301
      %v3799 = vunpack.c.l.b16 %v3302
      %v3800 = vunpack.c.h.b16 %v3302
      %v3801 = vunpack.c.l.b16 %v3303
      %v3802 = vunpack.c.h.b16 %v3303
      %v3803 = vunpack.c.l.b16 %v3304
      %v3804 = vunpack.c.h.b16 %v3304
      %v3805 = vunpack.c.l.b16 %v3305
      %v3806 = vunpack.c.h.b16 %v3305
      %v3807 = vunpack.c.l.b16 %v3306
      %v3808 = vunpack.c.h.b16 %v3306
      %v3809 = vunpack.c.l.b16 %v3307
      %v3810 = vunpack.c.h.b16 %v3307
      %v3811 = vunpack.c.l.b16 %v3308
      %v3812 = vunpack.c.h.b16 %v3308
      %v3813 = vunpack.c.l.b16 %v3309
      %v3814 = vunpack.c.h.b16 %v3309
      %v3815 = vunpack.c.l.b16 %v3310
      %v3816 = vunpack.c.h.b16 %v3310
      %v3817 = vunpack.c.l.b16 %v3311
      %v3818 = vunpack.c.h.b16 %v3311
      %v3819 = vunpack.c.l.b16 %v3312
      %v3820 = vunpack.c.h.b16 %v3312
      %v3821 = vunpack.c.l.b16 %v3313
      %v3822 = vunpack.c.h.b16 %v3313
      %v3823 = vunpack.c.l.b16 %v3314
      %v3824 = vunpack.c.h.b16 %v3314
      %v3825 = vunpack.c.l.b16 %v3315
      %v3826 = vunpack.c.h.b16 %v3315
      %v3827 = vunpack.c.l.b16 %v3316
      %v3828 = vunpack.c.h.b16 %v3316
      %v3829 = vunpack.c.l.b16 %v3317
      %v3830 = vunpack.c.h.b16 %v3317
      %v3831 = vunpack.c.l.b16 %v3318
      %v3832 = vunpack.c.h.b16 %v3318
      %v3833 = vunpack.c.l.b16 %v3319
      %v3834 = vunpack.c.h.b16 %v3319
      %v3835 = vunpack.c.l.b16 %v3320
      %v3836 = vunpack.c.h.b16 %v3320
      %v3837 = vunpack.c.l.b16 %v3321
      %v3838 = vunpack.c.h.b16 %v3321
      %v3839 = vunpack.c.l.b16 %v3322
      %v3840 = vunpack.c.h.b16 %v3322
      %v3841 = vunpack.c.l.b16 %v3323
      %v3842 = vunpack.c.h.b16 %v3323
      %v3843 = vunpack.c.l.b16 %v3324
      %v3844 = vunpack.c.h.b16 %v3324
      %v3845 = vunpack.c.l.b16 %v3325
      %v3846 = vunpack.c.h.b16 %v3325
      %v3847 = vunpack.c.l.b16 %v3326
      %v3848 = vunpack.c.h.b16 %v3326
      %v3849 = vunpack.c.l.b16 %v3327
      %v3850 = vunpack.c.h.b16 %v3327
      %v3851 = vunpack.c.l.b16 %v3328
      %v3852 = vunpack.c.h.b16 %v3328
      %v3853 = vunpack.c.l.b16 %v3329
      %v3854 = vunpack.c.h.b16 %v3329
      %v3855 = vunpack.c.l.b16 %v3330
      %v3856 = vunpack.c.h.b16 %v3330
      %v3857 = vunpack.c.l.b16 %v3331
      %v3858 = vunpack.c.h.b16 %v3331
      %v3859 = vunpack.c.l.b16 %v3332
      %v3860 = vunpack.c.h.b16 %v3332
      %v3861 = vunpack.c.l.b16 %v3333
      %v3862 = vunpack.c.h.b16 %v3333
      %v3863 = vunpack.c.l.b16 %v3334
      %v3864 = vunpack.c.h.b16 %v3334
      %v3865 = vunpack.c.l.b16 %v3335
      %v3866 = vunpack.c.h.b16 %v3335
      %v3867 = vunpack.c.l.b16 %v3336
      %v3868 = vunpack.c.h.b16 %v3336
      %v3869 = vunpack.c.l.b16 %v3337
      %v3870 = vunpack.c.h.b16 %v3337
      %v3871 = vunpack.c.l.b16 %v3338
      %v3872 = vunpack.c.h.b16 %v3338
      %v3873 = vunpack.c.l.b16 %v3339
      %v3874 = vunpack.c.h.b16 %v3339
      %v3875 = vunpack.c.l.b16 %v3340
      %v3876 = vunpack.c.h.b16 %v3340
      %v3877 = vunpack.c.l.b16 %v3341
      %v3878 = vunpack.c.h.b16 %v3341
      %v3879 = vunpack.c.l.b16 %v3342
      %v3880 = vunpack.c.h.b16 %v3342
      %v3881 = vunpack.c.l.b16 %v3343
      %v3882 = vunpack.c.h.b16 %v3343
      %v3883 = vunpack.c.l.b16 %v3344
      %v3884 = vunpack.c.h.b16 %v3344
      %v3885 = vunpack.c.l.b16 %v3345
      %v3886 = vunpack.c.h.b16 %v3345
      %v3887 = vunpack.c.l.b16 %v3346
      %v3888 = vunpack.c.h.b16 %v3346
      %v3889 = vunpack.c.l.b16 %v3347
      %v3890 = vunpack.c.h.b16 %v3347
      %v3891 = vunpack.c.l.b16 %v3348
      %v3892 = vunpack.c.h.b16 %v3348
      %v3893 = vunpack.c.l.b16 %v3349
      %v3894 = vunpack.c.h.b16 %v3349
      %v3895 = vunpack.c.l.b16 %v3350
      %v3896 = vunpack.c.h.b16 %v3350
      %v3897 = vunpack.c.l.b16 %v3351
      %v3898 = vunpack.c.h.b16 %v3351
      %v3899 = vunpack.c.l.b16 %v3352
      %v3900 = vunpack.c.h.b16 %v3352
      %v3901 = vunpack.c.l.b16 %v3353
      %v3902 = vunpack.c.h.b16 %v3353
      %v3903 = vunpack.c.l.b16 %v3354
      %v3904 = vunpack.c.h.b16 %v3354
      %v3905 = vunpack.c.l.b16 %v3355
      %v3906 = vunpack.c.h.b16 %v3355
      %v3907 = vunpack.c.l.b16 %v3356
      %v3908 = vunpack.c.h.b16 %v3356
      %v3909 = vunpack.c.l.b16 %v3357
      %v3910 = vunpack.c.h.b16 %v3357
      %v3911 = vunpack.c.l.b16 %v3358
      %v3912 = vunpack.c.h.b16 %v3358
      %v3913 = vunpack.c.l.b16 %v3359
      %v3914 = vunpack.c.h.b16 %v3359
      %v3915 = vunpack.c.l.b16 %v3360
      %v3916 = vunpack.c.h.b16 %v3360
      %v3917 = vunpack.c.l.b16 %v3361
      %v3918 = vunpack.c.h.b16 %v3361
      %v3919 = vunpack.c.l.b16 %v3362
      %v3920 = vunpack.c.h.b16 %v3362
      %v3921 = vunpack.c.l.b16 %v3363
      %v3922 = vunpack.c.h.b16 %v3363
      %v3923 = vunpack.c.l.b16 %v3364
      %v3924 = vunpack.c.h.b16 %v3364
      %v3925 = vunpack.c.l.b16 %v3365
      %v3926 = vunpack.c.h.b16 %v3365
      %v3927 = vunpack.c.l.b16 %v3366
      %v3928 = vunpack.c.h.b16 %v3366
      %v3929 = vunpack.c.l.b16 %v3367
      %v3930 = vunpack.c.h.b16 %v3367
      %v3931 = vunpack.c.l.b16 %v3368
      %v3932 = vunpack.c.h.b16 %v3368
      %v3933 = vunpack.c.l.b16 %v3369
      %v3934 = vunpack.c.h.b16 %v3369
      %v3935 = vunpack.c.l.b16 %v3370
      %v3936 = vunpack.c.h.b16 %v3370
      %v3937 = vunpack.c.l.b16 %v3371
      %v3938 = vunpack.c.h.b16 %v3371
      %v3939 = vunpack.c.l.b16 %v3372
      %v3940 = vunpack.c.h.b16 %v3372
      %v3941 = vunpack.c.l.b16 %v3373
      %v3942 = vunpack.c.h.b16 %v3373
      %v3943 = vunpack.c.l.b16 %v3374
      %v3944 = vunpack.c.h.b16 %v3374
      %v3945 = vunpack.c.l.b16 %v3375
      %v3946 = vunpack.c.h.b16 %v3375
      %v3947 = vunpack.c.l.b16 %v3376
      %v3948 = vunpack.c.h.b16 %v3376
      %v3949 = vunpack.c.l.b16 %v3377
      %v3950 = vunpack.c.h.b16 %v3377
      %v3951 = vunpack.c.l.b16 %v3378
      %v3952 = vunpack.c.h.b16 %v3378
      %v3953 = vunpack.c.l.b16 %v3379
      %v3954 = vunpack.c.h.b16 %v3379
      %v3955 = vunpack.c.l.b16 %v3380
      %v3956 = vunpack.c.h.b16 %v3380
      %v3957 = vunpack.c.l.b16 %v3381
      %v3958 = vunpack.c.h.b16 %v3381
      %v3959 = vunpack.c.l.b16 %v3382
      %v3960 = vunpack.c.h.b16 %v3382
      %v3961 = vunpack.c.l.b16 %v3383
      %v3962 = vunpack.c.h.b16 %v3383
      %v3963 = vunpack.c.l.b16 %v3384
      %v3964 = vunpack.c.h.b16 %v3384
      %v3965 = vunpack.c.l.b16 %v3385
      %v3966 = vunpack.c.h.b16 %v3385
      %v3967 = vunpack.c.l.b16 %v3386
      %v3968 = vunpack.c.h.b16 %v3386
      %v3969 = vunpack.c.l.b16 %v3387
      %v3970 = vunpack.c.h.b16 %v3387
      %v3971 = vunpack.c.l.b16 %v3388
      %v3972 = vunpack.c.h.b16 %v3388
      %v3973 = vunpack.c.l.b16 %v3389
      %v3974 = vunpack.c.h.b16 %v3389
      %v3975 = vunpack.c.l.b16 %v3390
      %v3976 = vunpack.c.h.b16 %v3390
      %v3977 = vunpack.c.l.b16 %v3391
      %v3978 = vunpack.c.h.b16 %v3391
      %v3979 = vunpack.c.l.b16 %v3392
      %v3980 = vunpack.c.h.b16 %v3392
      %v3981 = vunpack.c.l.b16 %v3393
      %v3982 = vunpack.c.h.b16 %v3393
      %v3983 = vunpack.c.l.b16 %v3394
      %v3984 = vunpack.c.h.b16 %v3394
      %v3985 = vunpack.c.l.b16 %v3395
      %v3986 = vunpack.c.h.b16 %v3395
      %v3987 = vunpack.c.l.b16 %v3396
      %v3988 = vunpack.c.h.b16 %v3396
      %v3989 = vunpack.c.l.b16 %v3397
      %v3990 = vunpack.c.h.b16 %v3397
      %v3991 = vunpack.c.l.b16 %v3398
      %v3992 = vunpack.c.h.b16 %v3398
      %v3993 = vunpack.c.l.b16 %v3399
      %v3994 = vunpack.c.h.b16 %v3399
      %v3995 = vunpack.c.l.b16 %v3400
      %v3996 = vunpack.c.h.b16 %v3400
      %v3997 = vunpack.c.l.b16 %v3401
      %v3998 = vunpack.c.h.b16 %v3401
      %v3999 = vunpack.c.l.b16 %v3402
      %v4000 = vunpack.c.h.b16 %v3402
      %v4001 = vpack.c.b16 %v3621, %v3617
      %v4002 = vpack.c.b16 %v3622, %v3618
      %v4003 = vpack.c.b16 %v3623, %v3619
      %v4004 = vpack.c.b16 %v3624, %v3620
      %v4005 = vpack.c.b16 %v3629, %v3625
      %v4006 = vpack.c.b16 %v3630, %v3626
      %v4007 = vpack.c.b16 %v3631, %v3627
      %v4008 = vpack.c.b16 %v3632, %v3628
      %v4009 = vpack.c.b16 %v3637, %v3633
      %v4010 = vpack.c.b16 %v3638, %v3634
      %v4011 = vpack.c.b16 %v3639, %v3635
      %v4012 = vpack.c.b16 %v3640, %v3636
      %v4013 = vpack.c.b16 %v3645, %v3641
      %v4014 = vpack.c.b16 %v3646, %v3642
      %v4015 = vpack.c.b16 %v3647, %v3643
      %v4016 = vpack.c.b16 %v3648, %v3644
      %v4017 = vpack.c.b16 %v3653, %v3649
      %v4018 = vpack.c.b16 %v3654, %v3650
      %v4019 = vpack.c.b16 %v3655, %v3651
      %v4020 = vpack.c.b16 %v3656, %v3652
      %v4021 = vpack.c.b16 %v3661, %v3657
      %v4022 = vpack.c.b16 %v3662, %v3658
      %v4023 = vpack.c.b16 %v3663, %v3659
      %v4024 = vpack.c.b16 %v3664, %v3660
      %v4025 = vpack.c.b16 %v3669, %v3665
      %v4026 = vpack.c.b16 %v3670, %v3666
      %v4027 = vpack.c.b16 %v3671, %v3667
      %v4028 = vpack.c.b16 %v3672, %v3668
      %v4029 = vpack.c.b16 %v3677, %v3673
      %v4030 = vpack.c.b16 %v3678, %v3674
      %v4031 = vpack.c.b16 %v3679, %v3675
      %v4032 = vpack.c.b16 %v3680, %v3676
      %v4033 = vpack.c.b16 %v3685, %v3681
      %v4034 = vpack.c.b16 %v3686, %v3682
      %v4035 = vpack.c.b16 %v3687, %v3683
      %v4036 = vpack.c.b16 %v3688, %v3684
      %v4037 = vpack.c.b16 %v3693, %v3689
      %v4038 = vpack.c.b16 %v3694, %v3690
      %v4039 = vpack.c.b16 %v3695, %v3691
      %v4040 = vpack.c.b16 %v3696, %v3692
      %v4041 = vpack.c.b16 %v3701, %v3697
      %v4042 = vpack.c.b16 %v3702, %v3698
      %v4043 = vpack.c.b16 %v3703, %v3699
      %v4044 = vpack.c.b16 %v3704, %v3700
      %v4045 = vpack.c.b16 %v3709, %v3705
      %v4046 = vpack.c.b16 %v3710, %v3706
      %v4047 = vpack.c.b16 %v3711, %v3707
      %v4048 = vpack.c.b16 %v3712, %v3708
      %v4049 = vpack.c.b16 %v3717, %v3713
      %v4050 = vpack.c.b16 %v3718, %v3714
      %v4051 = vpack.c.b16 %v3719, %v3715
      %v4052 = vpack.c.b16 %v3720, %v3716
      %v4053 = vpack.c.b16 %v3725, %v3721
      %v4054 = vpack.c.b16 %v3726, %v3722
      %v4055 = vpack.c.b16 %v3727, %v3723
      %v4056 = vpack.c.b16 %v3728, %v3724
      %v4057 = vpack.c.b16 %v3733, %v3729
      %v4058 = vpack.c.b16 %v3734, %v3730
      %v4059 = vpack.c.b16 %v3735, %v3731
      %v4060 = vpack.c.b16 %v3736, %v3732
      %v4061 = vpack.c.b16 %v3741, %v3737
      %v4062 = vpack.c.b16 %v3742, %v3738
      %v4063 = vpack.c.b16 %v3743, %v3739
      %v4064 = vpack.c.b16 %v3744, %v3740
      %v4065 = vpack.c.b16 %v3749, %v3745
      %v4066 = vpack.c.b16 %v3750, %v3746
      %v4067 = vpack.c.b16 %v3751, %v3747
      %v4068 = vpack.c.b16 %v3752, %v3748
      %v4069 = vpack.c.b16 %v3757, %v3753
      %v4070 = vpack.c.b16 %v3758, %v3754
      %v4071 = vpack.c.b16 %v3759, %v3755
      %v4072 = vpack.c.b16 %v3760, %v3756
      %v4073 = vpack.c.b16 %v3765, %v3761
      %v4074 = vpack.c.b16 %v3766, %v3762
      %v4075 = vpack.c.b16 %v3767, %v3763
      %v4076 = vpack.c.b16 %v3768, %v3764
      %v4077 = vpack.c.b16 %v3773, %v3769
      %v4078 = vpack.c.b16 %v3774, %v3770
      %v4079 = vpack.c.b16 %v3775, %v3771
      %v4080 = vpack.c.b16 %v3776, %v3772
      %v4081 = vpack.c.b16 %v3781, %v3777
      %v4082 = vpack.c.b16 %v3782, %v3778
      %v4083 = vpack.c.b16 %v3783, %v3779
      %v4084 = vpack.c.b16 %v3784, %v3780
      %v4085 = vpack.c.b16 %v3789, %v3785
      %v4086 = vpack.c.b16 %v3790, %v3786
      %v4087 = vpack.c.b16 %v3791, %v3787
      %v4088 = vpack.c.b16 %v3792, %v3788
      %v4089 = vpack.c.b16 %v3797, %v3793
      %v4090 = vpack.c.b16 %v3798, %v3794
      %v4091 = vpack.c.b16 %v3799, %v3795
      %v4092 = vpack.c.b16 %v3800, %v3796
      %v4093 = vpack.c.b16 %v3805, %v3801
      %v4094 = vpack.c.b16 %v3806, %v3802
      %v4095 = vpack.c.b16 %v3807, %v3803
      %v4096 = vpack.c.b16 %v3808, %v3804
      %v4097 = vpack.c.b16 %v3813, %v3809
      %v4098 = vpack.c.b16 %v3814, %v3810
      %v4099 = vpack.c.b16 %v3815, %v3811
      %v4100 = vpack.c.b16 %v3816, %v3812
      %v4101 = vpack.c.b16 %v3821, %v3817
      %v4102 = vpack.c.b16 %v3822, %v3818
      %v4103 = vpack.c.b16 %v3823, %v3819
      %v4104 = vpack.c.b16 %v3824, %v3820
      %v4105 = vpack.c.b16 %v3829, %v3825
      %v4106 = vpack.c.b16 %v3830, %v3826
      %v4107 = vpack.c.b16 %v3831, %v3827
      %v4108 = vpack.c.b16 %v3832, %v3828
      %v4109 = vpack.c.b16 %v3837, %v3833
      %v4110 = vpack.c.b16 %v3838, %v3834
      %v4111 = vpack.c.b16 %v3839, %v3835
      %v4112 = vpack.c.b16 %v3840, %v3836
      %v4113 = vpack.c.b16 %v3845, %v3841
      %v4114 = vpack.c.b16 %v3846, %v3842
      %v4115 = vpack.c.b16 %v3847, %v3843
      %v4116 = vpack.c.b16 %v3848, %v3844
      %v4117 = vpack.c.b16 %v3853, %v3849
      %v4118 = vpack.c.b16 %v3854, %v3850
      %v4119 = vpack.c.b16 %v3855, %v3851
      %v4120 = vpack.c.b16 %v3856, %v3852
      %v4121 = vpack.c.b16 %v3861, %v3857
      %v4122 = vpack.c.b16 %v3862, %v3858
      %v4123 = vpack.c.b16 %v3863, %v3859
      %v4124 = vpack.c.b16 %v3864, %v3860
      %v4125 = vpack.c.b16 %v3869, %v3865
      %v4126 = vpack.c.b16 %v3870, %v3866
      %v4127 = vpack.c.b16 %v3871, %v3867
      %v4128 = vpack.c.b16 %v3872, %v3868
      %v4129 = vpack.c.b16 %v3877, %v3873
      %v4130 = vpack.c.b16 %v3878, %v3874
      %v4131 = vpack.c.b16 %v3879, %v3875
      %v4132 = vpack.c.b16 %v3880, %v3876
      %v4133 = vpack.c.b16 %v3885, %v3881
      %v4134 = vpack.c.b16 %v3886, %v3882
      %v4135 = vpack.c.b16 %v3887, %v3883
      %v4136 = vpack.c.b16 %v3888, %v3884
      %v4137 = vpack.c.b16 %v3893, %v3889
      %v4138 = vpack.c.b16 %v3894, %v3890
      %v4139 = vpack.c.b16 %v3895, %v3891
      %v4140 = vpack.c.b16 %v3896, %v3892
      %v4141 = vpack.c.b16 %v3901, %v3897
      %v4142 = vpack.c.b16 %v3902, %v3898
      %v4143 = vpack.c.b16 %v3903, %v3899
      %v4144 = vpack.c.b16 %v3904, %v3900
      %v4145 = vpack.c.b16 %v3909, %v3905
      %v4146 = vpack.c.b16 %v3910, %v3906
      %v4147 = vpack.c.b16 %v3911, %v3907
      %v4148 = vpack.c.b16 %v3912, %v3908
      %v4149 = vpack.c.b16 %v3917, %v3913
      %v4150 = vpack.c.b16 %v3918, %v3914
      %v4151 = vpack.c.b16 %v3919, %v3915
      %v4152 = vpack.c.b16 %v3920, %v3916
      %v4153 = vpack.c.b16 %v3925, %v3921
      %v4154 = vpack.c.b16 %v3926, %v3922
      %v4155 = vpack.c.b16 %v3927, %v3923
      %v4156 = vpack.c.b16 %v3928, %v3924
      %v4157 = vpack.c.b16 %v3933, %v3929
      %v4158 = vpack.c.b16 %v3934, %v3930
      %v4159 = vpack.c.b16 %v3935, %v3931
      %v4160 = vpack.c.b16 %v3936, %v3932
      %v4161 = vpack.c.b16 %v3941, %v3937
      %v4162 = vpack.c.b16 %v3942, %v3938
      %v4163 = vpack.c.b16 %v3943, %v3939
      %v4164 = vpack.c.b16 %v3944, %v3940
      %v4165 = vpack.c.b16 %v3949, %v3945
      %v4166 = vpack.c.b16 %v3950, %v3946
      %v4167 = vpack.c.b16 %v3951, %v3947
      %v4168 = vpack.c.b16 %v3952, %v3948
      %v4169 = vpack.c.b16 %v3957, %v3953
      %v4170 = vpack.c.b16 %v3958, %v3954
      %v4171 = vpack.c.b16 %v3959, %v3955
      %v4172 = vpack.c.b16 %v3960, %v3956
      %v4173 = vpack.c.b16 %v3965, %v3961
      %v4174 = vpack.c.b16 %v3966, %v3962
      %v4175 = vpack.c.b16 %v3967, %v3963
      %v4176 = vpack.c.b16 %v3968, %v3964
      %v4177 = vpack.c.b16 %v3973, %v3969
      %v4178 = vpack.c.b16 %v3974, %v3970
      %v4179 = vpack.c.b16 %v3975, %v3971
      %v4180 = vpack.c.b16 %v3976, %v3972
      %v4181 = vpack.c.b16 %v3981, %v3977
      %v4182 = vpack.c.b16 %v3982, %v3978
      %v4183 = vpack.c.b16 %v3983, %v3979
      %v4184 = vpack.c.b16 %v3984, %v3980
      %v4185 = vpack.c.b16 %v3989, %v3985
      %v4186 = vpack.c.b16 %v3990, %v3986
      %v4187 = vpack.c.b16 %v3991, %v3987
      %v4188 = vpack.c.b16 %v3992, %v3988
      %v4189 = vpack.c.b16 %v3997, %v3993
      %v4190 = vpack.c.b16 %v3998, %v3994
      %v4191 = vpack.c.b16 %v3999, %v3995
      %v4192 = vpack.c.b16 %v4000, %v3996
      %4385 = vmatprep.subr.bf16.mxu0 %v4002
      %4386 = vmatpush1.bf16.msra.mxu0 %v4001
      %4387 = vmatprep.subr.bf16.mxu0 %v4006
      %4388 = vmatpush1.bf16.msra.mxu0 %v4005
      %4389 = vmatprep.subr.bf16.mxu0 %v4010
      %4390 = vmatpush1.bf16.msra.mxu0 %v4009
      %4391 = vmatprep.subr.bf16.mxu0 %v4014
      %4392 = vmatpush1.bf16.msra.mxu0 %v4013
      %4393 = vmatprep.subr.bf16.mxu0 %v4018
      %4394 = vmatpush1.bf16.msra.mxu0 %v4017
      %4395 = vmatprep.subr.bf16.mxu0 %v4022
      %4396 = vmatpush1.bf16.msra.mxu0 %v4021
      %4397 = vmatprep.subr.bf16.mxu0 %v4026
      %4398 = vmatpush1.bf16.msra.mxu0 %v4025
      %4399 = vmatprep.subr.bf16.mxu0 %v4030
      %4400 = vmatpush1.bf16.msra.mxu0 %v4029
      %4401 = vmatprep.subr.bf16.mxu0 %v4034
      %4402 = vmatpush1.bf16.msra.mxu0 %v4033
      %4403 = vmatprep.subr.bf16.mxu0 %v4038
      %4404 = vmatpush1.bf16.msra.mxu0 %v4037
      %4405 = vmatprep.subr.bf16.mxu0 %v4042
      %4406 = vmatpush1.bf16.msra.mxu0 %v4041
      %4407 = vmatprep.subr.bf16.mxu0 %v4046
      %4408 = vmatpush1.bf16.msra.mxu0 %v4045
      %4409 = vmatprep.subr.bf16.mxu0 %v4050
      %4410 = vmatpush1.bf16.msra.mxu0 %v4049
      %4411 = vmatprep.subr.bf16.mxu0 %v4054
      %4412 = vmatpush1.bf16.msra.mxu0 %v4053
      %4413 = vmatprep.subr.bf16.mxu0 %v4058
      %4414 = vmatpush1.bf16.msra.mxu0 %v4057
      %4415 = vmatprep.subr.bf16.mxu0 %v4062
      %4416 = vmatpush1.bf16.msra.mxu0 %v4061
      %4417 = vmatprep.mubr.bf16.mxu0 %v2924
      %4418 = vmatmul.mubr.bf16.gmra.mrb[0].mxu0 %v2923
      %v4419 = vpop.f32.mrb[0].mxu0
      %v4420 = vadd.f32 %v3408, %v4419
      %v4421 = vpop.f32.mrb[0].mxu0
      %v4422 = vadd.f32 %v3412, %v4421
      %v4423 = vpop.f32.mrb[0].mxu0
      %v4424 = vadd.f32 %v3408, %v4423
      %v4425 = vpop.f32.mrb[0].mxu0
      %v4426 = vadd.f32 %v3412, %v4425
      %4427 = vmatprep.mubr.bf16.mxu0 %v2926
      %4428 = vmatmul.mubr.bf16.gmra.mrb[0].mxu0 %v2925
      %v4429 = vpop.f32.mrb[0].mxu0
      %v4430 = vadd.f32 %v3408, %v4429
      %v4431 = vpop.f32.mrb[0].mxu0
      %v4432 = vadd.f32 %v3412, %v4431
      %v4433 = vpop.f32.mrb[0].mxu0
      %v4434 = vadd.f32 %v3408, %v4433
      %v4435 = vpop.f32.mrb[0].mxu0
      %v4436 = vadd.f32 %v3412, %v4435
      %4437 = vmatprep.mubr.bf16.mxu0 %v2928
      %4438 = vmatmul.mubr.bf16.gmra.mrb[0].mxu0 %v2927
      %v4439 = vpop.f32.mrb[0].mxu0
      %v4440 = vadd.f32 %v3408, %v4439
      %v4441 = vpop.f32.mrb[0].mxu0
      %v4442 = vadd.f32 %v3412, %v4441
      %v4443 = vpop.f32.mrb[0].mxu0
      %v4444 = vadd.f32 %v3408, %v4443
      %v4445 = vpop.f32.mrb[0].mxu0
      %v4446 = vadd.f32 %v3412, %v4445
      %4447 = vmatprep.mubr.bf16.mxu0 %v2930
      %4448 = vmatmul.mubr.bf16.gmra.mrb[0].mxu0 %v2929
      %v4449 = vpop.f32.mrb[0].mxu0
      %v4450 = vadd.f32 %v3408, %v4449
      %v4451 = vpop.f32.mrb[0].mxu0
      %v4452 = vadd.f32 %v3412, %v4451
      %v4453 = vpop.f32.mrb[0].mxu0
      %v4454 = vadd.f32 %v3408, %v4453
      %v4455 = vpop.f32.mrb[0].mxu0
      %v4456 = vadd.f32 %v3412, %v4455
      %4457 = vmatprep.mubr.bf16.mxu0 %v2932
      %4458 = vmatmul.mubr.bf16.gmra.mrb[0].mxu0 %v2931
      %v4459 = vpop.f32.mrb[0].mxu0
      %v4460 = vadd.f32 %v3408, %v4459
      %v4461 = vpop.f32.mrb[0].mxu0
      %v4462 = vadd.f32 %v3412, %v4461
      %v4463 = vpop.f32.mrb[0].mxu0
      %v4464 = vadd.f32 %v3408, %v4463
      %v4465 = vpop.f32.mrb[0].mxu0
      %v4466 = vadd.f32 %v3412, %v4465
      %4467 = vmatprep.mubr.bf16.mxu0 %v2934
      %4468 = vmatmul.mubr.bf16.gmra.mrb[0].mxu0 %v2933
      %v4469 = vpop.f32.mrb[0].mxu0
      %v4470 = vadd.f32 %v3408, %v4469
      %v4471 = vpop.f32.mrb[0].mxu0
      %v4472 = vadd.f32 %v3412, %v4471
      %v4473 = vpop.f32.mrb[0].mxu0
      %v4474 = vadd.f32 %v3408, %v4473
      %v4475 = vpop.f32.mrb[0].mxu0
      %v4476 = vadd.f32 %v3412, %v4475
      %4477 = vmatprep.mubr.bf16.mxu0 %v2936
      %4478 = vmatmul.mubr.bf16.gmra.mrb[0].mxu0 %v2935
      %v4479 = vpop.f32.mrb[0].mxu0
      %v4480 = vadd.f32 %v3408, %v4479
      %v4481 = vpop.f32.mrb[0].mxu0
      %v4482 = vadd.f32 %v3412, %v4481
      %v4483 = vpop.f32.mrb[0].mxu0
      %v4484 = vadd.f32 %v3408, %v4483
      %v4485 = vpop.f32.mrb[0].mxu0
      %v4486 = vadd.f32 %v3412, %v4485
      %4487 = vmatprep.mubr.bf16.mxu0 %v2938
      %4488 = vmatmul.mubr.bf16.gmra.mrb[0].mxu0 %v2937
      %v4489 = vpop.f32.mrb[0].mxu0
      %v4490 = vadd.f32 %v3408, %v4489
      %v4491 = vpop.f32.mrb[0].mxu0
      %v4492 = vadd.f32 %v3412, %v4491
      %v4493 = vpop.f32.mrb[0].mxu0
      %v4494 = vadd.f32 %v3408, %v4493
      %v4495 = vpop.f32.mrb[0].mxu0
      %v4496 = vadd.f32 %v3412, %v4495
      %4497 = vmatprep.mubr.bf16.mxu0 %v2940
      %4498 = vmatmul.mubr.bf16.gmra.mrb[0].mxu0 %v2939
      %v4499 = vpop.f32.mrb[0].mxu0
      %v4500 = vadd.f32 %v3408, %v4499
      %v4501 = vpop.f32.mrb[0].mxu0
      %v4502 = vadd.f32 %v3412, %v4501
      %v4503 = vpop.f32.mrb[0].mxu0
      %v4504 = vadd.f32 %v3408, %v4503
      %v4505 = vpop.f32.mrb[0].mxu0
      %v4506 = vadd.f32 %v3412, %v4505
      %4507 = vmatprep.mubr.bf16.mxu0 %v2942
      %4508 = vmatmul.mubr.bf16.gmra.mrb[0].mxu0 %v2941
      %v4509 = vpop.f32.mrb[0].mxu0
      %v4510 = vadd.f32 %v3408, %v4509
      %v4511 = vpop.f32.mrb[0].mxu0
      %v4512 = vadd.f32 %v3412, %v4511
      %v4513 = vpop.f32.mrb[0].mxu0
      %v4514 = vadd.f32 %v3408, %v4513
      %v4515 = vpop.f32.mrb[0].mxu0
      %v4516 = vadd.f32 %v3412, %v4515
      %4517 = vmatprep.mubr.bf16.mxu0 %v2944
      %4518 = vmatmul.mubr.bf16.gmra.mrb[0].mxu0 %v2943
      %v4519 = vpop.f32.mrb[0].mxu0
      %v4520 = vadd.f32 %v3408, %v4519
      %v4521 = vpop.f32.mrb[0].mxu0
      %v4522 = vadd.f32 %v3412, %v4521
      %v4523 = vpop.f32.mrb[0].mxu0
      %v4524 = vadd.f32 %v3408, %v4523
      %v4525 = vpop.f32.mrb[0].mxu0
      %v4526 = vadd.f32 %v3412, %v4525
      %4527 = vmatprep.mubr.bf16.mxu0 %v2946
      %4528 = vmatmul.mubr.bf16.gmra.mrb[0].mxu0 %v2945
      %v4529 = vpop.f32.mrb[0].mxu0
      %v4530 = vadd.f32 %v3408, %v4529
      %v4531 = vpop.f32.mrb[0].mxu0
      %v4532 = vadd.f32 %v3412, %v4531
      %v4533 = vpop.f32.mrb[0].mxu0
      %v4534 = vadd.f32 %v3408, %v4533
      %v4535 = vpop.f32.mrb[0].mxu0
      %v4536 = vadd.f32 %v3412, %v4535
      %4537 = vmatprep.mubr.bf16.mxu0 %v2948
      %4538 = vmatmul.mubr.bf16.gmra.mrb[0].mxu0 %v2947
      %v4539 = vpop.f32.mrb[0].mxu0
      %v4540 = vadd.f32 %v3408, %v4539
      %v4541 = vpop.f32.mrb[0].mxu0
      %v4542 = vadd.f32 %v3412, %v4541
      %v4543 = vpop.f32.mrb[0].mxu0
      %v4544 = vadd.f32 %v3408, %v4543
      %v4545 = vpop.f32.mrb[0].mxu0
      %v4546 = vadd.f32 %v3412, %v4545
      %4547 = vmatprep.mubr.bf16.mxu0 %v2950
      %4548 = vmatmul.mubr.bf16.gmra.mrb[0].mxu0 %v2949
      %v4549 = vpop.f32.mrb[0].mxu0
      %v4550 = vadd.f32 %v3408, %v4549
      %v4551 = vpop.f32.mrb[0].mxu0
      %v4552 = vadd.f32 %v3412, %v4551
      %v4553 = vpop.f32.mrb[0].mxu0
      %v4554 = vadd.f32 %v3408, %v4553
      %v4555 = vpop.f32.mrb[0].mxu0
      %v4556 = vadd.f32 %v3412, %v4555
      %4557 = vmatprep.mubr.bf16.mxu0 %v2952
      %4558 = vmatmul.mubr.bf16.gmra.mrb[0].mxu0 %v2951
      %v4559 = vpop.f32.mrb[0].mxu0
      %v4560 = vadd.f32 %v3408, %v4559
      %v4561 = vpop.f32.mrb[0].mxu0
      %v4562 = vadd.f32 %v3412, %v4561
      %v4563 = vpop.f32.mrb[0].mxu0
      %v4564 = vadd.f32 %v3408, %v4563
      %v4565 = vpop.f32.mrb[0].mxu0
      %v4566 = vadd.f32 %v3412, %v4565
      %4567 = vmatprep.mubr.bf16.mxu0 %v2954
      %4568 = vmatmul.mubr.bf16.gmra.mrb[0].mxu0 %v2953
      %v4569 = vpop.f32.mrb[0].mxu0
      %v4570 = vadd.f32 %v3408, %v4569
      %v4571 = vpop.f32.mrb[0].mxu0
      %v4572 = vadd.f32 %v3412, %v4571
      %v4573 = vpop.f32.mrb[0].mxu0
      %v4574 = vadd.f32 %v3408, %v4573
      %v4575 = vpop.f32.mrb[0].mxu0
      %v4576 = vadd.f32 %v3412, %v4575
      %4577 = vdwg.mxu0
      %4578 = vmatprep.subr.bf16.mxu0 %v4066
      %4579 = vmatpush1.bf16.msra.mxu0 %v4065
      %4580 = vmatprep.subr.bf16.mxu0 %v4070
      %4581 = vmatpush1.bf16.msra.mxu0 %v4069
      %4582 = vmatprep.subr.bf16.mxu0 %v4074
      %4583 = vmatpush1.bf16.msra.mxu0 %v4073
      %4584 = vmatprep.subr.bf16.mxu0 %v4078
      %4585 = vmatpush1.bf16.msra.mxu0 %v4077
      %4586 = vmatprep.subr.bf16.mxu0 %v4082
      %4587 = vmatpush1.bf16.msra.mxu0 %v4081
      %4588 = vmatprep.subr.bf16.mxu0 %v4086
      %4589 = vmatpush1.bf16.msra.mxu0 %v4085
      %4590 = vmatprep.subr.bf16.mxu0 %v4090
      %4591 = vmatpush1.bf16.msra.mxu0 %v4089
      %4592 = vmatprep.subr.bf16.mxu0 %v4094
      %4593 = vmatpush1.bf16.msra.mxu0 %v4093
      %4594 = vmatprep.subr.bf16.mxu0 %v4098
      %4595 = vmatpush1.bf16.msra.mxu0 %v4097
      %4596 = vmatprep.subr.bf16.mxu0 %v4102
      %4597 = vmatpush1.bf16.msra.mxu0 %v4101
      %4598 = vmatprep.subr.bf16.mxu0 %v4106
      %4599 = vmatpush1.bf16.msra.mxu0 %v4105
      %4600 = vmatprep.subr.bf16.mxu0 %v4110
      %4601 = vmatpush1.bf16.msra.mxu0 %v4109
      %4602 = vmatprep.subr.bf16.mxu0 %v4114
      %4603 = vmatpush1.bf16.msra.mxu0 %v4113
      %4604 = vmatprep.subr.bf16.mxu0 %v4118
      %4605 = vmatpush1.bf16.msra.mxu0 %v4117
      %4606 = vmatprep.subr.bf16.mxu0 %v4122
      %4607 = vmatpush1.bf16.msra.mxu0 %v4121
      %4608 = vmatprep.subr.bf16.mxu0 %v4126
      %4609 = vmatpush1.bf16.msra.mxu0 %v4125
      %4610 = vmatprep.mubr.bf16.mxu0 %v3180
      %4611 = vmatmul.mubr.bf16.gmra.mrb[0].mxu0 %v3179
      %v4612 = vpop.f32.mrb[0].mxu0
      %v4613 = vadd.f32 %v4420, %v4612
      %v4614 = vpop.f32.mrb[0].mxu0
      %v4615 = vadd.f32 %v4422, %v4614
      %v4616 = vpop.f32.mrb[0].mxu0
      %v4617 = vadd.f32 %v4424, %v4616
      %v4618 = vpop.f32.mrb[0].mxu0
      %v4619 = vadd.f32 %v4426, %v4618
      %4620 = vmatprep.mubr.bf16.mxu0 %v3182
      %4621 = vmatmul.mubr.bf16.gmra.mrb[0].mxu0 %v3181
      %v4622 = vpop.f32.mrb[0].mxu0
      %v4623 = vadd.f32 %v4430, %v4622
      %v4624 = vpop.f32.mrb[0].mxu0
      %v4625 = vadd.f32 %v4432, %v4624
      %v4626 = vpop.f32.mrb[0].mxu0
      %v4627 = vadd.f32 %v4434, %v4626
      %v4628 = vpop.f32.mrb[0].mxu0
      %v4629 = vadd.f32 %v4436, %v4628
      %4630 = vmatprep.mubr.bf16.mxu0 %v3184
      %4631 = vmatmul.mubr.bf16.gmra.mrb[0].mxu0 %v3183
      %v4632 = vpop.f32.mrb[0].mxu0
      %v4633 = vadd.f32 %v4440, %v4632
      %v4634 = vpop.f32.mrb[0].mxu0
      %v4635 = vadd.f32 %v4442, %v4634
      %v4636 = vpop.f32.mrb[0].mxu0
      %v4637 = vadd.f32 %v4444, %v4636
      %v4638 = vpop.f32.mrb[0].mxu0
      %v4639 = vadd.f32 %v4446, %v4638
      %4640 = vmatprep.mubr.bf16.mxu0 %v3186
      %4641 = vmatmul.mubr.bf16.gmra.mrb[0].mxu0 %v3185
      %v4642 = vpop.f32.mrb[0].mxu0
      %v4643 = vadd.f32 %v4450, %v4642
      %v4644 = vpop.f32.mrb[0].mxu0
      %v4645 = vadd.f32 %v4452, %v4644
      %v4646 = vpop.f32.mrb[0].mxu0
      %v4647 = vadd.f32 %v4454, %v4646
      %v4648 = vpop.f32.mrb[0].mxu0
      %v4649 = vadd.f32 %v4456, %v4648
      %4650 = vmatprep.mubr.bf16.mxu0 %v3188
      %4651 = vmatmul.mubr.bf16.gmra.mrb[0].mxu0 %v3187
      %v4652 = vpop.f32.mrb[0].mxu0
      %v4653 = vadd.f32 %v4460, %v4652
      %v4654 = vpop.f32.mrb[0].mxu0
      %v4655 = vadd.f32 %v4462, %v4654
      %v4656 = vpop.f32.mrb[0].mxu0
      %v4657 = vadd.f32 %v4464, %v4656
      %v4658 = vpop.f32.mrb[0].mxu0
      %v4659 = vadd.f32 %v4466, %v4658
      %4660 = vmatprep.mubr.bf16.mxu0 %v3190
      %4661 = vmatmul.mubr.bf16.gmra.mrb[0].mxu0 %v3189
      %v4662 = vpop.f32.mrb[0].mxu0
      %v4663 = vadd.f32 %v4470, %v4662
      %v4664 = vpop.f32.mrb[0].mxu0
      %v4665 = vadd.f32 %v4472, %v4664
      %v4666 = vpop.f32.mrb[0].mxu0
      %v4667 = vadd.f32 %v4474, %v4666
      %v4668 = vpop.f32.mrb[0].mxu0
      %v4669 = vadd.f32 %v4476, %v4668
      %4670 = vmatprep.mubr.bf16.mxu0 %v3192
      %4671 = vmatmul.mubr.bf16.gmra.mrb[0].mxu0 %v3191
      %v4672 = vpop.f32.mrb[0].mxu0
      %v4673 = vadd.f32 %v4480, %v4672
      %v4674 = vpop.f32.mrb[0].mxu0
      %v4675 = vadd.f32 %v4482, %v4674
      %v4676 = vpop.f32.mrb[0].mxu0
      %v4677 = vadd.f32 %v4484, %v4676
      %v4678 = vpop.f32.mrb[0].mxu0
      %v4679 = vadd.f32 %v4486, %v4678
      %4680 = vmatprep.mubr.bf16.mxu0 %v3194
      %4681 = vmatmul.mubr.bf16.gmra.mrb[0].mxu0 %v3193
      %v4682 = vpop.f32.mrb[0].mxu0
      %v4683 = vadd.f32 %v4490, %v4682
      %v4684 = vpop.f32.mrb[0].mxu0
      %v4685 = vadd.f32 %v4492, %v4684
      %v4686 = vpop.f32.mrb[0].mxu0
      %v4687 = vadd.f32 %v4494, %v4686
      %v4688 = vpop.f32.mrb[0].mxu0
      %v4689 = vadd.f32 %v4496, %v4688
      %4690 = vmatprep.mubr.bf16.mxu0 %v3196
      %4691 = vmatmul.mubr.bf16.gmra.mrb[0].mxu0 %v3195
      %v4692 = vpop.f32.mrb[0].mxu0
      %v4693 = vadd.f32 %v4500, %v4692
      %v4694 = vpop.f32.mrb[0].mxu0
      %v4695 = vadd.f32 %v4502, %v4694
      %v4696 = vpop.f32.mrb[0].mxu0
      %v4697 = vadd.f32 %v4504, %v4696
      %v4698 = vpop.f32.mrb[0].mxu0
      %v4699 = vadd.f32 %v4506, %v4698
      %4700 = vmatprep.mubr.bf16.mxu0 %v3198
      %4701 = vmatmul.mubr.bf16.gmra.mrb[0].mxu0 %v3197
      %v4702 = vpop.f32.mrb[0].mxu0
      %v4703 = vadd.f32 %v4510, %v4702
      %v4704 = vpop.f32.mrb[0].mxu0
      %v4705 = vadd.f32 %v4512, %v4704
      %v4706 = vpop.f32.mrb[0].mxu0
      %v4707 = vadd.f32 %v4514, %v4706
      %v4708 = vpop.f32.mrb[0].mxu0
      %v4709 = vadd.f32 %v4516, %v4708
      %4710 = vmatprep.mubr.bf16.mxu0 %v3200
      %4711 = vmatmul.mubr.bf16.gmra.mrb[0].mxu0 %v3199
      %v4712 = vpop.f32.mrb[0].mxu0
      %v4713 = vadd.f32 %v4520, %v4712
      %v4714 = vpop.f32.mrb[0].mxu0
      %v4715 = vadd.f32 %v4522, %v4714
      %v4716 = vpop.f32.mrb[0].mxu0
      %v4717 = vadd.f32 %v4524, %v4716
      %v4718 = vpop.f32.mrb[0].mxu0
      %v4719 = vadd.f32 %v4526, %v4718
      %4720 = vmatprep.mubr.bf16.mxu0 %v3202
      %4721 = vmatmul.mubr.bf16.gmra.mrb[0].mxu0 %v3201
      %v4722 = vpop.f32.mrb[0].mxu0
      %v4723 = vadd.f32 %v4530, %v4722
      %v4724 = vpop.f32.mrb[0].mxu0
      %v4725 = vadd.f32 %v4532, %v4724
      %v4726 = vpop.f32.mrb[0].mxu0
      %v4727 = vadd.f32 %v4534, %v4726
      %v4728 = vpop.f32.mrb[0].mxu0
      %v4729 = vadd.f32 %v4536, %v4728
      %4730 = vmatprep.mubr.bf16.mxu0 %v3204
      %4731 = vmatmul.mubr.bf16.gmra.mrb[0].mxu0 %v3203
      %v4732 = vpop.f32.mrb[0].mxu0
      %v4733 = vadd.f32 %v4540, %v4732
      %v4734 = vpop.f32.mrb[0].mxu0
      %v4735 = vadd.f32 %v4542, %v4734
      %v4736 = vpop.f32.mrb[0].mxu0
      %v4737 = vadd.f32 %v4544, %v4736
      %v4738 = vpop.f32.mrb[0].mxu0
      %v4739 = vadd.f32 %v4546, %v4738
      %4740 = vmatprep.mubr.bf16.mxu0 %v3206
      %4741 = vmatmul.mubr.bf16.gmra.mrb[0].mxu0 %v3205
      %v4742 = vpop.f32.mrb[0].mxu0
      %v4743 = vadd.f32 %v4550, %v4742
      %v4744 = vpop.f32.mrb[0].mxu0
      %v4745 = vadd.f32 %v4552, %v4744
      %v4746 = vpop.f32.mrb[0].mxu0
      %v4747 = vadd.f32 %v4554, %v4746
      %v4748 = vpop.f32.mrb[0].mxu0
      %v4749 = vadd.f32 %v4556, %v4748
      %4750 = vmatprep.mubr.bf16.mxu0 %v3208
      %4751 = vmatmul.mubr.bf16.gmra.mrb[0].mxu0 %v3207
      %v4752 = vpop.f32.mrb[0].mxu0
      %v4753 = vadd.f32 %v4560, %v4752
      %v4754 = vpop.f32.mrb[0].mxu0
      %v4755 = vadd.f32 %v4562, %v4754
      %v4756 = vpop.f32.mrb[0].mxu0
      %v4757 = vadd.f32 %v4564, %v4756
      %v4758 = vpop.f32.mrb[0].mxu0
      %v4759 = vadd.f32 %v4566, %v4758
      %4760 = vmatprep.mubr.bf16.mxu0 %v3210
      %4761 = vmatmul.mubr.bf16.gmra.mrb[0].mxu0 %v3209
      %v4762 = vpop.f32.mrb[0].mxu0
      %v4763 = vadd.f32 %v4570, %v4762
      %v4764 = vpop.f32.mrb[0].mxu0
      %v4765 = vadd.f32 %v4572, %v4764
      %v4766 = vpop.f32.mrb[0].mxu0
      %v4767 = vadd.f32 %v4574, %v4766
      %v4768 = vpop.f32.mrb[0].mxu0
      %v4769 = vadd.f32 %v4576, %v4768
      %4770 = vdwg.mxu0
      %4771 = vmatprep.subr.bf16.mxu0 %v4130
      %4772 = vmatpush1.bf16.msra.mxu0 %v4129
      %4773 = vmatprep.subr.bf16.mxu0 %v4134
      %4774 = vmatpush1.bf16.msra.mxu0 %v4133
      %4775 = vmatprep.subr.bf16.mxu0 %v4138
      %4776 = vmatpush1.bf16.msra.mxu0 %v4137
      %4777 = vmatprep.subr.bf16.mxu0 %v4142
      %4778 = vmatpush1.bf16.msra.mxu0 %v4141
      %4779 = vmatprep.subr.bf16.mxu0 %v4146
      %4780 = vmatpush1.bf16.msra.mxu0 %v4145
      %4781 = vmatprep.subr.bf16.mxu0 %v4150
      %4782 = vmatpush1.bf16.msra.mxu0 %v4149
      %4783 = vmatprep.subr.bf16.mxu0 %v4154
      %4784 = vmatpush1.bf16.msra.mxu0 %v4153
      %4785 = vmatprep.subr.bf16.mxu0 %v4158
      %4786 = vmatpush1.bf16.msra.mxu0 %v4157
      %4787 = vmatprep.subr.bf16.mxu0 %v4162
      %4788 = vmatpush1.bf16.msra.mxu0 %v4161
      %4789 = vmatprep.subr.bf16.mxu0 %v4166
      %4790 = vmatpush1.bf16.msra.mxu0 %v4165
      %4791 = vmatprep.subr.bf16.mxu0 %v4170
      %4792 = vmatpush1.bf16.msra.mxu0 %v4169
      %4793 = vmatprep.subr.bf16.mxu0 %v4174
      %4794 = vmatpush1.bf16.msra.mxu0 %v4173
      %4795 = vmatprep.subr.bf16.mxu0 %v4178
      %4796 = vmatpush1.bf16.msra.mxu0 %v4177
      %4797 = vmatprep.subr.bf16.mxu0 %v4182
      %4798 = vmatpush1.bf16.msra.mxu0 %v4181
      %4799 = vmatprep.subr.bf16.mxu0 %v4186
      %4800 = vmatpush1.bf16.msra.mxu0 %v4185
      %4801 = vmatprep.subr.bf16.mxu0 %v4190
      %4802 = vmatpush1.bf16.msra.mxu0 %v4189
      %4803 = vmatprep.mubr.bf16.mxu0 %v3148
      %4804 = vmatmul.mubr.bf16.gmra.mrb[0].mxu0 %v3147
      %v4805 = vpop.f32.mrb[0].mxu0
      %v4806 = vadd.f32 %v4613, %v4805
      %v4807 = vpop.f32.mrb[0].mxu0
      %v4808 = vadd.f32 %v4615, %v4807
      %v4809 = vpop.f32.mrb[0].mxu0
      %v4810 = vadd.f32 %v4617, %v4809
      %v4811 = vpop.f32.mrb[0].mxu0
      %v4812 = vadd.f32 %v4619, %v4811
      %4813 = vmatprep.mubr.bf16.mxu0 %v3150
      %4814 = vmatmul.mubr.bf16.gmra.mrb[0].mxu0 %v3149
      %v4815 = vpop.f32.mrb[0].mxu0
      %v4816 = vadd.f32 %v4623, %v4815
      %v4817 = vpop.f32.mrb[0].mxu0
      %v4818 = vadd.f32 %v4625, %v4817
      %v4819 = vpop.f32.mrb[0].mxu0
      %v4820 = vadd.f32 %v4627, %v4819
      %v4821 = vpop.f32.mrb[0].mxu0
      %v4822 = vadd.f32 %v4629, %v4821
      %4823 = vmatprep.mubr.bf16.mxu0 %v3152
      %4824 = vmatmul.mubr.bf16.gmra.mrb[0].mxu0 %v3151
      %v4825 = vpop.f32.mrb[0].mxu0
      %v4826 = vadd.f32 %v4633, %v4825
      %v4827 = vpop.f32.mrb[0].mxu0
      %v4828 = vadd.f32 %v4635, %v4827
      %v4829 = vpop.f32.mrb[0].mxu0
      %v4830 = vadd.f32 %v4637, %v4829
      %v4831 = vpop.f32.mrb[0].mxu0
      %v4832 = vadd.f32 %v4639, %v4831
      %4833 = vmatprep.mubr.bf16.mxu0 %v3154
      %4834 = vmatmul.mubr.bf16.gmra.mrb[0].mxu0 %v3153
      %v4835 = vpop.f32.mrb[0].mxu0
      %v4836 = vadd.f32 %v4643, %v4835
      %v4837 = vpop.f32.mrb[0].mxu0
      %v4838 = vadd.f32 %v4645, %v4837
      %v4839 = vpop.f32.mrb[0].mxu0
      %v4840 = vadd.f32 %v4647, %v4839
      %v4841 = vpop.f32.mrb[0].mxu0
      %v4842 = vadd.f32 %v4649, %v4841
      %4843 = vmatprep.mubr.bf16.mxu0 %v3156
      %4844 = vmatmul.mubr.bf16.gmra.mrb[0].mxu0 %v3155
      %v4845 = vpop.f32.mrb[0].mxu0
      %v4846 = vadd.f32 %v4653, %v4845
      %v4847 = vpop.f32.mrb[0].mxu0
      %v4848 = vadd.f32 %v4655, %v4847
      %v4849 = vpop.f32.mrb[0].mxu0
      %v4850 = vadd.f32 %v4657, %v4849
      %v4851 = vpop.f32.mrb[0].mxu0
      %v4852 = vadd.f32 %v4659, %v4851
      %4853 = vmatprep.mubr.bf16.mxu0 %v3158
      %4854 = vmatmul.mubr.bf16.gmra.mrb[0].mxu0 %v3157
      %v4855 = vpop.f32.mrb[0].mxu0
      %v4856 = vadd.f32 %v4663, %v4855
      %v4857 = vpop.f32.mrb[0].mxu0
      %v4858 = vadd.f32 %v4665, %v4857
      %v4859 = vpop.f32.mrb[0].mxu0
      %v4860 = vadd.f32 %v4667, %v4859
      %v4861 = vpop.f32.mrb[0].mxu0
      %v4862 = vadd.f32 %v4669, %v4861
      %4863 = vmatprep.mubr.bf16.mxu0 %v3160
      %4864 = vmatmul.mubr.bf16.gmra.mrb[0].mxu0 %v3159
      %v4865 = vpop.f32.mrb[0].mxu0
      %v4866 = vadd.f32 %v4673, %v4865
      %v4867 = vpop.f32.mrb[0].mxu0
      %v4868 = vadd.f32 %v4675, %v4867
      %v4869 = vpop.f32.mrb[0].mxu0
      %v4870 = vadd.f32 %v4677, %v4869
      %v4871 = vpop.f32.mrb[0].mxu0
      %v4872 = vadd.f32 %v4679, %v4871
      %4873 = vmatprep.mubr.bf16.mxu0 %v3162
      %4874 = vmatmul.mubr.bf16.gmra.mrb[0].mxu0 %v3161
      %v4875 = vpop.f32.mrb[0].mxu0
      %v4876 = vadd.f32 %v4683, %v4875
      %v4877 = vpop.f32.mrb[0].mxu0
      %v4878 = vadd.f32 %v4685, %v4877
      %v4879 = vpop.f32.mrb[0].mxu0
      %v4880 = vadd.f32 %v4687, %v4879
      %v4881 = vpop.f32.mrb[0].mxu0
      %v4882 = vadd.f32 %v4689, %v4881
      %4883 = vmatprep.mubr.bf16.mxu0 %v3164
      %4884 = vmatmul.mubr.bf16.gmra.mrb[0].mxu0 %v3163
      %v4885 = vpop.f32.mrb[0].mxu0
      %v4886 = vadd.f32 %v4693, %v4885
      %v4887 = vpop.f32.mrb[0].mxu0
      %v4888 = vadd.f32 %v4695, %v4887
      %v4889 = vpop.f32.mrb[0].mxu0
      %v4890 = vadd.f32 %v4697, %v4889
      %v4891 = vpop.f32.mrb[0].mxu0
      %v4892 = vadd.f32 %v4699, %v4891
      %4893 = vmatprep.mubr.bf16.mxu0 %v3166
      %4894 = vmatmul.mubr.bf16.gmra.mrb[0].mxu0 %v3165
      %v4895 = vpop.f32.mrb[0].mxu0
      %v4896 = vadd.f32 %v4703, %v4895
      %v4897 = vpop.f32.mrb[0].mxu0
      %v4898 = vadd.f32 %v4705, %v4897
      %v4899 = vpop.f32.mrb[0].mxu0
      %v4900 = vadd.f32 %v4707, %v4899
      %v4901 = vpop.f32.mrb[0].mxu0
      %v4902 = vadd.f32 %v4709, %v4901
      %4903 = vmatprep.mubr.bf16.mxu0 %v3168
      %4904 = vmatmul.mubr.bf16.gmra.mrb[0].mxu0 %v3167
      %v4905 = vpop.f32.mrb[0].mxu0
      %v4906 = vadd.f32 %v4713, %v4905
      %v4907 = vpop.f32.mrb[0].mxu0
      %v4908 = vadd.f32 %v4715, %v4907
      %v4909 = vpop.f32.mrb[0].mxu0
      %v4910 = vadd.f32 %v4717, %v4909
      %v4911 = vpop.f32.mrb[0].mxu0
      %v4912 = vadd.f32 %v4719, %v4911
      %4913 = vmatprep.mubr.bf16.mxu0 %v3170
      %4914 = vmatmul.mubr.bf16.gmra.mrb[0].mxu0 %v3169
      %v4915 = vpop.f32.mrb[0].mxu0
      %v4916 = vadd.f32 %v4723, %v4915
      %v4917 = vpop.f32.mrb[0].mxu0
      %v4918 = vadd.f32 %v4725, %v4917
      %v4919 = vpop.f32.mrb[0].mxu0
      %v4920 = vadd.f32 %v4727, %v4919
      %v4921 = vpop.f32.mrb[0].mxu0
      %v4922 = vadd.f32 %v4729, %v4921
      %4923 = vmatprep.mubr.bf16.mxu0 %v3172
      %4924 = vmatmul.mubr.bf16.gmra.mrb[0].mxu0 %v3171
      %v4925 = vpop.f32.mrb[0].mxu0
      %v4926 = vadd.f32 %v4733, %v4925
      %v4927 = vpop.f32.mrb[0].mxu0
      %v4928 = vadd.f32 %v4735, %v4927
      %v4929 = vpop.f32.mrb[0].mxu0
      %v4930 = vadd.f32 %v4737, %v4929
      %v4931 = vpop.f32.mrb[0].mxu0
      %v4932 = vadd.f32 %v4739, %v4931
      %4933 = vmatprep.mubr.bf16.mxu0 %v3174
      %4934 = vmatmul.mubr.bf16.gmra.mrb[0].mxu0 %v3173
      %v4935 = vpop.f32.mrb[0].mxu0
      %v4936 = vadd.f32 %v4743, %v4935
      %v4937 = vpop.f32.mrb[0].mxu0
      %v4938 = vadd.f32 %v4745, %v4937
      %v4939 = vpop.f32.mrb[0].mxu0
      %v4940 = vadd.f32 %v4747, %v4939
      %v4941 = vpop.f32.mrb[0].mxu0
      %v4942 = vadd.f32 %v4749, %v4941
      %4943 = vmatprep.mubr.bf16.mxu0 %v3176
      %4944 = vmatmul.mubr.bf16.gmra.mrb[0].mxu0 %v3175
      %v4945 = vpop.f32.mrb[0].mxu0
      %v4946 = vadd.f32 %v4753, %v4945
      %v4947 = vpop.f32.mrb[0].mxu0
      %v4948 = vadd.f32 %v4755, %v4947
      %v4949 = vpop.f32.mrb[0].mxu0
      %v4950 = vadd.f32 %v4757, %v4949
      %v4951 = vpop.f32.mrb[0].mxu0
      %v4952 = vadd.f32 %v4759, %v4951
      %4953 = vmatprep.mubr.bf16.mxu0 %v3178
      %4954 = vmatmul.mubr.bf16.gmra.mrb[0].mxu0 %v3177
      %v4955 = vpop.f32.mrb[0].mxu0
      %v4956 = vadd.f32 %v4763, %v4955
      %v4957 = vpop.f32.mrb[0].mxu0
      %v4958 = vadd.f32 %v4765, %v4957
      %v4959 = vpop.f32.mrb[0].mxu0
      %v4960 = vadd.f32 %v4767, %v4959
      %v4961 = vpop.f32.mrb[0].mxu0
      %v4962 = vadd.f32 %v4769, %v4961
      %4963 = vdwg.mxu0
      %4964 = vmatprep.subr.bf16.mxu0 %v4004
      %4965 = vmatpush1.bf16.msra.mxu0 %v4003
      %4966 = vmatprep.subr.bf16.mxu0 %v4008
      %4967 = vmatpush1.bf16.msra.mxu0 %v4007
      %4968 = vmatprep.subr.bf16.mxu0 %v4012
      %4969 = vmatpush1.bf16.msra.mxu0 %v4011
      %4970 = vmatprep.subr.bf16.mxu0 %v4016
      %4971 = vmatpush1.bf16.msra.mxu0 %v4015
      %4972 = vmatprep.subr.bf16.mxu0 %v4020
      %4973 = vmatpush1.bf16.msra.mxu0 %v4019
      %4974 = vmatprep.subr.bf16.mxu0 %v4024
      %4975 = vmatpush1.bf16.msra.mxu0 %v4023
      %4976 = vmatprep.subr.bf16.mxu0 %v4028
      %4977 = vmatpush1.bf16.msra.mxu0 %v4027
      %4978 = vmatprep.subr.bf16.mxu0 %v4032
      %4979 = vmatpush1.bf16.msra.mxu0 %v4031
      %4980 = vmatprep.subr.bf16.mxu0 %v4036
      %4981 = vmatpush1.bf16.msra.mxu0 %v4035
      %4982 = vmatprep.subr.bf16.mxu0 %v4040
      %4983 = vmatpush1.bf16.msra.mxu0 %v4039
      %4984 = vmatprep.subr.bf16.mxu0 %v4044
      %4985 = vmatpush1.bf16.msra.mxu0 %v4043
      %4986 = vmatprep.subr.bf16.mxu0 %v4048
      %4987 = vmatpush1.bf16.msra.mxu0 %v4047
      %4988 = vmatprep.subr.bf16.mxu0 %v4052
      %4989 = vmatpush1.bf16.msra.mxu0 %v4051
      %4990 = vmatprep.subr.bf16.mxu0 %v4056
      %4991 = vmatpush1.bf16.msra.mxu0 %v4055
      %4992 = vmatprep.subr.bf16.mxu0 %v4060
      %4993 = vmatpush1.bf16.msra.mxu0 %v4059
      %4994 = vmatprep.subr.bf16.mxu0 %v4064
      %4995 = vmatpush1.bf16.msra.mxu0 %v4063
      %4996 = vmatprep.mubr.bf16.mxu0 %v2924
      %4997 = vmatmul.mubr.bf16.gmra.mrb[0].mxu0 %v2923
      %v4998 = vpop.f32.mrb[0].mxu0
      %v4999 = vadd.f32 %v3416, %v4998
      %v5000 = vpop.f32.mrb[0].mxu0
      %v5001 = vadd.f32 %v3420, %v5000
      %v5002 = vpop.f32.mrb[0].mxu0
      %v5003 = vadd.f32 %v3416, %v5002
      %v5004 = vpop.f32.mrb[0].mxu0
      %v5005 = vadd.f32 %v3420, %v5004
      %5006 = vmatprep.mubr.bf16.mxu0 %v2926
      %5007 = vmatmul.mubr.bf16.gmra.mrb[0].mxu0 %v2925
      %v5008 = vpop.f32.mrb[0].mxu0
      %v5009 = vadd.f32 %v3416, %v5008
      %v5010 = vpop.f32.mrb[0].mxu0
      %v5011 = vadd.f32 %v3420, %v5010
      %v5012 = vpop.f32.mrb[0].mxu0
      %v5013 = vadd.f32 %v3416, %v5012
      %v5014 = vpop.f32.mrb[0].mxu0
      %v5015 = vadd.f32 %v3420, %v5014
      %5016 = vmatprep.mubr.bf16.mxu0 %v2928
      %5017 = vmatmul.mubr.bf16.gmra.mrb[0].mxu0 %v2927
      %v5018 = vpop.f32.mrb[0].mxu0
      %v5019 = vadd.f32 %v3416, %v5018
      %v5020 = vpop.f32.mrb[0].mxu0
      %v5021 = vadd.f32 %v3420, %v5020
      %v5022 = vpop.f32.mrb[0].mxu0
      %v5023 = vadd.f32 %v3416, %v5022
      %v5024 = vpop.f32.mrb[0].mxu0
      %v5025 = vadd.f32 %v3420, %v5024
      %5026 = vmatprep.mubr.bf16.mxu0 %v2930
      %5027 = vmatmul.mubr.bf16.gmra.mrb[0].mxu0 %v2929
      %v5028 = vpop.f32.mrb[0].mxu0
      %v5029 = vadd.f32 %v3416, %v5028
      %v5030 = vpop.f32.mrb[0].mxu0
      %v5031 = vadd.f32 %v3420, %v5030
      %v5032 = vpop.f32.mrb[0].mxu0
      %v5033 = vadd.f32 %v3416, %v5032
      %v5034 = vpop.f32.mrb[0].mxu0
      %v5035 = vadd.f32 %v3420, %v5034
      %5036 = vmatprep.mubr.bf16.mxu0 %v2932
      %5037 = vmatmul.mubr.bf16.gmra.mrb[0].mxu0 %v2931
      %v5038 = vpop.f32.mrb[0].mxu0
      %v5039 = vadd.f32 %v3416, %v5038
      %v5040 = vpop.f32.mrb[0].mxu0
      %v5041 = vadd.f32 %v3420, %v5040
      %v5042 = vpop.f32.mrb[0].mxu0
      %v5043 = vadd.f32 %v3416, %v5042
      %v5044 = vpop.f32.mrb[0].mxu0
      %v5045 = vadd.f32 %v3420, %v5044
      %5046 = vmatprep.mubr.bf16.mxu0 %v2934
      %5047 = vmatmul.mubr.bf16.gmra.mrb[0].mxu0 %v2933
      %v5048 = vpop.f32.mrb[0].mxu0
      %v5049 = vadd.f32 %v3416, %v5048
      %v5050 = vpop.f32.mrb[0].mxu0
      %v5051 = vadd.f32 %v3420, %v5050
      %v5052 = vpop.f32.mrb[0].mxu0
      %v5053 = vadd.f32 %v3416, %v5052
      %v5054 = vpop.f32.mrb[0].mxu0
      %v5055 = vadd.f32 %v3420, %v5054
      %5056 = vmatprep.mubr.bf16.mxu0 %v2936
      %5057 = vmatmul.mubr.bf16.gmra.mrb[0].mxu0 %v2935
      %v5058 = vpop.f32.mrb[0].mxu0
      %v5059 = vadd.f32 %v3416, %v5058
      %v5060 = vpop.f32.mrb[0].mxu0
      %v5061 = vadd.f32 %v3420, %v5060
      %v5062 = vpop.f32.mrb[0].mxu0
      %v5063 = vadd.f32 %v3416, %v5062
      %v5064 = vpop.f32.mrb[0].mxu0
      %v5065 = vadd.f32 %v3420, %v5064
      %5066 = vmatprep.mubr.bf16.mxu0 %v2938
      %5067 = vmatmul.mubr.bf16.gmra.mrb[0].mxu0 %v2937
      %v5068 = vpop.f32.mrb[0].mxu0
      %v5069 = vadd.f32 %v3416, %v5068
      %v5070 = vpop.f32.mrb[0].mxu0
      %v5071 = vadd.f32 %v3420, %v5070
      %v5072 = vpop.f32.mrb[0].mxu0
      %v5073 = vadd.f32 %v3416, %v5072
      %v5074 = vpop.f32.mrb[0].mxu0
      %v5075 = vadd.f32 %v3420, %v5074
      %5076 = vmatprep.mubr.bf16.mxu0 %v2940
      %5077 = vmatmul.mubr.bf16.gmra.mrb[0].mxu0 %v2939
      %v5078 = vpop.f32.mrb[0].mxu0
      %v5079 = vadd.f32 %v3416, %v5078
      %v5080 = vpop.f32.mrb[0].mxu0
      %v5081 = vadd.f32 %v3420, %v5080
      %v5082 = vpop.f32.mrb[0].mxu0
      %v5083 = vadd.f32 %v3416, %v5082
      %v5084 = vpop.f32.mrb[0].mxu0
      %v5085 = vadd.f32 %v3420, %v5084
      %5086 = vmatprep.mubr.bf16.mxu0 %v2942
      %5087 = vmatmul.mubr.bf16.gmra.mrb[0].mxu0 %v2941
      %v5088 = vpop.f32.mrb[0].mxu0
      %v5089 = vadd.f32 %v3416, %v5088
      %v5090 = vpop.f32.mrb[0].mxu0
      %v5091 = vadd.f32 %v3420, %v5090
      %v5092 = vpop.f32.mrb[0].mxu0
      %v5093 = vadd.f32 %v3416, %v5092
      %v5094 = vpop.f32.mrb[0].mxu0
      %v5095 = vadd.f32 %v3420, %v5094
      %5096 = vmatprep.mubr.bf16.mxu0 %v2944
      %5097 = vmatmul.mubr.bf16.gmra.mrb[0].mxu0 %v2943
      %v5098 = vpop.f32.mrb[0].mxu0
      %v5099 = vadd.f32 %v3416, %v5098
      %v5100 = vpop.f32.mrb[0].mxu0
      %v5101 = vadd.f32 %v3420, %v5100
      %v5102 = vpop.f32.mrb[0].mxu0
      %v5103 = vadd.f32 %v3416, %v5102
      %v5104 = vpop.f32.mrb[0].mxu0
      %v5105 = vadd.f32 %v3420, %v5104
      %5106 = vmatprep.mubr.bf16.mxu0 %v2946
      %5107 = vmatmul.mubr.bf16.gmra.mrb[0].mxu0 %v2945
      %v5108 = vpop.f32.mrb[0].mxu0
      %v5109 = vadd.f32 %v3416, %v5108
      %v5110 = vpop.f32.mrb[0].mxu0
      %v5111 = vadd.f32 %v3420, %v5110
      %v5112 = vpop.f32.mrb[0].mxu0
      %v5113 = vadd.f32 %v3416, %v5112
      %v5114 = vpop.f32.mrb[0].mxu0
      %v5115 = vadd.f32 %v3420, %v5114
      %5116 = vmatprep.mubr.bf16.mxu0 %v2948
      %5117 = vmatmul.mubr.bf16.gmra.mrb[0].mxu0 %v2947
      %v5118 = vpop.f32.mrb[0].mxu0
      %v5119 = vadd.f32 %v3416, %v5118
      %v5120 = vpop.f32.mrb[0].mxu0
      %v5121 = vadd.f32 %v3420, %v5120
      %v5122 = vpop.f32.mrb[0].mxu0
      %v5123 = vadd.f32 %v3416, %v5122
      %v5124 = vpop.f32.mrb[0].mxu0
      %v5125 = vadd.f32 %v3420, %v5124
      %5126 = vmatprep.mubr.bf16.mxu0 %v2950
      %5127 = vmatmul.mubr.bf16.gmra.mrb[0].mxu0 %v2949
      %v5128 = vpop.f32.mrb[0].mxu0
      %v5129 = vadd.f32 %v3416, %v5128
      %v5130 = vpop.f32.mrb[0].mxu0
      %v5131 = vadd.f32 %v3420, %v5130
      %v5132 = vpop.f32.mrb[0].mxu0
      %v5133 = vadd.f32 %v3416, %v5132
      %v5134 = vpop.f32.mrb[0].mxu0
      %v5135 = vadd.f32 %v3420, %v5134
      %5136 = vmatprep.mubr.bf16.mxu0 %v2952
      %5137 = vmatmul.mubr.bf16.gmra.mrb[0].mxu0 %v2951
      %v5138 = vpop.f32.mrb[0].mxu0
      %v5139 = vadd.f32 %v3416, %v5138
      %v5140 = vpop.f32.mrb[0].mxu0
      %v5141 = vadd.f32 %v3420, %v5140
      %v5142 = vpop.f32.mrb[0].mxu0
      %v5143 = vadd.f32 %v3416, %v5142
      %v5144 = vpop.f32.mrb[0].mxu0
      %v5145 = vadd.f32 %v3420, %v5144
      %5146 = vmatprep.mubr.bf16.mxu0 %v2954
      %5147 = vmatmul.mubr.bf16.gmra.mrb[0].mxu0 %v2953
      %v5148 = vpop.f32.mrb[0].mxu0
      %v5149 = vadd.f32 %v3416, %v5148
      %v5150 = vpop.f32.mrb[0].mxu0
      %v5151 = vadd.f32 %v3420, %v5150
      %v5152 = vpop.f32.mrb[0].mxu0
      %v5153 = vadd.f32 %v3416, %v5152
      %v5154 = vpop.f32.mrb[0].mxu0
      %v5155 = vadd.f32 %v3420, %v5154
      %5156 = vdwg.mxu0
      %5157 = vmatprep.subr.bf16.mxu0 %v4068
      %5158 = vmatpush1.bf16.msra.mxu0 %v4067
      %5159 = vmatprep.subr.bf16.mxu0 %v4072
      %5160 = vmatpush1.bf16.msra.mxu0 %v4071
      %5161 = vmatprep.subr.bf16.mxu0 %v4076
      %5162 = vmatpush1.bf16.msra.mxu0 %v4075
      %5163 = vmatprep.subr.bf16.mxu0 %v4080
      %5164 = vmatpush1.bf16.msra.mxu0 %v4079
      %5165 = vmatprep.subr.bf16.mxu0 %v4084
      %5166 = vmatpush1.bf16.msra.mxu0 %v4083
      %5167 = vmatprep.subr.bf16.mxu0 %v4088
      %5168 = vmatpush1.bf16.msra.mxu0 %v4087
      %5169 = vmatprep.subr.bf16.mxu0 %v4092
      %5170 = vmatpush1.bf16.msra.mxu0 %v4091
      %5171 = vmatprep.subr.bf16.mxu0 %v4096
      %5172 = vmatpush1.bf16.msra.mxu0 %v4095
      %5173 = vmatprep.subr.bf16.mxu0 %v4100
      %5174 = vmatpush1.bf16.msra.mxu0 %v4099
      %5175 = vmatprep.subr.bf16.mxu0 %v4104
      %5176 = vmatpush1.bf16.msra.mxu0 %v4103
      %5177 = vmatprep.subr.bf16.mxu0 %v4108
      %5178 = vmatpush1.bf16.msra.mxu0 %v4107
      %5179 = vmatprep.subr.bf16.mxu0 %v4112
      %5180 = vmatpush1.bf16.msra.mxu0 %v4111
      %5181 = vmatprep.subr.bf16.mxu0 %v4116
      %5182 = vmatpush1.bf16.msra.mxu0 %v4115
      %5183 = vmatprep.subr.bf16.mxu0 %v4120
      %5184 = vmatpush1.bf16.msra.mxu0 %v4119
      %5185 = vmatprep.subr.bf16.mxu0 %v4124
      %5186 = vmatpush1.bf16.msra.mxu0 %v4123
      %5187 = vmatprep.subr.bf16.mxu0 %v4128
      %5188 = vmatpush1.bf16.msra.mxu0 %v4127
      %5189 = vmatprep.mubr.bf16.mxu0 %v3180
      %5190 = vmatmul.mubr.bf16.gmra.mrb[0].mxu0 %v3179
      %v5191 = vpop.f32.mrb[0].mxu0
      %v5192 = vadd.f32 %v4999, %v5191
      %v5193 = vpop.f32.mrb[0].mxu0
      %v5194 = vadd.f32 %v5001, %v5193
      %v5195 = vpop.f32.mrb[0].mxu0
      %v5196 = vadd.f32 %v5003, %v5195
      %v5197 = vpop.f32.mrb[0].mxu0
      %v5198 = vadd.f32 %v5005, %v5197
      %5199 = vmatprep.mubr.bf16.mxu0 %v3182
      %5200 = vmatmul.mubr.bf16.gmra.mrb[0].mxu0 %v3181
      %v5201 = vpop.f32.mrb[0].mxu0
      %v5202 = vadd.f32 %v5009, %v5201
      %v5203 = vpop.f32.mrb[0].mxu0
      %v5204 = vadd.f32 %v5011, %v5203
      %v5205 = vpop.f32.mrb[0].mxu0
      %v5206 = vadd.f32 %v5013, %v5205
      %v5207 = vpop.f32.mrb[0].mxu0
      %v5208 = vadd.f32 %v5015, %v5207
      %5209 = vmatprep.mubr.bf16.mxu0 %v3184
      %5210 = vmatmul.mubr.bf16.gmra.mrb[0].mxu0 %v3183
      %v5211 = vpop.f32.mrb[0].mxu0
      %v5212 = vadd.f32 %v5019, %v5211
      %v5213 = vpop.f32.mrb[0].mxu0
      %v5214 = vadd.f32 %v5021, %v5213
      %v5215 = vpop.f32.mrb[0].mxu0
      %v5216 = vadd.f32 %v5023, %v5215
      %v5217 = vpop.f32.mrb[0].mxu0
      %v5218 = vadd.f32 %v5025, %v5217
      %5219 = vmatprep.mubr.bf16.mxu0 %v3186
      %5220 = vmatmul.mubr.bf16.gmra.mrb[0].mxu0 %v3185
      %v5221 = vpop.f32.mrb[0].mxu0
      %v5222 = vadd.f32 %v5029, %v5221
      %v5223 = vpop.f32.mrb[0].mxu0
      %v5224 = vadd.f32 %v5031, %v5223
      %v5225 = vpop.f32.mrb[0].mxu0
      %v5226 = vadd.f32 %v5033, %v5225
      %v5227 = vpop.f32.mrb[0].mxu0
      %v5228 = vadd.f32 %v5035, %v5227
      %5229 = vmatprep.mubr.bf16.mxu0 %v3188
      %5230 = vmatmul.mubr.bf16.gmra.mrb[0].mxu0 %v3187
      %v5231 = vpop.f32.mrb[0].mxu0
      %v5232 = vadd.f32 %v5039, %v5231
      %v5233 = vpop.f32.mrb[0].mxu0
      %v5234 = vadd.f32 %v5041, %v5233
      %v5235 = vpop.f32.mrb[0].mxu0
      %v5236 = vadd.f32 %v5043, %v5235
      %v5237 = vpop.f32.mrb[0].mxu0
      %v5238 = vadd.f32 %v5045, %v5237
      %5239 = vmatprep.mubr.bf16.mxu0 %v3190
      %5240 = vmatmul.mubr.bf16.gmra.mrb[0].mxu0 %v3189
      %v5241 = vpop.f32.mrb[0].mxu0
      %v5242 = vadd.f32 %v5049, %v5241
      %v5243 = vpop.f32.mrb[0].mxu0
      %v5244 = vadd.f32 %v5051, %v5243
      %v5245 = vpop.f32.mrb[0].mxu0
      %v5246 = vadd.f32 %v5053, %v5245
      %v5247 = vpop.f32.mrb[0].mxu0
      %v5248 = vadd.f32 %v5055, %v5247
      %5249 = vmatprep.mubr.bf16.mxu0 %v3192
      %5250 = vmatmul.mubr.bf16.gmra.mrb[0].mxu0 %v3191
      %v5251 = vpop.f32.mrb[0].mxu0
      %v5252 = vadd.f32 %v5059, %v5251
      %v5253 = vpop.f32.mrb[0].mxu0
      %v5254 = vadd.f32 %v5061, %v5253
      %v5255 = vpop.f32.mrb[0].mxu0
      %v5256 = vadd.f32 %v5063, %v5255
      %v5257 = vpop.f32.mrb[0].mxu0
      %v5258 = vadd.f32 %v5065, %v5257
      %5259 = vmatprep.mubr.bf16.mxu0 %v3194
      %5260 = vmatmul.mubr.bf16.gmra.mrb[0].mxu0 %v3193
      %v5261 = vpop.f32.mrb[0].mxu0
      %v5262 = vadd.f32 %v5069, %v5261
      %v5263 = vpop.f32.mrb[0].mxu0
      %v5264 = vadd.f32 %v5071, %v5263
      %v5265 = vpop.f32.mrb[0].mxu0
      %v5266 = vadd.f32 %v5073, %v5265
      %v5267 = vpop.f32.mrb[0].mxu0
      %v5268 = vadd.f32 %v5075, %v5267
      %5269 = vmatprep.mubr.bf16.mxu0 %v3196
      %5270 = vmatmul.mubr.bf16.gmra.mrb[0].mxu0 %v3195
      %v5271 = vpop.f32.mrb[0].mxu0
      %v5272 = vadd.f32 %v5079, %v5271
      %v5273 = vpop.f32.mrb[0].mxu0
      %v5274 = vadd.f32 %v5081, %v5273
      %v5275 = vpop.f32.mrb[0].mxu0
      %v5276 = vadd.f32 %v5083, %v5275
      %v5277 = vpop.f32.mrb[0].mxu0
      %v5278 = vadd.f32 %v5085, %v5277
      %5279 = vmatprep.mubr.bf16.mxu0 %v3198
      %5280 = vmatmul.mubr.bf16.gmra.mrb[0].mxu0 %v3197
      %v5281 = vpop.f32.mrb[0].mxu0
      %v5282 = vadd.f32 %v5089, %v5281
      %v5283 = vpop.f32.mrb[0].mxu0
      %v5284 = vadd.f32 %v5091, %v5283
      %v5285 = vpop.f32.mrb[0].mxu0
      %v5286 = vadd.f32 %v5093, %v5285
      %v5287 = vpop.f32.mrb[0].mxu0
      %v5288 = vadd.f32 %v5095, %v5287
      %5289 = vmatprep.mubr.bf16.mxu0 %v3200
      %5290 = vmatmul.mubr.bf16.gmra.mrb[0].mxu0 %v3199
      %v5291 = vpop.f32.mrb[0].mxu0
      %v5292 = vadd.f32 %v5099, %v5291
      %v5293 = vpop.f32.mrb[0].mxu0
      %v5294 = vadd.f32 %v5101, %v5293
      %v5295 = vpop.f32.mrb[0].mxu0
      %v5296 = vadd.f32 %v5103, %v5295
      %v5297 = vpop.f32.mrb[0].mxu0
      %v5298 = vadd.f32 %v5105, %v5297
      %5299 = vmatprep.mubr.bf16.mxu0 %v3202
      %5300 = vmatmul.mubr.bf16.gmra.mrb[0].mxu0 %v3201
      %v5301 = vpop.f32.mrb[0].mxu0
      %v5302 = vadd.f32 %v5109, %v5301
      %v5303 = vpop.f32.mrb[0].mxu0
      %v5304 = vadd.f32 %v5111, %v5303
      %v5305 = vpop.f32.mrb[0].mxu0
      %v5306 = vadd.f32 %v5113, %v5305
      %v5307 = vpop.f32.mrb[0].mxu0
      %v5308 = vadd.f32 %v5115, %v5307
      %5309 = vmatprep.mubr.bf16.mxu0 %v3204
      %5310 = vmatmul.mubr.bf16.gmra.mrb[0].mxu0 %v3203
      %v5311 = vpop.f32.mrb[0].mxu0
      %v5312 = vadd.f32 %v5119, %v5311
      %v5313 = vpop.f32.mrb[0].mxu0
      %v5314 = vadd.f32 %v5121, %v5313
      %v5315 = vpop.f32.mrb[0].mxu0
      %v5316 = vadd.f32 %v5123, %v5315
      %v5317 = vpop.f32.mrb[0].mxu0
      %v5318 = vadd.f32 %v5125, %v5317
      %5319 = vmatprep.mubr.bf16.mxu0 %v3206
      %5320 = vmatmul.mubr.bf16.gmra.mrb[0].mxu0 %v3205
      %v5321 = vpop.f32.mrb[0].mxu0
      %v5322 = vadd.f32 %v5129, %v5321
      %v5323 = vpop.f32.mrb[0].mxu0
      %v5324 = vadd.f32 %v5131, %v5323
      %v5325 = vpop.f32.mrb[0].mxu0
      %v5326 = vadd.f32 %v5133, %v5325
      %v5327 = vpop.f32.mrb[0].mxu0
      %v5328 = vadd.f32 %v5135, %v5327
      %5329 = vmatprep.mubr.bf16.mxu0 %v3208
      %5330 = vmatmul.mubr.bf16.gmra.mrb[0].mxu0 %v3207
      %v5331 = vpop.f32.mrb[0].mxu0
      %v5332 = vadd.f32 %v5139, %v5331
      %v5333 = vpop.f32.mrb[0].mxu0
      %v5334 = vadd.f32 %v5141, %v5333
      %v5335 = vpop.f32.mrb[0].mxu0
      %v5336 = vadd.f32 %v5143, %v5335
      %v5337 = vpop.f32.mrb[0].mxu0
      %v5338 = vadd.f32 %v5145, %v5337
      %5339 = vmatprep.mubr.bf16.mxu0 %v3210
      %5340 = vmatmul.mubr.bf16.gmra.mrb[0].mxu0 %v3209
      %v5341 = vpop.f32.mrb[0].mxu0
      %v5342 = vadd.f32 %v5149, %v5341
      %v5343 = vpop.f32.mrb[0].mxu0
      %v5344 = vadd.f32 %v5151, %v5343
      %v5345 = vpop.f32.mrb[0].mxu0
      %v5346 = vadd.f32 %v5153, %v5345
      %v5347 = vpop.f32.mrb[0].mxu0
      %v5348 = vadd.f32 %v5155, %v5347
      %5349 = vdwg.mxu0
      %5350 = vmatprep.subr.bf16.mxu0 %v4132
      %5351 = vmatpush1.bf16.msra.mxu0 %v4131
      %5352 = vmatprep.subr.bf16.mxu0 %v4136
      %5353 = vmatpush1.bf16.msra.mxu0 %v4135
      %5354 = vmatprep.subr.bf16.mxu0 %v4140
      %5355 = vmatpush1.bf16.msra.mxu0 %v4139
      %5356 = vmatprep.subr.bf16.mxu0 %v4144
      %5357 = vmatpush1.bf16.msra.mxu0 %v4143
      %5358 = vmatprep.subr.bf16.mxu0 %v4148
      %5359 = vmatpush1.bf16.msra.mxu0 %v4147
      %5360 = vmatprep.subr.bf16.mxu0 %v4152
      %5361 = vmatpush1.bf16.msra.mxu0 %v4151
      %5362 = vmatprep.subr.bf16.mxu0 %v4156
      %5363 = vmatpush1.bf16.msra.mxu0 %v4155
      %5364 = vmatprep.subr.bf16.mxu0 %v4160
      %5365 = vmatpush1.bf16.msra.mxu0 %v4159
      %5366 = vmatprep.subr.bf16.mxu0 %v4164
      %5367 = vmatpush1.bf16.msra.mxu0 %v4163
      %5368 = vmatprep.subr.bf16.mxu0 %v4168
      %5369 = vmatpush1.bf16.msra.mxu0 %v4167
      %5370 = vmatprep.subr.bf16.mxu0 %v4172
      %5371 = vmatpush1.bf16.msra.mxu0 %v4171
      %5372 = vmatprep.subr.bf16.mxu0 %v4176
      %5373 = vmatpush1.bf16.msra.mxu0 %v4175
      %5374 = vmatprep.subr.bf16.mxu0 %v4180
      %5375 = vmatpush1.bf16.msra.mxu0 %v4179
      %5376 = vmatprep.subr.bf16.mxu0 %v4184
      %5377 = vmatpush1.bf16.msra.mxu0 %v4183
      %5378 = vmatprep.subr.bf16.mxu0 %v4188
      %5379 = vmatpush1.bf16.msra.mxu0 %v4187
      %5380 = vmatprep.subr.bf16.mxu0 %v4192
      %5381 = vmatpush1.bf16.msra.mxu0 %v4191
      %5382 = vmatprep.mubr.bf16.mxu0 %v3148
      %5383 = vmatmul.mubr.bf16.gmra.mrb[0].mxu0 %v3147
      %v5384 = vpop.f32.mrb[0].mxu0
      %v5385 = vadd.f32 %v5192, %v5384
      %v5386 = vpop.f32.mrb[0].mxu0
      %v5387 = vadd.f32 %v5194, %v5386
      %v5388 = vpop.f32.mrb[0].mxu0
      %v5389 = vadd.f32 %v5196, %v5388
      %v5390 = vpop.f32.mrb[0].mxu0
      %v5391 = vadd.f32 %v5198, %v5390
      %5392 = vmatprep.mubr.bf16.mxu0 %v3150
      %5393 = vmatmul.mubr.bf16.gmra.mrb[0].mxu0 %v3149
      %v5394 = vpop.f32.mrb[0].mxu0
      %v5395 = vadd.f32 %v5202, %v5394
      %v5396 = vpop.f32.mrb[0].mxu0
      %v5397 = vadd.f32 %v5204, %v5396
      %v5398 = vpop.f32.mrb[0].mxu0
      %v5399 = vadd.f32 %v5206, %v5398
      %v5400 = vpop.f32.mrb[0].mxu0
      %v5401 = vadd.f32 %v5208, %v5400
      %5402 = vmatprep.mubr.bf16.mxu0 %v3152
      %5403 = vmatmul.mubr.bf16.gmra.mrb[0].mxu0 %v3151
      %v5404 = vpop.f32.mrb[0].mxu0
      %v5405 = vadd.f32 %v5212, %v5404
      %v5406 = vpop.f32.mrb[0].mxu0
      %v5407 = vadd.f32 %v5214, %v5406
      %v5408 = vpop.f32.mrb[0].mxu0
      %v5409 = vadd.f32 %v5216, %v5408
      %v5410 = vpop.f32.mrb[0].mxu0
      %v5411 = vadd.f32 %v5218, %v5410
      %5412 = vmatprep.mubr.bf16.mxu0 %v3154
      %5413 = vmatmul.mubr.bf16.gmra.mrb[0].mxu0 %v3153
      %v5414 = vpop.f32.mrb[0].mxu0
      %v5415 = vadd.f32 %v5222, %v5414
      %v5416 = vpop.f32.mrb[0].mxu0
      %v5417 = vadd.f32 %v5224, %v5416
      %v5418 = vpop.f32.mrb[0].mxu0
      %v5419 = vadd.f32 %v5226, %v5418
      %v5420 = vpop.f32.mrb[0].mxu0
      %v5421 = vadd.f32 %v5228, %v5420
      %5422 = vmatprep.mubr.bf16.mxu0 %v3156
      %5423 = vmatmul.mubr.bf16.gmra.mrb[0].mxu0 %v3155
      %v5424 = vpop.f32.mrb[0].mxu0
      %v5425 = vadd.f32 %v5232, %v5424
      %v5426 = vpop.f32.mrb[0].mxu0
      %v5427 = vadd.f32 %v5234, %v5426
      %v5428 = vpop.f32.mrb[0].mxu0
      %v5429 = vadd.f32 %v5236, %v5428
      %v5430 = vpop.f32.mrb[0].mxu0
      %v5431 = vadd.f32 %v5238, %v5430
      %5432 = vmatprep.mubr.bf16.mxu0 %v3158
      %5433 = vmatmul.mubr.bf16.gmra.mrb[0].mxu0 %v3157
      %v5434 = vpop.f32.mrb[0].mxu0
      %v5435 = vadd.f32 %v5242, %v5434
      %v5436 = vpop.f32.mrb[0].mxu0
      %v5437 = vadd.f32 %v5244, %v5436
      %v5438 = vpop.f32.mrb[0].mxu0
      %v5439 = vadd.f32 %v5246, %v5438
      %v5440 = vpop.f32.mrb[0].mxu0
      %v5441 = vadd.f32 %v5248, %v5440
      %5442 = vmatprep.mubr.bf16.mxu0 %v3160
      %5443 = vmatmul.mubr.bf16.gmra.mrb[0].mxu0 %v3159
      %v5444 = vpop.f32.mrb[0].mxu0
      %v5445 = vadd.f32 %v5252, %v5444
      %v5446 = vpop.f32.mrb[0].mxu0
      %v5447 = vadd.f32 %v5254, %v5446
      %v5448 = vpop.f32.mrb[0].mxu0
      %v5449 = vadd.f32 %v5256, %v5448
      %v5450 = vpop.f32.mrb[0].mxu0
      %v5451 = vadd.f32 %v5258, %v5450
      %5452 = vmatprep.mubr.bf16.mxu0 %v3162
      %5453 = vmatmul.mubr.bf16.gmra.mrb[0].mxu0 %v3161
      %v5454 = vpop.f32.mrb[0].mxu0
      %v5455 = vadd.f32 %v5262, %v5454
      %v5456 = vpop.f32.mrb[0].mxu0
      %v5457 = vadd.f32 %v5264, %v5456
      %v5458 = vpop.f32.mrb[0].mxu0
      %v5459 = vadd.f32 %v5266, %v5458
      %v5460 = vpop.f32.mrb[0].mxu0
      %v5461 = vadd.f32 %v5268, %v5460
      %5462 = vmatprep.mubr.bf16.mxu0 %v3164
      %5463 = vmatmul.mubr.bf16.gmra.mrb[0].mxu0 %v3163
      %v5464 = vpop.f32.mrb[0].mxu0
      %v5465 = vadd.f32 %v5272, %v5464
      %v5466 = vpop.f32.mrb[0].mxu0
      %v5467 = vadd.f32 %v5274, %v5466
      %v5468 = vpop.f32.mrb[0].mxu0
      %v5469 = vadd.f32 %v5276, %v5468
      %v5470 = vpop.f32.mrb[0].mxu0
      %v5471 = vadd.f32 %v5278, %v5470
      %5472 = vmatprep.mubr.bf16.mxu0 %v3166
      %5473 = vmatmul.mubr.bf16.gmra.mrb[0].mxu0 %v3165
      %v5474 = vpop.f32.mrb[0].mxu0
      %v5475 = vadd.f32 %v5282, %v5474
      %v5476 = vpop.f32.mrb[0].mxu0
      %v5477 = vadd.f32 %v5284, %v5476
      %v5478 = vpop.f32.mrb[0].mxu0
      %v5479 = vadd.f32 %v5286, %v5478
      %v5480 = vpop.f32.mrb[0].mxu0
      %v5481 = vadd.f32 %v5288, %v5480
      %5482 = vmatprep.mubr.bf16.mxu0 %v3168
      %5483 = vmatmul.mubr.bf16.gmra.mrb[0].mxu0 %v3167
      %v5484 = vpop.f32.mrb[0].mxu0
      %v5485 = vadd.f32 %v5292, %v5484
      %v5486 = vpop.f32.mrb[0].mxu0
      %v5487 = vadd.f32 %v5294, %v5486
      %v5488 = vpop.f32.mrb[0].mxu0
      %v5489 = vadd.f32 %v5296, %v5488
      %v5490 = vpop.f32.mrb[0].mxu0
      %v5491 = vadd.f32 %v5298, %v5490
      %5492 = vmatprep.mubr.bf16.mxu0 %v3170
      %5493 = vmatmul.mubr.bf16.gmra.mrb[0].mxu0 %v3169
      %v5494 = vpop.f32.mrb[0].mxu0
      %v5495 = vadd.f32 %v5302, %v5494
      %v5496 = vpop.f32.mrb[0].mxu0
      %v5497 = vadd.f32 %v5304, %v5496
      %v5498 = vpop.f32.mrb[0].mxu0
      %v5499 = vadd.f32 %v5306, %v5498
      %v5500 = vpop.f32.mrb[0].mxu0
      %v5501 = vadd.f32 %v5308, %v5500
      %5502 = vmatprep.mubr.bf16.mxu0 %v3172
      %5503 = vmatmul.mubr.bf16.gmra.mrb[0].mxu0 %v3171
      %v5504 = vpop.f32.mrb[0].mxu0
      %v5505 = vadd.f32 %v5312, %v5504
      %v5506 = vpop.f32.mrb[0].mxu0
      %v5507 = vadd.f32 %v5314, %v5506
      %v5508 = vpop.f32.mrb[0].mxu0
      %v5509 = vadd.f32 %v5316, %v5508
      %v5510 = vpop.f32.mrb[0].mxu0
      %v5511 = vadd.f32 %v5318, %v5510
      %5512 = vmatprep.mubr.bf16.mxu0 %v3174
      %5513 = vmatmul.mubr.bf16.gmra.mrb[0].mxu0 %v3173
      %v5514 = vpop.f32.mrb[0].mxu0
      %v5515 = vadd.f32 %v5322, %v5514
      %v5516 = vpop.f32.mrb[0].mxu0
      %v5517 = vadd.f32 %v5324, %v5516
      %v5518 = vpop.f32.mrb[0].mxu0
      %v5519 = vadd.f32 %v5326, %v5518
      %v5520 = vpop.f32.mrb[0].mxu0
      %v5521 = vadd.f32 %v5328, %v5520
      %5522 = vmatprep.mubr.bf16.mxu0 %v3176
      %5523 = vmatmul.mubr.bf16.gmra.mrb[0].mxu0 %v3175
      %v5524 = vpop.f32.mrb[0].mxu0
      %v5525 = vadd.f32 %v5332, %v5524
      %v5526 = vpop.f32.mrb[0].mxu0
      %v5527 = vadd.f32 %v5334, %v5526
      %v5528 = vpop.f32.mrb[0].mxu0
      %v5529 = vadd.f32 %v5336, %v5528
      %v5530 = vpop.f32.mrb[0].mxu0
      %v5531 = vadd.f32 %v5338, %v5530
      %5532 = vmatprep.mubr.bf16.mxu0 %v3178
      %5533 = vmatmul.mubr.bf16.gmra.mrb[0].mxu0 %v3177
      %v5534 = vpop.f32.mrb[0].mxu0
      %v5535 = vadd.f32 %v5342, %v5534
      %v5536 = vpop.f32.mrb[0].mxu0
      %v5537 = vadd.f32 %v5344, %v5536
      %v5538 = vpop.f32.mrb[0].mxu0
      %v5539 = vadd.f32 %v5346, %v5538
      %v5540 = vpop.f32.mrb[0].mxu0
      %v5541 = vadd.f32 %v5348, %v5540
      %5542 = vdwg.mxu0
      %vm5543 = vcmp.ge.f32.partialorder %v4806, 0.0
      %vm5544 = vcmp.ge.f32.partialorder %v4808, 0.0
      %vm5545 = vcmp.ge.f32.partialorder %v5385, 0.0
      %vm5546 = vcmp.ge.f32.partialorder %v5387, 0.0
      %vm5547 = vcmp.ge.f32.partialorder %v4810, 0.0
      %vm5548 = vcmp.ge.f32.partialorder %v4812, 0.0
      %vm5549 = vcmp.ge.f32.partialorder %v5389, 0.0
      %vm5550 = vcmp.ge.f32.partialorder %v5391, 0.0
      %vm5551 = vcmp.ge.f32.partialorder %v4816, 0.0
      %vm5552 = vcmp.ge.f32.partialorder %v4818, 0.0
      %vm5553 = vcmp.ge.f32.partialorder %v5395, 0.0
      %vm5554 = vcmp.ge.f32.partialorder %v5397, 0.0
      %vm5555 = vcmp.ge.f32.partialorder %v4820, 0.0
      %vm5556 = vcmp.ge.f32.partialorder %v4822, 0.0
      %vm5557 = vcmp.ge.f32.partialorder %v5399, 0.0
      %vm5558 = vcmp.ge.f32.partialorder %v5401, 0.0
      %vm5559 = vcmp.ge.f32.partialorder %v4826, 0.0
      %vm5560 = vcmp.ge.f32.partialorder %v4828, 0.0
      %vm5561 = vcmp.ge.f32.partialorder %v5405, 0.0
      %vm5562 = vcmp.ge.f32.partialorder %v5407, 0.0
      %vm5563 = vcmp.ge.f32.partialorder %v4830, 0.0
      %vm5564 = vcmp.ge.f32.partialorder %v4832, 0.0
      %vm5565 = vcmp.ge.f32.partialorder %v5409, 0.0
      %vm5566 = vcmp.ge.f32.partialorder %v5411, 0.0
      %vm5567 = vcmp.ge.f32.partialorder %v4836, 0.0
      %vm5568 = vcmp.ge.f32.partialorder %v4838, 0.0
      %vm5569 = vcmp.ge.f32.partialorder %v5415, 0.0
      %vm5570 = vcmp.ge.f32.partialorder %v5417, 0.0
      %vm5571 = vcmp.ge.f32.partialorder %v4840, 0.0
      %vm5572 = vcmp.ge.f32.partialorder %v4842, 0.0
      %vm5573 = vcmp.ge.f32.partialorder %v5419, 0.0
      %vm5574 = vcmp.ge.f32.partialorder %v5421, 0.0
      %vm5575 = vcmp.ge.f32.partialorder %v4846, 0.0
      %vm5576 = vcmp.ge.f32.partialorder %v4848, 0.0
      %vm5577 = vcmp.ge.f32.partialorder %v5425, 0.0
      %vm5578 = vcmp.ge.f32.partialorder %v5427, 0.0
      %vm5579 = vcmp.ge.f32.partialorder %v4850, 0.0
      %vm5580 = vcmp.ge.f32.partialorder %v4852, 0.0
      %vm5581 = vcmp.ge.f32.partialorder %v5429, 0.0
      %vm5582 = vcmp.ge.f32.partialorder %v5431, 0.0
      %vm5583 = vcmp.ge.f32.partialorder %v4856, 0.0
      %vm5584 = vcmp.ge.f32.partialorder %v4858, 0.0
      %vm5585 = vcmp.ge.f32.partialorder %v5435, 0.0
      %vm5586 = vcmp.ge.f32.partialorder %v5437, 0.0
      %vm5587 = vcmp.ge.f32.partialorder %v4860, 0.0
      %vm5588 = vcmp.ge.f32.partialorder %v4862, 0.0
      %vm5589 = vcmp.ge.f32.partialorder %v5439, 0.0
      %vm5590 = vcmp.ge.f32.partialorder %v5441, 0.0
      %vm5591 = vcmp.ge.f32.partialorder %v4866, 0.0
      %vm5592 = vcmp.ge.f32.partialorder %v4868, 0.0
      %vm5593 = vcmp.ge.f32.partialorder %v5445, 0.0
      %vm5594 = vcmp.ge.f32.partialorder %v5447, 0.0
      %vm5595 = vcmp.ge.f32.partialorder %v4870, 0.0
      %vm5596 = vcmp.ge.f32.partialorder %v4872, 0.0
      %vm5597 = vcmp.ge.f32.partialorder %v5449, 0.0
      %vm5598 = vcmp.ge.f32.partialorder %v5451, 0.0
      %vm5599 = vcmp.ge.f32.partialorder %v4876, 0.0
      %vm5600 = vcmp.ge.f32.partialorder %v4878, 0.0
      %vm5601 = vcmp.ge.f32.partialorder %v5455, 0.0
      %vm5602 = vcmp.ge.f32.partialorder %v5457, 0.0
      %vm5603 = vcmp.ge.f32.partialorder %v4880, 0.0
      %vm5604 = vcmp.ge.f32.partialorder %v4882, 0.0
      %vm5605 = vcmp.ge.f32.partialorder %v5459, 0.0
      %vm5606 = vcmp.ge.f32.partialorder %v5461, 0.0
      %vm5607 = vcmp.ge.f32.partialorder %v4886, 0.0
      %vm5608 = vcmp.ge.f32.partialorder %v4888, 0.0
      %vm5609 = vcmp.ge.f32.partialorder %v5465, 0.0
      %vm5610 = vcmp.ge.f32.partialorder %v5467, 0.0
      %vm5611 = vcmp.ge.f32.partialorder %v4890, 0.0
      %vm5612 = vcmp.ge.f32.partialorder %v4892, 0.0
      %vm5613 = vcmp.ge.f32.partialorder %v5469, 0.0
      %vm5614 = vcmp.ge.f32.partialorder %v5471, 0.0
      %vm5615 = vcmp.ge.f32.partialorder %v4896, 0.0
      %vm5616 = vcmp.ge.f32.partialorder %v4898, 0.0
      %vm5617 = vcmp.ge.f32.partialorder %v5475, 0.0
      %vm5618 = vcmp.ge.f32.partialorder %v5477, 0.0
      %vm5619 = vcmp.ge.f32.partialorder %v4900, 0.0
      %vm5620 = vcmp.ge.f32.partialorder %v4902, 0.0
      %vm5621 = vcmp.ge.f32.partialorder %v5479, 0.0
      %vm5622 = vcmp.ge.f32.partialorder %v5481, 0.0
      %vm5623 = vcmp.ge.f32.partialorder %v4906, 0.0
      %vm5624 = vcmp.ge.f32.partialorder %v4908, 0.0
      %vm5625 = vcmp.ge.f32.partialorder %v5485, 0.0
      %vm5626 = vcmp.ge.f32.partialorder %v5487, 0.0
      %vm5627 = vcmp.ge.f32.partialorder %v4910, 0.0
      %vm5628 = vcmp.ge.f32.partialorder %v4912, 0.0
      %vm5629 = vcmp.ge.f32.partialorder %v5489, 0.0
      %vm5630 = vcmp.ge.f32.partialorder %v5491, 0.0
      %vm5631 = vcmp.ge.f32.partialorder %v4916, 0.0
      %vm5632 = vcmp.ge.f32.partialorder %v4918, 0.0
      %vm5633 = vcmp.ge.f32.partialorder %v5495, 0.0
      %vm5634 = vcmp.ge.f32.partialorder %v5497, 0.0
      %vm5635 = vcmp.ge.f32.partialorder %v4920, 0.0
      %vm5636 = vcmp.ge.f32.partialorder %v4922, 0.0
      %vm5637 = vcmp.ge.f32.partialorder %v5499, 0.0
      %vm5638 = vcmp.ge.f32.partialorder %v5501, 0.0
      %vm5639 = vcmp.ge.f32.partialorder %v4926, 0.0
      %vm5640 = vcmp.ge.f32.partialorder %v4928, 0.0
      %vm5641 = vcmp.ge.f32.partialorder %v5505, 0.0
      %vm5642 = vcmp.ge.f32.partialorder %v5507, 0.0
      %vm5643 = vcmp.ge.f32.partialorder %v4930, 0.0
      %vm5644 = vcmp.ge.f32.partialorder %v4932, 0.0
      %vm5645 = vcmp.ge.f32.partialorder %v5509, 0.0
      %vm5646 = vcmp.ge.f32.partialorder %v5511, 0.0
      %vm5647 = vcmp.ge.f32.partialorder %v4936, 0.0
      %vm5648 = vcmp.ge.f32.partialorder %v4938, 0.0
      %vm5649 = vcmp.ge.f32.partialorder %v5515, 0.0
      %vm5650 = vcmp.ge.f32.partialorder %v5517, 0.0
      %vm5651 = vcmp.ge.f32.partialorder %v4940, 0.0
      %vm5652 = vcmp.ge.f32.partialorder %v4942, 0.0
      %vm5653 = vcmp.ge.f32.partialorder %v5519, 0.0
      %vm5654 = vcmp.ge.f32.partialorder %v5521, 0.0
      %vm5655 = vcmp.ge.f32.partialorder %v4946, 0.0
      %vm5656 = vcmp.ge.f32.partialorder %v4948, 0.0
      %vm5657 = vcmp.ge.f32.partialorder %v5525, 0.0
      %vm5658 = vcmp.ge.f32.partialorder %v5527, 0.0
      %vm5659 = vcmp.ge.f32.partialorder %v4950, 0.0
      %vm5660 = vcmp.ge.f32.partialorder %v4952, 0.0
      %vm5661 = vcmp.ge.f32.partialorder %v5529, 0.0
      %vm5662 = vcmp.ge.f32.partialorder %v5531, 0.0
      %vm5663 = vcmp.ge.f32.partialorder %v4956, 0.0
      %vm5664 = vcmp.ge.f32.partialorder %v4958, 0.0
      %vm5665 = vcmp.ge.f32.partialorder %v5535, 0.0
      %vm5666 = vcmp.ge.f32.partialorder %v5537, 0.0
      %vm5667 = vcmp.ge.f32.partialorder %v4960, 0.0
      %vm5668 = vcmp.ge.f32.partialorder %v4962, 0.0
      %vm5669 = vcmp.ge.f32.partialorder %v5539, 0.0
      %vm5670 = vcmp.ge.f32.partialorder %v5541, 0.0
      %v5671 = vmul.f32 %v4806, 0.01
      %v5672 = vmul.f32 %v4808, 0.01
      %v5673 = vmul.f32 %v5385, 0.01
      %v5674 = vmul.f32 %v5387, 0.01
      %v5675 = vmul.f32 %v4810, 0.01
      %v5676 = vmul.f32 %v4812, 0.01
      %v5677 = vmul.f32 %v5389, 0.01
      %v5678 = vmul.f32 %v5391, 0.01
      %v5679 = vmul.f32 %v4816, 0.01
      %v5680 = vmul.f32 %v4818, 0.01
      %v5681 = vmul.f32 %v5395, 0.01
      %v5682 = vmul.f32 %v5397, 0.01
      %v5683 = vmul.f32 %v4820, 0.01
      %v5684 = vmul.f32 %v4822, 0.01
      %v5685 = vmul.f32 %v5399, 0.01
      %v5686 = vmul.f32 %v5401, 0.01
      %v5687 = vmul.f32 %v4826, 0.01
      %v5688 = vmul.f32 %v4828, 0.01
      %v5689 = vmul.f32 %v5405, 0.01
      %v5690 = vmul.f32 %v5407, 0.01
      %v5691 = vmul.f32 %v4830, 0.01
      %v5692 = vmul.f32 %v4832, 0.01
      %v5693 = vmul.f32 %v5409, 0.01
      %v5694 = vmul.f32 %v5411, 0.01
      %v5695 = vmul.f32 %v4836, 0.01
      %v5696 = vmul.f32 %v4838, 0.01
      %v5697 = vmul.f32 %v5415, 0.01
      %v5698 = vmul.f32 %v5417, 0.01
      %v5699 = vmul.f32 %v4840, 0.01
      %v5700 = vmul.f32 %v4842, 0.01
      %v5701 = vmul.f32 %v5419, 0.01
      %v5702 = vmul.f32 %v5421, 0.01
      %v5703 = vmul.f32 %v4846, 0.01
      %v5704 = vmul.f32 %v4848, 0.01
      %v5705 = vmul.f32 %v5425, 0.01
      %v5706 = vmul.f32 %v5427, 0.01
      %v5707 = vmul.f32 %v4850, 0.01
      %v5708 = vmul.f32 %v4852, 0.01
      %v5709 = vmul.f32 %v5429, 0.01
      %v5710 = vmul.f32 %v5431, 0.01
      %v5711 = vmul.f32 %v4856, 0.01
      %v5712 = vmul.f32 %v4858, 0.01
      %v5713 = vmul.f32 %v5435, 0.01
      %v5714 = vmul.f32 %v5437, 0.01
      %v5715 = vmul.f32 %v4860, 0.01
      %v5716 = vmul.f32 %v4862, 0.01
      %v5717 = vmul.f32 %v5439, 0.01
      %v5718 = vmul.f32 %v5441, 0.01
      %v5719 = vmul.f32 %v4866, 0.01
      %v5720 = vmul.f32 %v4868, 0.01
      %v5721 = vmul.f32 %v5445, 0.01
      %v5722 = vmul.f32 %v5447, 0.01
      %v5723 = vmul.f32 %v4870, 0.01
      %v5724 = vmul.f32 %v4872, 0.01
      %v5725 = vmul.f32 %v5449, 0.01
      %v5726 = vmul.f32 %v5451, 0.01
      %v5727 = vmul.f32 %v4876, 0.01
      %v5728 = vmul.f32 %v4878, 0.01
      %v5729 = vmul.f32 %v5455, 0.01
      %v5730 = vmul.f32 %v5457, 0.01
      %v5731 = vmul.f32 %v4880, 0.01
      %v5732 = vmul.f32 %v4882, 0.01
      %v5733 = vmul.f32 %v5459, 0.01
      %v5734 = vmul.f32 %v5461, 0.01
      %v5735 = vmul.f32 %v4886, 0.01
      %v5736 = vmul.f32 %v4888, 0.01
      %v5737 = vmul.f32 %v5465, 0.01
      %v5738 = vmul.f32 %v5467, 0.01
      %v5739 = vmul.f32 %v4890, 0.01
      %v5740 = vmul.f32 %v4892, 0.01
      %v5741 = vmul.f32 %v5469, 0.01
      %v5742 = vmul.f32 %v5471, 0.01
      %v5743 = vmul.f32 %v4896, 0.01
      %v5744 = vmul.f32 %v4898, 0.01
      %v5745 = vmul.f32 %v5475, 0.01
      %v5746 = vmul.f32 %v5477, 0.01
      %v5747 = vmul.f32 %v4900, 0.01
      %v5748 = vmul.f32 %v4902, 0.01
      %v5749 = vmul.f32 %v5479, 0.01
      %v5750 = vmul.f32 %v5481, 0.01
      %v5751 = vmul.f32 %v4906, 0.01
      %v5752 = vmul.f32 %v4908, 0.01
      %v5753 = vmul.f32 %v5485, 0.01
      %v5754 = vmul.f32 %v5487, 0.01
      %v5755 = vmul.f32 %v4910, 0.01
      %v5756 = vmul.f32 %v4912, 0.01
      %v5757 = vmul.f32 %v5489, 0.01
      %v5758 = vmul.f32 %v5491, 0.01
      %v5759 = vmul.f32 %v4916, 0.01
      %v5760 = vmul.f32 %v4918, 0.01
      %v5761 = vmul.f32 %v5495, 0.01
      %v5762 = vmul.f32 %v5497, 0.01
      %v5763 = vmul.f32 %v4920, 0.01
      %v5764 = vmul.f32 %v4922, 0.01
      %v5765 = vmul.f32 %v5499, 0.01
      %v5766 = vmul.f32 %v5501, 0.01
      %v5767 = vmul.f32 %v4926, 0.01
      %v5768 = vmul.f32 %v4928, 0.01
      %v5769 = vmul.f32 %v5505, 0.01
      %v5770 = vmul.f32 %v5507, 0.01
      %v5771 = vmul.f32 %v4930, 0.01
      %v5772 = vmul.f32 %v4932, 0.01
      %v5773 = vmul.f32 %v5509, 0.01
      %v5774 = vmul.f32 %v5511, 0.01
      %v5775 = vmul.f32 %v4936, 0.01
      %v5776 = vmul.f32 %v4938, 0.01
      %v5777 = vmul.f32 %v5515, 0.01
      %v5778 = vmul.f32 %v5517, 0.01
      %v5779 = vmul.f32 %v4940, 0.01
      %v5780 = vmul.f32 %v4942, 0.01
      %v5781 = vmul.f32 %v5519, 0.01
      %v5782 = vmul.f32 %v5521, 0.01
      %v5783 = vmul.f32 %v4946, 0.01
      %v5784 = vmul.f32 %v4948, 0.01
      %v5785 = vmul.f32 %v5525, 0.01
      %v5786 = vmul.f32 %v5527, 0.01
      %v5787 = vmul.f32 %v4950, 0.01
      %v5788 = vmul.f32 %v4952, 0.01
      %v5789 = vmul.f32 %v5529, 0.01
      %v5790 = vmul.f32 %v5531, 0.01
      %v5791 = vmul.f32 %v4956, 0.01
      %v5792 = vmul.f32 %v4958, 0.01
      %v5793 = vmul.f32 %v5535, 0.01
      %v5794 = vmul.f32 %v5537, 0.01
      %v5795 = vmul.f32 %v4960, 0.01
      %v5796 = vmul.f32 %v4962, 0.01
      %v5797 = vmul.f32 %v5539, 0.01
      %v5798 = vmul.f32 %v5541, 0.01
      %v5799 = vsel %vm5543, %v4806, %v5671
      %v5800 = vsel %vm5544, %v4808, %v5672
      %v5801 = vsel %vm5545, %v5385, %v5673
      %v5802 = vsel %vm5546, %v5387, %v5674
      %v5803 = vsel %vm5547, %v4810, %v5675
      %v5804 = vsel %vm5548, %v4812, %v5676
      %v5805 = vsel %vm5549, %v5389, %v5677
      %v5806 = vsel %vm5550, %v5391, %v5678
      %v5807 = vsel %vm5551, %v4816, %v5679
      %v5808 = vsel %vm5552, %v4818, %v5680
      %v5809 = vsel %vm5553, %v5395, %v5681
      %v5810 = vsel %vm5554, %v5397, %v5682
      %v5811 = vsel %vm5555, %v4820, %v5683
      %v5812 = vsel %vm5556, %v4822, %v5684
      %v5813 = vsel %vm5557, %v5399, %v5685
      %v5814 = vsel %vm5558, %v5401, %v5686
      %v5815 = vsel %vm5559, %v4826, %v5687
      %v5816 = vsel %vm5560, %v4828, %v5688
      %v5817 = vsel %vm5561, %v5405, %v5689
      %v5818 = vsel %vm5562, %v5407, %v5690
      %v5819 = vsel %vm5563, %v4830, %v5691
      %v5820 = vsel %vm5564, %v4832, %v5692
      %v5821 = vsel %vm5565, %v5409, %v5693
      %v5822 = vsel %vm5566, %v5411, %v5694
      %v5823 = vsel %vm5567, %v4836, %v5695
      %v5824 = vsel %vm5568, %v4838, %v5696
      %v5825 = vsel %vm5569, %v5415, %v5697
      %v5826 = vsel %vm5570, %v5417, %v5698
      %v5827 = vsel %vm5571, %v4840, %v5699
      %v5828 = vsel %vm5572, %v4842, %v5700
      %v5829 = vsel %vm5573, %v5419, %v5701
      %v5830 = vsel %vm5574, %v5421, %v5702
      %v5831 = vsel %vm5575, %v4846, %v5703
      %v5832 = vsel %vm5576, %v4848, %v5704
      %v5833 = vsel %vm5577, %v5425, %v5705
      %v5834 = vsel %vm5578, %v5427, %v5706
      %v5835 = vsel %vm5579, %v4850, %v5707
      %v5836 = vsel %vm5580, %v4852, %v5708
      %v5837 = vsel %vm5581, %v5429, %v5709
      %v5838 = vsel %vm5582, %v5431, %v5710
      %v5839 = vsel %vm5583, %v4856, %v5711
      %v5840 = vsel %vm5584, %v4858, %v5712
      %v5841 = vsel %vm5585, %v5435, %v5713
      %v5842 = vsel %vm5586, %v5437, %v5714
      %v5843 = vsel %vm5587, %v4860, %v5715
      %v5844 = vsel %vm5588, %v4862, %v5716
      %v5845 = vsel %vm5589, %v5439, %v5717
      %v5846 = vsel %vm5590, %v5441, %v5718
      %v5847 = vsel %vm5591, %v4866, %v5719
      %v5848 = vsel %vm5592, %v4868, %v5720
      %v5849 = vsel %vm5593, %v5445, %v5721
      %v5850 = vsel %vm5594, %v5447, %v5722
      %v5851 = vsel %vm5595, %v4870, %v5723
      %v5852 = vsel %vm5596, %v4872, %v5724
      %v5853 = vsel %vm5597, %v5449, %v5725
      %v5854 = vsel %vm5598, %v5451, %v5726
      %v5855 = vsel %vm5599, %v4876, %v5727
      %v5856 = vsel %vm5600, %v4878, %v5728
      %v5857 = vsel %vm5601, %v5455, %v5729
      %v5858 = vsel %vm5602, %v5457, %v5730
      %v5859 = vsel %vm5603, %v4880, %v5731
      %v5860 = vsel %vm5604, %v4882, %v5732
      %v5861 = vsel %vm5605, %v5459, %v5733
      %v5862 = vsel %vm5606, %v5461, %v5734
      %v5863 = vsel %vm5607, %v4886, %v5735
      %v5864 = vsel %vm5608, %v4888, %v5736
      %v5865 = vsel %vm5609, %v5465, %v5737
      %v5866 = vsel %vm5610, %v5467, %v5738
      %v5867 = vsel %vm5611, %v4890, %v5739
      %v5868 = vsel %vm5612, %v4892, %v5740
      %v5869 = vsel %vm5613, %v5469, %v5741
      %v5870 = vsel %vm5614, %v5471, %v5742
      %v5871 = vsel %vm5615, %v4896, %v5743
      %v5872 = vsel %vm5616, %v4898, %v5744
      %v5873 = vsel %vm5617, %v5475, %v5745
      %v5874 = vsel %vm5618, %v5477, %v5746
      %v5875 = vsel %vm5619, %v4900, %v5747
      %v5876 = vsel %vm5620, %v4902, %v5748
      %v5877 = vsel %vm5621, %v5479, %v5749
      %v5878 = vsel %vm5622, %v5481, %v5750
      %v5879 = vsel %vm5623, %v4906, %v5751
      %v5880 = vsel %vm5624, %v4908, %v5752
      %v5881 = vsel %vm5625, %v5485, %v5753
      %v5882 = vsel %vm5626, %v5487, %v5754
      %v5883 = vsel %vm5627, %v4910, %v5755
      %v5884 = vsel %vm5628, %v4912, %v5756
      %v5885 = vsel %vm5629, %v5489, %v5757
      %v5886 = vsel %vm5630, %v5491, %v5758
      %v5887 = vsel %vm5631, %v4916, %v5759
      %v5888 = vsel %vm5632, %v4918, %v5760
      %v5889 = vsel %vm5633, %v5495, %v5761
      %v5890 = vsel %vm5634, %v5497, %v5762
      %v5891 = vsel %vm5635, %v4920, %v5763
      %v5892 = vsel %vm5636, %v4922, %v5764
      %v5893 = vsel %vm5637, %v5499, %v5765
      %v5894 = vsel %vm5638, %v5501, %v5766
      %v5895 = vsel %vm5639, %v4926, %v5767
      %v5896 = vsel %vm5640, %v4928, %v5768
      %v5897 = vsel %vm5641, %v5505, %v5769
      %v5898 = vsel %vm5642, %v5507, %v5770
      %v5899 = vsel %vm5643, %v4930, %v5771
      %v5900 = vsel %vm5644, %v4932, %v5772
      %v5901 = vsel %vm5645, %v5509, %v5773
      %v5902 = vsel %vm5646, %v5511, %v5774
      %v5903 = vsel %vm5647, %v4936, %v5775
      %v5904 = vsel %vm5648, %v4938, %v5776
      %v5905 = vsel %vm5649, %v5515, %v5777
      %v5906 = vsel %vm5650, %v5517, %v5778
      %v5907 = vsel %vm5651, %v4940, %v5779
      %v5908 = vsel %vm5652, %v4942, %v5780
      %v5909 = vsel %vm5653, %v5519, %v5781
      %v5910 = vsel %vm5654, %v5521, %v5782
      %v5911 = vsel %vm5655, %v4946, %v5783
      %v5912 = vsel %vm5656, %v4948, %v5784
      %v5913 = vsel %vm5657, %v5525, %v5785
      %v5914 = vsel %vm5658, %v5527, %v5786
      %v5915 = vsel %vm5659, %v4950, %v5787
      %v5916 = vsel %vm5660, %v4952, %v5788
      %v5917 = vsel %vm5661, %v5529, %v5789
      %v5918 = vsel %vm5662, %v5531, %v5790
      %v5919 = vsel %vm5663, %v4956, %v5791
      %v5920 = vsel %vm5664, %v4958, %v5792
      %v5921 = vsel %vm5665, %v5535, %v5793
      %v5922 = vsel %vm5666, %v5537, %v5794
      %v5923 = vsel %vm5667, %v4960, %v5795
      %v5924 = vsel %vm5668, %v4962, %v5796
      %v5925 = vsel %vm5669, %v5539, %v5797
      %v5926 = vsel %vm5670, %v5541, %v5798
      %s5927 = scalar_lea.vmem %s6, 1
      %v5928 = vld [vmem:[%s5927] ss:$4 sm:$0xf]
      %v5930 = vlaneseq
      %v5931 = vshrl.u32 %v5930, 7
      %v5932 = vsub.s32 0, %v5931
      %v5933 = vrot.slane %v5928, %v5932
      %v5934 = vlaneseq
      %v5935 = vshrl.u32 %v5934, 7
      %v5936 = vsub.s32 1, %v5935
      %v5937 = vrot.slane %v5928, %v5936
      %v5938 = vlaneseq
      %v5939 = vshrl.u32 %v5938, 7
      %v5940 = vsub.s32 2, %v5939
      %v5941 = vrot.slane %v5928, %v5940
      %v5942 = vlaneseq
      %v5943 = vshrl.u32 %v5942, 7
      %v5944 = vsub.s32 3, %v5943
      %v5945 = vrot.slane %v5928, %v5944
      %v5950 = vmul.f32 %v5799, %v5933
      %v5951 = vmul.f32 %v5800, %v5937
      %v5952 = vmul.f32 %v5801, %v5941
      %v5953 = vmul.f32 %v5802, %v5945
      %v5954 = vmul.f32 %v5803, %v5933
      %v5955 = vmul.f32 %v5804, %v5937
      %v5956 = vmul.f32 %v5805, %v5941
      %v5957 = vmul.f32 %v5806, %v5945
      %v5958 = vmul.f32 %v5807, %v5933
      %v5959 = vmul.f32 %v5808, %v5937
      %v5960 = vmul.f32 %v5809, %v5941
      %v5961 = vmul.f32 %v5810, %v5945
      %v5962 = vmul.f32 %v5811, %v5933
      %v5963 = vmul.f32 %v5812, %v5937
      %v5964 = vmul.f32 %v5813, %v5941
      %v5965 = vmul.f32 %v5814, %v5945
      %v5966 = vmul.f32 %v5815, %v5933
      %v5967 = vmul.f32 %v5816, %v5937
      %v5968 = vmul.f32 %v5817, %v5941
      %v5969 = vmul.f32 %v5818, %v5945
      %v5970 = vmul.f32 %v5819, %v5933
      %v5971 = vmul.f32 %v5820, %v5937
      %v5972 = vmul.f32 %v5821, %v5941
      %v5973 = vmul.f32 %v5822, %v5945
      %v5974 = vmul.f32 %v5823, %v5933
      %v5975 = vmul.f32 %v5824, %v5937
      %v5976 = vmul.f32 %v5825, %v5941
      %v5977 = vmul.f32 %v5826, %v5945
      %v5978 = vmul.f32 %v5827, %v5933
      %v5979 = vmul.f32 %v5828, %v5937
      %v5980 = vmul.f32 %v5829, %v5941
      %v5981 = vmul.f32 %v5830, %v5945
      %v5982 = vmul.f32 %v5831, %v5933
      %v5983 = vmul.f32 %v5832, %v5937
      %v5984 = vmul.f32 %v5833, %v5941
      %v5985 = vmul.f32 %v5834, %v5945
      %v5986 = vmul.f32 %v5835, %v5933
      %v5987 = vmul.f32 %v5836, %v5937
      %v5988 = vmul.f32 %v5837, %v5941
      %v5989 = vmul.f32 %v5838, %v5945
      %v5990 = vmul.f32 %v5839, %v5933
      %v5991 = vmul.f32 %v5840, %v5937
      %v5992 = vmul.f32 %v5841, %v5941
      %v5993 = vmul.f32 %v5842, %v5945
      %v5994 = vmul.f32 %v5843, %v5933
      %v5995 = vmul.f32 %v5844, %v5937
      %v5996 = vmul.f32 %v5845, %v5941
      %v5997 = vmul.f32 %v5846, %v5945
      %v5998 = vmul.f32 %v5847, %v5933
      %v5999 = vmul.f32 %v5848, %v5937
      %v6000 = vmul.f32 %v5849, %v5941
      %v6001 = vmul.f32 %v5850, %v5945
      %v6002 = vmul.f32 %v5851, %v5933
      %v6003 = vmul.f32 %v5852, %v5937
      %v6004 = vmul.f32 %v5853, %v5941
      %v6005 = vmul.f32 %v5854, %v5945
      %v6006 = vmul.f32 %v5855, %v5933
      %v6007 = vmul.f32 %v5856, %v5937
      %v6008 = vmul.f32 %v5857, %v5941
      %v6009 = vmul.f32 %v5858, %v5945
      %v6010 = vmul.f32 %v5859, %v5933
      %v6011 = vmul.f32 %v5860, %v5937
      %v6012 = vmul.f32 %v5861, %v5941
      %v6013 = vmul.f32 %v5862, %v5945
      %v6014 = vmul.f32 %v5863, %v5933
      %v6015 = vmul.f32 %v5864, %v5937
      %v6016 = vmul.f32 %v5865, %v5941
      %v6017 = vmul.f32 %v5866, %v5945
      %v6018 = vmul.f32 %v5867, %v5933
      %v6019 = vmul.f32 %v5868, %v5937
      %v6020 = vmul.f32 %v5869, %v5941
      %v6021 = vmul.f32 %v5870, %v5945
      %v6022 = vmul.f32 %v5871, %v5933
      %v6023 = vmul.f32 %v5872, %v5937
      %v6024 = vmul.f32 %v5873, %v5941
      %v6025 = vmul.f32 %v5874, %v5945
      %v6026 = vmul.f32 %v5875, %v5933
      %v6027 = vmul.f32 %v5876, %v5937
      %v6028 = vmul.f32 %v5877, %v5941
      %v6029 = vmul.f32 %v5878, %v5945
      %v6030 = vmul.f32 %v5879, %v5933
      %v6031 = vmul.f32 %v5880, %v5937
      %v6032 = vmul.f32 %v5881, %v5941
      %v6033 = vmul.f32 %v5882, %v5945
      %v6034 = vmul.f32 %v5883, %v5933
      %v6035 = vmul.f32 %v5884, %v5937
      %v6036 = vmul.f32 %v5885, %v5941
      %v6037 = vmul.f32 %v5886, %v5945
      %v6038 = vmul.f32 %v5887, %v5933
      %v6039 = vmul.f32 %v5888, %v5937
      %v6040 = vmul.f32 %v5889, %v5941
      %v6041 = vmul.f32 %v5890, %v5945
      %v6042 = vmul.f32 %v5891, %v5933
      %v6043 = vmul.f32 %v5892, %v5937
      %v6044 = vmul.f32 %v5893, %v5941
      %v6045 = vmul.f32 %v5894, %v5945
      %v6046 = vmul.f32 %v5895, %v5933
      %v6047 = vmul.f32 %v5896, %v5937
      %v6048 = vmul.f32 %v5897, %v5941
      %v6049 = vmul.f32 %v5898, %v5945
      %v6050 = vmul.f32 %v5899, %v5933
      %v6051 = vmul.f32 %v5900, %v5937
      %v6052 = vmul.f32 %v5901, %v5941
      %v6053 = vmul.f32 %v5902, %v5945
      %v6054 = vmul.f32 %v5903, %v5933
      %v6055 = vmul.f32 %v5904, %v5937
      %v6056 = vmul.f32 %v5905, %v5941
      %v6057 = vmul.f32 %v5906, %v5945
      %v6058 = vmul.f32 %v5907, %v5933
      %v6059 = vmul.f32 %v5908, %v5937
      %v6060 = vmul.f32 %v5909, %v5941
      %v6061 = vmul.f32 %v5910, %v5945
      %v6062 = vmul.f32 %v5911, %v5933
      %v6063 = vmul.f32 %v5912, %v5937
      %v6064 = vmul.f32 %v5913, %v5941
      %v6065 = vmul.f32 %v5914, %v5945
      %v6066 = vmul.f32 %v5915, %v5933
      %v6067 = vmul.f32 %v5916, %v5937
      %v6068 = vmul.f32 %v5917, %v5941
      %v6069 = vmul.f32 %v5918, %v5945
      %v6070 = vmul.f32 %v5919, %v5933
      %v6071 = vmul.f32 %v5920, %v5937
      %v6072 = vmul.f32 %v5921, %v5941
      %v6073 = vmul.f32 %v5922, %v5945
      %v6074 = vmul.f32 %v5923, %v5933
      %v6075 = vmul.f32 %v5924, %v5937
      %v6076 = vmul.f32 %v5925, %v5941
      %v6077 = vmul.f32 %v5926, %v5945
      %s6078 = scalar_lea.vmem %s6, 2
      %v6079 = vld [vmem:[%s6078] ss:$4 sm:$0xf]
      %v6081 = vlaneseq
      %v6082 = vshrl.u32 %v6081, 7
      %v6083 = vsub.s32 0, %v6082
      %v6084 = vrot.slane %v6079, %v6083
      %v6085 = vlaneseq
      %v6086 = vshrl.u32 %v6085, 7
      %v6087 = vsub.s32 1, %v6086
      %v6088 = vrot.slane %v6079, %v6087
      %v6089 = vlaneseq
      %v6090 = vshrl.u32 %v6089, 7
      %v6091 = vsub.s32 2, %v6090
      %v6092 = vrot.slane %v6079, %v6091
      %v6093 = vlaneseq
      %v6094 = vshrl.u32 %v6093, 7
      %v6095 = vsub.s32 3, %v6094
      %v6096 = vrot.slane %v6079, %v6095
      %v6101 = vadd.f32 %v5950, %v6084
      %v6102 = vadd.f32 %v5951, %v6088
      %v6103 = vadd.f32 %v5952, %v6092
      %v6104 = vadd.f32 %v5953, %v6096
      %v6105 = vadd.f32 %v5954, %v6084
      %v6106 = vadd.f32 %v5955, %v6088
      %v6107 = vadd.f32 %v5956, %v6092
      %v6108 = vadd.f32 %v5957, %v6096
      %v6109 = vadd.f32 %v5958, %v6084
      %v6110 = vadd.f32 %v5959, %v6088
      %v6111 = vadd.f32 %v5960, %v6092
      %v6112 = vadd.f32 %v5961, %v6096
      %v6113 = vadd.f32 %v5962, %v6084
      %v6114 = vadd.f32 %v5963, %v6088
      %v6115 = vadd.f32 %v5964, %v6092
      %v6116 = vadd.f32 %v5965, %v6096
      %v6117 = vadd.f32 %v5966, %v6084
      %v6118 = vadd.f32 %v5967, %v6088
      %v6119 = vadd.f32 %v5968, %v6092
      %v6120 = vadd.f32 %v5969, %v6096
      %v6121 = vadd.f32 %v5970, %v6084
      %v6122 = vadd.f32 %v5971, %v6088
      %v6123 = vadd.f32 %v5972, %v6092
      %v6124 = vadd.f32 %v5973, %v6096
      %v6125 = vadd.f32 %v5974, %v6084
      %v6126 = vadd.f32 %v5975, %v6088
      %v6127 = vadd.f32 %v5976, %v6092
      %v6128 = vadd.f32 %v5977, %v6096
      %v6129 = vadd.f32 %v5978, %v6084
      %v6130 = vadd.f32 %v5979, %v6088
      %v6131 = vadd.f32 %v5980, %v6092
      %v6132 = vadd.f32 %v5981, %v6096
      %v6133 = vadd.f32 %v5982, %v6084
      %v6134 = vadd.f32 %v5983, %v6088
      %v6135 = vadd.f32 %v5984, %v6092
      %v6136 = vadd.f32 %v5985, %v6096
      %v6137 = vadd.f32 %v5986, %v6084
      %v6138 = vadd.f32 %v5987, %v6088
      %v6139 = vadd.f32 %v5988, %v6092
      %v6140 = vadd.f32 %v5989, %v6096
      %v6141 = vadd.f32 %v5990, %v6084
      %v6142 = vadd.f32 %v5991, %v6088
      %v6143 = vadd.f32 %v5992, %v6092
      %v6144 = vadd.f32 %v5993, %v6096
      %v6145 = vadd.f32 %v5994, %v6084
      %v6146 = vadd.f32 %v5995, %v6088
      %v6147 = vadd.f32 %v5996, %v6092
      %v6148 = vadd.f32 %v5997, %v6096
      %v6149 = vadd.f32 %v5998, %v6084
      %v6150 = vadd.f32 %v5999, %v6088
      %v6151 = vadd.f32 %v6000, %v6092
      %v6152 = vadd.f32 %v6001, %v6096
      %v6153 = vadd.f32 %v6002, %v6084
      %v6154 = vadd.f32 %v6003, %v6088
      %v6155 = vadd.f32 %v6004, %v6092
      %v6156 = vadd.f32 %v6005, %v6096
      %v6157 = vadd.f32 %v6006, %v6084
      %v6158 = vadd.f32 %v6007, %v6088
      %v6159 = vadd.f32 %v6008, %v6092
      %v6160 = vadd.f32 %v6009, %v6096
      %v6161 = vadd.f32 %v6010, %v6084
      %v6162 = vadd.f32 %v6011, %v6088
      %v6163 = vadd.f32 %v6012, %v6092
      %v6164 = vadd.f32 %v6013, %v6096
      %v6165 = vadd.f32 %v6014, %v6084
      %v6166 = vadd.f32 %v6015, %v6088
      %v6167 = vadd.f32 %v6016, %v6092
      %v6168 = vadd.f32 %v6017, %v6096
      %v6169 = vadd.f32 %v6018, %v6084
      %v6170 = vadd.f32 %v6019, %v6088
      %v6171 = vadd.f32 %v6020, %v6092
      %v6172 = vadd.f32 %v6021, %v6096
      %v6173 = vadd.f32 %v6022, %v6084
      %v6174 = vadd.f32 %v6023, %v6088
      %v6175 = vadd.f32 %v6024, %v6092
      %v6176 = vadd.f32 %v6025, %v6096
      %v6177 = vadd.f32 %v6026, %v6084
      %v6178 = vadd.f32 %v6027, %v6088
      %v6179 = vadd.f32 %v6028, %v6092
      %v6180 = vadd.f32 %v6029, %v6096
      %v6181 = vadd.f32 %v6030, %v6084
      %v6182 = vadd.f32 %v6031, %v6088
      %v6183 = vadd.f32 %v6032, %v6092
      %v6184 = vadd.f32 %v6033, %v6096
      %v6185 = vadd.f32 %v6034, %v6084
      %v6186 = vadd.f32 %v6035, %v6088
      %v6187 = vadd.f32 %v6036, %v6092
      %v6188 = vadd.f32 %v6037, %v6096
      %v6189 = vadd.f32 %v6038, %v6084
      %v6190 = vadd.f32 %v6039, %v6088
      %v6191 = vadd.f32 %v6040, %v6092
      %v6192 = vadd.f32 %v6041, %v6096
      %v6193 = vadd.f32 %v6042, %v6084
      %v6194 = vadd.f32 %v6043, %v6088
      %v6195 = vadd.f32 %v6044, %v6092
      %v6196 = vadd.f32 %v6045, %v6096
      %v6197 = vadd.f32 %v6046, %v6084
      %v6198 = vadd.f32 %v6047, %v6088
      %v6199 = vadd.f32 %v6048, %v6092
      %v6200 = vadd.f32 %v6049, %v6096
      %v6201 = vadd.f32 %v6050, %v6084
      %v6202 = vadd.f32 %v6051, %v6088
      %v6203 = vadd.f32 %v6052, %v6092
      %v6204 = vadd.f32 %v6053, %v6096
      %v6205 = vadd.f32 %v6054, %v6084
      %v6206 = vadd.f32 %v6055, %v6088
      %v6207 = vadd.f32 %v6056, %v6092
      %v6208 = vadd.f32 %v6057, %v6096
      %v6209 = vadd.f32 %v6058, %v6084
      %v6210 = vadd.f32 %v6059, %v6088
      %v6211 = vadd.f32 %v6060, %v6092
      %v6212 = vadd.f32 %v6061, %v6096
      %v6213 = vadd.f32 %v6062, %v6084
      %v6214 = vadd.f32 %v6063, %v6088
      %v6215 = vadd.f32 %v6064, %v6092
      %v6216 = vadd.f32 %v6065, %v6096
      %v6217 = vadd.f32 %v6066, %v6084
      %v6218 = vadd.f32 %v6067, %v6088
      %v6219 = vadd.f32 %v6068, %v6092
      %v6220 = vadd.f32 %v6069, %v6096
      %v6221 = vadd.f32 %v6070, %v6084
      %v6222 = vadd.f32 %v6071, %v6088
      %v6223 = vadd.f32 %v6072, %v6092
      %v6224 = vadd.f32 %v6073, %v6096
      %v6225 = vadd.f32 %v6074, %v6084
      %v6226 = vadd.f32 %v6075, %v6088
      %v6227 = vadd.f32 %v6076, %v6092
      %v6228 = vadd.f32 %v6077, %v6096
      %v6229 = vrot.slane %v6101, 1
      %v6230 = vrot.slane %v6102, 1
      %v6231 = vrot.slane %v6103, 1
      %v6232 = vrot.slane %v6104, 1
      %v6233 = vrot.slane %v6105, 1
      %v6234 = vrot.slane %v6106, 1
      %v6235 = vrot.slane %v6107, 1
      %v6236 = vrot.slane %v6108, 1
      %v6237 = vrot.slane %v6109, 1
      %v6238 = vrot.slane %v6110, 1
      %v6239 = vrot.slane %v6111, 1
      %v6240 = vrot.slane %v6112, 1
      %v6241 = vrot.slane %v6113, 1
      %v6242 = vrot.slane %v6114, 1
      %v6243 = vrot.slane %v6115, 1
      %v6244 = vrot.slane %v6116, 1
      %v6245 = vrot.slane %v6117, 1
      %v6246 = vrot.slane %v6118, 1
      %v6247 = vrot.slane %v6119, 1
      %v6248 = vrot.slane %v6120, 1
      %v6249 = vrot.slane %v6121, 1
      %v6250 = vrot.slane %v6122, 1
      %v6251 = vrot.slane %v6123, 1
      %v6252 = vrot.slane %v6124, 1
      %v6253 = vrot.slane %v6125, 1
      %v6254 = vrot.slane %v6126, 1
      %v6255 = vrot.slane %v6127, 1
      %v6256 = vrot.slane %v6128, 1
      %v6257 = vrot.slane %v6129, 1
      %v6258 = vrot.slane %v6130, 1
      %v6259 = vrot.slane %v6131, 1
      %v6260 = vrot.slane %v6132, 1
      %v6261 = vrot.slane %v6133, 1
      %v6262 = vrot.slane %v6134, 1
      %v6263 = vrot.slane %v6135, 1
      %v6264 = vrot.slane %v6136, 1
      %v6265 = vrot.slane %v6137, 1
      %v6266 = vrot.slane %v6138, 1
      %v6267 = vrot.slane %v6139, 1
      %v6268 = vrot.slane %v6140, 1
      %v6269 = vrot.slane %v6141, 1
      %v6270 = vrot.slane %v6142, 1
      %v6271 = vrot.slane %v6143, 1
      %v6272 = vrot.slane %v6144, 1
      %v6273 = vrot.slane %v6145, 1
      %v6274 = vrot.slane %v6146, 1
      %v6275 = vrot.slane %v6147, 1
      %v6276 = vrot.slane %v6148, 1
      %v6277 = vrot.slane %v6149, 1
      %v6278 = vrot.slane %v6150, 1
      %v6279 = vrot.slane %v6151, 1
      %v6280 = vrot.slane %v6152, 1
      %v6281 = vrot.slane %v6153, 1
      %v6282 = vrot.slane %v6154, 1
      %v6283 = vrot.slane %v6155, 1
      %v6284 = vrot.slane %v6156, 1
      %v6285 = vrot.slane %v6157, 1
      %v6286 = vrot.slane %v6158, 1
      %v6287 = vrot.slane %v6159, 1
      %v6288 = vrot.slane %v6160, 1
      %v6289 = vrot.slane %v6161, 1
      %v6290 = vrot.slane %v6162, 1
      %v6291 = vrot.slane %v6163, 1
      %v6292 = vrot.slane %v6164, 1
      %v6293 = vrot.slane %v6165, 1
      %v6294 = vrot.slane %v6166, 1
      %v6295 = vrot.slane %v6167, 1
      %v6296 = vrot.slane %v6168, 1
      %v6297 = vrot.slane %v6169, 1
      %v6298 = vrot.slane %v6170, 1
      %v6299 = vrot.slane %v6171, 1
      %v6300 = vrot.slane %v6172, 1
      %v6301 = vrot.slane %v6173, 1
      %v6302 = vrot.slane %v6174, 1
      %v6303 = vrot.slane %v6175, 1
      %v6304 = vrot.slane %v6176, 1
      %v6305 = vrot.slane %v6177, 1
      %v6306 = vrot.slane %v6178, 1
      %v6307 = vrot.slane %v6179, 1
      %v6308 = vrot.slane %v6180, 1
      %v6309 = vrot.slane %v6181, 1
      %v6310 = vrot.slane %v6182, 1
      %v6311 = vrot.slane %v6183, 1
      %v6312 = vrot.slane %v6184, 1
      %v6313 = vrot.slane %v6185, 1
      %v6314 = vrot.slane %v6186, 1
      %v6315 = vrot.slane %v6187, 1
      %v6316 = vrot.slane %v6188, 1
      %v6317 = vrot.slane %v6189, 1
      %v6318 = vrot.slane %v6190, 1
      %v6319 = vrot.slane %v6191, 1
      %v6320 = vrot.slane %v6192, 1
      %v6321 = vrot.slane %v6193, 1
      %v6322 = vrot.slane %v6194, 1
      %v6323 = vrot.slane %v6195, 1
      %v6324 = vrot.slane %v6196, 1
      %v6325 = vrot.slane %v6197, 1
      %v6326 = vrot.slane %v6198, 1
      %v6327 = vrot.slane %v6199, 1
      %v6328 = vrot.slane %v6200, 1
      %v6329 = vrot.slane %v6201, 1
      %v6330 = vrot.slane %v6202, 1
      %v6331 = vrot.slane %v6203, 1
      %v6332 = vrot.slane %v6204, 1
      %v6333 = vrot.slane %v6205, 1
      %v6334 = vrot.slane %v6206, 1
      %v6335 = vrot.slane %v6207, 1
      %v6336 = vrot.slane %v6208, 1
      %v6337 = vrot.slane %v6209, 1
      %v6338 = vrot.slane %v6210, 1
      %v6339 = vrot.slane %v6211, 1
      %v6340 = vrot.slane %v6212, 1
      %v6341 = vrot.slane %v6213, 1
      %v6342 = vrot.slane %v6214, 1
      %v6343 = vrot.slane %v6215, 1
      %v6344 = vrot.slane %v6216, 1
      %v6345 = vrot.slane %v6217, 1
      %v6346 = vrot.slane %v6218, 1
      %v6347 = vrot.slane %v6219, 1
      %v6348 = vrot.slane %v6220, 1
      %v6349 = vrot.slane %v6221, 1
      %v6350 = vrot.slane %v6222, 1
      %v6351 = vrot.slane %v6223, 1
      %v6352 = vrot.slane %v6224, 1
      %v6353 = vrot.slane %v6225, 1
      %v6354 = vrot.slane %v6226, 1
      %v6355 = vrot.slane %v6227, 1
      %v6356 = vrot.slane %v6228, 1
      %v6357 = vsel %vm1602, %v6349, %v6353
      %v6358 = vsel %vm1602, %v6350, %v6354
      %v6359 = vsel %vm1602, %v6351, %v6355
      %v6360 = vsel %vm1602, %v6352, %v6356
      %v6361 = vsel %vm1602, %v6345, %v6349
      %v6362 = vsel %vm1602, %v6346, %v6350
      %v6363 = vsel %vm1602, %v6347, %v6351
      %v6364 = vsel %vm1602, %v6348, %v6352
      %v6365 = vsel %vm1602, %v6341, %v6345
      %v6366 = vsel %vm1602, %v6342, %v6346
      %v6367 = vsel %vm1602, %v6343, %v6347
      %v6368 = vsel %vm1602, %v6344, %v6348
      %v6369 = vsel %vm1602, %v6337, %v6341
      %v6370 = vsel %vm1602, %v6338, %v6342
      %v6371 = vsel %vm1602, %v6339, %v6343
      %v6372 = vsel %vm1602, %v6340, %v6344
      %v6373 = vsel %vm1602, %v6333, %v6337
      %v6374 = vsel %vm1602, %v6334, %v6338
      %v6375 = vsel %vm1602, %v6335, %v6339
      %v6376 = vsel %vm1602, %v6336, %v6340
      %v6377 = vsel %vm1602, %v6329, %v6333
      %v6378 = vsel %vm1602, %v6330, %v6334
      %v6379 = vsel %vm1602, %v6331, %v6335
      %v6380 = vsel %vm1602, %v6332, %v6336
      %v6381 = vsel %vm1602, %v6325, %v6329
      %v6382 = vsel %vm1602, %v6326, %v6330
      %v6383 = vsel %vm1602, %v6327, %v6331
      %v6384 = vsel %vm1602, %v6328, %v6332
      %v6385 = vsel %vm1602, %v6321, %v6325
      %v6386 = vsel %vm1602, %v6322, %v6326
      %v6387 = vsel %vm1602, %v6323, %v6327
      %v6388 = vsel %vm1602, %v6324, %v6328
      %v6389 = vsel %vm1602, %v6317, %v6321
      %v6390 = vsel %vm1602, %v6318, %v6322
      %v6391 = vsel %vm1602, %v6319, %v6323
      %v6392 = vsel %vm1602, %v6320, %v6324
      %v6393 = vsel %vm1602, %v6313, %v6317
      %v6394 = vsel %vm1602, %v6314, %v6318
      %v6395 = vsel %vm1602, %v6315, %v6319
      %v6396 = vsel %vm1602, %v6316, %v6320
      %v6397 = vsel %vm1602, %v6309, %v6313
      %v6398 = vsel %vm1602, %v6310, %v6314
      %v6399 = vsel %vm1602, %v6311, %v6315
      %v6400 = vsel %vm1602, %v6312, %v6316
      %v6401 = vsel %vm1602, %v6305, %v6309
      %v6402 = vsel %vm1602, %v6306, %v6310
      %v6403 = vsel %vm1602, %v6307, %v6311
      %v6404 = vsel %vm1602, %v6308, %v6312
      %v6405 = vsel %vm1602, %v6301, %v6305
      %v6406 = vsel %vm1602, %v6302, %v6306
      %v6407 = vsel %vm1602, %v6303, %v6307
      %v6408 = vsel %vm1602, %v6304, %v6308
      %v6409 = vsel %vm1602, %v6297, %v6301
      %v6410 = vsel %vm1602, %v6298, %v6302
      %v6411 = vsel %vm1602, %v6299, %v6303
      %v6412 = vsel %vm1602, %v6300, %v6304
      %v6413 = vsel %vm1602, %v6293, %v6297
      %v6414 = vsel %vm1602, %v6294, %v6298
      %v6415 = vsel %vm1602, %v6295, %v6299
      %v6416 = vsel %vm1602, %v6296, %v6300
      %v6417 = vsel %vm1602, %v6289, %v6293
      %v6418 = vsel %vm1602, %v6290, %v6294
      %v6419 = vsel %vm1602, %v6291, %v6295
      %v6420 = vsel %vm1602, %v6292, %v6296
      %v6421 = vsel %vm1602, %v6285, %v6289
      %v6422 = vsel %vm1602, %v6286, %v6290
      %v6423 = vsel %vm1602, %v6287, %v6291
      %v6424 = vsel %vm1602, %v6288, %v6292
      %v6425 = vsel %vm1602, %v6281, %v6285
      %v6426 = vsel %vm1602, %v6282, %v6286
      %v6427 = vsel %vm1602, %v6283, %v6287
      %v6428 = vsel %vm1602, %v6284, %v6288
      %v6429 = vsel %vm1602, %v6277, %v6281
      %v6430 = vsel %vm1602, %v6278, %v6282
      %v6431 = vsel %vm1602, %v6279, %v6283
      %v6432 = vsel %vm1602, %v6280, %v6284
      %v6433 = vsel %vm1602, %v6273, %v6277
      %v6434 = vsel %vm1602, %v6274, %v6278
      %v6435 = vsel %vm1602, %v6275, %v6279
      %v6436 = vsel %vm1602, %v6276, %v6280
      %v6437 = vsel %vm1602, %v6269, %v6273
      %v6438 = vsel %vm1602, %v6270, %v6274
      %v6439 = vsel %vm1602, %v6271, %v6275
      %v6440 = vsel %vm1602, %v6272, %v6276
      %v6441 = vsel %vm1602, %v6265, %v6269
      %v6442 = vsel %vm1602, %v6266, %v6270
      %v6443 = vsel %vm1602, %v6267, %v6271
      %v6444 = vsel %vm1602, %v6268, %v6272
      %v6445 = vsel %vm1602, %v6261, %v6265
      %v6446 = vsel %vm1602, %v6262, %v6266
      %v6447 = vsel %vm1602, %v6263, %v6267
      %v6448 = vsel %vm1602, %v6264, %v6268
      %v6449 = vsel %vm1602, %v6257, %v6261
      %v6450 = vsel %vm1602, %v6258, %v6262
      %v6451 = vsel %vm1602, %v6259, %v6263
      %v6452 = vsel %vm1602, %v6260, %v6264
      %v6453 = vsel %vm1602, %v6253, %v6257
      %v6454 = vsel %vm1602, %v6254, %v6258
      %v6455 = vsel %vm1602, %v6255, %v6259
      %v6456 = vsel %vm1602, %v6256, %v6260
      %v6457 = vsel %vm1602, %v6249, %v6253
      %v6458 = vsel %vm1602, %v6250, %v6254
      %v6459 = vsel %vm1602, %v6251, %v6255
      %v6460 = vsel %vm1602, %v6252, %v6256
      %v6461 = vsel %vm1602, %v6245, %v6249
      %v6462 = vsel %vm1602, %v6246, %v6250
      %v6463 = vsel %vm1602, %v6247, %v6251
      %v6464 = vsel %vm1602, %v6248, %v6252
      %v6465 = vsel %vm1602, %v6241, %v6245
      %v6466 = vsel %vm1602, %v6242, %v6246
      %v6467 = vsel %vm1602, %v6243, %v6247
      %v6468 = vsel %vm1602, %v6244, %v6248
      %v6469 = vsel %vm1602, %v6237, %v6241
      %v6470 = vsel %vm1602, %v6238, %v6242
      %v6471 = vsel %vm1602, %v6239, %v6243
      %v6472 = vsel %vm1602, %v6240, %v6244
      %v6473 = vsel %vm1602, %v6233, %v6237
      %v6474 = vsel %vm1602, %v6234, %v6238
      %v6475 = vsel %vm1602, %v6235, %v6239
      %v6476 = vsel %vm1602, %v6236, %v6240
      %v6477 = vsel %vm1602, %v6229, %v6233
      %v6478 = vsel %vm1602, %v6230, %v6234
      %v6479 = vsel %vm1602, %v6231, %v6235
      %v6480 = vsel %vm1602, %v6232, %v6236
      %v6481 = vsel %vm1602, %v6353, %v6229
      %v6482 = vsel %vm1602, %v6354, %v6230
      %v6483 = vsel %vm1602, %v6355, %v6231
      %v6484 = vsel %vm1602, %v6356, %v6232
      %v6485 = vmax.f32 %v6101, %v6477
      %v6486 = vmax.f32 %v6102, %v6478
      %v6487 = vmax.f32 %v6103, %v6479
      %v6488 = vmax.f32 %v6104, %v6480
      %v6489 = vmax.f32 %v6105, %v6473
      %v6490 = vmax.f32 %v6106, %v6474
      %v6491 = vmax.f32 %v6107, %v6475
      %v6492 = vmax.f32 %v6108, %v6476
      %v6493 = vmax.f32 %v6109, %v6469
      %v6494 = vmax.f32 %v6110, %v6470
      %v6495 = vmax.f32 %v6111, %v6471
      %v6496 = vmax.f32 %v6112, %v6472
      %v6497 = vmax.f32 %v6113, %v6465
      %v6498 = vmax.f32 %v6114, %v6466
      %v6499 = vmax.f32 %v6115, %v6467
      %v6500 = vmax.f32 %v6116, %v6468
      %v6501 = vmax.f32 %v6117, %v6461
      %v6502 = vmax.f32 %v6118, %v6462
      %v6503 = vmax.f32 %v6119, %v6463
      %v6504 = vmax.f32 %v6120, %v6464
      %v6505 = vmax.f32 %v6121, %v6457
      %v6506 = vmax.f32 %v6122, %v6458
      %v6507 = vmax.f32 %v6123, %v6459
      %v6508 = vmax.f32 %v6124, %v6460
      %v6509 = vmax.f32 %v6125, %v6453
      %v6510 = vmax.f32 %v6126, %v6454
      %v6511 = vmax.f32 %v6127, %v6455
      %v6512 = vmax.f32 %v6128, %v6456
      %v6513 = vmax.f32 %v6129, %v6449
      %v6514 = vmax.f32 %v6130, %v6450
      %v6515 = vmax.f32 %v6131, %v6451
      %v6516 = vmax.f32 %v6132, %v6452
      %v6517 = vmax.f32 %v6133, %v6445
      %v6518 = vmax.f32 %v6134, %v6446
      %v6519 = vmax.f32 %v6135, %v6447
      %v6520 = vmax.f32 %v6136, %v6448
      %v6521 = vmax.f32 %v6137, %v6441
      %v6522 = vmax.f32 %v6138, %v6442
      %v6523 = vmax.f32 %v6139, %v6443
      %v6524 = vmax.f32 %v6140, %v6444
      %v6525 = vmax.f32 %v6141, %v6437
      %v6526 = vmax.f32 %v6142, %v6438
      %v6527 = vmax.f32 %v6143, %v6439
      %v6528 = vmax.f32 %v6144, %v6440
      %v6529 = vmax.f32 %v6145, %v6433
      %v6530 = vmax.f32 %v6146, %v6434
      %v6531 = vmax.f32 %v6147, %v6435
      %v6532 = vmax.f32 %v6148, %v6436
      %v6533 = vmax.f32 %v6149, %v6429
      %v6534 = vmax.f32 %v6150, %v6430
      %v6535 = vmax.f32 %v6151, %v6431
      %v6536 = vmax.f32 %v6152, %v6432
      %v6537 = vmax.f32 %v6153, %v6425
      %v6538 = vmax.f32 %v6154, %v6426
      %v6539 = vmax.f32 %v6155, %v6427
      %v6540 = vmax.f32 %v6156, %v6428
      %v6541 = vmax.f32 %v6157, %v6421
      %v6542 = vmax.f32 %v6158, %v6422
      %v6543 = vmax.f32 %v6159, %v6423
      %v6544 = vmax.f32 %v6160, %v6424
      %v6545 = vmax.f32 %v6161, %v6417
      %v6546 = vmax.f32 %v6162, %v6418
      %v6547 = vmax.f32 %v6163, %v6419
      %v6548 = vmax.f32 %v6164, %v6420
      %v6549 = vmax.f32 %v6165, %v6413
      %v6550 = vmax.f32 %v6166, %v6414
      %v6551 = vmax.f32 %v6167, %v6415
      %v6552 = vmax.f32 %v6168, %v6416
      %v6553 = vmax.f32 %v6169, %v6409
      %v6554 = vmax.f32 %v6170, %v6410
      %v6555 = vmax.f32 %v6171, %v6411
      %v6556 = vmax.f32 %v6172, %v6412
      %v6557 = vmax.f32 %v6173, %v6405
      %v6558 = vmax.f32 %v6174, %v6406
      %v6559 = vmax.f32 %v6175, %v6407
      %v6560 = vmax.f32 %v6176, %v6408
      %v6561 = vmax.f32 %v6177, %v6401
      %v6562 = vmax.f32 %v6178, %v6402
      %v6563 = vmax.f32 %v6179, %v6403
      %v6564 = vmax.f32 %v6180, %v6404
      %v6565 = vmax.f32 %v6181, %v6397
      %v6566 = vmax.f32 %v6182, %v6398
      %v6567 = vmax.f32 %v6183, %v6399
      %v6568 = vmax.f32 %v6184, %v6400
      %v6569 = vmax.f32 %v6185, %v6393
      %v6570 = vmax.f32 %v6186, %v6394
      %v6571 = vmax.f32 %v6187, %v6395
      %v6572 = vmax.f32 %v6188, %v6396
      %v6573 = vmax.f32 %v6189, %v6389
      %v6574 = vmax.f32 %v6190, %v6390
      %v6575 = vmax.f32 %v6191, %v6391
      %v6576 = vmax.f32 %v6192, %v6392
      %v6577 = vmax.f32 %v6193, %v6385
      %v6578 = vmax.f32 %v6194, %v6386
      %v6579 = vmax.f32 %v6195, %v6387
      %v6580 = vmax.f32 %v6196, %v6388
      %v6581 = vmax.f32 %v6197, %v6381
      %v6582 = vmax.f32 %v6198, %v6382
      %v6583 = vmax.f32 %v6199, %v6383
      %v6584 = vmax.f32 %v6200, %v6384
      %v6585 = vmax.f32 %v6201, %v6377
      %v6586 = vmax.f32 %v6202, %v6378
      %v6587 = vmax.f32 %v6203, %v6379
      %v6588 = vmax.f32 %v6204, %v6380
      %v6589 = vmax.f32 %v6205, %v6373
      %v6590 = vmax.f32 %v6206, %v6374
      %v6591 = vmax.f32 %v6207, %v6375
      %v6592 = vmax.f32 %v6208, %v6376
      %v6593 = vmax.f32 %v6209, %v6369
      %v6594 = vmax.f32 %v6210, %v6370
      %v6595 = vmax.f32 %v6211, %v6371
      %v6596 = vmax.f32 %v6212, %v6372
      %v6597 = vmax.f32 %v6213, %v6365
      %v6598 = vmax.f32 %v6214, %v6366
      %v6599 = vmax.f32 %v6215, %v6367
      %v6600 = vmax.f32 %v6216, %v6368
      %v6601 = vmax.f32 %v6217, %v6361
      %v6602 = vmax.f32 %v6218, %v6362
      %v6603 = vmax.f32 %v6219, %v6363
      %v6604 = vmax.f32 %v6220, %v6364
      %v6605 = vmax.f32 %v6221, %v6357
      %v6606 = vmax.f32 %v6222, %v6358
      %v6607 = vmax.f32 %v6223, %v6359
      %v6608 = vmax.f32 %v6224, %v6360
      %v6609 = vmax.f32 %v6225, %v6481
      %v6610 = vmax.f32 %v6226, %v6482
      %v6611 = vmax.f32 %v6227, %v6483
      %v6612 = vmax.f32 %v6228, %v6484
      %v6613 = vld [vmem:[%s9] sm:$0xff]
      %v6614 = vld [vmem:[%s9 + $0x8] sm:$0xff]
      %v6615 = vld [vmem:[%s9 + $0x10] sm:$0xff]
      %v6616 = vld [vmem:[%s9 + $0x18] sm:$0xff]
      %v6617 = vld [vmem:[%s9 + $0x20] sm:$0xff]
      %v6618 = vld [vmem:[%s9 + $0x28] sm:$0xff]
      %v6619 = vld [vmem:[%s9 + $0x30] sm:$0xff]
      %v6620 = vld [vmem:[%s9 + $0x38] sm:$0xff]
      %v6621 = vld [vmem:[%s9 + $0x40] sm:$0xff]
      %v6622 = vld [vmem:[%s9 + $0x48] sm:$0xff]
      %v6623 = vld [vmem:[%s9 + $0x50] sm:$0xff]
      %v6624 = vld [vmem:[%s9 + $0x58] sm:$0xff]
      %v6625 = vld [vmem:[%s9 + $0x60] sm:$0xff]
      %v6626 = vld [vmem:[%s9 + $0x68] sm:$0xff]
      %v6627 = vld [vmem:[%s9 + $0x70] sm:$0xff]
      %v6628 = vld [vmem:[%s9 + $0x78] sm:$0xff]
      %v6629 = vpack.c.bf16 %v6489, %v6485
      %v6630 = vpack.c.bf16 %v6490, %v6486
      %v6631 = vpack.c.bf16 %v6491, %v6487
      %v6632 = vpack.c.bf16 %v6492, %v6488
      %v6633 = vpack.c.bf16 %v6497, %v6493
      %v6634 = vpack.c.bf16 %v6498, %v6494
      %v6635 = vpack.c.bf16 %v6499, %v6495
      %v6636 = vpack.c.bf16 %v6500, %v6496
      %v6637 = vpack.c.bf16 %v6505, %v6501
      %v6638 = vpack.c.bf16 %v6506, %v6502
      %v6639 = vpack.c.bf16 %v6507, %v6503
      %v6640 = vpack.c.bf16 %v6508, %v6504
      %v6641 = vpack.c.bf16 %v6513, %v6509
      %v6642 = vpack.c.bf16 %v6514, %v6510
      %v6643 = vpack.c.bf16 %v6515, %v6511
      %v6644 = vpack.c.bf16 %v6516, %v6512
      %v6645 = vpack.c.bf16 %v6521, %v6517
      %v6646 = vpack.c.bf16 %v6522, %v6518
      %v6647 = vpack.c.bf16 %v6523, %v6519
      %v6648 = vpack.c.bf16 %v6524, %v6520
      %v6649 = vpack.c.bf16 %v6529, %v6525
      %v6650 = vpack.c.bf16 %v6530, %v6526
      %v6651 = vpack.c.bf16 %v6531, %v6527
      %v6652 = vpack.c.bf16 %v6532, %v6528
      %v6653 = vpack.c.bf16 %v6537, %v6533
      %v6654 = vpack.c.bf16 %v6538, %v6534
      %v6655 = vpack.c.bf16 %v6539, %v6535
      %v6656 = vpack.c.bf16 %v6540, %v6536
      %v6657 = vpack.c.bf16 %v6545, %v6541
      %v6658 = vpack.c.bf16 %v6546, %v6542
      %v6659 = vpack.c.bf16 %v6547, %v6543
      %v6660 = vpack.c.bf16 %v6548, %v6544
      %v6661 = vpack.c.bf16 %v6553, %v6549
      %v6662 = vpack.c.bf16 %v6554, %v6550
      %v6663 = vpack.c.bf16 %v6555, %v6551
      %v6664 = vpack.c.bf16 %v6556, %v6552
      %v6665 = vpack.c.bf16 %v6561, %v6557
      %v6666 = vpack.c.bf16 %v6562, %v6558
      %v6667 = vpack.c.bf16 %v6563, %v6559
      %v6668 = vpack.c.bf16 %v6564, %v6560
      %v6669 = vpack.c.bf16 %v6569, %v6565
      %v6670 = vpack.c.bf16 %v6570, %v6566
      %v6671 = vpack.c.bf16 %v6571, %v6567
      %v6672 = vpack.c.bf16 %v6572, %v6568
      %v6673 = vpack.c.bf16 %v6577, %v6573
      %v6674 = vpack.c.bf16 %v6578, %v6574
      %v6675 = vpack.c.bf16 %v6579, %v6575
      %v6676 = vpack.c.bf16 %v6580, %v6576
      %v6677 = vpack.c.bf16 %v6585, %v6581
      %v6678 = vpack.c.bf16 %v6586, %v6582
      %v6679 = vpack.c.bf16 %v6587, %v6583
      %v6680 = vpack.c.bf16 %v6588, %v6584
      %v6681 = vpack.c.bf16 %v6593, %v6589
      %v6682 = vpack.c.bf16 %v6594, %v6590
      %v6683 = vpack.c.bf16 %v6595, %v6591
      %v6684 = vpack.c.bf16 %v6596, %v6592
      %v6685 = vpack.c.bf16 %v6601, %v6597
      %v6686 = vpack.c.bf16 %v6602, %v6598
      %v6687 = vpack.c.bf16 %v6603, %v6599
      %v6688 = vpack.c.bf16 %v6604, %v6600
      %v6689 = vpack.c.bf16 %v6609, %v6605
      %v6690 = vpack.c.bf16 %v6610, %v6606
      %v6691 = vpack.c.bf16 %v6611, %v6607
      %v6692 = vpack.c.bf16 %v6612, %v6608
      %v6709 = vunpack.c.l.b16 %v6613
      %v6710 = vunpack.c.h.b16 %v6613
      %v6711 = vunpack.c.l.b16 %v6614
      %v6712 = vunpack.c.h.b16 %v6614
      %v6713 = vunpack.c.l.b16 %v6615
      %v6714 = vunpack.c.h.b16 %v6615
      %v6715 = vunpack.c.l.b16 %v6616
      %v6716 = vunpack.c.h.b16 %v6616
      %v6717 = vunpack.c.l.b16 %v6617
      %v6718 = vunpack.c.h.b16 %v6617
      %v6719 = vunpack.c.l.b16 %v6618
      %v6720 = vunpack.c.h.b16 %v6618
      %v6721 = vunpack.c.l.b16 %v6619
      %v6722 = vunpack.c.h.b16 %v6619
      %v6723 = vunpack.c.l.b16 %v6620
      %v6724 = vunpack.c.h.b16 %v6620
      %v6725 = vunpack.c.l.b16 %v6621
      %v6726 = vunpack.c.h.b16 %v6621
      %v6727 = vunpack.c.l.b16 %v6622
      %v6728 = vunpack.c.h.b16 %v6622
      %v6729 = vunpack.c.l.b16 %v6623
      %v6730 = vunpack.c.h.b16 %v6623
      %v6731 = vunpack.c.l.b16 %v6624
      %v6732 = vunpack.c.h.b16 %v6624
      %v6733 = vunpack.c.l.b16 %v6625
      %v6734 = vunpack.c.h.b16 %v6625
      %v6735 = vunpack.c.l.b16 %v6626
      %v6736 = vunpack.c.h.b16 %v6626
      %v6737 = vunpack.c.l.b16 %v6627
      %v6738 = vunpack.c.h.b16 %v6627
      %v6739 = vunpack.c.l.b16 %v6628
      %v6740 = vunpack.c.h.b16 %v6628
      %v6741 = vpack.c.b16 %v6711, %v6709
      %v6742 = vpack.c.b16 %v6712, %v6710
      %v6743 = vpack.c.b16 %v6715, %v6713
      %v6744 = vpack.c.b16 %v6716, %v6714
      %v6745 = vpack.c.b16 %v6719, %v6717
      %v6746 = vpack.c.b16 %v6720, %v6718
      %v6747 = vpack.c.b16 %v6723, %v6721
      %v6748 = vpack.c.b16 %v6724, %v6722
      %v6749 = vpack.c.b16 %v6727, %v6725
      %v6750 = vpack.c.b16 %v6728, %v6726
      %v6751 = vpack.c.b16 %v6731, %v6729
      %v6752 = vpack.c.b16 %v6732, %v6730
      %v6753 = vpack.c.b16 %v6735, %v6733
      %v6754 = vpack.c.b16 %v6736, %v6734
      %v6755 = vpack.c.b16 %v6739, %v6737
      %v6756 = vpack.c.b16 %v6740, %v6738
      %6773 = vmatprep.subr.bf16.mxu0 %v6630
      %6774 = vmatpush1.bf16.msra.mxu0 %v6629
      %6775 = vmatprep.subr.bf16.mxu0 %v6634
      %6776 = vmatpush1.bf16.msra.mxu0 %v6633
      %6777 = vmatprep.subr.bf16.mxu0 %v6638
      %6778 = vmatpush1.bf16.msra.mxu0 %v6637
      %6779 = vmatprep.subr.bf16.mxu0 %v6642
      %6780 = vmatpush1.bf16.msra.mxu0 %v6641
      %6781 = vmatprep.subr.bf16.mxu0 %v6646
      %6782 = vmatpush1.bf16.msra.mxu0 %v6645
      %6783 = vmatprep.subr.bf16.mxu0 %v6650
      %6784 = vmatpush1.bf16.msra.mxu0 %v6649
      %6785 = vmatprep.subr.bf16.mxu0 %v6654
      %6786 = vmatpush1.bf16.msra.mxu0 %v6653
      %6787 = vmatprep.subr.bf16.mxu0 %v6658
      %6788 = vmatpush1.bf16.msra.mxu0 %v6657
      %6789 = vmatprep.subr.bf16.mxu0 %v6662
      %6790 = vmatpush1.bf16.msra.mxu0 %v6661
      %6791 = vmatprep.subr.bf16.mxu0 %v6666
      %6792 = vmatpush1.bf16.msra.mxu0 %v6665
      %6793 = vmatprep.subr.bf16.mxu0 %v6670
      %6794 = vmatpush1.bf16.msra.mxu0 %v6669
      %6795 = vmatprep.subr.bf16.mxu0 %v6674
      %6796 = vmatpush1.bf16.msra.mxu0 %v6673
      %6797 = vmatprep.subr.bf16.mxu0 %v6678
      %6798 = vmatpush1.bf16.msra.mxu0 %v6677
      %6799 = vmatprep.subr.bf16.mxu0 %v6682
      %6800 = vmatpush1.bf16.msra.mxu0 %v6681
      %6801 = vmatprep.subr.bf16.mxu0 %v6686
      %6802 = vmatpush1.bf16.msra.mxu0 %v6685
      %6803 = vmatprep.subr.bf16.mxu0 %v6690
      %6804 = vmatpush1.bf16.msra.mxu0 %v6689
      %6805 = vmatprep.mubr.bf16.mxu0 %v6742
      %6806 = vmatmul.mubr.bf16.gmra.mrb[0].mxu0 %v6741
      %v6807 = vpop.f32.mrb[0].mxu0
      %v6808 = vadd.f32 0.0, %v6807
      %v6809 = vpop.f32.mrb[0].mxu0
      %v6810 = vadd.f32 0.0, %v6809
      %v6811 = vpop.f32.mrb[0].mxu0
      %v6812 = vadd.f32 0.0, %v6811
      %v6813 = vpop.f32.mrb[0].mxu0
      %v6814 = vadd.f32 0.0, %v6813
      %6815 = vmatprep.mubr.bf16.mxu0 %v6744
      %6816 = vmatmul.mubr.bf16.gmra.mrb[0].mxu0 %v6743
      %v6817 = vpop.f32.mrb[0].mxu0
      %v6818 = vadd.f32 0.0, %v6817
      %v6819 = vpop.f32.mrb[0].mxu0
      %v6820 = vadd.f32 0.0, %v6819
      %v6821 = vpop.f32.mrb[0].mxu0
      %v6822 = vadd.f32 0.0, %v6821
      %v6823 = vpop.f32.mrb[0].mxu0
      %v6824 = vadd.f32 0.0, %v6823
      %6825 = vmatprep.mubr.bf16.mxu0 %v6746
      %6826 = vmatmul.mubr.bf16.gmra.mrb[0].mxu0 %v6745
      %v6827 = vpop.f32.mrb[0].mxu0
      %v6828 = vadd.f32 0.0, %v6827
      %v6829 = vpop.f32.mrb[0].mxu0
      %v6830 = vadd.f32 0.0, %v6829
      %v6831 = vpop.f32.mrb[0].mxu0
      %v6832 = vadd.f32 0.0, %v6831
      %v6833 = vpop.f32.mrb[0].mxu0
      %v6834 = vadd.f32 0.0, %v6833
      %6835 = vmatprep.mubr.bf16.mxu0 %v6748
      %6836 = vmatmul.mubr.bf16.gmra.mrb[0].mxu0 %v6747
      %v6837 = vpop.f32.mrb[0].mxu0
      %v6838 = vadd.f32 0.0, %v6837
      %v6839 = vpop.f32.mrb[0].mxu0
      %v6840 = vadd.f32 0.0, %v6839
      %v6841 = vpop.f32.mrb[0].mxu0
      %v6842 = vadd.f32 0.0, %v6841
      %v6843 = vpop.f32.mrb[0].mxu0
      %v6844 = vadd.f32 0.0, %v6843
      %6845 = vmatprep.mubr.bf16.mxu0 %v6750
      %6846 = vmatmul.mubr.bf16.gmra.mrb[0].mxu0 %v6749
      %v6847 = vpop.f32.mrb[0].mxu0
      %v6848 = vadd.f32 0.0, %v6847
      %v6849 = vpop.f32.mrb[0].mxu0
      %v6850 = vadd.f32 0.0, %v6849
      %v6851 = vpop.f32.mrb[0].mxu0
      %v6852 = vadd.f32 0.0, %v6851
      %v6853 = vpop.f32.mrb[0].mxu0
      %v6854 = vadd.f32 0.0, %v6853
      %6855 = vmatprep.mubr.bf16.mxu0 %v6752
      %6856 = vmatmul.mubr.bf16.gmra.mrb[0].mxu0 %v6751
      %v6857 = vpop.f32.mrb[0].mxu0
      %v6858 = vadd.f32 0.0, %v6857
      %v6859 = vpop.f32.mrb[0].mxu0
      %v6860 = vadd.f32 0.0, %v6859
      %v6861 = vpop.f32.mrb[0].mxu0
      %v6862 = vadd.f32 0.0, %v6861
      %v6863 = vpop.f32.mrb[0].mxu0
      %v6864 = vadd.f32 0.0, %v6863
      %6865 = vmatprep.mubr.bf16.mxu0 %v6754
      %6866 = vmatmul.mubr.bf16.gmra.mrb[0].mxu0 %v6753
      %v6867 = vpop.f32.mrb[0].mxu0
      %v6868 = vadd.f32 0.0, %v6867
      %v6869 = vpop.f32.mrb[0].mxu0
      %v6870 = vadd.f32 0.0, %v6869
      %v6871 = vpop.f32.mrb[0].mxu0
      %v6872 = vadd.f32 0.0, %v6871
      %v6873 = vpop.f32.mrb[0].mxu0
      %v6874 = vadd.f32 0.0, %v6873
      %6875 = vmatprep.mubr.bf16.mxu0 %v6756
      %6876 = vmatmul.mubr.bf16.gmra.mrb[0].mxu0 %v6755
      %v6877 = vpop.f32.mrb[0].mxu0
      %v6878 = vadd.f32 0.0, %v6877
      %v6879 = vpop.f32.mrb[0].mxu0
      %v6880 = vadd.f32 0.0, %v6879
      %v6881 = vpop.f32.mrb[0].mxu0
      %v6882 = vadd.f32 0.0, %v6881
      %v6883 = vpop.f32.mrb[0].mxu0
      %v6884 = vadd.f32 0.0, %v6883
      %6885 = vdwg.mxu0
      %6886 = vmatprep.subr.bf16.mxu0 %v6632
      %6887 = vmatpush1.bf16.msra.mxu0 %v6631
      %6888 = vmatprep.subr.bf16.mxu0 %v6636
      %6889 = vmatpush1.bf16.msra.mxu0 %v6635
      %6890 = vmatprep.subr.bf16.mxu0 %v6640
      %6891 = vmatpush1.bf16.msra.mxu0 %v6639
      %6892 = vmatprep.subr.bf16.mxu0 %v6644
      %6893 = vmatpush1.bf16.msra.mxu0 %v6643
      %6894 = vmatprep.subr.bf16.mxu0 %v6648
      %6895 = vmatpush1.bf16.msra.mxu0 %v6647
      %6896 = vmatprep.subr.bf16.mxu0 %v6652
      %6897 = vmatpush1.bf16.msra.mxu0 %v6651
      %6898 = vmatprep.subr.bf16.mxu0 %v6656
      %6899 = vmatpush1.bf16.msra.mxu0 %v6655
      %6900 = vmatprep.subr.bf16.mxu0 %v6660
      %6901 = vmatpush1.bf16.msra.mxu0 %v6659
      %6902 = vmatprep.subr.bf16.mxu0 %v6664
      %6903 = vmatpush1.bf16.msra.mxu0 %v6663
      %6904 = vmatprep.subr.bf16.mxu0 %v6668
      %6905 = vmatpush1.bf16.msra.mxu0 %v6667
      %6906 = vmatprep.subr.bf16.mxu0 %v6672
      %6907 = vmatpush1.bf16.msra.mxu0 %v6671
      %6908 = vmatprep.subr.bf16.mxu0 %v6676
      %6909 = vmatpush1.bf16.msra.mxu0 %v6675
      %6910 = vmatprep.subr.bf16.mxu0 %v6680
      %6911 = vmatpush1.bf16.msra.mxu0 %v6679
      %6912 = vmatprep.subr.bf16.mxu0 %v6684
      %6913 = vmatpush1.bf16.msra.mxu0 %v6683
      %6914 = vmatprep.subr.bf16.mxu0 %v6688
      %6915 = vmatpush1.bf16.msra.mxu0 %v6687
      %6916 = vmatprep.subr.bf16.mxu0 %v6692
      %6917 = vmatpush1.bf16.msra.mxu0 %v6691
      %6918 = vmatprep.mubr.bf16.mxu0 %v6742
      %6919 = vmatmul.mubr.bf16.gmra.mrb[0].mxu0 %v6741
      %v6920 = vpop.f32.mrb[0].mxu0
      %v6921 = vadd.f32 0.0, %v6920
      %v6922 = vpop.f32.mrb[0].mxu0
      %v6923 = vadd.f32 0.0, %v6922
      %v6924 = vpop.f32.mrb[0].mxu0
      %v6925 = vadd.f32 0.0, %v6924
      %v6926 = vpop.f32.mrb[0].mxu0
      %v6927 = vadd.f32 0.0, %v6926
      %6928 = vmatprep.mubr.bf16.mxu0 %v6744
      %6929 = vmatmul.mubr.bf16.gmra.mrb[0].mxu0 %v6743
      %v6930 = vpop.f32.mrb[0].mxu0
      %v6931 = vadd.f32 0.0, %v6930
      %v6932 = vpop.f32.mrb[0].mxu0
      %v6933 = vadd.f32 0.0, %v6932
      %v6934 = vpop.f32.mrb[0].mxu0
      %v6935 = vadd.f32 0.0, %v6934
      %v6936 = vpop.f32.mrb[0].mxu0
      %v6937 = vadd.f32 0.0, %v6936
      %6938 = vmatprep.mubr.bf16.mxu0 %v6746
      %6939 = vmatmul.mubr.bf16.gmra.mrb[0].mxu0 %v6745
      %v6940 = vpop.f32.mrb[0].mxu0
      %v6941 = vadd.f32 0.0, %v6940
      %v6942 = vpop.f32.mrb[0].mxu0
      %v6943 = vadd.f32 0.0, %v6942
      %v6944 = vpop.f32.mrb[0].mxu0
      %v6945 = vadd.f32 0.0, %v6944
      %v6946 = vpop.f32.mrb[0].mxu0
      %v6947 = vadd.f32 0.0, %v6946
      %6948 = vmatprep.mubr.bf16.mxu0 %v6748
      %6949 = vmatmul.mubr.bf16.gmra.mrb[0].mxu0 %v6747
      %v6950 = vpop.f32.mrb[0].mxu0
      %v6951 = vadd.f32 0.0, %v6950
      %v6952 = vpop.f32.mrb[0].mxu0
      %v6953 = vadd.f32 0.0, %v6952
      %v6954 = vpop.f32.mrb[0].mxu0
      %v6955 = vadd.f32 0.0, %v6954
      %v6956 = vpop.f32.mrb[0].mxu0
      %v6957 = vadd.f32 0.0, %v6956
      %6958 = vmatprep.mubr.bf16.mxu0 %v6750
      %6959 = vmatmul.mubr.bf16.gmra.mrb[0].mxu0 %v6749
      %v6960 = vpop.f32.mrb[0].mxu0
      %v6961 = vadd.f32 0.0, %v6960
      %v6962 = vpop.f32.mrb[0].mxu0
      %v6963 = vadd.f32 0.0, %v6962
      %v6964 = vpop.f32.mrb[0].mxu0
      %v6965 = vadd.f32 0.0, %v6964
      %v6966 = vpop.f32.mrb[0].mxu0
      %v6967 = vadd.f32 0.0, %v6966
      %6968 = vmatprep.mubr.bf16.mxu0 %v6752
      %6969 = vmatmul.mubr.bf16.gmra.mrb[0].mxu0 %v6751
      %v6970 = vpop.f32.mrb[0].mxu0
      %v6971 = vadd.f32 0.0, %v6970
      %v6972 = vpop.f32.mrb[0].mxu0
      %v6973 = vadd.f32 0.0, %v6972
      %v6974 = vpop.f32.mrb[0].mxu0
      %v6975 = vadd.f32 0.0, %v6974
      %v6976 = vpop.f32.mrb[0].mxu0
      %v6977 = vadd.f32 0.0, %v6976
      %6978 = vmatprep.mubr.bf16.mxu0 %v6754
      %6979 = vmatmul.mubr.bf16.gmra.mrb[0].mxu0 %v6753
      %v6980 = vpop.f32.mrb[0].mxu0
      %v6981 = vadd.f32 0.0, %v6980
      %v6982 = vpop.f32.mrb[0].mxu0
      %v6983 = vadd.f32 0.0, %v6982
      %v6984 = vpop.f32.mrb[0].mxu0
      %v6985 = vadd.f32 0.0, %v6984
      %v6986 = vpop.f32.mrb[0].mxu0
      %v6987 = vadd.f32 0.0, %v6986
      %6988 = vmatprep.mubr.bf16.mxu0 %v6756
      %6989 = vmatmul.mubr.bf16.gmra.mrb[0].mxu0 %v6755
      %v6990 = vpop.f32.mrb[0].mxu0
      %v6991 = vadd.f32 0.0, %v6990
      %v6992 = vpop.f32.mrb[0].mxu0
      %v6993 = vadd.f32 0.0, %v6992
      %v6994 = vpop.f32.mrb[0].mxu0
      %v6995 = vadd.f32 0.0, %v6994
      %v6996 = vpop.f32.mrb[0].mxu0
      %v6997 = vadd.f32 0.0, %v6996
      %6998 = vdwg.mxu0
      %6999 = vrot.lane.b32.xlu0 %v6808, 112
      %v7000 = vpop.permute.xlu0 %6999
      %7001 = vrot.lane.b32.xlu0 %v6812, 112
      %v7002 = vpop.permute.xlu0 %7001
      %7003 = vrot.lane.b32.xlu0 %v6818, 112
      %v7004 = vpop.permute.xlu0 %7003
      %7005 = vrot.lane.b32.xlu0 %v6822, 112
      %v7006 = vpop.permute.xlu0 %7005
      %7007 = vrot.lane.b32.xlu0 %v6828, 112
      %v7008 = vpop.permute.xlu0 %7007
      %7009 = vrot.lane.b32.xlu0 %v6832, 112
      %v7010 = vpop.permute.xlu0 %7009
      %7011 = vrot.lane.b32.xlu0 %v6838, 112
      %v7012 = vpop.permute.xlu0 %7011
      %7013 = vrot.lane.b32.xlu0 %v6842, 112
      %v7014 = vpop.permute.xlu0 %7013
      %7015 = vrot.lane.b32.xlu0 %v6848, 112
      %v7016 = vpop.permute.xlu0 %7015
      %7017 = vrot.lane.b32.xlu0 %v6852, 112
      %v7018 = vpop.permute.xlu0 %7017
      %7019 = vrot.lane.b32.xlu0 %v6858, 112
      %v7020 = vpop.permute.xlu0 %7019
      %7021 = vrot.lane.b32.xlu0 %v6862, 112
      %v7022 = vpop.permute.xlu0 %7021
      %7023 = vrot.lane.b32.xlu0 %v6868, 112
      %v7024 = vpop.permute.xlu0 %7023
      %7025 = vrot.lane.b32.xlu0 %v6872, 112
      %v7026 = vpop.permute.xlu0 %7025
      %7027 = vrot.lane.b32.xlu0 %v6878, 112
      %v7028 = vpop.permute.xlu0 %7027
      %7029 = vrot.lane.b32.xlu0 %v6882, 112
      %v7030 = vpop.permute.xlu0 %7029
      %7031 = vrot.lane.b32.xlu0 %v6810, 112
      %v7032 = vpop.permute.xlu0 %7031
      %7033 = vrot.lane.b32.xlu0 %v6814, 112
      %v7034 = vpop.permute.xlu0 %7033
      %7035 = vrot.lane.b32.xlu0 %v6820, 112
      %v7036 = vpop.permute.xlu0 %7035
      %7037 = vrot.lane.b32.xlu0 %v6824, 112
      %v7038 = vpop.permute.xlu0 %7037
      %7039 = vrot.lane.b32.xlu0 %v6830, 112
      %v7040 = vpop.permute.xlu0 %7039
      %7041 = vrot.lane.b32.xlu0 %v6834, 112
      %v7042 = vpop.permute.xlu0 %7041
      %7043 = vrot.lane.b32.xlu0 %v6840, 112
      %v7044 = vpop.permute.xlu0 %7043
      %7045 = vrot.lane.b32.xlu0 %v6844, 112
      %v7046 = vpop.permute.xlu0 %7045
      %7047 = vrot.lane.b32.xlu0 %v6850, 112
      %v7048 = vpop.permute.xlu0 %7047
      %7049 = vrot.lane.b32.xlu0 %v6854, 112
      %v7050 = vpop.permute.xlu0 %7049
      %7051 = vrot.lane.b32.xlu0 %v6860, 112
      %v7052 = vpop.permute.xlu0 %7051
      %7053 = vrot.lane.b32.xlu0 %v6864, 112
      %v7054 = vpop.permute.xlu0 %7053
      %7055 = vrot.lane.b32.xlu0 %v6870, 112
      %v7056 = vpop.permute.xlu0 %7055
      %7057 = vrot.lane.b32.xlu0 %v6874, 112
      %v7058 = vpop.permute.xlu0 %7057
      %7059 = vrot.lane.b32.xlu0 %v6880, 112
      %v7060 = vpop.permute.xlu0 %7059
      %7061 = vrot.lane.b32.xlu0 %v6884, 112
      %v7062 = vpop.permute.xlu0 %7061
      %7063 = vrot.lane.b32.xlu0 %v6921, 112
      %v7064 = vpop.permute.xlu0 %7063
      %7065 = vrot.lane.b32.xlu0 %v6925, 112
      %v7066 = vpop.permute.xlu0 %7065
      %7067 = vrot.lane.b32.xlu0 %v6931, 112
      %v7068 = vpop.permute.xlu0 %7067
      %7069 = vrot.lane.b32.xlu0 %v6935, 112
      %v7070 = vpop.permute.xlu0 %7069
      %7071 = vrot.lane.b32.xlu0 %v6941, 112
      %v7072 = vpop.permute.xlu0 %7071
      %7073 = vrot.lane.b32.xlu0 %v6945, 112
      %v7074 = vpop.permute.xlu0 %7073
      %7075 = vrot.lane.b32.xlu0 %v6951, 112
      %v7076 = vpop.permute.xlu0 %7075
      %7077 = vrot.lane.b32.xlu0 %v6955, 112
      %v7078 = vpop.permute.xlu0 %7077
      %7079 = vrot.lane.b32.xlu0 %v6961, 112
      %v7080 = vpop.permute.xlu0 %7079
      %7081 = vrot.lane.b32.xlu0 %v6965, 112
      %v7082 = vpop.permute.xlu0 %7081
      %7083 = vrot.lane.b32.xlu0 %v6971, 112
      %v7084 = vpop.permute.xlu0 %7083
      %7085 = vrot.lane.b32.xlu0 %v6975, 112
      %v7086 = vpop.permute.xlu0 %7085
      %7087 = vrot.lane.b32.xlu0 %v6981, 112
      %v7088 = vpop.permute.xlu0 %7087
      %7089 = vrot.lane.b32.xlu0 %v6985, 112
      %v7090 = vpop.permute.xlu0 %7089
      %7091 = vrot.lane.b32.xlu0 %v6991, 112
      %v7092 = vpop.permute.xlu0 %7091
      %7093 = vrot.lane.b32.xlu0 %v6995, 112
      %v7094 = vpop.permute.xlu0 %7093
      %7095 = vrot.lane.b32.xlu0 %v6923, 112
      %v7096 = vpop.permute.xlu0 %7095
      %7097 = vrot.lane.b32.xlu0 %v6927, 112
      %v7098 = vpop.permute.xlu0 %7097
      %7099 = vrot.lane.b32.xlu0 %v6933, 112
      %v7100 = vpop.permute.xlu0 %7099
      %7101 = vrot.lane.b32.xlu0 %v6937, 112
      %v7102 = vpop.permute.xlu0 %7101
      %7103 = vrot.lane.b32.xlu0 %v6943, 112
      %v7104 = vpop.permute.xlu0 %7103
      %7105 = vrot.lane.b32.xlu0 %v6947, 112
      %v7106 = vpop.permute.xlu0 %7105
      %7107 = vrot.lane.b32.xlu0 %v6953, 112
      %v7108 = vpop.permute.xlu0 %7107
      %7109 = vrot.lane.b32.xlu0 %v6957, 112
      %v7110 = vpop.permute.xlu0 %7109
      %7111 = vrot.lane.b32.xlu0 %v6963, 112
      %v7112 = vpop.permute.xlu0 %7111
      %7113 = vrot.lane.b32.xlu0 %v6967, 112
      %v7114 = vpop.permute.xlu0 %7113
      %7115 = vrot.lane.b32.xlu0 %v6973, 112
      %v7116 = vpop.permute.xlu0 %7115
      %7117 = vrot.lane.b32.xlu0 %v6977, 112
      %v7118 = vpop.permute.xlu0 %7117
      %7119 = vrot.lane.b32.xlu0 %v6983, 112
      %v7120 = vpop.permute.xlu0 %7119
      %7121 = vrot.lane.b32.xlu0 %v6987, 112
      %v7122 = vpop.permute.xlu0 %7121
      %7123 = vrot.lane.b32.xlu0 %v6993, 112
      %v7124 = vpop.permute.xlu0 %7123
      %7125 = vrot.lane.b32.xlu0 %v6997, 112
      %v7126 = vpop.permute.xlu0 %7125
      %v7127 = vlaneseq
      %v7128 = vand.u32 %v7127, 127
      %vm7129 = vcmp.lt.s32.totalorder %v7128, 112
      %v7130 = vsel %vm7129, %v7064, %v7096
      %v7131 = vsel %vm7129, %v7066, %v7098
      %v7132 = vsel %vm7129, %v7068, %v7100
      %v7133 = vsel %vm7129, %v7070, %v7102
      %v7134 = vsel %vm7129, %v7072, %v7104
      %v7135 = vsel %vm7129, %v7074, %v7106
      %v7136 = vsel %vm7129, %v7076, %v7108
      %v7137 = vsel %vm7129, %v7078, %v7110
      %v7138 = vsel %vm7129, %v7080, %v7112
      %v7139 = vsel %vm7129, %v7082, %v7114
      %v7140 = vsel %vm7129, %v7084, %v7116
      %v7141 = vsel %vm7129, %v7086, %v7118
      %v7142 = vsel %vm7129, %v7088, %v7120
      %v7143 = vsel %vm7129, %v7090, %v7122
      %v7144 = vsel %vm7129, %v7092, %v7124
      %v7145 = vsel %vm7129, %v7094, %v7126
      %v7146 = vsel %vm7129, %v7032, %v7064
      %v7147 = vsel %vm7129, %v7034, %v7066
      %v7148 = vsel %vm7129, %v7036, %v7068
      %v7149 = vsel %vm7129, %v7038, %v7070
      %v7150 = vsel %vm7129, %v7040, %v7072
      %v7151 = vsel %vm7129, %v7042, %v7074
      %v7152 = vsel %vm7129, %v7044, %v7076
      %v7153 = vsel %vm7129, %v7046, %v7078
      %v7154 = vsel %vm7129, %v7048, %v7080
      %v7155 = vsel %vm7129, %v7050, %v7082
      %v7156 = vsel %vm7129, %v7052, %v7084
      %v7157 = vsel %vm7129, %v7054, %v7086
      %v7158 = vsel %vm7129, %v7056, %v7088
      %v7159 = vsel %vm7129, %v7058, %v7090
      %v7160 = vsel %vm7129, %v7060, %v7092
      %v7161 = vsel %vm7129, %v7062, %v7094
      %v7162 = vsel %vm7129, %v7000, %v7032
      %v7163 = vsel %vm7129, %v7002, %v7034
      %v7164 = vsel %vm7129, %v7004, %v7036
      %v7165 = vsel %vm7129, %v7006, %v7038
      %v7166 = vsel %vm7129, %v7008, %v7040
      %v7167 = vsel %vm7129, %v7010, %v7042
      %v7168 = vsel %vm7129, %v7012, %v7044
      %v7169 = vsel %vm7129, %v7014, %v7046
      %v7170 = vsel %vm7129, %v7016, %v7048
      %v7171 = vsel %vm7129, %v7018, %v7050
      %v7172 = vsel %vm7129, %v7020, %v7052
      %v7173 = vsel %vm7129, %v7022, %v7054
      %v7174 = vsel %vm7129, %v7024, %v7056
      %v7175 = vsel %vm7129, %v7026, %v7058
      %v7176 = vsel %vm7129, %v7028, %v7060
      %v7177 = vsel %vm7129, %v7030, %v7062
      %v7178 = vsel %vm7129, %v7096, %v7000
      %v7179 = vsel %vm7129, %v7098, %v7002
      %v7180 = vsel %vm7129, %v7100, %v7004
      %v7181 = vsel %vm7129, %v7102, %v7006
      %v7182 = vsel %vm7129, %v7104, %v7008
      %v7183 = vsel %vm7129, %v7106, %v7010
      %v7184 = vsel %vm7129, %v7108, %v7012
      %v7185 = vsel %vm7129, %v7110, %v7014
      %v7186 = vsel %vm7129, %v7112, %v7016
      %v7187 = vsel %vm7129, %v7114, %v7018
      %v7188 = vsel %vm7129, %v7116, %v7020
      %v7189 = vsel %vm7129, %v7118, %v7022
      %v7190 = vsel %vm7129, %v7120, %v7024
      %v7191 = vsel %vm7129, %v7122, %v7026
      %v7192 = vsel %vm7129, %v7124, %v7028
      %v7193 = vsel %vm7129, %v7126, %v7030
      %v7194 = vmax.f32 %v6808, %v7162
      %v7195 = vmax.f32 %v6810, %v7146
      %v7196 = vmax.f32 %v6921, %v7130
      %v7197 = vmax.f32 %v6923, %v7178
      %v7198 = vmax.f32 %v6812, %v7163
      %v7199 = vmax.f32 %v6814, %v7147
      %v7200 = vmax.f32 %v6925, %v7131
      %v7201 = vmax.f32 %v6927, %v7179
      %v7202 = vmax.f32 %v6818, %v7164
      %v7203 = vmax.f32 %v6820, %v7148
      %v7204 = vmax.f32 %v6931, %v7132
      %v7205 = vmax.f32 %v6933, %v7180
      %v7206 = vmax.f32 %v6822, %v7165
      %v7207 = vmax.f32 %v6824, %v7149
      %v7208 = vmax.f32 %v6935, %v7133
      %v7209 = vmax.f32 %v6937, %v7181
      %v7210 = vmax.f32 %v6828, %v7166
      %v7211 = vmax.f32 %v6830, %v7150
      %v7212 = vmax.f32 %v6941, %v7134
      %v7213 = vmax.f32 %v6943, %v7182
      %v7214 = vmax.f32 %v6832, %v7167
      %v7215 = vmax.f32 %v6834, %v7151
      %v7216 = vmax.f32 %v6945, %v7135
      %v7217 = vmax.f32 %v6947, %v7183
      %v7218 = vmax.f32 %v6838, %v7168
      %v7219 = vmax.f32 %v6840, %v7152
      %v7220 = vmax.f32 %v6951, %v7136
      %v7221 = vmax.f32 %v6953, %v7184
      %v7222 = vmax.f32 %v6842, %v7169
      %v7223 = vmax.f32 %v6844, %v7153
      %v7224 = vmax.f32 %v6955, %v7137
      %v7225 = vmax.f32 %v6957, %v7185
      %v7226 = vmax.f32 %v6848, %v7170
      %v7227 = vmax.f32 %v6850, %v7154
      %v7228 = vmax.f32 %v6961, %v7138
      %v7229 = vmax.f32 %v6963, %v7186
      %v7230 = vmax.f32 %v6852, %v7171
      %v7231 = vmax.f32 %v6854, %v7155
      %v7232 = vmax.f32 %v6965, %v7139
      %v7233 = vmax.f32 %v6967, %v7187
      %v7234 = vmax.f32 %v6858, %v7172
      %v7235 = vmax.f32 %v6860, %v7156
      %v7236 = vmax.f32 %v6971, %v7140
      %v7237 = vmax.f32 %v6973, %v7188
      %v7238 = vmax.f32 %v6862, %v7173
      %v7239 = vmax.f32 %v6864, %v7157
      %v7240 = vmax.f32 %v6975, %v7141
      %v7241 = vmax.f32 %v6977, %v7189
      %v7242 = vmax.f32 %v6868, %v7174
      %v7243 = vmax.f32 %v6870, %v7158
      %v7244 = vmax.f32 %v6981, %v7142
      %v7245 = vmax.f32 %v6983, %v7190
      %v7246 = vmax.f32 %v6872, %v7175
      %v7247 = vmax.f32 %v6874, %v7159
      %v7248 = vmax.f32 %v6985, %v7143
      %v7249 = vmax.f32 %v6987, %v7191
      %v7250 = vmax.f32 %v6878, %v7176
      %v7251 = vmax.f32 %v6880, %v7160
      %v7252 = vmax.f32 %v6991, %v7144
      %v7253 = vmax.f32 %v6993, %v7192
      %v7254 = vmax.f32 %v6882, %v7177
      %v7255 = vmax.f32 %v6884, %v7161
      %v7256 = vmax.f32 %v6995, %v7145
      %v7257 = vmax.f32 %v6997, %v7193
      %v7258 = vpack.c.bf16 %v7198, %v7194
      %v7259 = vpack.c.bf16 %v7199, %v7195
      %v7260 = vpack.c.bf16 %v7200, %v7196
      %v7261 = vpack.c.bf16 %v7201, %v7197
      %v7262 = vpack.c.bf16 %v7206, %v7202
      %v7263 = vpack.c.bf16 %v7207, %v7203
      %v7264 = vpack.c.bf16 %v7208, %v7204
      %v7265 = vpack.c.bf16 %v7209, %v7205
      %v7266 = vpack.c.bf16 %v7214, %v7210
      %v7267 = vpack.c.bf16 %v7215, %v7211
      %v7268 = vpack.c.bf16 %v7216, %v7212
      %v7269 = vpack.c.bf16 %v7217, %v7213
      %v7270 = vpack.c.bf16 %v7222, %v7218
      %v7271 = vpack.c.bf16 %v7223, %v7219
      %v7272 = vpack.c.bf16 %v7224, %v7220
      %v7273 = vpack.c.bf16 %v7225, %v7221
      %v7274 = vpack.c.bf16 %v7230, %v7226
      %v7275 = vpack.c.bf16 %v7231, %v7227
      %v7276 = vpack.c.bf16 %v7232, %v7228
      %v7277 = vpack.c.bf16 %v7233, %v7229
      %v7278 = vpack.c.bf16 %v7238, %v7234
      %v7279 = vpack.c.bf16 %v7239, %v7235
      %v7280 = vpack.c.bf16 %v7240, %v7236
      %v7281 = vpack.c.bf16 %v7241, %v7237
      %v7282 = vpack.c.bf16 %v7246, %v7242
      %v7283 = vpack.c.bf16 %v7247, %v7243
      %v7284 = vpack.c.bf16 %v7248, %v7244
      %v7285 = vpack.c.bf16 %v7249, %v7245
      %v7286 = vpack.c.bf16 %v7254, %v7250
      %v7287 = vpack.c.bf16 %v7255, %v7251
      %v7288 = vpack.c.bf16 %v7256, %v7252
      %v7289 = vpack.c.bf16 %v7257, %v7253
      %v7290 = vld [vmem:[%s10] sm:$0xff]
      %v7291 = vld [vmem:[%s10 + $0x8] sm:$0xff]
      %v7292 = vld [vmem:[%s10 + $0x10] sm:$0xff]
      %v7293 = vld [vmem:[%s10 + $0x18] sm:$0xff]
      %v7294 = vld [vmem:[%s10 + $0x20] sm:$0xff]
      %v7295 = vld [vmem:[%s10 + $0x28] sm:$0xff]
      %v7296 = vld [vmem:[%s10 + $0x30] sm:$0xff]
      %v7297 = vld [vmem:[%s10 + $0x38] sm:$0xff]
      %v7298 = vld [vmem:[%s10 + $0x40] sm:$0xff]
      %v7299 = vld [vmem:[%s10 + $0x48] sm:$0xff]
      %v7300 = vld [vmem:[%s10 + $0x50] sm:$0xff]
      %v7301 = vld [vmem:[%s10 + $0x58] sm:$0xff]
      %v7302 = vld [vmem:[%s10 + $0x60] sm:$0xff]
      %v7303 = vld [vmem:[%s10 + $0x68] sm:$0xff]
      %v7304 = vld [vmem:[%s10 + $0x70] sm:$0xff]
      %v7305 = vld [vmem:[%s10 + $0x78] sm:$0xff]
      %v7306 = vld [vmem:[%s10 + $0x80] sm:$0xff]
      %v7307 = vld [vmem:[%s10 + $0x88] sm:$0xff]
      %v7308 = vld [vmem:[%s10 + $0x90] sm:$0xff]
      %v7309 = vld [vmem:[%s10 + $0x98] sm:$0xff]
      %v7310 = vld [vmem:[%s10 + $0xa0] sm:$0xff]
      %v7311 = vld [vmem:[%s10 + $0xa8] sm:$0xff]
      %v7312 = vld [vmem:[%s10 + $0xb0] sm:$0xff]
      %v7313 = vld [vmem:[%s10 + $0xb8] sm:$0xff]
      %v7314 = vld [vmem:[%s10 + $0xc0] sm:$0xff]
      %v7315 = vld [vmem:[%s10 + $0xc8] sm:$0xff]
      %v7316 = vld [vmem:[%s10 + $0xd0] sm:$0xff]
      %v7317 = vld [vmem:[%s10 + $0xd8] sm:$0xff]
      %v7318 = vld [vmem:[%s10 + $0xe0] sm:$0xff]
      %v7319 = vld [vmem:[%s10 + $0xe8] sm:$0xff]
      %v7320 = vld [vmem:[%s10 + $0xf0] sm:$0xff]
      %v7321 = vld [vmem:[%s10 + $0xf8] sm:$0xff]
      %v7322 = vld [vmem:[%s10 + $0x100] sm:$0xff]
      %v7323 = vld [vmem:[%s10 + $0x108] sm:$0xff]
      %v7324 = vld [vmem:[%s10 + $0x110] sm:$0xff]
      %v7325 = vld [vmem:[%s10 + $0x118] sm:$0xff]
      %v7326 = vld [vmem:[%s10 + $0x120] sm:$0xff]
      %v7327 = vld [vmem:[%s10 + $0x128] sm:$0xff]
      %v7328 = vld [vmem:[%s10 + $0x130] sm:$0xff]
      %v7329 = vld [vmem:[%s10 + $0x138] sm:$0xff]
      %v7330 = vld [vmem:[%s10 + $0x140] sm:$0xff]
      %v7331 = vld [vmem:[%s10 + $0x148] sm:$0xff]
      %v7332 = vld [vmem:[%s10 + $0x150] sm:$0xff]
      %v7333 = vld [vmem:[%s10 + $0x158] sm:$0xff]
      %v7334 = vld [vmem:[%s10 + $0x160] sm:$0xff]
      %v7335 = vld [vmem:[%s10 + $0x168] sm:$0xff]
      %v7336 = vld [vmem:[%s10 + $0x170] sm:$0xff]
      %v7337 = vld [vmem:[%s10 + $0x178] sm:$0xff]
      %v7338 = vld [vmem:[%s10 + $0x180] sm:$0xff]
      %v7339 = vld [vmem:[%s10 + $0x188] sm:$0xff]
      %v7340 = vld [vmem:[%s10 + $0x190] sm:$0xff]
      %v7341 = vld [vmem:[%s10 + $0x198] sm:$0xff]
      %v7342 = vld [vmem:[%s10 + $0x1a0] sm:$0xff]
      %v7343 = vld [vmem:[%s10 + $0x1a8] sm:$0xff]
      %v7344 = vld [vmem:[%s10 + $0x1b0] sm:$0xff]
      %v7345 = vld [vmem:[%s10 + $0x1b8] sm:$0xff]
      %v7346 = vld [vmem:[%s10 + $0x1c0] sm:$0xff]
      %v7347 = vld [vmem:[%s10 + $0x1c8] sm:$0xff]
      %v7348 = vld [vmem:[%s10 + $0x1d0] sm:$0xff]
      %v7349 = vld [vmem:[%s10 + $0x1d8] sm:$0xff]
      %v7350 = vld [vmem:[%s10 + $0x1e0] sm:$0xff]
      %v7351 = vld [vmem:[%s10 + $0x1e8] sm:$0xff]
      %v7352 = vld [vmem:[%s10 + $0x1f0] sm:$0xff]
      %v7353 = vld [vmem:[%s10 + $0x1f8] sm:$0xff]
      %v7418 = vunpack.c.l.b16 %v7290
      %v7419 = vunpack.c.h.b16 %v7290
      %v7420 = vunpack.c.l.b16 %v7291
      %v7421 = vunpack.c.h.b16 %v7291
      %v7422 = vunpack.c.l.b16 %v7292
      %v7423 = vunpack.c.h.b16 %v7292
      %v7424 = vunpack.c.l.b16 %v7293
      %v7425 = vunpack.c.h.b16 %v7293
      %v7426 = vunpack.c.l.b16 %v7294
      %v7427 = vunpack.c.h.b16 %v7294
      %v7428 = vunpack.c.l.b16 %v7295
      %v7429 = vunpack.c.h.b16 %v7295
      %v7430 = vunpack.c.l.b16 %v7296
      %v7431 = vunpack.c.h.b16 %v7296
      %v7432 = vunpack.c.l.b16 %v7297
      %v7433 = vunpack.c.h.b16 %v7297
      %v7434 = vunpack.c.l.b16 %v7298
      %v7435 = vunpack.c.h.b16 %v7298
      %v7436 = vunpack.c.l.b16 %v7299
      %v7437 = vunpack.c.h.b16 %v7299
      %v7438 = vunpack.c.l.b16 %v7300
      %v7439 = vunpack.c.h.b16 %v7300
      %v7440 = vunpack.c.l.b16 %v7301
      %v7441 = vunpack.c.h.b16 %v7301
      %v7442 = vunpack.c.l.b16 %v7302
      %v7443 = vunpack.c.h.b16 %v7302
      %v7444 = vunpack.c.l.b16 %v7303
      %v7445 = vunpack.c.h.b16 %v7303
      %v7446 = vunpack.c.l.b16 %v7304
      %v7447 = vunpack.c.h.b16 %v7304
      %v7448 = vunpack.c.l.b16 %v7305
      %v7449 = vunpack.c.h.b16 %v7305
      %v7450 = vunpack.c.l.b16 %v7306
      %v7451 = vunpack.c.h.b16 %v7306
      %v7452 = vunpack.c.l.b16 %v7307
      %v7453 = vunpack.c.h.b16 %v7307
      %v7454 = vunpack.c.l.b16 %v7308
      %v7455 = vunpack.c.h.b16 %v7308
      %v7456 = vunpack.c.l.b16 %v7309
      %v7457 = vunpack.c.h.b16 %v7309
      %v7458 = vunpack.c.l.b16 %v7310
      %v7459 = vunpack.c.h.b16 %v7310
      %v7460 = vunpack.c.l.b16 %v7311
      %v7461 = vunpack.c.h.b16 %v7311
      %v7462 = vunpack.c.l.b16 %v7312
      %v7463 = vunpack.c.h.b16 %v7312
      %v7464 = vunpack.c.l.b16 %v7313
      %v7465 = vunpack.c.h.b16 %v7313
      %v7466 = vunpack.c.l.b16 %v7314
      %v7467 = vunpack.c.h.b16 %v7314
      %v7468 = vunpack.c.l.b16 %v7315
      %v7469 = vunpack.c.h.b16 %v7315
      %v7470 = vunpack.c.l.b16 %v7316
      %v7471 = vunpack.c.h.b16 %v7316
      %v7472 = vunpack.c.l.b16 %v7317
      %v7473 = vunpack.c.h.b16 %v7317
      %v7474 = vunpack.c.l.b16 %v7318
      %v7475 = vunpack.c.h.b16 %v7318
      %v7476 = vunpack.c.l.b16 %v7319
      %v7477 = vunpack.c.h.b16 %v7319
      %v7478 = vunpack.c.l.b16 %v7320
      %v7479 = vunpack.c.h.b16 %v7320
      %v7480 = vunpack.c.l.b16 %v7321
      %v7481 = vunpack.c.h.b16 %v7321
      %v7482 = vunpack.c.l.b16 %v7322
      %v7483 = vunpack.c.h.b16 %v7322
      %v7484 = vunpack.c.l.b16 %v7323
      %v7485 = vunpack.c.h.b16 %v7323
      %v7486 = vunpack.c.l.b16 %v7324
      %v7487 = vunpack.c.h.b16 %v7324
      %v7488 = vunpack.c.l.b16 %v7325
      %v7489 = vunpack.c.h.b16 %v7325
      %v7490 = vunpack.c.l.b16 %v7326
      %v7491 = vunpack.c.h.b16 %v7326
      %v7492 = vunpack.c.l.b16 %v7327
      %v7493 = vunpack.c.h.b16 %v7327
      %v7494 = vunpack.c.l.b16 %v7328
      %v7495 = vunpack.c.h.b16 %v7328
      %v7496 = vunpack.c.l.b16 %v7329
      %v7497 = vunpack.c.h.b16 %v7329
      %v7498 = vunpack.c.l.b16 %v7330
      %v7499 = vunpack.c.h.b16 %v7330
      %v7500 = vunpack.c.l.b16 %v7331
      %v7501 = vunpack.c.h.b16 %v7331
      %v7502 = vunpack.c.l.b16 %v7332
      %v7503 = vunpack.c.h.b16 %v7332
      %v7504 = vunpack.c.l.b16 %v7333
      %v7505 = vunpack.c.h.b16 %v7333
      %v7506 = vunpack.c.l.b16 %v7334
      %v7507 = vunpack.c.h.b16 %v7334
      %v7508 = vunpack.c.l.b16 %v7335
      %v7509 = vunpack.c.h.b16 %v7335
      %v7510 = vunpack.c.l.b16 %v7336
      %v7511 = vunpack.c.h.b16 %v7336
      %v7512 = vunpack.c.l.b16 %v7337
      %v7513 = vunpack.c.h.b16 %v7337
      %v7514 = vunpack.c.l.b16 %v7338
      %v7515 = vunpack.c.h.b16 %v7338
      %v7516 = vunpack.c.l.b16 %v7339
      %v7517 = vunpack.c.h.b16 %v7339
      %v7518 = vunpack.c.l.b16 %v7340
      %v7519 = vunpack.c.h.b16 %v7340
      %v7520 = vunpack.c.l.b16 %v7341
      %v7521 = vunpack.c.h.b16 %v7341
      %v7522 = vunpack.c.l.b16 %v7342
      %v7523 = vunpack.c.h.b16 %v7342
      %v7524 = vunpack.c.l.b16 %v7343
      %v7525 = vunpack.c.h.b16 %v7343
      %v7526 = vunpack.c.l.b16 %v7344
      %v7527 = vunpack.c.h.b16 %v7344
      %v7528 = vunpack.c.l.b16 %v7345
      %v7529 = vunpack.c.h.b16 %v7345
      %v7530 = vunpack.c.l.b16 %v7346
      %v7531 = vunpack.c.h.b16 %v7346
      %v7532 = vunpack.c.l.b16 %v7347
      %v7533 = vunpack.c.h.b16 %v7347
      %v7534 = vunpack.c.l.b16 %v7348
      %v7535 = vunpack.c.h.b16 %v7348
      %v7536 = vunpack.c.l.b16 %v7349
      %v7537 = vunpack.c.h.b16 %v7349
      %v7538 = vunpack.c.l.b16 %v7350
      %v7539 = vunpack.c.h.b16 %v7350
      %v7540 = vunpack.c.l.b16 %v7351
      %v7541 = vunpack.c.h.b16 %v7351
      %v7542 = vunpack.c.l.b16 %v7352
      %v7543 = vunpack.c.h.b16 %v7352
      %v7544 = vunpack.c.l.b16 %v7353
      %v7545 = vunpack.c.h.b16 %v7353
      %v7546 = vpack.c.b16 %v7420, %v7418
      %v7547 = vpack.c.b16 %v7421, %v7419
      %v7548 = vpack.c.b16 %v7424, %v7422
      %v7549 = vpack.c.b16 %v7425, %v7423
      %v7550 = vpack.c.b16 %v7428, %v7426
      %v7551 = vpack.c.b16 %v7429, %v7427
      %v7552 = vpack.c.b16 %v7432, %v7430
      %v7553 = vpack.c.b16 %v7433, %v7431
      %v7554 = vpack.c.b16 %v7436, %v7434
      %v7555 = vpack.c.b16 %v7437, %v7435
      %v7556 = vpack.c.b16 %v7440, %v7438
      %v7557 = vpack.c.b16 %v7441, %v7439
      %v7558 = vpack.c.b16 %v7444, %v7442
      %v7559 = vpack.c.b16 %v7445, %v7443
      %v7560 = vpack.c.b16 %v7448, %v7446
      %v7561 = vpack.c.b16 %v7449, %v7447
      %v7562 = vpack.c.b16 %v7452, %v7450
      %v7563 = vpack.c.b16 %v7453, %v7451
      %v7564 = vpack.c.b16 %v7456, %v7454
      %v7565 = vpack.c.b16 %v7457, %v7455
      %v7566 = vpack.c.b16 %v7460, %v7458
      %v7567 = vpack.c.b16 %v7461, %v7459
      %v7568 = vpack.c.b16 %v7464, %v7462
      %v7569 = vpack.c.b16 %v7465, %v7463
      %v7570 = vpack.c.b16 %v7468, %v7466
      %v7571 = vpack.c.b16 %v7469, %v7467
      %v7572 = vpack.c.b16 %v7472, %v7470
      %v7573 = vpack.c.b16 %v7473, %v7471
      %v7574 = vpack.c.b16 %v7476, %v7474
      %v7575 = vpack.c.b16 %v7477, %v7475
      %v7576 = vpack.c.b16 %v7480, %v7478
      %v7577 = vpack.c.b16 %v7481, %v7479
      %v7578 = vpack.c.b16 %v7484, %v7482
      %v7579 = vpack.c.b16 %v7485, %v7483
      %v7580 = vpack.c.b16 %v7488, %v7486
      %v7581 = vpack.c.b16 %v7489, %v7487
      %v7582 = vpack.c.b16 %v7492, %v7490
      %v7583 = vpack.c.b16 %v7493, %v7491
      %v7584 = vpack.c.b16 %v7496, %v7494
      %v7585 = vpack.c.b16 %v7497, %v7495
      %v7586 = vpack.c.b16 %v7500, %v7498
      %v7587 = vpack.c.b16 %v7501, %v7499
      %v7588 = vpack.c.b16 %v7504, %v7502
      %v7589 = vpack.c.b16 %v7505, %v7503
      %v7590 = vpack.c.b16 %v7508, %v7506
      %v7591 = vpack.c.b16 %v7509, %v7507
      %v7592 = vpack.c.b16 %v7512, %v7510
      %v7593 = vpack.c.b16 %v7513, %v7511
      %v7594 = vpack.c.b16 %v7516, %v7514
      %v7595 = vpack.c.b16 %v7517, %v7515
      %v7596 = vpack.c.b16 %v7520, %v7518
      %v7597 = vpack.c.b16 %v7521, %v7519
      %v7598 = vpack.c.b16 %v7524, %v7522
      %v7599 = vpack.c.b16 %v7525, %v7523
      %v7600 = vpack.c.b16 %v7528, %v7526
      %v7601 = vpack.c.b16 %v7529, %v7527
      %v7602 = vpack.c.b16 %v7532, %v7530
      %v7603 = vpack.c.b16 %v7533, %v7531
      %v7604 = vpack.c.b16 %v7536, %v7534
      %v7605 = vpack.c.b16 %v7537, %v7535
      %v7606 = vpack.c.b16 %v7540, %v7538
      %v7607 = vpack.c.b16 %v7541, %v7539
      %v7608 = vpack.c.b16 %v7544, %v7542
      %v7609 = vpack.c.b16 %v7545, %v7543
      %7674 = vmatprep.subr.bf16.mxu0 %v7547
      %7675 = vmatpush1.bf16.msra.mxu0 %v7546
      %7676 = vmatprep.subr.bf16.mxu0 %v7549
      %7677 = vmatpush1.bf16.msra.mxu0 %v7548
      %7678 = vmatprep.subr.bf16.mxu0 %v7551
      %7679 = vmatpush1.bf16.msra.mxu0 %v7550
      %7680 = vmatprep.subr.bf16.mxu0 %v7553
      %7681 = vmatpush1.bf16.msra.mxu0 %v7552
      %7682 = vmatprep.subr.bf16.mxu0 %v7555
      %7683 = vmatpush1.bf16.msra.mxu0 %v7554
      %7684 = vmatprep.subr.bf16.mxu0 %v7557
      %7685 = vmatpush1.bf16.msra.mxu0 %v7556
      %7686 = vmatprep.subr.bf16.mxu0 %v7559
      %7687 = vmatpush1.bf16.msra.mxu0 %v7558
      %7688 = vmatprep.subr.bf16.mxu0 %v7561
      %7689 = vmatpush1.bf16.msra.mxu0 %v7560
      %7690 = vmatprep.subr.bf16.mxu0 %v7563
      %7691 = vmatpush1.bf16.msra.mxu0 %v7562
      %7692 = vmatprep.subr.bf16.mxu0 %v7565
      %7693 = vmatpush1.bf16.msra.mxu0 %v7564
      %7694 = vmatprep.subr.bf16.mxu0 %v7567
      %7695 = vmatpush1.bf16.msra.mxu0 %v7566
      %7696 = vmatprep.subr.bf16.mxu0 %v7569
      %7697 = vmatpush1.bf16.msra.mxu0 %v7568
      %7698 = vmatprep.subr.bf16.mxu0 %v7571
      %7699 = vmatpush1.bf16.msra.mxu0 %v7570
      %7700 = vmatprep.subr.bf16.mxu0 %v7573
      %7701 = vmatpush1.bf16.msra.mxu0 %v7572
      %7702 = vmatprep.subr.bf16.mxu0 %v7575
      %7703 = vmatpush1.bf16.msra.mxu0 %v7574
      %7704 = vmatprep.subr.bf16.mxu0 %v7577
      %7705 = vmatpush1.bf16.msra.mxu0 %v7576
      %7706 = vmatprep.mubr.bf16.mxu0 %v7259
      %7707 = vmatmul.mubr.bf16.gmra.mrb[0].mxu0 %v7258
      %v7708 = vpop.f32.mrb[0].mxu0
      %v7709 = vadd.f32 0.0, %v7708
      %v7710 = vpop.f32.mrb[0].mxu0
      %v7711 = vadd.f32 0.0, %v7710
      %v7712 = vpop.f32.mrb[0].mxu0
      %v7713 = vadd.f32 0.0, %v7712
      %v7714 = vpop.f32.mrb[0].mxu0
      %v7715 = vadd.f32 0.0, %v7714
      %7716 = vmatprep.mubr.bf16.mxu0 %v7263
      %7717 = vmatmul.mubr.bf16.gmra.mrb[0].mxu0 %v7262
      %v7718 = vpop.f32.mrb[0].mxu0
      %v7719 = vadd.f32 0.0, %v7718
      %v7720 = vpop.f32.mrb[0].mxu0
      %v7721 = vadd.f32 0.0, %v7720
      %v7722 = vpop.f32.mrb[0].mxu0
      %v7723 = vadd.f32 0.0, %v7722
      %v7724 = vpop.f32.mrb[0].mxu0
      %v7725 = vadd.f32 0.0, %v7724
      %7726 = vmatprep.mubr.bf16.mxu0 %v7267
      %7727 = vmatmul.mubr.bf16.gmra.mrb[0].mxu0 %v7266
      %v7728 = vpop.f32.mrb[0].mxu0
      %v7729 = vadd.f32 0.0, %v7728
      %v7730 = vpop.f32.mrb[0].mxu0
      %v7731 = vadd.f32 0.0, %v7730
      %v7732 = vpop.f32.mrb[0].mxu0
      %v7733 = vadd.f32 0.0, %v7732
      %v7734 = vpop.f32.mrb[0].mxu0
      %v7735 = vadd.f32 0.0, %v7734
      %7736 = vmatprep.mubr.bf16.mxu0 %v7271
      %7737 = vmatmul.mubr.bf16.gmra.mrb[0].mxu0 %v7270
      %v7738 = vpop.f32.mrb[0].mxu0
      %v7739 = vadd.f32 0.0, %v7738
      %v7740 = vpop.f32.mrb[0].mxu0
      %v7741 = vadd.f32 0.0, %v7740
      %v7742 = vpop.f32.mrb[0].mxu0
      %v7743 = vadd.f32 0.0, %v7742
      %v7744 = vpop.f32.mrb[0].mxu0
      %v7745 = vadd.f32 0.0, %v7744
      %7746 = vmatprep.mubr.bf16.mxu0 %v7275
      %7747 = vmatmul.mubr.bf16.gmra.mrb[0].mxu0 %v7274
      %v7748 = vpop.f32.mrb[0].mxu0
      %v7749 = vadd.f32 0.0, %v7748
      %v7750 = vpop.f32.mrb[0].mxu0
      %v7751 = vadd.f32 0.0, %v7750
      %v7752 = vpop.f32.mrb[0].mxu0
      %v7753 = vadd.f32 0.0, %v7752
      %v7754 = vpop.f32.mrb[0].mxu0
      %v7755 = vadd.f32 0.0, %v7754
      %7756 = vmatprep.mubr.bf16.mxu0 %v7279
      %7757 = vmatmul.mubr.bf16.gmra.mrb[0].mxu0 %v7278
      %v7758 = vpop.f32.mrb[0].mxu0
      %v7759 = vadd.f32 0.0, %v7758
      %v7760 = vpop.f32.mrb[0].mxu0
      %v7761 = vadd.f32 0.0, %v7760
      %v7762 = vpop.f32.mrb[0].mxu0
      %v7763 = vadd.f32 0.0, %v7762
      %v7764 = vpop.f32.mrb[0].mxu0
      %v7765 = vadd.f32 0.0, %v7764
      %7766 = vmatprep.mubr.bf16.mxu0 %v7283
      %7767 = vmatmul.mubr.bf16.gmra.mrb[0].mxu0 %v7282
      %v7768 = vpop.f32.mrb[0].mxu0
      %v7769 = vadd.f32 0.0, %v7768
      %v7770 = vpop.f32.mrb[0].mxu0
      %v7771 = vadd.f32 0.0, %v7770
      %v7772 = vpop.f32.mrb[0].mxu0
      %v7773 = vadd.f32 0.0, %v7772
      %v7774 = vpop.f32.mrb[0].mxu0
      %v7775 = vadd.f32 0.0, %v7774
      %7776 = vmatprep.mubr.bf16.mxu0 %v7287
      %7777 = vmatmul.mubr.bf16.gmra.mrb[0].mxu0 %v7286
      %v7778 = vpop.f32.mrb[0].mxu0
      %v7779 = vadd.f32 0.0, %v7778
      %v7780 = vpop.f32.mrb[0].mxu0
      %v7781 = vadd.f32 0.0, %v7780
      %v7782 = vpop.f32.mrb[0].mxu0
      %v7783 = vadd.f32 0.0, %v7782
      %v7784 = vpop.f32.mrb[0].mxu0
      %v7785 = vadd.f32 0.0, %v7784
      %7786 = vdwg.mxu0
      %7787 = vmatprep.subr.bf16.mxu0 %v7579
      %7788 = vmatpush1.bf16.msra.mxu0 %v7578
      %7789 = vmatprep.subr.bf16.mxu0 %v7581
      %7790 = vmatpush1.bf16.msra.mxu0 %v7580
      %7791 = vmatprep.subr.bf16.mxu0 %v7583
      %7792 = vmatpush1.bf16.msra.mxu0 %v7582
      %7793 = vmatprep.subr.bf16.mxu0 %v7585
      %7794 = vmatpush1.bf16.msra.mxu0 %v7584
      %7795 = vmatprep.subr.bf16.mxu0 %v7587
      %7796 = vmatpush1.bf16.msra.mxu0 %v7586
      %7797 = vmatprep.subr.bf16.mxu0 %v7589
      %7798 = vmatpush1.bf16.msra.mxu0 %v7588
      %7799 = vmatprep.subr.bf16.mxu0 %v7591
      %7800 = vmatpush1.bf16.msra.mxu0 %v7590
      %7801 = vmatprep.subr.bf16.mxu0 %v7593
      %7802 = vmatpush1.bf16.msra.mxu0 %v7592
      %7803 = vmatprep.subr.bf16.mxu0 %v7595
      %7804 = vmatpush1.bf16.msra.mxu0 %v7594
      %7805 = vmatprep.subr.bf16.mxu0 %v7597
      %7806 = vmatpush1.bf16.msra.mxu0 %v7596
      %7807 = vmatprep.subr.bf16.mxu0 %v7599
      %7808 = vmatpush1.bf16.msra.mxu0 %v7598
      %7809 = vmatprep.subr.bf16.mxu0 %v7601
      %7810 = vmatpush1.bf16.msra.mxu0 %v7600
      %7811 = vmatprep.subr.bf16.mxu0 %v7603
      %7812 = vmatpush1.bf16.msra.mxu0 %v7602
      %7813 = vmatprep.subr.bf16.mxu0 %v7605
      %7814 = vmatpush1.bf16.msra.mxu0 %v7604
      %7815 = vmatprep.subr.bf16.mxu0 %v7607
      %7816 = vmatpush1.bf16.msra.mxu0 %v7606
      %7817 = vmatprep.subr.bf16.mxu0 %v7609
      %7818 = vmatpush1.bf16.msra.mxu0 %v7608
      %7819 = vmatprep.mubr.bf16.mxu0 %v7261
      %7820 = vmatmul.mubr.bf16.gmra.mrb[0].mxu0 %v7260
      %v7821 = vpop.f32.mrb[0].mxu0
      %v7822 = vadd.f32 %v7709, %v7821
      %v7823 = vpop.f32.mrb[0].mxu0
      %v7824 = vadd.f32 %v7711, %v7823
      %v7825 = vpop.f32.mrb[0].mxu0
      %v7826 = vadd.f32 %v7713, %v7825
      %v7827 = vpop.f32.mrb[0].mxu0
      %v7828 = vadd.f32 %v7715, %v7827
      %7829 = vmatprep.mubr.bf16.mxu0 %v7265
      %7830 = vmatmul.mubr.bf16.gmra.mrb[0].mxu0 %v7264
      %v7831 = vpop.f32.mrb[0].mxu0
      %v7832 = vadd.f32 %v7719, %v7831
      %v7833 = vpop.f32.mrb[0].mxu0
      %v7834 = vadd.f32 %v7721, %v7833
      %v7835 = vpop.f32.mrb[0].mxu0
      %v7836 = vadd.f32 %v7723, %v7835
      %v7837 = vpop.f32.mrb[0].mxu0
      %v7838 = vadd.f32 %v7725, %v7837
      %7839 = vmatprep.mubr.bf16.mxu0 %v7269
      %7840 = vmatmul.mubr.bf16.gmra.mrb[0].mxu0 %v7268
      %v7841 = vpop.f32.mrb[0].mxu0
      %v7842 = vadd.f32 %v7729, %v7841
      %v7843 = vpop.f32.mrb[0].mxu0
      %v7844 = vadd.f32 %v7731, %v7843
      %v7845 = vpop.f32.mrb[0].mxu0
      %v7846 = vadd.f32 %v7733, %v7845
      %v7847 = vpop.f32.mrb[0].mxu0
      %v7848 = vadd.f32 %v7735, %v7847
      %7849 = vmatprep.mubr.bf16.mxu0 %v7273
      %7850 = vmatmul.mubr.bf16.gmra.mrb[0].mxu0 %v7272
      %v7851 = vpop.f32.mrb[0].mxu0
      %v7852 = vadd.f32 %v7739, %v7851
      %v7853 = vpop.f32.mrb[0].mxu0
      %v7854 = vadd.f32 %v7741, %v7853
      %v7855 = vpop.f32.mrb[0].mxu0
      %v7856 = vadd.f32 %v7743, %v7855
      %v7857 = vpop.f32.mrb[0].mxu0
      %v7858 = vadd.f32 %v7745, %v7857
      %7859 = vmatprep.mubr.bf16.mxu0 %v7277
      %7860 = vmatmul.mubr.bf16.gmra.mrb[0].mxu0 %v7276
      %v7861 = vpop.f32.mrb[0].mxu0
      %v7862 = vadd.f32 %v7749, %v7861
      %v7863 = vpop.f32.mrb[0].mxu0
      %v7864 = vadd.f32 %v7751, %v7863
      %v7865 = vpop.f32.mrb[0].mxu0
      %v7866 = vadd.f32 %v7753, %v7865
      %v7867 = vpop.f32.mrb[0].mxu0
      %v7868 = vadd.f32 %v7755, %v7867
      %7869 = vmatprep.mubr.bf16.mxu0 %v7281
      %7870 = vmatmul.mubr.bf16.gmra.mrb[0].mxu0 %v7280
      %v7871 = vpop.f32.mrb[0].mxu0
      %v7872 = vadd.f32 %v7759, %v7871
      %v7873 = vpop.f32.mrb[0].mxu0
      %v7874 = vadd.f32 %v7761, %v7873
      %v7875 = vpop.f32.mrb[0].mxu0
      %v7876 = vadd.f32 %v7763, %v7875
      %v7877 = vpop.f32.mrb[0].mxu0
      %v7878 = vadd.f32 %v7765, %v7877
      %7879 = vmatprep.mubr.bf16.mxu0 %v7285
      %7880 = vmatmul.mubr.bf16.gmra.mrb[0].mxu0 %v7284
      %v7881 = vpop.f32.mrb[0].mxu0
      %v7882 = vadd.f32 %v7769, %v7881
      %v7883 = vpop.f32.mrb[0].mxu0
      %v7884 = vadd.f32 %v7771, %v7883
      %v7885 = vpop.f32.mrb[0].mxu0
      %v7886 = vadd.f32 %v7773, %v7885
      %v7887 = vpop.f32.mrb[0].mxu0
      %v7888 = vadd.f32 %v7775, %v7887
      %7889 = vmatprep.mubr.bf16.mxu0 %v7289
      %7890 = vmatmul.mubr.bf16.gmra.mrb[0].mxu0 %v7288
      %v7891 = vpop.f32.mrb[0].mxu0
      %v7892 = vadd.f32 %v7779, %v7891
      %v7893 = vpop.f32.mrb[0].mxu0
      %v7894 = vadd.f32 %v7781, %v7893
      %v7895 = vpop.f32.mrb[0].mxu0
      %v7896 = vadd.f32 %v7783, %v7895
      %v7897 = vpop.f32.mrb[0].mxu0
      %v7898 = vadd.f32 %v7785, %v7897
      %7899 = vdwg.mxu0
      %v7900 = vrot.slane %v7822, 7
      %v7901 = vrot.slane %v7824, 7
      %v7902 = vrot.slane %v7826, 7
      %v7903 = vrot.slane %v7828, 7
      %v7904 = vrot.slane %v7832, 7
      %v7905 = vrot.slane %v7834, 7
      %v7906 = vrot.slane %v7836, 7
      %v7907 = vrot.slane %v7838, 7
      %v7908 = vrot.slane %v7842, 7
      %v7909 = vrot.slane %v7844, 7
      %v7910 = vrot.slane %v7846, 7
      %v7911 = vrot.slane %v7848, 7
      %v7912 = vrot.slane %v7852, 7
      %v7913 = vrot.slane %v7854, 7
      %v7914 = vrot.slane %v7856, 7
      %v7915 = vrot.slane %v7858, 7
      %v7916 = vrot.slane %v7862, 7
      %v7917 = vrot.slane %v7864, 7
      %v7918 = vrot.slane %v7866, 7
      %v7919 = vrot.slane %v7868, 7
      %v7920 = vrot.slane %v7872, 7
      %v7921 = vrot.slane %v7874, 7
      %v7922 = vrot.slane %v7876, 7
      %v7923 = vrot.slane %v7878, 7
      %v7924 = vrot.slane %v7882, 7
      %v7925 = vrot.slane %v7884, 7
      %v7926 = vrot.slane %v7886, 7
      %v7927 = vrot.slane %v7888, 7
      %v7928 = vrot.slane %v7892, 7
      %v7929 = vrot.slane %v7894, 7
      %v7930 = vrot.slane %v7896, 7
      %v7931 = vrot.slane %v7898, 7
      %v7932 = vsel %vm1489, %v7928, %v7930
      %v7933 = vsel %vm1489, %v7929, %v7931
      %v7934 = vsel %vm1489, %v7926, %v7928
      %v7935 = vsel %vm1489, %v7927, %v7929
      %v7936 = vsel %vm1489, %v7924, %v7926
      %v7937 = vsel %vm1489, %v7925, %v7927
      %v7938 = vsel %vm1489, %v7922, %v7924
      %v7939 = vsel %vm1489, %v7923, %v7925
      %v7940 = vsel %vm1489, %v7920, %v7922
      %v7941 = vsel %vm1489, %v7921, %v7923
      %v7942 = vsel %vm1489, %v7918, %v7920
      %v7943 = vsel %vm1489, %v7919, %v7921
      %v7944 = vsel %vm1489, %v7916, %v7918
      %v7945 = vsel %vm1489, %v7917, %v7919
      %v7946 = vsel %vm1489, %v7914, %v7916
      %v7947 = vsel %vm1489, %v7915, %v7917
      %v7948 = vsel %vm1489, %v7912, %v7914
      %v7949 = vsel %vm1489, %v7913, %v7915
      %v7950 = vsel %vm1489, %v7910, %v7912
      %v7951 = vsel %vm1489, %v7911, %v7913
      %v7952 = vsel %vm1489, %v7908, %v7910
      %v7953 = vsel %vm1489, %v7909, %v7911
      %v7954 = vsel %vm1489, %v7906, %v7908
      %v7955 = vsel %vm1489, %v7907, %v7909
      %v7956 = vsel %vm1489, %v7904, %v7906
      %v7957 = vsel %vm1489, %v7905, %v7907
      %v7958 = vsel %vm1489, %v7902, %v7904
      %v7959 = vsel %vm1489, %v7903, %v7905
      %v7960 = vsel %vm1489, %v7900, %v7902
      %v7961 = vsel %vm1489, %v7901, %v7903
      %v7962 = vsel %vm1489, %v7930, %v7900
      %v7963 = vsel %vm1489, %v7931, %v7901
      %v7964 = vmul.f32 %v7962, %v1393
      %v7965 = vmul.f32 %v7963, %v1393
      %v7966 = vmul.f32 %v7960, %v1394
      %v7967 = vmul.f32 %v7961, %v1394
      %v7968 = vmul.f32 %v7958, %v1395
      %v7969 = vmul.f32 %v7959, %v1395
      %v7970 = vmul.f32 %v7956, %v1396
      %v7971 = vmul.f32 %v7957, %v1396
      %v7972 = vmul.f32 %v7954, %v1397
      %v7973 = vmul.f32 %v7955, %v1397
      %v7974 = vmul.f32 %v7952, %v1398
      %v7975 = vmul.f32 %v7953, %v1398
      %v7976 = vmul.f32 %v7950, %v1399
      %v7977 = vmul.f32 %v7951, %v1399
      %v7978 = vmul.f32 %v7948, %v1400
      %v7979 = vmul.f32 %v7949, %v1400
      %v7980 = vmul.f32 %v7946, %v1401
      %v7981 = vmul.f32 %v7947, %v1401
      %v7982 = vmul.f32 %v7944, %v1402
      %v7983 = vmul.f32 %v7945, %v1402
      %v7984 = vmul.f32 %v7942, %v1403
      %v7985 = vmul.f32 %v7943, %v1403
      %v7986 = vmul.f32 %v7940, %v1404
      %v7987 = vmul.f32 %v7941, %v1404
      %v7988 = vmul.f32 %v7938, %v1405
      %v7989 = vmul.f32 %v7939, %v1405
      %v7990 = vmul.f32 %v7936, %v1406
      %v7991 = vmul.f32 %v7937, %v1406
      %v7992 = vmul.f32 %v7934, %v1407
      %v7993 = vmul.f32 %v7935, %v1407
      %v7994 = vmul.f32 %v7932, %v1408
      %v7995 = vmul.f32 %v7933, %v1408
      %v7996 = vpack.c.bf16 %v7966, %v7964
      %v7997 = vpack.c.bf16 %v7967, %v7965
      %v7998 = vpack.c.bf16 %v7970, %v7968
      %v7999 = vpack.c.bf16 %v7971, %v7969
      %v8000 = vpack.c.bf16 %v7974, %v7972
      %v8001 = vpack.c.bf16 %v7975, %v7973
      %v8002 = vpack.c.bf16 %v7978, %v7976
      %v8003 = vpack.c.bf16 %v7979, %v7977
      %v8004 = vpack.c.bf16 %v7982, %v7980
      %v8005 = vpack.c.bf16 %v7983, %v7981
      %v8006 = vpack.c.bf16 %v7986, %v7984
      %v8007 = vpack.c.bf16 %v7987, %v7985
      %v8008 = vpack.c.bf16 %v7990, %v7988
      %v8009 = vpack.c.bf16 %v7991, %v7989
      %v8010 = vpack.c.bf16 %v7994, %v7992
      %v8011 = vpack.c.bf16 %v7995, %v7993
      %v8012 = vrot.slane %v7822, 1
      %v8013 = vrot.slane %v7824, 1
      %v8014 = vrot.slane %v7826, 1
      %v8015 = vrot.slane %v7828, 1
      %v8016 = vrot.slane %v7832, 1
      %v8017 = vrot.slane %v7834, 1
      %v8018 = vrot.slane %v7836, 1
      %v8019 = vrot.slane %v7838, 1
      %v8020 = vrot.slane %v7842, 1
      %v8021 = vrot.slane %v7844, 1
      %v8022 = vrot.slane %v7846, 1
      %v8023 = vrot.slane %v7848, 1
      %v8024 = vrot.slane %v7852, 1
      %v8025 = vrot.slane %v7854, 1
      %v8026 = vrot.slane %v7856, 1
      %v8027 = vrot.slane %v7858, 1
      %v8028 = vrot.slane %v7862, 1
      %v8029 = vrot.slane %v7864, 1
      %v8030 = vrot.slane %v7866, 1
      %v8031 = vrot.slane %v7868, 1
      %v8032 = vrot.slane %v7872, 1
      %v8033 = vrot.slane %v7874, 1
      %v8034 = vrot.slane %v7876, 1
      %v8035 = vrot.slane %v7878, 1
      %v8036 = vrot.slane %v7882, 1
      %v8037 = vrot.slane %v7884, 1
      %v8038 = vrot.slane %v7886, 1
      %v8039 = vrot.slane %v7888, 1
      %v8040 = vrot.slane %v7892, 1
      %v8041 = vrot.slane %v7894, 1
      %v8042 = vrot.slane %v7896, 1
      %v8043 = vrot.slane %v7898, 1
      %v8044 = vsel %vm1602, %v8040, %v8042
      %v8045 = vsel %vm1602, %v8041, %v8043
      %v8046 = vsel %vm1602, %v8038, %v8040
      %v8047 = vsel %vm1602, %v8039, %v8041
      %v8048 = vsel %vm1602, %v8036, %v8038
      %v8049 = vsel %vm1602, %v8037, %v8039
      %v8050 = vsel %vm1602, %v8034, %v8036
      %v8051 = vsel %vm1602, %v8035, %v8037
      %v8052 = vsel %vm1602, %v8032, %v8034
      %v8053 = vsel %vm1602, %v8033, %v8035
      %v8054 = vsel %vm1602, %v8030, %v8032
      %v8055 = vsel %vm1602, %v8031, %v8033
      %v8056 = vsel %vm1602, %v8028, %v8030
      %v8057 = vsel %vm1602, %v8029, %v8031
      %v8058 = vsel %vm1602, %v8026, %v8028
      %v8059 = vsel %vm1602, %v8027, %v8029
      %v8060 = vsel %vm1602, %v8024, %v8026
      %v8061 = vsel %vm1602, %v8025, %v8027
      %v8062 = vsel %vm1602, %v8022, %v8024
      %v8063 = vsel %vm1602, %v8023, %v8025
      %v8064 = vsel %vm1602, %v8020, %v8022
      %v8065 = vsel %vm1602, %v8021, %v8023
      %v8066 = vsel %vm1602, %v8018, %v8020
      %v8067 = vsel %vm1602, %v8019, %v8021
      %v8068 = vsel %vm1602, %v8016, %v8018
      %v8069 = vsel %vm1602, %v8017, %v8019
      %v8070 = vsel %vm1602, %v8014, %v8016
      %v8071 = vsel %vm1602, %v8015, %v8017
      %v8072 = vsel %vm1602, %v8012, %v8014
      %v8073 = vsel %vm1602, %v8013, %v8015
      %v8074 = vsel %vm1602, %v8042, %v8012
      %v8075 = vsel %vm1602, %v8043, %v8013
      %v8076 = vmul.f32 %v8072, %v1441
      %v8077 = vmul.f32 %v8073, %v1441
      %v8078 = vmul.f32 %v8070, %v1442
      %v8079 = vmul.f32 %v8071, %v1442
      %v8080 = vmul.f32 %v8068, %v1443
      %v8081 = vmul.f32 %v8069, %v1443
      %v8082 = vmul.f32 %v8066, %v1444
      %v8083 = vmul.f32 %v8067, %v1444
      %v8084 = vmul.f32 %v8064, %v1445
      %v8085 = vmul.f32 %v8065, %v1445
      %v8086 = vmul.f32 %v8062, %v1446
      %v8087 = vmul.f32 %v8063, %v1446
      %v8088 = vmul.f32 %v8060, %v1447
      %v8089 = vmul.f32 %v8061, %v1447
      %v8090 = vmul.f32 %v8058, %v1448
      %v8091 = vmul.f32 %v8059, %v1448
      %v8092 = vmul.f32 %v8056, %v1449
      %v8093 = vmul.f32 %v8057, %v1449
      %v8094 = vmul.f32 %v8054, %v1450
      %v8095 = vmul.f32 %v8055, %v1450
      %v8096 = vmul.f32 %v8052, %v1451
      %v8097 = vmul.f32 %v8053, %v1451
      %v8098 = vmul.f32 %v8050, %v1452
      %v8099 = vmul.f32 %v8051, %v1452
      %v8100 = vmul.f32 %v8048, %v1453
      %v8101 = vmul.f32 %v8049, %v1453
      %v8102 = vmul.f32 %v8046, %v1454
      %v8103 = vmul.f32 %v8047, %v1454
      %v8104 = vmul.f32 %v8044, %v1455
      %v8105 = vmul.f32 %v8045, %v1455
      %v8106 = vmul.f32 %v8074, %v1456
      %v8107 = vmul.f32 %v8075, %v1456
      %v8108 = vpack.c.bf16 %v8078, %v8076
      %v8109 = vpack.c.bf16 %v8079, %v8077
      %v8110 = vpack.c.bf16 %v8082, %v8080
      %v8111 = vpack.c.bf16 %v8083, %v8081
      %v8112 = vpack.c.bf16 %v8086, %v8084
      %v8113 = vpack.c.bf16 %v8087, %v8085
      %v8114 = vpack.c.bf16 %v8090, %v8088
      %v8115 = vpack.c.bf16 %v8091, %v8089
      %v8116 = vpack.c.bf16 %v8094, %v8092
      %v8117 = vpack.c.bf16 %v8095, %v8093
      %v8118 = vpack.c.bf16 %v8098, %v8096
      %v8119 = vpack.c.bf16 %v8099, %v8097
      %v8120 = vpack.c.bf16 %v8102, %v8100
      %v8121 = vpack.c.bf16 %v8103, %v8101
      %v8122 = vpack.c.bf16 %v8106, %v8104
      %v8123 = vpack.c.bf16 %v8107, %v8105
      %v8124 = vpack.c.bf16 %v7826, %v7822
      %v8125 = vpack.c.bf16 %v7828, %v7824
      %v8126 = vpack.c.bf16 %v7836, %v7832
      %v8127 = vpack.c.bf16 %v7838, %v7834
      %v8128 = vpack.c.bf16 %v7846, %v7842
      %v8129 = vpack.c.bf16 %v7848, %v7844
      %v8130 = vpack.c.bf16 %v7856, %v7852
      %v8131 = vpack.c.bf16 %v7858, %v7854
      %v8132 = vpack.c.bf16 %v7866, %v7862
      %v8133 = vpack.c.bf16 %v7868, %v7864
      %v8134 = vpack.c.bf16 %v7876, %v7872
      %v8135 = vpack.c.bf16 %v7878, %v7874
      %v8136 = vpack.c.bf16 %v7886, %v7882
      %v8137 = vpack.c.bf16 %v7888, %v7884
      %v8138 = vpack.c.bf16 %v7896, %v7892
      %v8139 = vpack.c.bf16 %v7898, %v7894
      %v8140 = vld [vmem:[%s3] sm:$0xff]
      %v8141 = vld [vmem:[%s3 + $0x8] sm:$0xff]
      %v8142 = vld [vmem:[%s3 + $0x10] sm:$0xff]
      %v8143 = vld [vmem:[%s3 + $0x18] sm:$0xff]
      %v8144 = vld [vmem:[%s3 + $0x20] sm:$0xff]
      %v8145 = vld [vmem:[%s3 + $0x28] sm:$0xff]
      %v8146 = vld [vmem:[%s3 + $0x30] sm:$0xff]
      %v8147 = vld [vmem:[%s3 + $0x38] sm:$0xff]
      %v8148 = vld [vmem:[%s3 + $0x40] sm:$0xff]
      %v8149 = vld [vmem:[%s3 + $0x48] sm:$0xff]
      %v8150 = vld [vmem:[%s3 + $0x50] sm:$0xff]
      %v8151 = vld [vmem:[%s3 + $0x58] sm:$0xff]
      %v8152 = vld [vmem:[%s3 + $0x60] sm:$0xff]
      %v8153 = vld [vmem:[%s3 + $0x68] sm:$0xff]
      %v8154 = vld [vmem:[%s3 + $0x70] sm:$0xff]
      %v8155 = vld [vmem:[%s3 + $0x78] sm:$0xff]
      %v8156 = vld [vmem:[%s3 + $0x80] sm:$0xff]
      %v8157 = vld [vmem:[%s3 + $0x88] sm:$0xff]
      %v8158 = vld [vmem:[%s3 + $0x90] sm:$0xff]
      %v8159 = vld [vmem:[%s3 + $0x98] sm:$0xff]
      %v8160 = vld [vmem:[%s3 + $0xa0] sm:$0xff]
      %v8161 = vld [vmem:[%s3 + $0xa8] sm:$0xff]
      %v8162 = vld [vmem:[%s3 + $0xb0] sm:$0xff]
      %v8163 = vld [vmem:[%s3 + $0xb8] sm:$0xff]
      %v8164 = vld [vmem:[%s3 + $0xc0] sm:$0xff]
      %v8165 = vld [vmem:[%s3 + $0xc8] sm:$0xff]
      %v8166 = vld [vmem:[%s3 + $0xd0] sm:$0xff]
      %v8167 = vld [vmem:[%s3 + $0xd8] sm:$0xff]
      %v8168 = vld [vmem:[%s3 + $0xe0] sm:$0xff]
      %v8169 = vld [vmem:[%s3 + $0xe8] sm:$0xff]
      %v8170 = vld [vmem:[%s3 + $0xf0] sm:$0xff]
      %v8171 = vld [vmem:[%s3 + $0xf8] sm:$0xff]
      %v8172 = vld [vmem:[%s3 + $0x100] sm:$0xff]
      %v8173 = vld [vmem:[%s3 + $0x108] sm:$0xff]
      %v8174 = vld [vmem:[%s3 + $0x110] sm:$0xff]
      %v8175 = vld [vmem:[%s3 + $0x118] sm:$0xff]
      %v8176 = vld [vmem:[%s3 + $0x120] sm:$0xff]
      %v8177 = vld [vmem:[%s3 + $0x128] sm:$0xff]
      %v8178 = vld [vmem:[%s3 + $0x130] sm:$0xff]
      %v8179 = vld [vmem:[%s3 + $0x138] sm:$0xff]
      %v8180 = vld [vmem:[%s3 + $0x140] sm:$0xff]
      %v8181 = vld [vmem:[%s3 + $0x148] sm:$0xff]
      %v8182 = vld [vmem:[%s3 + $0x150] sm:$0xff]
      %v8183 = vld [vmem:[%s3 + $0x158] sm:$0xff]
      %v8184 = vld [vmem:[%s3 + $0x160] sm:$0xff]
      %v8185 = vld [vmem:[%s3 + $0x168] sm:$0xff]
      %v8186 = vld [vmem:[%s3 + $0x170] sm:$0xff]
      %v8187 = vld [vmem:[%s3 + $0x178] sm:$0xff]
      %v8188 = vld [vmem:[%s3 + $0x180] sm:$0xff]
      %v8189 = vld [vmem:[%s3 + $0x188] sm:$0xff]
      %v8190 = vld [vmem:[%s3 + $0x190] sm:$0xff]
      %v8191 = vld [vmem:[%s3 + $0x198] sm:$0xff]
      %v8192 = vld [vmem:[%s3 + $0x1a0] sm:$0xff]
      %v8193 = vld [vmem:[%s3 + $0x1a8] sm:$0xff]
      %v8194 = vld [vmem:[%s3 + $0x1b0] sm:$0xff]
      %v8195 = vld [vmem:[%s3 + $0x1b8] sm:$0xff]
      %v8196 = vld [vmem:[%s3 + $0x1c0] sm:$0xff]
      %v8197 = vld [vmem:[%s3 + $0x1c8] sm:$0xff]
      %v8198 = vld [vmem:[%s3 + $0x1d0] sm:$0xff]
      %v8199 = vld [vmem:[%s3 + $0x1d8] sm:$0xff]
      %v8200 = vld [vmem:[%s3 + $0x1e0] sm:$0xff]
      %v8201 = vld [vmem:[%s3 + $0x1e8] sm:$0xff]
      %v8202 = vld [vmem:[%s3 + $0x1f0] sm:$0xff]
      %v8203 = vld [vmem:[%s3 + $0x1f8] sm:$0xff]
      %v8204 = vld [vmem:[%s3 + $0x200] sm:$0xff]
      %v8205 = vld [vmem:[%s3 + $0x208] sm:$0xff]
      %v8206 = vld [vmem:[%s3 + $0x210] sm:$0xff]
      %v8207 = vld [vmem:[%s3 + $0x218] sm:$0xff]
      %v8208 = vld [vmem:[%s3 + $0x220] sm:$0xff]
      %v8209 = vld [vmem:[%s3 + $0x228] sm:$0xff]
      %v8210 = vld [vmem:[%s3 + $0x230] sm:$0xff]
      %v8211 = vld [vmem:[%s3 + $0x238] sm:$0xff]
      %v8212 = vld [vmem:[%s3 + $0x240] sm:$0xff]
      %v8213 = vld [vmem:[%s3 + $0x248] sm:$0xff]
      %v8214 = vld [vmem:[%s3 + $0x250] sm:$0xff]
      %v8215 = vld [vmem:[%s3 + $0x258] sm:$0xff]
      %v8216 = vld [vmem:[%s3 + $0x260] sm:$0xff]
      %v8217 = vld [vmem:[%s3 + $0x268] sm:$0xff]
      %v8218 = vld [vmem:[%s3 + $0x270] sm:$0xff]
      %v8219 = vld [vmem:[%s3 + $0x278] sm:$0xff]
      %v8220 = vld [vmem:[%s3 + $0x280] sm:$0xff]
      %v8221 = vld [vmem:[%s3 + $0x288] sm:$0xff]
      %v8222 = vld [vmem:[%s3 + $0x290] sm:$0xff]
      %v8223 = vld [vmem:[%s3 + $0x298] sm:$0xff]
      %v8224 = vld [vmem:[%s3 + $0x2a0] sm:$0xff]
      %v8225 = vld [vmem:[%s3 + $0x2a8] sm:$0xff]
      %v8226 = vld [vmem:[%s3 + $0x2b0] sm:$0xff]
      %v8227 = vld [vmem:[%s3 + $0x2b8] sm:$0xff]
      %v8228 = vld [vmem:[%s3 + $0x2c0] sm:$0xff]
      %v8229 = vld [vmem:[%s3 + $0x2c8] sm:$0xff]
      %v8230 = vld [vmem:[%s3 + $0x2d0] sm:$0xff]
      %v8231 = vld [vmem:[%s3 + $0x2d8] sm:$0xff]
      %v8232 = vld [vmem:[%s3 + $0x2e0] sm:$0xff]
      %v8233 = vld [vmem:[%s3 + $0x2e8] sm:$0xff]
      %v8234 = vld [vmem:[%s3 + $0x2f0] sm:$0xff]
      %v8235 = vld [vmem:[%s3 + $0x2f8] sm:$0xff]
      %v8236 = vld [vmem:[%s7] ss:$4 sm:$0x3]
      %v8238 = vlaneseq
      %v8239 = vshrl.u32 %v8238, 7
      %v8240 = vsub.s32 0, %v8239
      %v8241 = vrot.slane %v8236, %v8240
      %v8242 = vlaneseq
      %v8243 = vshrl.u32 %v8242, 7
      %v8244 = vsub.s32 1, %v8243
      %v8245 = vrot.slane %v8236, %v8244
      %v8344 = vunpack.c.l.b16 %v8140
      %v8345 = vunpack.c.h.b16 %v8140
      %v8346 = vunpack.c.l.b16 %v8141
      %v8347 = vunpack.c.h.b16 %v8141
      %v8348 = vunpack.c.l.b16 %v8142
      %v8349 = vunpack.c.h.b16 %v8142
      %v8350 = vunpack.c.l.b16 %v8143
      %v8351 = vunpack.c.h.b16 %v8143
      %v8352 = vunpack.c.l.b16 %v8144
      %v8353 = vunpack.c.h.b16 %v8144
      %v8354 = vunpack.c.l.b16 %v8145
      %v8355 = vunpack.c.h.b16 %v8145
      %v8356 = vunpack.c.l.b16 %v8146
      %v8357 = vunpack.c.h.b16 %v8146
      %v8358 = vunpack.c.l.b16 %v8147
      %v8359 = vunpack.c.h.b16 %v8147
      %v8360 = vunpack.c.l.b16 %v8148
      %v8361 = vunpack.c.h.b16 %v8148
      %v8362 = vunpack.c.l.b16 %v8149
      %v8363 = vunpack.c.h.b16 %v8149
      %v8364 = vunpack.c.l.b16 %v8150
      %v8365 = vunpack.c.h.b16 %v8150
      %v8366 = vunpack.c.l.b16 %v8151
      %v8367 = vunpack.c.h.b16 %v8151
      %v8368 = vunpack.c.l.b16 %v8152
      %v8369 = vunpack.c.h.b16 %v8152
      %v8370 = vunpack.c.l.b16 %v8153
      %v8371 = vunpack.c.h.b16 %v8153
      %v8372 = vunpack.c.l.b16 %v8154
      %v8373 = vunpack.c.h.b16 %v8154
      %v8374 = vunpack.c.l.b16 %v8155
      %v8375 = vunpack.c.h.b16 %v8155
      %v8376 = vunpack.c.l.b16 %v8156
      %v8377 = vunpack.c.h.b16 %v8156
      %v8378 = vunpack.c.l.b16 %v8157
      %v8379 = vunpack.c.h.b16 %v8157
      %v8380 = vunpack.c.l.b16 %v8158
      %v8381 = vunpack.c.h.b16 %v8158
      %v8382 = vunpack.c.l.b16 %v8159
      %v8383 = vunpack.c.h.b16 %v8159
      %v8384 = vunpack.c.l.b16 %v8160
      %v8385 = vunpack.c.h.b16 %v8160
      %v8386 = vunpack.c.l.b16 %v8161
      %v8387 = vunpack.c.h.b16 %v8161
      %v8388 = vunpack.c.l.b16 %v8162
      %v8389 = vunpack.c.h.b16 %v8162
      %v8390 = vunpack.c.l.b16 %v8163
      %v8391 = vunpack.c.h.b16 %v8163
      %v8392 = vunpack.c.l.b16 %v8164
      %v8393 = vunpack.c.h.b16 %v8164
      %v8394 = vunpack.c.l.b16 %v8165
      %v8395 = vunpack.c.h.b16 %v8165
      %v8396 = vunpack.c.l.b16 %v8166
      %v8397 = vunpack.c.h.b16 %v8166
      %v8398 = vunpack.c.l.b16 %v8167
      %v8399 = vunpack.c.h.b16 %v8167
      %v8400 = vunpack.c.l.b16 %v8168
      %v8401 = vunpack.c.h.b16 %v8168
      %v8402 = vunpack.c.l.b16 %v8169
      %v8403 = vunpack.c.h.b16 %v8169
      %v8404 = vunpack.c.l.b16 %v8170
      %v8405 = vunpack.c.h.b16 %v8170
      %v8406 = vunpack.c.l.b16 %v8171
      %v8407 = vunpack.c.h.b16 %v8171
      %v8408 = vunpack.c.l.b16 %v8172
      %v8409 = vunpack.c.h.b16 %v8172
      %v8410 = vunpack.c.l.b16 %v8173
      %v8411 = vunpack.c.h.b16 %v8173
      %v8412 = vunpack.c.l.b16 %v8174
      %v8413 = vunpack.c.h.b16 %v8174
      %v8414 = vunpack.c.l.b16 %v8175
      %v8415 = vunpack.c.h.b16 %v8175
      %v8416 = vunpack.c.l.b16 %v8176
      %v8417 = vunpack.c.h.b16 %v8176
      %v8418 = vunpack.c.l.b16 %v8177
      %v8419 = vunpack.c.h.b16 %v8177
      %v8420 = vunpack.c.l.b16 %v8178
      %v8421 = vunpack.c.h.b16 %v8178
      %v8422 = vunpack.c.l.b16 %v8179
      %v8423 = vunpack.c.h.b16 %v8179
      %v8424 = vunpack.c.l.b16 %v8180
      %v8425 = vunpack.c.h.b16 %v8180
      %v8426 = vunpack.c.l.b16 %v8181
      %v8427 = vunpack.c.h.b16 %v8181
      %v8428 = vunpack.c.l.b16 %v8182
      %v8429 = vunpack.c.h.b16 %v8182
      %v8430 = vunpack.c.l.b16 %v8183
      %v8431 = vunpack.c.h.b16 %v8183
      %v8432 = vunpack.c.l.b16 %v8184
      %v8433 = vunpack.c.h.b16 %v8184
      %v8434 = vunpack.c.l.b16 %v8185
      %v8435 = vunpack.c.h.b16 %v8185
      %v8436 = vunpack.c.l.b16 %v8186
      %v8437 = vunpack.c.h.b16 %v8186
      %v8438 = vunpack.c.l.b16 %v8187
      %v8439 = vunpack.c.h.b16 %v8187
      %v8440 = vunpack.c.l.b16 %v8188
      %v8441 = vunpack.c.h.b16 %v8188
      %v8442 = vunpack.c.l.b16 %v8189
      %v8443 = vunpack.c.h.b16 %v8189
      %v8444 = vunpack.c.l.b16 %v8190
      %v8445 = vunpack.c.h.b16 %v8190
      %v8446 = vunpack.c.l.b16 %v8191
      %v8447 = vunpack.c.h.b16 %v8191
      %v8448 = vunpack.c.l.b16 %v8192
      %v8449 = vunpack.c.h.b16 %v8192
      %v8450 = vunpack.c.l.b16 %v8193
      %v8451 = vunpack.c.h.b16 %v8193
      %v8452 = vunpack.c.l.b16 %v8194
      %v8453 = vunpack.c.h.b16 %v8194
      %v8454 = vunpack.c.l.b16 %v8195
      %v8455 = vunpack.c.h.b16 %v8195
      %v8456 = vunpack.c.l.b16 %v8196
      %v8457 = vunpack.c.h.b16 %v8196
      %v8458 = vunpack.c.l.b16 %v8197
      %v8459 = vunpack.c.h.b16 %v8197
      %v8460 = vunpack.c.l.b16 %v8198
      %v8461 = vunpack.c.h.b16 %v8198
      %v8462 = vunpack.c.l.b16 %v8199
      %v8463 = vunpack.c.h.b16 %v8199
      %v8464 = vunpack.c.l.b16 %v8200
      %v8465 = vunpack.c.h.b16 %v8200
      %v8466 = vunpack.c.l.b16 %v8201
      %v8467 = vunpack.c.h.b16 %v8201
      %v8468 = vunpack.c.l.b16 %v8202
      %v8469 = vunpack.c.h.b16 %v8202
      %v8470 = vunpack.c.l.b16 %v8203
      %v8471 = vunpack.c.h.b16 %v8203
      %v8472 = vunpack.c.l.b16 %v8204
      %v8473 = vunpack.c.h.b16 %v8204
      %v8474 = vunpack.c.l.b16 %v8205
      %v8475 = vunpack.c.h.b16 %v8205
      %v8476 = vunpack.c.l.b16 %v8206
      %v8477 = vunpack.c.h.b16 %v8206
      %v8478 = vunpack.c.l.b16 %v8207
      %v8479 = vunpack.c.h.b16 %v8207
      %v8480 = vunpack.c.l.b16 %v8208
      %v8481 = vunpack.c.h.b16 %v8208
      %v8482 = vunpack.c.l.b16 %v8209
      %v8483 = vunpack.c.h.b16 %v8209
      %v8484 = vunpack.c.l.b16 %v8210
      %v8485 = vunpack.c.h.b16 %v8210
      %v8486 = vunpack.c.l.b16 %v8211
      %v8487 = vunpack.c.h.b16 %v8211
      %v8488 = vunpack.c.l.b16 %v8212
      %v8489 = vunpack.c.h.b16 %v8212
      %v8490 = vunpack.c.l.b16 %v8213
      %v8491 = vunpack.c.h.b16 %v8213
      %v8492 = vunpack.c.l.b16 %v8214
      %v8493 = vunpack.c.h.b16 %v8214
      %v8494 = vunpack.c.l.b16 %v8215
      %v8495 = vunpack.c.h.b16 %v8215
      %v8496 = vunpack.c.l.b16 %v8216
      %v8497 = vunpack.c.h.b16 %v8216
      %v8498 = vunpack.c.l.b16 %v8217
      %v8499 = vunpack.c.h.b16 %v8217
      %v8500 = vunpack.c.l.b16 %v8218
      %v8501 = vunpack.c.h.b16 %v8218
      %v8502 = vunpack.c.l.b16 %v8219
      %v8503 = vunpack.c.h.b16 %v8219
      %v8504 = vunpack.c.l.b16 %v8220
      %v8505 = vunpack.c.h.b16 %v8220
      %v8506 = vunpack.c.l.b16 %v8221
      %v8507 = vunpack.c.h.b16 %v8221
      %v8508 = vunpack.c.l.b16 %v8222
      %v8509 = vunpack.c.h.b16 %v8222
      %v8510 = vunpack.c.l.b16 %v8223
      %v8511 = vunpack.c.h.b16 %v8223
      %v8512 = vunpack.c.l.b16 %v8224
      %v8513 = vunpack.c.h.b16 %v8224
      %v8514 = vunpack.c.l.b16 %v8225
      %v8515 = vunpack.c.h.b16 %v8225
      %v8516 = vunpack.c.l.b16 %v8226
      %v8517 = vunpack.c.h.b16 %v8226
      %v8518 = vunpack.c.l.b16 %v8227
      %v8519 = vunpack.c.h.b16 %v8227
      %v8520 = vunpack.c.l.b16 %v8228
      %v8521 = vunpack.c.h.b16 %v8228
      %v8522 = vunpack.c.l.b16 %v8229
      %v8523 = vunpack.c.h.b16 %v8229
      %v8524 = vunpack.c.l.b16 %v8230
      %v8525 = vunpack.c.h.b16 %v8230
      %v8526 = vunpack.c.l.b16 %v8231
      %v8527 = vunpack.c.h.b16 %v8231
      %v8528 = vunpack.c.l.b16 %v8232
      %v8529 = vunpack.c.h.b16 %v8232
      %v8530 = vunpack.c.l.b16 %v8233
      %v8531 = vunpack.c.h.b16 %v8233
      %v8532 = vunpack.c.l.b16 %v8234
      %v8533 = vunpack.c.h.b16 %v8234
      %v8534 = vunpack.c.l.b16 %v8235
      %v8535 = vunpack.c.h.b16 %v8235
      %v8536 = vpack.c.b16 %v8346, %v8344
      %v8537 = vpack.c.b16 %v8347, %v8345
      %v8538 = vpack.c.b16 %v8350, %v8348
      %v8539 = vpack.c.b16 %v8351, %v8349
      %v8540 = vpack.c.b16 %v8354, %v8352
      %v8541 = vpack.c.b16 %v8355, %v8353
      %v8542 = vpack.c.b16 %v8358, %v8356
      %v8543 = vpack.c.b16 %v8359, %v8357
      %v8544 = vpack.c.b16 %v8362, %v8360
      %v8545 = vpack.c.b16 %v8363, %v8361
      %v8546 = vpack.c.b16 %v8366, %v8364
      %v8547 = vpack.c.b16 %v8367, %v8365
      %v8548 = vpack.c.b16 %v8370, %v8368
      %v8549 = vpack.c.b16 %v8371, %v8369
      %v8550 = vpack.c.b16 %v8374, %v8372
      %v8551 = vpack.c.b16 %v8375, %v8373
      %v8552 = vpack.c.b16 %v8378, %v8376
      %v8553 = vpack.c.b16 %v8379, %v8377
      %v8554 = vpack.c.b16 %v8382, %v8380
      %v8555 = vpack.c.b16 %v8383, %v8381
      %v8556 = vpack.c.b16 %v8386, %v8384
      %v8557 = vpack.c.b16 %v8387, %v8385
      %v8558 = vpack.c.b16 %v8390, %v8388
      %v8559 = vpack.c.b16 %v8391, %v8389
      %v8560 = vpack.c.b16 %v8394, %v8392
      %v8561 = vpack.c.b16 %v8395, %v8393
      %v8562 = vpack.c.b16 %v8398, %v8396
      %v8563 = vpack.c.b16 %v8399, %v8397
      %v8564 = vpack.c.b16 %v8402, %v8400
      %v8565 = vpack.c.b16 %v8403, %v8401
      %v8566 = vpack.c.b16 %v8406, %v8404
      %v8567 = vpack.c.b16 %v8407, %v8405
      %v8568 = vpack.c.b16 %v8410, %v8408
      %v8569 = vpack.c.b16 %v8411, %v8409
      %v8570 = vpack.c.b16 %v8414, %v8412
      %v8571 = vpack.c.b16 %v8415, %v8413
      %v8572 = vpack.c.b16 %v8418, %v8416
      %v8573 = vpack.c.b16 %v8419, %v8417
      %v8574 = vpack.c.b16 %v8422, %v8420
      %v8575 = vpack.c.b16 %v8423, %v8421
      %v8576 = vpack.c.b16 %v8426, %v8424
      %v8577 = vpack.c.b16 %v8427, %v8425
      %v8578 = vpack.c.b16 %v8430, %v8428
      %v8579 = vpack.c.b16 %v8431, %v8429
      %v8580 = vpack.c.b16 %v8434, %v8432
      %v8581 = vpack.c.b16 %v8435, %v8433
      %v8582 = vpack.c.b16 %v8438, %v8436
      %v8583 = vpack.c.b16 %v8439, %v8437
      %v8584 = vpack.c.b16 %v8442, %v8440
      %v8585 = vpack.c.b16 %v8443, %v8441
      %v8586 = vpack.c.b16 %v8446, %v8444
      %v8587 = vpack.c.b16 %v8447, %v8445
      %v8588 = vpack.c.b16 %v8450, %v8448
      %v8589 = vpack.c.b16 %v8451, %v8449
      %v8590 = vpack.c.b16 %v8454, %v8452
      %v8591 = vpack.c.b16 %v8455, %v8453
      %v8592 = vpack.c.b16 %v8458, %v8456
      %v8593 = vpack.c.b16 %v8459, %v8457
      %v8594 = vpack.c.b16 %v8462, %v8460
      %v8595 = vpack.c.b16 %v8463, %v8461
      %v8596 = vpack.c.b16 %v8466, %v8464
      %v8597 = vpack.c.b16 %v8467, %v8465
      %v8598 = vpack.c.b16 %v8470, %v8468
      %v8599 = vpack.c.b16 %v8471, %v8469
      %v8600 = vpack.c.b16 %v8474, %v8472
      %v8601 = vpack.c.b16 %v8475, %v8473
      %v8602 = vpack.c.b16 %v8478, %v8476
      %v8603 = vpack.c.b16 %v8479, %v8477
      %v8604 = vpack.c.b16 %v8482, %v8480
      %v8605 = vpack.c.b16 %v8483, %v8481
      %v8606 = vpack.c.b16 %v8486, %v8484
      %v8607 = vpack.c.b16 %v8487, %v8485
      %v8608 = vpack.c.b16 %v8490, %v8488
      %v8609 = vpack.c.b16 %v8491, %v8489
      %v8610 = vpack.c.b16 %v8494, %v8492
      %v8611 = vpack.c.b16 %v8495, %v8493
      %v8612 = vpack.c.b16 %v8498, %v8496
      %v8613 = vpack.c.b16 %v8499, %v8497
      %v8614 = vpack.c.b16 %v8502, %v8500
      %v8615 = vpack.c.b16 %v8503, %v8501
      %v8616 = vpack.c.b16 %v8506, %v8504
      %v8617 = vpack.c.b16 %v8507, %v8505
      %v8618 = vpack.c.b16 %v8510, %v8508
      %v8619 = vpack.c.b16 %v8511, %v8509
      %v8620 = vpack.c.b16 %v8514, %v8512
      %v8621 = vpack.c.b16 %v8515, %v8513
      %v8622 = vpack.c.b16 %v8518, %v8516
      %v8623 = vpack.c.b16 %v8519, %v8517
      %v8624 = vpack.c.b16 %v8522, %v8520
      %v8625 = vpack.c.b16 %v8523, %v8521
      %v8626 = vpack.c.b16 %v8526, %v8524
      %v8627 = vpack.c.b16 %v8527, %v8525
      %v8628 = vpack.c.b16 %v8530, %v8528
      %v8629 = vpack.c.b16 %v8531, %v8529
      %v8630 = vpack.c.b16 %v8534, %v8532
      %v8631 = vpack.c.b16 %v8535, %v8533
      %8728 = vmatprep.subr.bf16.mxu0 %v8537
      %8729 = vmatpush1.bf16.msra.mxu0 %v8536
      %8730 = vmatprep.subr.bf16.mxu0 %v8539
      %8731 = vmatpush1.bf16.msra.mxu0 %v8538
      %8732 = vmatprep.subr.bf16.mxu0 %v8541
      %8733 = vmatpush1.bf16.msra.mxu0 %v8540
      %8734 = vmatprep.subr.bf16.mxu0 %v8543
      %8735 = vmatpush1.bf16.msra.mxu0 %v8542
      %8736 = vmatprep.subr.bf16.mxu0 %v8545
      %8737 = vmatpush1.bf16.msra.mxu0 %v8544
      %8738 = vmatprep.subr.bf16.mxu0 %v8547
      %8739 = vmatpush1.bf16.msra.mxu0 %v8546
      %8740 = vmatprep.subr.bf16.mxu0 %v8549
      %8741 = vmatpush1.bf16.msra.mxu0 %v8548
      %8742 = vmatprep.subr.bf16.mxu0 %v8551
      %8743 = vmatpush1.bf16.msra.mxu0 %v8550
      %8744 = vmatprep.subr.bf16.mxu0 %v8553
      %8745 = vmatpush1.bf16.msra.mxu0 %v8552
      %8746 = vmatprep.subr.bf16.mxu0 %v8555
      %8747 = vmatpush1.bf16.msra.mxu0 %v8554
      %8748 = vmatprep.subr.bf16.mxu0 %v8557
      %8749 = vmatpush1.bf16.msra.mxu0 %v8556
      %8750 = vmatprep.subr.bf16.mxu0 %v8559
      %8751 = vmatpush1.bf16.msra.mxu0 %v8558
      %8752 = vmatprep.subr.bf16.mxu0 %v8561
      %8753 = vmatpush1.bf16.msra.mxu0 %v8560
      %8754 = vmatprep.subr.bf16.mxu0 %v8563
      %8755 = vmatpush1.bf16.msra.mxu0 %v8562
      %8756 = vmatprep.subr.bf16.mxu0 %v8565
      %8757 = vmatpush1.bf16.msra.mxu0 %v8564
      %8758 = vmatprep.subr.bf16.mxu0 %v8567
      %8759 = vmatpush1.bf16.msra.mxu0 %v8566
      %8760 = vmatprep.mubr.bf16.mxu0 %v7997
      %8761 = vmatmul.mubr.bf16.gmra.mrb[0].mxu0 %v7996
      %v8762 = vpop.f32.mrb[0].mxu0
      %v8763 = vadd.f32 %v8241, %v8762
      %v8764 = vpop.f32.mrb[0].mxu0
      %v8765 = vadd.f32 %v8245, %v8764
      %v8766 = vpop.f32.mrb[0].mxu0
      %v8767 = vadd.f32 %v8241, %v8766
      %v8768 = vpop.f32.mrb[0].mxu0
      %v8769 = vadd.f32 %v8245, %v8768
      %8770 = vmatprep.mubr.bf16.mxu0 %v7999
      %8771 = vmatmul.mubr.bf16.gmra.mrb[0].mxu0 %v7998
      %v8772 = vpop.f32.mrb[0].mxu0
      %v8773 = vadd.f32 %v8241, %v8772
      %v8774 = vpop.f32.mrb[0].mxu0
      %v8775 = vadd.f32 %v8245, %v8774
      %v8776 = vpop.f32.mrb[0].mxu0
      %v8777 = vadd.f32 %v8241, %v8776
      %v8778 = vpop.f32.mrb[0].mxu0
      %v8779 = vadd.f32 %v8245, %v8778
      %8780 = vmatprep.mubr.bf16.mxu0 %v8001
      %8781 = vmatmul.mubr.bf16.gmra.mrb[0].mxu0 %v8000
      %v8782 = vpop.f32.mrb[0].mxu0
      %v8783 = vadd.f32 %v8241, %v8782
      %v8784 = vpop.f32.mrb[0].mxu0
      %v8785 = vadd.f32 %v8245, %v8784
      %v8786 = vpop.f32.mrb[0].mxu0
      %v8787 = vadd.f32 %v8241, %v8786
      %v8788 = vpop.f32.mrb[0].mxu0
      %v8789 = vadd.f32 %v8245, %v8788
      %8790 = vmatprep.mubr.bf16.mxu0 %v8003
      %8791 = vmatmul.mubr.bf16.gmra.mrb[0].mxu0 %v8002
      %v8792 = vpop.f32.mrb[0].mxu0
      %v8793 = vadd.f32 %v8241, %v8792
      %v8794 = vpop.f32.mrb[0].mxu0
      %v8795 = vadd.f32 %v8245, %v8794
      %v8796 = vpop.f32.mrb[0].mxu0
      %v8797 = vadd.f32 %v8241, %v8796
      %v8798 = vpop.f32.mrb[0].mxu0
      %v8799 = vadd.f32 %v8245, %v8798
      %8800 = vmatprep.mubr.bf16.mxu0 %v8005
      %8801 = vmatmul.mubr.bf16.gmra.mrb[0].mxu0 %v8004
      %v8802 = vpop.f32.mrb[0].mxu0
      %v8803 = vadd.f32 %v8241, %v8802
      %v8804 = vpop.f32.mrb[0].mxu0
      %v8805 = vadd.f32 %v8245, %v8804
      %v8806 = vpop.f32.mrb[0].mxu0
      %v8807 = vadd.f32 %v8241, %v8806
      %v8808 = vpop.f32.mrb[0].mxu0
      %v8809 = vadd.f32 %v8245, %v8808
      %8810 = vmatprep.mubr.bf16.mxu0 %v8007
      %8811 = vmatmul.mubr.bf16.gmra.mrb[0].mxu0 %v8006
      %v8812 = vpop.f32.mrb[0].mxu0
      %v8813 = vadd.f32 %v8241, %v8812
      %v8814 = vpop.f32.mrb[0].mxu0
      %v8815 = vadd.f32 %v8245, %v8814
      %v8816 = vpop.f32.mrb[0].mxu0
      %v8817 = vadd.f32 %v8241, %v8816
      %v8818 = vpop.f32.mrb[0].mxu0
      %v8819 = vadd.f32 %v8245, %v8818
      %8820 = vmatprep.mubr.bf16.mxu0 %v8009
      %8821 = vmatmul.mubr.bf16.gmra.mrb[0].mxu0 %v8008
      %v8822 = vpop.f32.mrb[0].mxu0
      %v8823 = vadd.f32 %v8241, %v8822
      %v8824 = vpop.f32.mrb[0].mxu0
      %v8825 = vadd.f32 %v8245, %v8824
      %v8826 = vpop.f32.mrb[0].mxu0
      %v8827 = vadd.f32 %v8241, %v8826
      %v8828 = vpop.f32.mrb[0].mxu0
      %v8829 = vadd.f32 %v8245, %v8828
      %8830 = vmatprep.mubr.bf16.mxu0 %v8011
      %8831 = vmatmul.mubr.bf16.gmra.mrb[0].mxu0 %v8010
      %v8832 = vpop.f32.mrb[0].mxu0
      %v8833 = vadd.f32 %v8241, %v8832
      %v8834 = vpop.f32.mrb[0].mxu0
      %v8835 = vadd.f32 %v8245, %v8834
      %v8836 = vpop.f32.mrb[0].mxu0
      %v8837 = vadd.f32 %v8241, %v8836
      %v8838 = vpop.f32.mrb[0].mxu0
      %v8839 = vadd.f32 %v8245, %v8838
      %8840 = vdwg.mxu0
      %8841 = vmatprep.subr.bf16.mxu0 %v8569
      %8842 = vmatpush1.bf16.msra.mxu0 %v8568
      %8843 = vmatprep.subr.bf16.mxu0 %v8571
      %8844 = vmatpush1.bf16.msra.mxu0 %v8570
      %8845 = vmatprep.subr.bf16.mxu0 %v8573
      %8846 = vmatpush1.bf16.msra.mxu0 %v8572
      %8847 = vmatprep.subr.bf16.mxu0 %v8575
      %8848 = vmatpush1.bf16.msra.mxu0 %v8574
      %8849 = vmatprep.subr.bf16.mxu0 %v8577
      %8850 = vmatpush1.bf16.msra.mxu0 %v8576
      %8851 = vmatprep.subr.bf16.mxu0 %v8579
      %8852 = vmatpush1.bf16.msra.mxu0 %v8578
      %8853 = vmatprep.subr.bf16.mxu0 %v8581
      %8854 = vmatpush1.bf16.msra.mxu0 %v8580
      %8855 = vmatprep.subr.bf16.mxu0 %v8583
      %8856 = vmatpush1.bf16.msra.mxu0 %v8582
      %8857 = vmatprep.subr.bf16.mxu0 %v8585
      %8858 = vmatpush1.bf16.msra.mxu0 %v8584
      %8859 = vmatprep.subr.bf16.mxu0 %v8587
      %8860 = vmatpush1.bf16.msra.mxu0 %v8586
      %8861 = vmatprep.subr.bf16.mxu0 %v8589
      %8862 = vmatpush1.bf16.msra.mxu0 %v8588
      %8863 = vmatprep.subr.bf16.mxu0 %v8591
      %8864 = vmatpush1.bf16.msra.mxu0 %v8590
      %8865 = vmatprep.subr.bf16.mxu0 %v8593
      %8866 = vmatpush1.bf16.msra.mxu0 %v8592
      %8867 = vmatprep.subr.bf16.mxu0 %v8595
      %8868 = vmatpush1.bf16.msra.mxu0 %v8594
      %8869 = vmatprep.subr.bf16.mxu0 %v8597
      %8870 = vmatpush1.bf16.msra.mxu0 %v8596
      %8871 = vmatprep.subr.bf16.mxu0 %v8599
      %8872 = vmatpush1.bf16.msra.mxu0 %v8598
      %8873 = vmatprep.mubr.bf16.mxu0 %v8125
      %8874 = vmatmul.mubr.bf16.gmra.mrb[0].mxu0 %v8124
      %v8875 = vpop.f32.mrb[0].mxu0
      %v8876 = vadd.f32 %v8763, %v8875
      %v8877 = vpop.f32.mrb[0].mxu0
      %v8878 = vadd.f32 %v8765, %v8877
      %v8879 = vpop.f32.mrb[0].mxu0
      %v8880 = vadd.f32 %v8767, %v8879
      %v8881 = vpop.f32.mrb[0].mxu0
      %v8882 = vadd.f32 %v8769, %v8881
      %8883 = vmatprep.mubr.bf16.mxu0 %v8127
      %8884 = vmatmul.mubr.bf16.gmra.mrb[0].mxu0 %v8126
      %v8885 = vpop.f32.mrb[0].mxu0
      %v8886 = vadd.f32 %v8773, %v8885
      %v8887 = vpop.f32.mrb[0].mxu0
      %v8888 = vadd.f32 %v8775, %v8887
      %v8889 = vpop.f32.mrb[0].mxu0
      %v8890 = vadd.f32 %v8777, %v8889
      %v8891 = vpop.f32.mrb[0].mxu0
      %v8892 = vadd.f32 %v8779, %v8891
      %8893 = vmatprep.mubr.bf16.mxu0 %v8129
      %8894 = vmatmul.mubr.bf16.gmra.mrb[0].mxu0 %v8128
      %v8895 = vpop.f32.mrb[0].mxu0
      %v8896 = vadd.f32 %v8783, %v8895
      %v8897 = vpop.f32.mrb[0].mxu0
      %v8898 = vadd.f32 %v8785, %v8897
      %v8899 = vpop.f32.mrb[0].mxu0
      %v8900 = vadd.f32 %v8787, %v8899
      %v8901 = vpop.f32.mrb[0].mxu0
      %v8902 = vadd.f32 %v8789, %v8901
      %8903 = vmatprep.mubr.bf16.mxu0 %v8131
      %8904 = vmatmul.mubr.bf16.gmra.mrb[0].mxu0 %v8130
      %v8905 = vpop.f32.mrb[0].mxu0
      %v8906 = vadd.f32 %v8793, %v8905
      %v8907 = vpop.f32.mrb[0].mxu0
      %v8908 = vadd.f32 %v8795, %v8907
      %v8909 = vpop.f32.mrb[0].mxu0
      %v8910 = vadd.f32 %v8797, %v8909
      %v8911 = vpop.f32.mrb[0].mxu0
      %v8912 = vadd.f32 %v8799, %v8911
      %8913 = vmatprep.mubr.bf16.mxu0 %v8133
      %8914 = vmatmul.mubr.bf16.gmra.mrb[0].mxu0 %v8132
      %v8915 = vpop.f32.mrb[0].mxu0
      %v8916 = vadd.f32 %v8803, %v8915
      %v8917 = vpop.f32.mrb[0].mxu0
      %v8918 = vadd.f32 %v8805, %v8917
      %v8919 = vpop.f32.mrb[0].mxu0
      %v8920 = vadd.f32 %v8807, %v8919
      %v8921 = vpop.f32.mrb[0].mxu0
      %v8922 = vadd.f32 %v8809, %v8921
      %8923 = vmatprep.mubr.bf16.mxu0 %v8135
      %8924 = vmatmul.mubr.bf16.gmra.mrb[0].mxu0 %v8134
      %v8925 = vpop.f32.mrb[0].mxu0
      %v8926 = vadd.f32 %v8813, %v8925
      %v8927 = vpop.f32.mrb[0].mxu0
      %v8928 = vadd.f32 %v8815, %v8927
      %v8929 = vpop.f32.mrb[0].mxu0
      %v8930 = vadd.f32 %v8817, %v8929
      %v8931 = vpop.f32.mrb[0].mxu0
      %v8932 = vadd.f32 %v8819, %v8931
      %8933 = vmatprep.mubr.bf16.mxu0 %v8137
      %8934 = vmatmul.mubr.bf16.gmra.mrb[0].mxu0 %v8136
      %v8935 = vpop.f32.mrb[0].mxu0
      %v8936 = vadd.f32 %v8823, %v8935
      %v8937 = vpop.f32.mrb[0].mxu0
      %v8938 = vadd.f32 %v8825, %v8937
      %v8939 = vpop.f32.mrb[0].mxu0
      %v8940 = vadd.f32 %v8827, %v8939
      %v8941 = vpop.f32.mrb[0].mxu0
      %v8942 = vadd.f32 %v8829, %v8941
      %8943 = vmatprep.mubr.bf16.mxu0 %v8139
      %8944 = vmatmul.mubr.bf16.gmra.mrb[0].mxu0 %v8138
      %v8945 = vpop.f32.mrb[0].mxu0
      %v8946 = vadd.f32 %v8833, %v8945
      %v8947 = vpop.f32.mrb[0].mxu0
      %v8948 = vadd.f32 %v8835, %v8947
      %v8949 = vpop.f32.mrb[0].mxu0
      %v8950 = vadd.f32 %v8837, %v8949
      %v8951 = vpop.f32.mrb[0].mxu0
      %v8952 = vadd.f32 %v8839, %v8951
      %8953 = vdwg.mxu0
      %8954 = vmatprep.subr.bf16.mxu0 %v8601
      %8955 = vmatpush1.bf16.msra.mxu0 %v8600
      %8956 = vmatprep.subr.bf16.mxu0 %v8603
      %8957 = vmatpush1.bf16.msra.mxu0 %v8602
      %8958 = vmatprep.subr.bf16.mxu0 %v8605
      %8959 = vmatpush1.bf16.msra.mxu0 %v8604
      %8960 = vmatprep.subr.bf16.mxu0 %v8607
      %8961 = vmatpush1.bf16.msra.mxu0 %v8606
      %8962 = vmatprep.subr.bf16.mxu0 %v8609
      %8963 = vmatpush1.bf16.msra.mxu0 %v8608
      %8964 = vmatprep.subr.bf16.mxu0 %v8611
      %8965 = vmatpush1.bf16.msra.mxu0 %v8610
      %8966 = vmatprep.subr.bf16.mxu0 %v8613
      %8967 = vmatpush1.bf16.msra.mxu0 %v8612
      %8968 = vmatprep.subr.bf16.mxu0 %v8615
      %8969 = vmatpush1.bf16.msra.mxu0 %v8614
      %8970 = vmatprep.subr.bf16.mxu0 %v8617
      %8971 = vmatpush1.bf16.msra.mxu0 %v8616
      %8972 = vmatprep.subr.bf16.mxu0 %v8619
      %8973 = vmatpush1.bf16.msra.mxu0 %v8618
      %8974 = vmatprep.subr.bf16.mxu0 %v8621
      %8975 = vmatpush1.bf16.msra.mxu0 %v8620
      %8976 = vmatprep.subr.bf16.mxu0 %v8623
      %8977 = vmatpush1.bf16.msra.mxu0 %v8622
      %8978 = vmatprep.subr.bf16.mxu0 %v8625
      %8979 = vmatpush1.bf16.msra.mxu0 %v8624
      %8980 = vmatprep.subr.bf16.mxu0 %v8627
      %8981 = vmatpush1.bf16.msra.mxu0 %v8626
      %8982 = vmatprep.subr.bf16.mxu0 %v8629
      %8983 = vmatpush1.bf16.msra.mxu0 %v8628
      %8984 = vmatprep.subr.bf16.mxu0 %v8631
      %8985 = vmatpush1.bf16.msra.mxu0 %v8630
      %8986 = vmatprep.mubr.bf16.mxu0 %v8109
      %8987 = vmatmul.mubr.bf16.gmra.mrb[0].mxu0 %v8108
      %v8988 = vpop.f32.mrb[0].mxu0
      %v8989 = vadd.f32 %v8876, %v8988
      %v8990 = vpop.f32.mrb[0].mxu0
      %v8991 = vadd.f32 %v8878, %v8990
      %v8992 = vpop.f32.mrb[0].mxu0
      %v8993 = vadd.f32 %v8880, %v8992
      %v8994 = vpop.f32.mrb[0].mxu0
      %v8995 = vadd.f32 %v8882, %v8994
      %8996 = vmatprep.mubr.bf16.mxu0 %v8111
      %8997 = vmatmul.mubr.bf16.gmra.mrb[0].mxu0 %v8110
      %v8998 = vpop.f32.mrb[0].mxu0
      %v8999 = vadd.f32 %v8886, %v8998
      %v9000 = vpop.f32.mrb[0].mxu0
      %v9001 = vadd.f32 %v8888, %v9000
      %v9002 = vpop.f32.mrb[0].mxu0
      %v9003 = vadd.f32 %v8890, %v9002
      %v9004 = vpop.f32.mrb[0].mxu0
      %v9005 = vadd.f32 %v8892, %v9004
      %9006 = vmatprep.mubr.bf16.mxu0 %v8113
      %9007 = vmatmul.mubr.bf16.gmra.mrb[0].mxu0 %v8112
      %v9008 = vpop.f32.mrb[0].mxu0
      %v9009 = vadd.f32 %v8896, %v9008
      %v9010 = vpop.f32.mrb[0].mxu0
      %v9011 = vadd.f32 %v8898, %v9010
      %v9012 = vpop.f32.mrb[0].mxu0
      %v9013 = vadd.f32 %v8900, %v9012
      %v9014 = vpop.f32.mrb[0].mxu0
      %v9015 = vadd.f32 %v8902, %v9014
      %9016 = vmatprep.mubr.bf16.mxu0 %v8115
      %9017 = vmatmul.mubr.bf16.gmra.mrb[0].mxu0 %v8114
      %v9018 = vpop.f32.mrb[0].mxu0
      %v9019 = vadd.f32 %v8906, %v9018
      %v9020 = vpop.f32.mrb[0].mxu0
      %v9021 = vadd.f32 %v8908, %v9020
      %v9022 = vpop.f32.mrb[0].mxu0
      %v9023 = vadd.f32 %v8910, %v9022
      %v9024 = vpop.f32.mrb[0].mxu0
      %v9025 = vadd.f32 %v8912, %v9024
      %9026 = vmatprep.mubr.bf16.mxu0 %v8117
      %9027 = vmatmul.mubr.bf16.gmra.mrb[0].mxu0 %v8116
      %v9028 = vpop.f32.mrb[0].mxu0
      %v9029 = vadd.f32 %v8916, %v9028
      %v9030 = vpop.f32.mrb[0].mxu0
      %v9031 = vadd.f32 %v8918, %v9030
      %v9032 = vpop.f32.mrb[0].mxu0
      %v9033 = vadd.f32 %v8920, %v9032
      %v9034 = vpop.f32.mrb[0].mxu0
      %v9035 = vadd.f32 %v8922, %v9034
      %9036 = vmatprep.mubr.bf16.mxu0 %v8119
      %9037 = vmatmul.mubr.bf16.gmra.mrb[0].mxu0 %v8118
      %v9038 = vpop.f32.mrb[0].mxu0
      %v9039 = vadd.f32 %v8926, %v9038
      %v9040 = vpop.f32.mrb[0].mxu0
      %v9041 = vadd.f32 %v8928, %v9040
      %v9042 = vpop.f32.mrb[0].mxu0
      %v9043 = vadd.f32 %v8930, %v9042
      %v9044 = vpop.f32.mrb[0].mxu0
      %v9045 = vadd.f32 %v8932, %v9044
      %9046 = vmatprep.mubr.bf16.mxu0 %v8121
      %9047 = vmatmul.mubr.bf16.gmra.mrb[0].mxu0 %v8120
      %v9048 = vpop.f32.mrb[0].mxu0
      %v9049 = vadd.f32 %v8936, %v9048
      %v9050 = vpop.f32.mrb[0].mxu0
      %v9051 = vadd.f32 %v8938, %v9050
      %v9052 = vpop.f32.mrb[0].mxu0
      %v9053 = vadd.f32 %v8940, %v9052
      %v9054 = vpop.f32.mrb[0].mxu0
      %v9055 = vadd.f32 %v8942, %v9054
      %9056 = vmatprep.mubr.bf16.mxu0 %v8123
      %9057 = vmatmul.mubr.bf16.gmra.mrb[0].mxu0 %v8122
      %v9058 = vpop.f32.mrb[0].mxu0
      %v9059 = vadd.f32 %v8946, %v9058
      %v9060 = vpop.f32.mrb[0].mxu0
      %v9061 = vadd.f32 %v8948, %v9060
      %v9062 = vpop.f32.mrb[0].mxu0
      %v9063 = vadd.f32 %v8950, %v9062
      %v9064 = vpop.f32.mrb[0].mxu0
      %v9065 = vadd.f32 %v8952, %v9064
      %9066 = vdwg.mxu0
      %vm9067 = vcmp.ge.f32.partialorder %v8989, 0.0
      %vm9068 = vcmp.ge.f32.partialorder %v8991, 0.0
      %vm9069 = vcmp.ge.f32.partialorder %v8993, 0.0
      %vm9070 = vcmp.ge.f32.partialorder %v8995, 0.0
      %vm9071 = vcmp.ge.f32.partialorder %v8999, 0.0
      %vm9072 = vcmp.ge.f32.partialorder %v9001, 0.0
      %vm9073 = vcmp.ge.f32.partialorder %v9003, 0.0
      %vm9074 = vcmp.ge.f32.partialorder %v9005, 0.0
      %vm9075 = vcmp.ge.f32.partialorder %v9009, 0.0
      %vm9076 = vcmp.ge.f32.partialorder %v9011, 0.0
      %vm9077 = vcmp.ge.f32.partialorder %v9013, 0.0
      %vm9078 = vcmp.ge.f32.partialorder %v9015, 0.0
      %vm9079 = vcmp.ge.f32.partialorder %v9019, 0.0
      %vm9080 = vcmp.ge.f32.partialorder %v9021, 0.0
      %vm9081 = vcmp.ge.f32.partialorder %v9023, 0.0
      %vm9082 = vcmp.ge.f32.partialorder %v9025, 0.0
      %vm9083 = vcmp.ge.f32.partialorder %v9029, 0.0
      %vm9084 = vcmp.ge.f32.partialorder %v9031, 0.0
      %vm9085 = vcmp.ge.f32.partialorder %v9033, 0.0
      %vm9086 = vcmp.ge.f32.partialorder %v9035, 0.0
      %vm9087 = vcmp.ge.f32.partialorder %v9039, 0.0
      %vm9088 = vcmp.ge.f32.partialorder %v9041, 0.0
      %vm9089 = vcmp.ge.f32.partialorder %v9043, 0.0
      %vm9090 = vcmp.ge.f32.partialorder %v9045, 0.0
      %vm9091 = vcmp.ge.f32.partialorder %v9049, 0.0
      %vm9092 = vcmp.ge.f32.partialorder %v9051, 0.0
      %vm9093 = vcmp.ge.f32.partialorder %v9053, 0.0
      %vm9094 = vcmp.ge.f32.partialorder %v9055, 0.0
      %vm9095 = vcmp.ge.f32.partialorder %v9059, 0.0
      %vm9096 = vcmp.ge.f32.partialorder %v9061, 0.0
      %vm9097 = vcmp.ge.f32.partialorder %v9063, 0.0
      %vm9098 = vcmp.ge.f32.partialorder %v9065, 0.0
      %v9099 = vmul.f32 %v8989, 0.01
      %v9100 = vmul.f32 %v8991, 0.01
      %v9101 = vmul.f32 %v8993, 0.01
      %v9102 = vmul.f32 %v8995, 0.01
      %v9103 = vmul.f32 %v8999, 0.01
      %v9104 = vmul.f32 %v9001, 0.01
      %v9105 = vmul.f32 %v9003, 0.01
      %v9106 = vmul.f32 %v9005, 0.01
      %v9107 = vmul.f32 %v9009, 0.01
      %v9108 = vmul.f32 %v9011, 0.01
      %v9109 = vmul.f32 %v9013, 0.01
      %v9110 = vmul.f32 %v9015, 0.01
      %v9111 = vmul.f32 %v9019, 0.01
      %v9112 = vmul.f32 %v9021, 0.01
      %v9113 = vmul.f32 %v9023, 0.01
      %v9114 = vmul.f32 %v9025, 0.01
      %v9115 = vmul.f32 %v9029, 0.01
      %v9116 = vmul.f32 %v9031, 0.01
      %v9117 = vmul.f32 %v9033, 0.01
      %v9118 = vmul.f32 %v9035, 0.01
      %v9119 = vmul.f32 %v9039, 0.01
      %v9120 = vmul.f32 %v9041, 0.01
      %v9121 = vmul.f32 %v9043, 0.01
      %v9122 = vmul.f32 %v9045, 0.01
      %v9123 = vmul.f32 %v9049, 0.01
      %v9124 = vmul.f32 %v9051, 0.01
      %v9125 = vmul.f32 %v9053, 0.01
      %v9126 = vmul.f32 %v9055, 0.01
      %v9127 = vmul.f32 %v9059, 0.01
      %v9128 = vmul.f32 %v9061, 0.01
      %v9129 = vmul.f32 %v9063, 0.01
      %v9130 = vmul.f32 %v9065, 0.01
      %v9131 = vsel %vm9067, %v8989, %v9099
      %v9132 = vsel %vm9068, %v8991, %v9100
      %v9133 = vsel %vm9069, %v8993, %v9101
      %v9134 = vsel %vm9070, %v8995, %v9102
      %v9135 = vsel %vm9071, %v8999, %v9103
      %v9136 = vsel %vm9072, %v9001, %v9104
      %v9137 = vsel %vm9073, %v9003, %v9105
      %v9138 = vsel %vm9074, %v9005, %v9106
      %v9139 = vsel %vm9075, %v9009, %v9107
      %v9140 = vsel %vm9076, %v9011, %v9108
      %v9141 = vsel %vm9077, %v9013, %v9109
      %v9142 = vsel %vm9078, %v9015, %v9110
      %v9143 = vsel %vm9079, %v9019, %v9111
      %v9144 = vsel %vm9080, %v9021, %v9112
      %v9145 = vsel %vm9081, %v9023, %v9113
      %v9146 = vsel %vm9082, %v9025, %v9114
      %v9147 = vsel %vm9083, %v9029, %v9115
      %v9148 = vsel %vm9084, %v9031, %v9116
      %v9149 = vsel %vm9085, %v9033, %v9117
      %v9150 = vsel %vm9086, %v9035, %v9118
      %v9151 = vsel %vm9087, %v9039, %v9119
      %v9152 = vsel %vm9088, %v9041, %v9120
      %v9153 = vsel %vm9089, %v9043, %v9121
      %v9154 = vsel %vm9090, %v9045, %v9122
      %v9155 = vsel %vm9091, %v9049, %v9123
      %v9156 = vsel %vm9092, %v9051, %v9124
      %v9157 = vsel %vm9093, %v9053, %v9125
      %v9158 = vsel %vm9094, %v9055, %v9126
      %v9159 = vsel %vm9095, %v9059, %v9127
      %v9160 = vsel %vm9096, %v9061, %v9128
      %v9161 = vsel %vm9097, %v9063, %v9129
      %v9162 = vsel %vm9098, %v9065, %v9130
      %s9163 = scalar_lea.vmem %s7, 1
      %v9164 = vld [vmem:[%s9163] ss:$4 sm:$0x3]
      %v9166 = vlaneseq
      %v9167 = vshrl.u32 %v9166, 7
      %v9168 = vsub.s32 0, %v9167
      %v9169 = vrot.slane %v9164, %v9168
      %v9170 = vlaneseq
      %v9171 = vshrl.u32 %v9170, 7
      %v9172 = vsub.s32 1, %v9171
      %v9173 = vrot.slane %v9164, %v9172
      %v9176 = vmul.f32 %v9131, %v9169
      %v9177 = vmul.f32 %v9132, %v9173
      %v9178 = vmul.f32 %v9133, %v9169
      %v9179 = vmul.f32 %v9134, %v9173
      %v9180 = vmul.f32 %v9135, %v9169
      %v9181 = vmul.f32 %v9136, %v9173
      %v9182 = vmul.f32 %v9137, %v9169
      %v9183 = vmul.f32 %v9138, %v9173
      %v9184 = vmul.f32 %v9139, %v9169
      %v9185 = vmul.f32 %v9140, %v9173
      %v9186 = vmul.f32 %v9141, %v9169
      %v9187 = vmul.f32 %v9142, %v9173
      %v9188 = vmul.f32 %v9143, %v9169
      %v9189 = vmul.f32 %v9144, %v9173
      %v9190 = vmul.f32 %v9145, %v9169
      %v9191 = vmul.f32 %v9146, %v9173
      %v9192 = vmul.f32 %v9147, %v9169
      %v9193 = vmul.f32 %v9148, %v9173
      %v9194 = vmul.f32 %v9149, %v9169
      %v9195 = vmul.f32 %v9150, %v9173
      %v9196 = vmul.f32 %v9151, %v9169
      %v9197 = vmul.f32 %v9152, %v9173
      %v9198 = vmul.f32 %v9153, %v9169
      %v9199 = vmul.f32 %v9154, %v9173
      %v9200 = vmul.f32 %v9155, %v9169
      %v9201 = vmul.f32 %v9156, %v9173
      %v9202 = vmul.f32 %v9157, %v9169
      %v9203 = vmul.f32 %v9158, %v9173
      %v9204 = vmul.f32 %v9159, %v9169
      %v9205 = vmul.f32 %v9160, %v9173
      %v9206 = vmul.f32 %v9161, %v9169
      %v9207 = vmul.f32 %v9162, %v9173
      %s9208 = scalar_lea.vmem %s7, 2
      %v9209 = vld [vmem:[%s9208] ss:$4 sm:$0x3]
      %v9211 = vlaneseq
      %v9212 = vshrl.u32 %v9211, 7
      %v9213 = vsub.s32 0, %v9212
      %v9214 = vrot.slane %v9209, %v9213
      %v9215 = vlaneseq
      %v9216 = vshrl.u32 %v9215, 7
      %v9217 = vsub.s32 1, %v9216
      %v9218 = vrot.slane %v9209, %v9217
      %v9221 = vadd.f32 %v9176, %v9214
      %v9222 = vadd.f32 %v9177, %v9218
      %v9223 = vadd.f32 %v9178, %v9214
      %v9224 = vadd.f32 %v9179, %v9218
      %v9225 = vadd.f32 %v9180, %v9214
      %v9226 = vadd.f32 %v9181, %v9218
      %v9227 = vadd.f32 %v9182, %v9214
      %v9228 = vadd.f32 %v9183, %v9218
      %v9229 = vadd.f32 %v9184, %v9214
      %v9230 = vadd.f32 %v9185, %v9218
      %v9231 = vadd.f32 %v9186, %v9214
      %v9232 = vadd.f32 %v9187, %v9218
      %v9233 = vadd.f32 %v9188, %v9214
      %v9234 = vadd.f32 %v9189, %v9218
      %v9235 = vadd.f32 %v9190, %v9214
      %v9236 = vadd.f32 %v9191, %v9218
      %v9237 = vadd.f32 %v9192, %v9214
      %v9238 = vadd.f32 %v9193, %v9218
      %v9239 = vadd.f32 %v9194, %v9214
      %v9240 = vadd.f32 %v9195, %v9218
      %v9241 = vadd.f32 %v9196, %v9214
      %v9242 = vadd.f32 %v9197, %v9218
      %v9243 = vadd.f32 %v9198, %v9214
      %v9244 = vadd.f32 %v9199, %v9218
      %v9245 = vadd.f32 %v9200, %v9214
      %v9246 = vadd.f32 %v9201, %v9218
      %v9247 = vadd.f32 %v9202, %v9214
      %v9248 = vadd.f32 %v9203, %v9218
      %v9249 = vadd.f32 %v9204, %v9214
      %v9250 = vadd.f32 %v9205, %v9218
      %v9251 = vadd.f32 %v9206, %v9214
      %v9252 = vadd.f32 %v9207, %v9218
      %v9253 = vrot.slane %v9221, 7
      %v9254 = vrot.slane %v9222, 7
      %v9255 = vrot.slane %v9223, 7
      %v9256 = vrot.slane %v9224, 7
      %v9257 = vrot.slane %v9225, 7
      %v9258 = vrot.slane %v9226, 7
      %v9259 = vrot.slane %v9227, 7
      %v9260 = vrot.slane %v9228, 7
      %v9261 = vrot.slane %v9229, 7
      %v9262 = vrot.slane %v9230, 7
      %v9263 = vrot.slane %v9231, 7
      %v9264 = vrot.slane %v9232, 7
      %v9265 = vrot.slane %v9233, 7
      %v9266 = vrot.slane %v9234, 7
      %v9267 = vrot.slane %v9235, 7
      %v9268 = vrot.slane %v9236, 7
      %v9269 = vrot.slane %v9237, 7
      %v9270 = vrot.slane %v9238, 7
      %v9271 = vrot.slane %v9239, 7
      %v9272 = vrot.slane %v9240, 7
      %v9273 = vrot.slane %v9241, 7
      %v9274 = vrot.slane %v9242, 7
      %v9275 = vrot.slane %v9243, 7
      %v9276 = vrot.slane %v9244, 7
      %v9277 = vrot.slane %v9245, 7
      %v9278 = vrot.slane %v9246, 7
      %v9279 = vrot.slane %v9247, 7
      %v9280 = vrot.slane %v9248, 7
      %v9281 = vrot.slane %v9249, 7
      %v9282 = vrot.slane %v9250, 7
      %v9283 = vrot.slane %v9251, 7
      %v9284 = vrot.slane %v9252, 7
      %v9285 = vsel %vm1489, %v9281, %v9283
      %v9286 = vsel %vm1489, %v9282, %v9284
      %v9287 = vsel %vm1489, %v9279, %v9281
      %v9288 = vsel %vm1489, %v9280, %v9282
      %v9289 = vsel %vm1489, %v9277, %v9279
      %v9290 = vsel %vm1489, %v9278, %v9280
      %v9291 = vsel %vm1489, %v9275, %v9277
      %v9292 = vsel %vm1489, %v9276, %v9278
      %v9293 = vsel %vm1489, %v9273, %v9275
      %v9294 = vsel %vm1489, %v9274, %v9276
      %v9295 = vsel %vm1489, %v9271, %v9273
      %v9296 = vsel %vm1489, %v9272, %v9274
      %v9297 = vsel %vm1489, %v9269, %v9271
      %v9298 = vsel %vm1489, %v9270, %v9272
      %v9299 = vsel %vm1489, %v9267, %v9269
      %v9300 = vsel %vm1489, %v9268, %v9270
      %v9301 = vsel %vm1489, %v9265, %v9267
      %v9302 = vsel %vm1489, %v9266, %v9268
      %v9303 = vsel %vm1489, %v9263, %v9265
      %v9304 = vsel %vm1489, %v9264, %v9266
      %v9305 = vsel %vm1489, %v9261, %v9263
      %v9306 = vsel %vm1489, %v9262, %v9264
      %v9307 = vsel %vm1489, %v9259, %v9261
      %v9308 = vsel %vm1489, %v9260, %v9262
      %v9309 = vsel %vm1489, %v9257, %v9259
      %v9310 = vsel %vm1489, %v9258, %v9260
      %v9311 = vsel %vm1489, %v9255, %v9257
      %v9312 = vsel %vm1489, %v9256, %v9258
      %v9313 = vsel %vm1489, %v9253, %v9255
      %v9314 = vsel %vm1489, %v9254, %v9256
      %v9315 = vsel %vm1489, %v9283, %v9253
      %v9316 = vsel %vm1489, %v9284, %v9254
      %v9317 = vmul.f32 %v9315, %v1393
      %v9318 = vmul.f32 %v9316, %v1393
      %v9319 = vmul.f32 %v9313, %v1394
      %v9320 = vmul.f32 %v9314, %v1394
      %v9321 = vmul.f32 %v9311, %v1395
      %v9322 = vmul.f32 %v9312, %v1395
      %v9323 = vmul.f32 %v9309, %v1396
      %v9324 = vmul.f32 %v9310, %v1396
      %v9325 = vmul.f32 %v9307, %v1397
      %v9326 = vmul.f32 %v9308, %v1397
      %v9327 = vmul.f32 %v9305, %v1398
      %v9328 = vmul.f32 %v9306, %v1398
      %v9329 = vmul.f32 %v9303, %v1399
      %v9330 = vmul.f32 %v9304, %v1399
      %v9331 = vmul.f32 %v9301, %v1400
      %v9332 = vmul.f32 %v9302, %v1400
      %v9333 = vmul.f32 %v9299, %v1401
      %v9334 = vmul.f32 %v9300, %v1401
      %v9335 = vmul.f32 %v9297, %v1402
      %v9336 = vmul.f32 %v9298, %v1402
      %v9337 = vmul.f32 %v9295, %v1403
      %v9338 = vmul.f32 %v9296, %v1403
      %v9339 = vmul.f32 %v9293, %v1404
      %v9340 = vmul.f32 %v9294, %v1404
      %v9341 = vmul.f32 %v9291, %v1405
      %v9342 = vmul.f32 %v9292, %v1405
      %v9343 = vmul.f32 %v9289, %v1406
      %v9344 = vmul.f32 %v9290, %v1406
      %v9345 = vmul.f32 %v9287, %v1407
      %v9346 = vmul.f32 %v9288, %v1407
      %v9347 = vmul.f32 %v9285, %v1408
      %v9348 = vmul.f32 %v9286, %v1408
      %v9349 = vpack.c.bf16 %v9319, %v9317
      %v9350 = vpack.c.bf16 %v9320, %v9318
      %v9351 = vpack.c.bf16 %v9323, %v9321
      %v9352 = vpack.c.bf16 %v9324, %v9322
      %v9353 = vpack.c.bf16 %v9327, %v9325
      %v9354 = vpack.c.bf16 %v9328, %v9326
      %v9355 = vpack.c.bf16 %v9331, %v9329
      %v9356 = vpack.c.bf16 %v9332, %v9330
      %v9357 = vpack.c.bf16 %v9335, %v9333
      %v9358 = vpack.c.bf16 %v9336, %v9334
      %v9359 = vpack.c.bf16 %v9339, %v9337
      %v9360 = vpack.c.bf16 %v9340, %v9338
      %v9361 = vpack.c.bf16 %v9343, %v9341
      %v9362 = vpack.c.bf16 %v9344, %v9342
      %v9363 = vpack.c.bf16 %v9347, %v9345
      %v9364 = vpack.c.bf16 %v9348, %v9346
      %v9365 = vrot.slane %v9221, 1
      %v9366 = vrot.slane %v9222, 1
      %v9367 = vrot.slane %v9223, 1
      %v9368 = vrot.slane %v9224, 1
      %v9369 = vrot.slane %v9225, 1
      %v9370 = vrot.slane %v9226, 1
      %v9371 = vrot.slane %v9227, 1
      %v9372 = vrot.slane %v9228, 1
      %v9373 = vrot.slane %v9229, 1
      %v9374 = vrot.slane %v9230, 1
      %v9375 = vrot.slane %v9231, 1
      %v9376 = vrot.slane %v9232, 1
      %v9377 = vrot.slane %v9233, 1
      %v9378 = vrot.slane %v9234, 1
      %v9379 = vrot.slane %v9235, 1
      %v9380 = vrot.slane %v9236, 1
      %v9381 = vrot.slane %v9237, 1
      %v9382 = vrot.slane %v9238, 1
      %v9383 = vrot.slane %v9239, 1
      %v9384 = vrot.slane %v9240, 1
      %v9385 = vrot.slane %v9241, 1
      %v9386 = vrot.slane %v9242, 1
      %v9387 = vrot.slane %v9243, 1
      %v9388 = vrot.slane %v9244, 1
      %v9389 = vrot.slane %v9245, 1
      %v9390 = vrot.slane %v9246, 1
      %v9391 = vrot.slane %v9247, 1
      %v9392 = vrot.slane %v9248, 1
      %v9393 = vrot.slane %v9249, 1
      %v9394 = vrot.slane %v9250, 1
      %v9395 = vrot.slane %v9251, 1
      %v9396 = vrot.slane %v9252, 1
      %v9397 = vsel %vm1602, %v9393, %v9395
      %v9398 = vsel %vm1602, %v9394, %v9396
      %v9399 = vsel %vm1602, %v9391, %v9393
      %v9400 = vsel %vm1602, %v9392, %v9394
      %v9401 = vsel %vm1602, %v9389, %v9391
      %v9402 = vsel %vm1602, %v9390, %v9392
      %v9403 = vsel %vm1602, %v9387, %v9389
      %v9404 = vsel %vm1602, %v9388, %v9390
      %v9405 = vsel %vm1602, %v9385, %v9387
      %v9406 = vsel %vm1602, %v9386, %v9388
      %v9407 = vsel %vm1602, %v9383, %v9385
      %v9408 = vsel %vm1602, %v9384, %v9386
      %v9409 = vsel %vm1602, %v9381, %v9383
      %v9410 = vsel %vm1602, %v9382, %v9384
      %v9411 = vsel %vm1602, %v9379, %v9381
      %v9412 = vsel %vm1602, %v9380, %v9382
      %v9413 = vsel %vm1602, %v9377, %v9379
      %v9414 = vsel %vm1602, %v9378, %v9380
      %v9415 = vsel %vm1602, %v9375, %v9377
      %v9416 = vsel %vm1602, %v9376, %v9378
      %v9417 = vsel %vm1602, %v9373, %v9375
      %v9418 = vsel %vm1602, %v9374, %v9376
      %v9419 = vsel %vm1602, %v9371, %v9373
      %v9420 = vsel %vm1602, %v9372, %v9374
      %v9421 = vsel %vm1602, %v9369, %v9371
      %v9422 = vsel %vm1602, %v9370, %v9372
      %v9423 = vsel %vm1602, %v9367, %v9369
      %v9424 = vsel %vm1602, %v9368, %v9370
      %v9425 = vsel %vm1602, %v9365, %v9367
      %v9426 = vsel %vm1602, %v9366, %v9368
      %v9427 = vsel %vm1602, %v9395, %v9365
      %v9428 = vsel %vm1602, %v9396, %v9366
      %v9429 = vmul.f32 %v9425, %v1441
      %v9430 = vmul.f32 %v9426, %v1441
      %v9431 = vmul.f32 %v9423, %v1442
      %v9432 = vmul.f32 %v9424, %v1442
      %v9433 = vmul.f32 %v9421, %v1443
      %v9434 = vmul.f32 %v9422, %v1443
      %v9435 = vmul.f32 %v9419, %v1444
      %v9436 = vmul.f32 %v9420, %v1444
      %v9437 = vmul.f32 %v9417, %v1445
      %v9438 = vmul.f32 %v9418, %v1445
      %v9439 = vmul.f32 %v9415, %v1446
      %v9440 = vmul.f32 %v9416, %v1446
      %v9441 = vmul.f32 %v9413, %v1447
      %v9442 = vmul.f32 %v9414, %v1447
      %v9443 = vmul.f32 %v9411, %v1448
      %v9444 = vmul.f32 %v9412, %v1448
      %v9445 = vmul.f32 %v9409, %v1449
      %v9446 = vmul.f32 %v9410, %v1449
      %v9447 = vmul.f32 %v9407, %v1450
      %v9448 = vmul.f32 %v9408, %v1450
      %v9449 = vmul.f32 %v9405, %v1451
      %v9450 = vmul.f32 %v9406, %v1451
      %v9451 = vmul.f32 %v9403, %v1452
      %v9452 = vmul.f32 %v9404, %v1452
      %v9453 = vmul.f32 %v9401, %v1453
      %v9454 = vmul.f32 %v9402, %v1453
      %v9455 = vmul.f32 %v9399, %v1454
      %v9456 = vmul.f32 %v9400, %v1454
      %v9457 = vmul.f32 %v9397, %v1455
      %v9458 = vmul.f32 %v9398, %v1455
      %v9459 = vmul.f32 %v9427, %v1456
      %v9460 = vmul.f32 %v9428, %v1456
      %v9461 = vpack.c.bf16 %v9431, %v9429
      %v9462 = vpack.c.bf16 %v9432, %v9430
      %v9463 = vpack.c.bf16 %v9435, %v9433
      %v9464 = vpack.c.bf16 %v9436, %v9434
      %v9465 = vpack.c.bf16 %v9439, %v9437
      %v9466 = vpack.c.bf16 %v9440, %v9438
      %v9467 = vpack.c.bf16 %v9443, %v9441
      %v9468 = vpack.c.bf16 %v9444, %v9442
      %v9469 = vpack.c.bf16 %v9447, %v9445
      %v9470 = vpack.c.bf16 %v9448, %v9446
      %v9471 = vpack.c.bf16 %v9451, %v9449
      %v9472 = vpack.c.bf16 %v9452, %v9450
      %v9473 = vpack.c.bf16 %v9455, %v9453
      %v9474 = vpack.c.bf16 %v9456, %v9454
      %v9475 = vpack.c.bf16 %v9459, %v9457
      %v9476 = vpack.c.bf16 %v9460, %v9458
      %v9477 = vpack.c.bf16 %v9223, %v9221
      %v9478 = vpack.c.bf16 %v9224, %v9222
      %v9479 = vpack.c.bf16 %v9227, %v9225
      %v9480 = vpack.c.bf16 %v9228, %v9226
      %v9481 = vpack.c.bf16 %v9231, %v9229
      %v9482 = vpack.c.bf16 %v9232, %v9230
      %v9483 = vpack.c.bf16 %v9235, %v9233
      %v9484 = vpack.c.bf16 %v9236, %v9234
      %v9485 = vpack.c.bf16 %v9239, %v9237
      %v9486 = vpack.c.bf16 %v9240, %v9238
      %v9487 = vpack.c.bf16 %v9243, %v9241
      %v9488 = vpack.c.bf16 %v9244, %v9242
      %v9489 = vpack.c.bf16 %v9247, %v9245
      %v9490 = vpack.c.bf16 %v9248, %v9246
      %v9491 = vpack.c.bf16 %v9251, %v9249
      %v9492 = vpack.c.bf16 %v9252, %v9250
      %v9493 = vld [vmem:[%s4] sm:$0xf]
      %v9494 = vld [vmem:[%s4 + $0x4] sm:$0xf]
      %v9495 = vld [vmem:[%s4 + $0x8] sm:$0xf]
      %v9496 = vld [vmem:[%s4 + $0xc] sm:$0xf]
      %v9497 = vld [vmem:[%s4 + $0x10] sm:$0xf]
      %v9498 = vld [vmem:[%s4 + $0x14] sm:$0xf]
      %v9499 = vld [vmem:[%s4 + $0x18] sm:$0xf]
      %v9500 = vld [vmem:[%s4 + $0x1c] sm:$0xf]
      %v9501 = vld [vmem:[%s4 + $0x20] sm:$0xf]
      %v9502 = vld [vmem:[%s4 + $0x24] sm:$0xf]
      %v9503 = vld [vmem:[%s4 + $0x28] sm:$0xf]
      %v9504 = vld [vmem:[%s4 + $0x2c] sm:$0xf]
      %v9505 = vld [vmem:[%s4 + $0x30] sm:$0xf]
      %v9506 = vld [vmem:[%s4 + $0x34] sm:$0xf]
      %v9507 = vld [vmem:[%s4 + $0x38] sm:$0xf]
      %v9508 = vld [vmem:[%s4 + $0x3c] sm:$0xf]
      %v9509 = vld [vmem:[%s4 + $0x40] sm:$0xf]
      %v9510 = vld [vmem:[%s4 + $0x44] sm:$0xf]
      %v9511 = vld [vmem:[%s4 + $0x48] sm:$0xf]
      %v9512 = vld [vmem:[%s4 + $0x4c] sm:$0xf]
      %v9513 = vld [vmem:[%s4 + $0x50] sm:$0xf]
      %v9514 = vld [vmem:[%s4 + $0x54] sm:$0xf]
      %v9515 = vld [vmem:[%s4 + $0x58] sm:$0xf]
      %v9516 = vld [vmem:[%s4 + $0x5c] sm:$0xf]
      %v9517 = vld [vmem:[%s4 + $0x60] sm:$0xf]
      %v9518 = vld [vmem:[%s4 + $0x64] sm:$0xf]
      %v9519 = vld [vmem:[%s4 + $0x68] sm:$0xf]
      %v9520 = vld [vmem:[%s4 + $0x6c] sm:$0xf]
      %v9521 = vld [vmem:[%s4 + $0x70] sm:$0xf]
      %v9522 = vld [vmem:[%s4 + $0x74] sm:$0xf]
      %v9523 = vld [vmem:[%s4 + $0x78] sm:$0xf]
      %v9524 = vld [vmem:[%s4 + $0x7c] sm:$0xf]
      %v9525 = vld [vmem:[%s4 + $0x80] sm:$0xf]
      %v9526 = vld [vmem:[%s4 + $0x84] sm:$0xf]
      %v9527 = vld [vmem:[%s4 + $0x88] sm:$0xf]
      %v9528 = vld [vmem:[%s4 + $0x8c] sm:$0xf]
      %v9529 = vld [vmem:[%s4 + $0x90] sm:$0xf]
      %v9530 = vld [vmem:[%s4 + $0x94] sm:$0xf]
      %v9531 = vld [vmem:[%s4 + $0x98] sm:$0xf]
      %v9532 = vld [vmem:[%s4 + $0x9c] sm:$0xf]
      %v9533 = vld [vmem:[%s4 + $0xa0] sm:$0xf]
      %v9534 = vld [vmem:[%s4 + $0xa4] sm:$0xf]
      %v9535 = vld [vmem:[%s4 + $0xa8] sm:$0xf]
      %v9536 = vld [vmem:[%s4 + $0xac] sm:$0xf]
      %v9537 = vld [vmem:[%s4 + $0xb0] sm:$0xf]
      %v9538 = vld [vmem:[%s4 + $0xb4] sm:$0xf]
      %v9539 = vld [vmem:[%s4 + $0xb8] sm:$0xf]
      %v9540 = vld [vmem:[%s4 + $0xbc] sm:$0xf]
      %v9541 = vld [vmem:[%s4 + $0xc0] sm:$0xf]
      %v9542 = vld [vmem:[%s4 + $0xc4] sm:$0xf]
      %v9543 = vld [vmem:[%s4 + $0xc8] sm:$0xf]
      %v9544 = vld [vmem:[%s4 + $0xcc] sm:$0xf]
      %v9545 = vld [vmem:[%s4 + $0xd0] sm:$0xf]
      %v9546 = vld [vmem:[%s4 + $0xd4] sm:$0xf]
      %v9547 = vld [vmem:[%s4 + $0xd8] sm:$0xf]
      %v9548 = vld [vmem:[%s4 + $0xdc] sm:$0xf]
      %v9549 = vld [vmem:[%s4 + $0xe0] sm:$0xf]
      %v9550 = vld [vmem:[%s4 + $0xe4] sm:$0xf]
      %v9551 = vld [vmem:[%s4 + $0xe8] sm:$0xf]
      %v9552 = vld [vmem:[%s4 + $0xec] sm:$0xf]
      %v9553 = vld [vmem:[%s4 + $0xf0] sm:$0xf]
      %v9554 = vld [vmem:[%s4 + $0xf4] sm:$0xf]
      %v9555 = vld [vmem:[%s4 + $0xf8] sm:$0xf]
      %v9556 = vld [vmem:[%s4 + $0xfc] sm:$0xf]
      %v9557 = vld [vmem:[%s4 + $0x100] sm:$0xf]
      %v9558 = vld [vmem:[%s4 + $0x104] sm:$0xf]
      %v9559 = vld [vmem:[%s4 + $0x108] sm:$0xf]
      %v9560 = vld [vmem:[%s4 + $0x10c] sm:$0xf]
      %v9561 = vld [vmem:[%s4 + $0x110] sm:$0xf]
      %v9562 = vld [vmem:[%s4 + $0x114] sm:$0xf]
      %v9563 = vld [vmem:[%s4 + $0x118] sm:$0xf]
      %v9564 = vld [vmem:[%s4 + $0x11c] sm:$0xf]
      %v9565 = vld [vmem:[%s4 + $0x120] sm:$0xf]
      %v9566 = vld [vmem:[%s4 + $0x124] sm:$0xf]
      %v9567 = vld [vmem:[%s4 + $0x128] sm:$0xf]
      %v9568 = vld [vmem:[%s4 + $0x12c] sm:$0xf]
      %v9569 = vld [vmem:[%s4 + $0x130] sm:$0xf]
      %v9570 = vld [vmem:[%s4 + $0x134] sm:$0xf]
      %v9571 = vld [vmem:[%s4 + $0x138] sm:$0xf]
      %v9572 = vld [vmem:[%s4 + $0x13c] sm:$0xf]
      %v9573 = vld [vmem:[%s4 + $0x140] sm:$0xf]
      %v9574 = vld [vmem:[%s4 + $0x144] sm:$0xf]
      %v9575 = vld [vmem:[%s4 + $0x148] sm:$0xf]
      %v9576 = vld [vmem:[%s4 + $0x14c] sm:$0xf]
      %v9577 = vld [vmem:[%s4 + $0x150] sm:$0xf]
      %v9578 = vld [vmem:[%s4 + $0x154] sm:$0xf]
      %v9579 = vld [vmem:[%s4 + $0x158] sm:$0xf]
      %v9580 = vld [vmem:[%s4 + $0x15c] sm:$0xf]
      %v9581 = vld [vmem:[%s4 + $0x160] sm:$0xf]
      %v9582 = vld [vmem:[%s4 + $0x164] sm:$0xf]
      %v9583 = vld [vmem:[%s4 + $0x168] sm:$0xf]
      %v9584 = vld [vmem:[%s4 + $0x16c] sm:$0xf]
      %v9585 = vld [vmem:[%s4 + $0x170] sm:$0xf]
      %v9586 = vld [vmem:[%s4 + $0x174] sm:$0xf]
      %v9587 = vld [vmem:[%s4 + $0x178] sm:$0xf]
      %v9588 = vld [vmem:[%s4 + $0x17c] sm:$0xf]
      %v9589 = vld [vmem:[%s8] sm:$0x1]
      %v9590 = vlaneseq
      %v9591 = vshrl.u32 %v9590, 7
      %v9592 = vsub.s32 0, %v9591
      %v9593 = vrot.slane %v9589, %v9592
      %v9690 = vunpack.c.l.b16 %v9493
      %v9691 = vunpack.c.l.b16 %v9494
      %v9692 = vunpack.c.l.b16 %v9495
      %v9693 = vunpack.c.l.b16 %v9496
      %v9694 = vunpack.c.l.b16 %v9497
      %v9695 = vunpack.c.l.b16 %v9498
      %v9696 = vunpack.c.l.b16 %v9499
      %v9697 = vunpack.c.l.b16 %v9500
      %v9698 = vunpack.c.l.b16 %v9501
      %v9699 = vunpack.c.l.b16 %v9502
      %v9700 = vunpack.c.l.b16 %v9503
      %v9701 = vunpack.c.l.b16 %v9504
      %v9702 = vunpack.c.l.b16 %v9505
      %v9703 = vunpack.c.l.b16 %v9506
      %v9704 = vunpack.c.l.b16 %v9507
      %v9705 = vunpack.c.l.b16 %v9508
      %v9706 = vunpack.c.l.b16 %v9509
      %v9707 = vunpack.c.l.b16 %v9510
      %v9708 = vunpack.c.l.b16 %v9511
      %v9709 = vunpack.c.l.b16 %v9512
      %v9710 = vunpack.c.l.b16 %v9513
      %v9711 = vunpack.c.l.b16 %v9514
      %v9712 = vunpack.c.l.b16 %v9515
      %v9713 = vunpack.c.l.b16 %v9516
      %v9714 = vunpack.c.l.b16 %v9517
      %v9715 = vunpack.c.l.b16 %v9518
      %v9716 = vunpack.c.l.b16 %v9519
      %v9717 = vunpack.c.l.b16 %v9520
      %v9718 = vunpack.c.l.b16 %v9521
      %v9719 = vunpack.c.l.b16 %v9522
      %v9720 = vunpack.c.l.b16 %v9523
      %v9721 = vunpack.c.l.b16 %v9524
      %v9722 = vunpack.c.l.b16 %v9525
      %v9723 = vunpack.c.l.b16 %v9526
      %v9724 = vunpack.c.l.b16 %v9527
      %v9725 = vunpack.c.l.b16 %v9528
      %v9726 = vunpack.c.l.b16 %v9529
      %v9727 = vunpack.c.l.b16 %v9530
      %v9728 = vunpack.c.l.b16 %v9531
      %v9729 = vunpack.c.l.b16 %v9532
      %v9730 = vunpack.c.l.b16 %v9533
      %v9731 = vunpack.c.l.b16 %v9534
      %v9732 = vunpack.c.l.b16 %v9535
      %v9733 = vunpack.c.l.b16 %v9536
      %v9734 = vunpack.c.l.b16 %v9537
      %v9735 = vunpack.c.l.b16 %v9538
      %v9736 = vunpack.c.l.b16 %v9539
      %v9737 = vunpack.c.l.b16 %v9540
      %v9738 = vunpack.c.l.b16 %v9541
      %v9739 = vunpack.c.l.b16 %v9542
      %v9740 = vunpack.c.l.b16 %v9543
      %v9741 = vunpack.c.l.b16 %v9544
      %v9742 = vunpack.c.l.b16 %v9545
      %v9743 = vunpack.c.l.b16 %v9546
      %v9744 = vunpack.c.l.b16 %v9547
      %v9745 = vunpack.c.l.b16 %v9548
      %v9746 = vunpack.c.l.b16 %v9549
      %v9747 = vunpack.c.l.b16 %v9550
      %v9748 = vunpack.c.l.b16 %v9551
      %v9749 = vunpack.c.l.b16 %v9552
      %v9750 = vunpack.c.l.b16 %v9553
      %v9751 = vunpack.c.l.b16 %v9554
      %v9752 = vunpack.c.l.b16 %v9555
      %v9753 = vunpack.c.l.b16 %v9556
      %v9754 = vunpack.c.l.b16 %v9557
      %v9755 = vunpack.c.l.b16 %v9558
      %v9756 = vunpack.c.l.b16 %v9559
      %v9757 = vunpack.c.l.b16 %v9560
      %v9758 = vunpack.c.l.b16 %v9561
      %v9759 = vunpack.c.l.b16 %v9562
      %v9760 = vunpack.c.l.b16 %v9563
      %v9761 = vunpack.c.l.b16 %v9564
      %v9762 = vunpack.c.l.b16 %v9565
      %v9763 = vunpack.c.l.b16 %v9566
      %v9764 = vunpack.c.l.b16 %v9567
      %v9765 = vunpack.c.l.b16 %v9568
      %v9766 = vunpack.c.l.b16 %v9569
      %v9767 = vunpack.c.l.b16 %v9570
      %v9768 = vunpack.c.l.b16 %v9571
      %v9769 = vunpack.c.l.b16 %v9572
      %v9770 = vunpack.c.l.b16 %v9573
      %v9771 = vunpack.c.l.b16 %v9574
      %v9772 = vunpack.c.l.b16 %v9575
      %v9773 = vunpack.c.l.b16 %v9576
      %v9774 = vunpack.c.l.b16 %v9577
      %v9775 = vunpack.c.l.b16 %v9578
      %v9776 = vunpack.c.l.b16 %v9579
      %v9777 = vunpack.c.l.b16 %v9580
      %v9778 = vunpack.c.l.b16 %v9581
      %v9779 = vunpack.c.l.b16 %v9582
      %v9780 = vunpack.c.l.b16 %v9583
      %v9781 = vunpack.c.l.b16 %v9584
      %v9782 = vunpack.c.l.b16 %v9585
      %v9783 = vunpack.c.l.b16 %v9586
      %v9784 = vunpack.c.l.b16 %v9587
      %v9785 = vunpack.c.l.b16 %v9588
      %v9786 = vpack.c.b16 %v9691, %v9690
      %v9787 = vpack.c.b16 %v9693, %v9692
      %v9788 = vpack.c.b16 %v9695, %v9694
      %v9789 = vpack.c.b16 %v9697, %v9696
      %v9790 = vpack.c.b16 %v9699, %v9698
      %v9791 = vpack.c.b16 %v9701, %v9700
      %v9792 = vpack.c.b16 %v9703, %v9702
      %v9793 = vpack.c.b16 %v9705, %v9704
      %v9794 = vpack.c.b16 %v9707, %v9706
      %v9795 = vpack.c.b16 %v9709, %v9708
      %v9796 = vpack.c.b16 %v9711, %v9710
      %v9797 = vpack.c.b16 %v9713, %v9712
      %v9798 = vpack.c.b16 %v9715, %v9714
      %v9799 = vpack.c.b16 %v9717, %v9716
      %v9800 = vpack.c.b16 %v9719, %v9718
      %v9801 = vpack.c.b16 %v9721, %v9720
      %v9802 = vpack.c.b16 %v9723, %v9722
      %v9803 = vpack.c.b16 %v9725, %v9724
      %v9804 = vpack.c.b16 %v9727, %v9726
      %v9805 = vpack.c.b16 %v9729, %v9728
      %v9806 = vpack.c.b16 %v9731, %v9730
      %v9807 = vpack.c.b16 %v9733, %v9732
      %v9808 = vpack.c.b16 %v9735, %v9734
      %v9809 = vpack.c.b16 %v9737, %v9736
      %v9810 = vpack.c.b16 %v9739, %v9738
      %v9811 = vpack.c.b16 %v9741, %v9740
      %v9812 = vpack.c.b16 %v9743, %v9742
      %v9813 = vpack.c.b16 %v9745, %v9744
      %v9814 = vpack.c.b16 %v9747, %v9746
      %v9815 = vpack.c.b16 %v9749, %v9748
      %v9816 = vpack.c.b16 %v9751, %v9750
      %v9817 = vpack.c.b16 %v9753, %v9752
      %v9818 = vpack.c.b16 %v9755, %v9754
      %v9819 = vpack.c.b16 %v9757, %v9756
      %v9820 = vpack.c.b16 %v9759, %v9758
      %v9821 = vpack.c.b16 %v9761, %v9760
      %v9822 = vpack.c.b16 %v9763, %v9762
      %v9823 = vpack.c.b16 %v9765, %v9764
      %v9824 = vpack.c.b16 %v9767, %v9766
      %v9825 = vpack.c.b16 %v9769, %v9768
      %v9826 = vpack.c.b16 %v9771, %v9770
      %v9827 = vpack.c.b16 %v9773, %v9772
      %v9828 = vpack.c.b16 %v9775, %v9774
      %v9829 = vpack.c.b16 %v9777, %v9776
      %v9830 = vpack.c.b16 %v9779, %v9778
      %v9831 = vpack.c.b16 %v9781, %v9780
      %v9832 = vpack.c.b16 %v9783, %v9782
      %v9833 = vpack.c.b16 %v9785, %v9784
      %9882 = vmatprep.subr.bf16.mxu0 0
      %9883 = vmatpush1.bf16.msra.mxu0 %v9786
      %9884 = vmatprep.subr.bf16.mxu0 0
      %9885 = vmatpush1.bf16.msra.mxu0 %v9787
      %9886 = vmatprep.subr.bf16.mxu0 0
      %9887 = vmatpush1.bf16.msra.mxu0 %v9788
      %9888 = vmatprep.subr.bf16.mxu0 0
      %9889 = vmatpush1.bf16.msra.mxu0 %v9789
      %9890 = vmatprep.subr.bf16.mxu0 0
      %9891 = vmatpush1.bf16.msra.mxu0 %v9790
      %9892 = vmatprep.subr.bf16.mxu0 0
      %9893 = vmatpush1.bf16.msra.mxu0 %v9791
      %9894 = vmatprep.subr.bf16.mxu0 0
      %9895 = vmatpush1.bf16.msra.mxu0 %v9792
      %9896 = vmatprep.subr.bf16.mxu0 0
      %9897 = vmatpush1.bf16.msra.mxu0 %v9793
      %9898 = vmatprep.subr.bf16.mxu0 0
      %9899 = vmatpush1.bf16.msra.mxu0 %v9794
      %9900 = vmatprep.subr.bf16.mxu0 0
      %9901 = vmatpush1.bf16.msra.mxu0 %v9795
      %9902 = vmatprep.subr.bf16.mxu0 0
      %9903 = vmatpush1.bf16.msra.mxu0 %v9796
      %9904 = vmatprep.subr.bf16.mxu0 0
      %9905 = vmatpush1.bf16.msra.mxu0 %v9797
      %9906 = vmatprep.subr.bf16.mxu0 0
      %9907 = vmatpush1.bf16.msra.mxu0 %v9798
      %9908 = vmatprep.subr.bf16.mxu0 0
      %9909 = vmatpush1.bf16.msra.mxu0 %v9799
      %9910 = vmatprep.subr.bf16.mxu0 0
      %9911 = vmatpush1.bf16.msra.mxu0 %v9800
      %9912 = vmatprep.subr.bf16.mxu0 0
      %9913 = vmatpush1.bf16.msra.mxu0 %v9801
      %9914 = vmatprep.mubr.bf16.mxu0 %v9350
      %9915 = vmatmul.mubr.bf16.gmra.mrb[0].mxu0 %v9349
      %v9916 = vpop.f32.mrb[0].mxu0
      %v9917 = vadd.f32 %v9593, %v9916
      %v9918 = vpop.f32.mrb[0].mxu0
      %v9919 = vpop.f32.mrb[0].mxu0
      %v9920 = vadd.f32 %v9593, %v9919
      %v9921 = vpop.f32.mrb[0].mxu0
      %9922 = vmatprep.mubr.bf16.mxu0 %v9352
      %9923 = vmatmul.mubr.bf16.gmra.mrb[0].mxu0 %v9351
      %v9924 = vpop.f32.mrb[0].mxu0
      %v9925 = vadd.f32 %v9593, %v9924
      %v9926 = vpop.f32.mrb[0].mxu0
      %v9927 = vpop.f32.mrb[0].mxu0
      %v9928 = vadd.f32 %v9593, %v9927
      %v9929 = vpop.f32.mrb[0].mxu0
      %9930 = vmatprep.mubr.bf16.mxu0 %v9354
      %9931 = vmatmul.mubr.bf16.gmra.mrb[0].mxu0 %v9353
      %v9932 = vpop.f32.mrb[0].mxu0
      %v9933 = vadd.f32 %v9593, %v9932
      %v9934 = vpop.f32.mrb[0].mxu0
      %v9935 = vpop.f32.mrb[0].mxu0
      %v9936 = vadd.f32 %v9593, %v9935
      %v9937 = vpop.f32.mrb[0].mxu0
      %9938 = vmatprep.mubr.bf16.mxu0 %v9356
      %9939 = vmatmul.mubr.bf16.gmra.mrb[0].mxu0 %v9355
      %v9940 = vpop.f32.mrb[0].mxu0
      %v9941 = vadd.f32 %v9593, %v9940
      %v9942 = vpop.f32.mrb[0].mxu0
      %v9943 = vpop.f32.mrb[0].mxu0
      %v9944 = vadd.f32 %v9593, %v9943
      %v9945 = vpop.f32.mrb[0].mxu0
      %9946 = vmatprep.mubr.bf16.mxu0 %v9358
      %9947 = vmatmul.mubr.bf16.gmra.mrb[0].mxu0 %v9357
      %v9948 = vpop.f32.mrb[0].mxu0
      %v9949 = vadd.f32 %v9593, %v9948
      %v9950 = vpop.f32.mrb[0].mxu0
      %v9951 = vpop.f32.mrb[0].mxu0
      %v9952 = vadd.f32 %v9593, %v9951
      %v9953 = vpop.f32.mrb[0].mxu0
      %9954 = vmatprep.mubr.bf16.mxu0 %v9360
      %9955 = vmatmul.mubr.bf16.gmra.mrb[0].mxu0 %v9359
      %v9956 = vpop.f32.mrb[0].mxu0
      %v9957 = vadd.f32 %v9593, %v9956
      %v9958 = vpop.f32.mrb[0].mxu0
      %v9959 = vpop.f32.mrb[0].mxu0
      %v9960 = vadd.f32 %v9593, %v9959
      %v9961 = vpop.f32.mrb[0].mxu0
      %9962 = vmatprep.mubr.bf16.mxu0 %v9362
      %9963 = vmatmul.mubr.bf16.gmra.mrb[0].mxu0 %v9361
      %v9964 = vpop.f32.mrb[0].mxu0
      %v9965 = vadd.f32 %v9593, %v9964
      %v9966 = vpop.f32.mrb[0].mxu0
      %v9967 = vpop.f32.mrb[0].mxu0
      %v9968 = vadd.f32 %v9593, %v9967
      %v9969 = vpop.f32.mrb[0].mxu0
      %9970 = vmatprep.mubr.bf16.mxu0 %v9364
      %9971 = vmatmul.mubr.bf16.gmra.mrb[0].mxu0 %v9363
      %v9972 = vpop.f32.mrb[0].mxu0
      %v9973 = vadd.f32 %v9593, %v9972
      %v9974 = vpop.f32.mrb[0].mxu0
      %v9975 = vpop.f32.mrb[0].mxu0
      %v9976 = vadd.f32 %v9593, %v9975
      %v9977 = vpop.f32.mrb[0].mxu0
      %9978 = vdwg.mxu0
      %9979 = vmatprep.subr.bf16.mxu0 0
      %9980 = vmatpush1.bf16.msra.mxu0 %v9802
      %9981 = vmatprep.subr.bf16.mxu0 0
      %9982 = vmatpush1.bf16.msra.mxu0 %v9803
      %9983 = vmatprep.subr.bf16.mxu0 0
      %9984 = vmatpush1.bf16.msra.mxu0 %v9804
      %9985 = vmatprep.subr.bf16.mxu0 0
      %9986 = vmatpush1.bf16.msra.mxu0 %v9805
      %9987 = vmatprep.subr.bf16.mxu0 0
      %9988 = vmatpush1.bf16.msra.mxu0 %v9806
      %9989 = vmatprep.subr.bf16.mxu0 0
      %9990 = vmatpush1.bf16.msra.mxu0 %v9807
      %9991 = vmatprep.subr.bf16.mxu0 0
      %9992 = vmatpush1.bf16.msra.mxu0 %v9808
      %9993 = vmatprep.subr.bf16.mxu0 0
      %9994 = vmatpush1.bf16.msra.mxu0 %v9809
      %9995 = vmatprep.subr.bf16.mxu0 0
      %9996 = vmatpush1.bf16.msra.mxu0 %v9810
      %9997 = vmatprep.subr.bf16.mxu0 0
      %9998 = vmatpush1.bf16.msra.mxu0 %v9811
      %9999 = vmatprep.subr.bf16.mxu0 0
      %10000 = vmatpush1.bf16.msra.mxu0 %v9812
      %10001 = vmatprep.subr.bf16.mxu0 0
      %10002 = vmatpush1.bf16.msra.mxu0 %v9813
      %10003 = vmatprep.subr.bf16.mxu0 0
      %10004 = vmatpush1.bf16.msra.mxu0 %v9814
      %10005 = vmatprep.subr.bf16.mxu0 0
      %10006 = vmatpush1.bf16.msra.mxu0 %v9815
      %10007 = vmatprep.subr.bf16.mxu0 0
      %10008 = vmatpush1.bf16.msra.mxu0 %v9816
      %10009 = vmatprep.subr.bf16.mxu0 0
      %10010 = vmatpush1.bf16.msra.mxu0 %v9817
      %10011 = vmatprep.mubr.bf16.mxu0 %v9478
      %10012 = vmatmul.mubr.bf16.gmra.mrb[0].mxu0 %v9477
      %v10013 = vpop.f32.mrb[0].mxu0
      %v10014 = vadd.f32 %v9917, %v10013
      %v10015 = vpop.f32.mrb[0].mxu0
      %v10016 = vpop.f32.mrb[0].mxu0
      %v10017 = vadd.f32 %v9920, %v10016
      %v10018 = vpop.f32.mrb[0].mxu0
      %10019 = vmatprep.mubr.bf16.mxu0 %v9480
      %10020 = vmatmul.mubr.bf16.gmra.mrb[0].mxu0 %v9479
      %v10021 = vpop.f32.mrb[0].mxu0
      %v10022 = vadd.f32 %v9925, %v10021
      %v10023 = vpop.f32.mrb[0].mxu0
      %v10024 = vpop.f32.mrb[0].mxu0
      %v10025 = vadd.f32 %v9928, %v10024
      %v10026 = vpop.f32.mrb[0].mxu0
      %10027 = vmatprep.mubr.bf16.mxu0 %v9482
      %10028 = vmatmul.mubr.bf16.gmra.mrb[0].mxu0 %v9481
      %v10029 = vpop.f32.mrb[0].mxu0
      %v10030 = vadd.f32 %v9933, %v10029
      %v10031 = vpop.f32.mrb[0].mxu0
      %v10032 = vpop.f32.mrb[0].mxu0
      %v10033 = vadd.f32 %v9936, %v10032
      %v10034 = vpop.f32.mrb[0].mxu0
      %10035 = vmatprep.mubr.bf16.mxu0 %v9484
      %10036 = vmatmul.mubr.bf16.gmra.mrb[0].mxu0 %v9483
      %v10037 = vpop.f32.mrb[0].mxu0
      %v10038 = vadd.f32 %v9941, %v10037
      %v10039 = vpop.f32.mrb[0].mxu0
      %v10040 = vpop.f32.mrb[0].mxu0
      %v10041 = vadd.f32 %v9944, %v10040
      %v10042 = vpop.f32.mrb[0].mxu0
      %10043 = vmatprep.mubr.bf16.mxu0 %v9486
      %10044 = vmatmul.mubr.bf16.gmra.mrb[0].mxu0 %v9485
      %v10045 = vpop.f32.mrb[0].mxu0
      %v10046 = vadd.f32 %v9949, %v10045
      %v10047 = vpop.f32.mrb[0].mxu0
      %v10048 = vpop.f32.mrb[0].mxu0
      %v10049 = vadd.f32 %v9952, %v10048
      %v10050 = vpop.f32.mrb[0].mxu0
      %10051 = vmatprep.mubr.bf16.mxu0 %v9488
      %10052 = vmatmul.mubr.bf16.gmra.mrb[0].mxu0 %v9487
      %v10053 = vpop.f32.mrb[0].mxu0
      %v10054 = vadd.f32 %v9957, %v10053
      %v10055 = vpop.f32.mrb[0].mxu0
      %v10056 = vpop.f32.mrb[0].mxu0
      %v10057 = vadd.f32 %v9960, %v10056
      %v10058 = vpop.f32.mrb[0].mxu0
      %10059 = vmatprep.mubr.bf16.mxu0 %v9490
      %10060 = vmatmul.mubr.bf16.gmra.mrb[0].mxu0 %v9489
      %v10061 = vpop.f32.mrb[0].mxu0
      %v10062 = vadd.f32 %v9965, %v10061
      %v10063 = vpop.f32.mrb[0].mxu0
      %v10064 = vpop.f32.mrb[0].mxu0
      %v10065 = vadd.f32 %v9968, %v10064
      %v10066 = vpop.f32.mrb[0].mxu0
      %10067 = vmatprep.mubr.bf16.mxu0 %v9492
      %10068 = vmatmul.mubr.bf16.gmra.mrb[0].mxu0 %v9491
      %v10069 = vpop.f32.mrb[0].mxu0
      %v10070 = vadd.f32 %v9973, %v10069
      %v10071 = vpop.f32.mrb[0].mxu0
      %v10072 = vpop.f32.mrb[0].mxu0
      %v10073 = vadd.f32 %v9976, %v10072
      %v10074 = vpop.f32.mrb[0].mxu0
      %10075 = vdwg.mxu0
      %10076 = vmatprep.subr.bf16.mxu0 0
      %10077 = vmatpush1.bf16.msra.mxu0 %v9818
      %10078 = vmatprep.subr.bf16.mxu0 0
      %10079 = vmatpush1.bf16.msra.mxu0 %v9819
      %10080 = vmatprep.subr.bf16.mxu0 0
      %10081 = vmatpush1.bf16.msra.mxu0 %v9820
      %10082 = vmatprep.subr.bf16.mxu0 0
      %10083 = vmatpush1.bf16.msra.mxu0 %v9821
      %10084 = vmatprep.subr.bf16.mxu0 0
      %10085 = vmatpush1.bf16.msra.mxu0 %v9822
      %10086 = vmatprep.subr.bf16.mxu0 0
      %10087 = vmatpush1.bf16.msra.mxu0 %v9823
      %10088 = vmatprep.subr.bf16.mxu0 0
      %10089 = vmatpush1.bf16.msra.mxu0 %v9824
      %10090 = vmatprep.subr.bf16.mxu0 0
      %10091 = vmatpush1.bf16.msra.mxu0 %v9825
      %10092 = vmatprep.subr.bf16.mxu0 0
      %10093 = vmatpush1.bf16.msra.mxu0 %v9826
      %10094 = vmatprep.subr.bf16.mxu0 0
      %10095 = vmatpush1.bf16.msra.mxu0 %v9827
      %10096 = vmatprep.subr.bf16.mxu0 0
      %10097 = vmatpush1.bf16.msra.mxu0 %v9828
      %10098 = vmatprep.subr.bf16.mxu0 0
      %10099 = vmatpush1.bf16.msra.mxu0 %v9829
      %10100 = vmatprep.subr.bf16.mxu0 0
      %10101 = vmatpush1.bf16.msra.mxu0 %v9830
      %10102 = vmatprep.subr.bf16.mxu0 0
      %10103 = vmatpush1.bf16.msra.mxu0 %v9831
      %10104 = vmatprep.subr.bf16.mxu0 0
      %10105 = vmatpush1.bf16.msra.mxu0 %v9832
      %10106 = vmatprep.subr.bf16.mxu0 0
      %10107 = vmatpush1.bf16.msra.mxu0 %v9833
      %10108 = vmatprep.mubr.bf16.mxu0 %v9462
      %10109 = vmatmul.mubr.bf16.gmra.mrb[0].mxu0 %v9461
      %v10110 = vpop.f32.mrb[0].mxu0
      %v10111 = vadd.f32 %v10014, %v10110
      %v10112 = vpop.f32.mrb[0].mxu0
      %v10113 = vpop.f32.mrb[0].mxu0
      %v10114 = vadd.f32 %v10017, %v10113
      %v10115 = vpop.f32.mrb[0].mxu0
      %10116 = vmatprep.mubr.bf16.mxu0 %v9464
      %10117 = vmatmul.mubr.bf16.gmra.mrb[0].mxu0 %v9463
      %v10118 = vpop.f32.mrb[0].mxu0
      %v10119 = vadd.f32 %v10022, %v10118
      %v10120 = vpop.f32.mrb[0].mxu0
      %v10121 = vpop.f32.mrb[0].mxu0
      %v10122 = vadd.f32 %v10025, %v10121
      %v10123 = vpop.f32.mrb[0].mxu0
      %10124 = vmatprep.mubr.bf16.mxu0 %v9466
      %10125 = vmatmul.mubr.bf16.gmra.mrb[0].mxu0 %v9465
      %v10126 = vpop.f32.mrb[0].mxu0
      %v10127 = vadd.f32 %v10030, %v10126
      %v10128 = vpop.f32.mrb[0].mxu0
      %v10129 = vpop.f32.mrb[0].mxu0
      %v10130 = vadd.f32 %v10033, %v10129
      %v10131 = vpop.f32.mrb[0].mxu0
      %10132 = vmatprep.mubr.bf16.mxu0 %v9468
      %10133 = vmatmul.mubr.bf16.gmra.mrb[0].mxu0 %v9467
      %v10134 = vpop.f32.mrb[0].mxu0
      %v10135 = vadd.f32 %v10038, %v10134
      %v10136 = vpop.f32.mrb[0].mxu0
      %v10137 = vpop.f32.mrb[0].mxu0
      %v10138 = vadd.f32 %v10041, %v10137
      %v10139 = vpop.f32.mrb[0].mxu0
      %10140 = vmatprep.mubr.bf16.mxu0 %v9470
      %10141 = vmatmul.mubr.bf16.gmra.mrb[0].mxu0 %v9469
      %v10142 = vpop.f32.mrb[0].mxu0
      %v10143 = vadd.f32 %v10046, %v10142
      %v10144 = vpop.f32.mrb[0].mxu0
      %v10145 = vpop.f32.mrb[0].mxu0
      %v10146 = vadd.f32 %v10049, %v10145
      %v10147 = vpop.f32.mrb[0].mxu0
      %10148 = vmatprep.mubr.bf16.mxu0 %v9472
      %10149 = vmatmul.mubr.bf16.gmra.mrb[0].mxu0 %v9471
      %v10150 = vpop.f32.mrb[0].mxu0
      %v10151 = vadd.f32 %v10054, %v10150
      %v10152 = vpop.f32.mrb[0].mxu0
      %v10153 = vpop.f32.mrb[0].mxu0
      %v10154 = vadd.f32 %v10057, %v10153
      %v10155 = vpop.f32.mrb[0].mxu0
      %10156 = vmatprep.mubr.bf16.mxu0 %v9474
      %10157 = vmatmul.mubr.bf16.gmra.mrb[0].mxu0 %v9473
      %v10158 = vpop.f32.mrb[0].mxu0
      %v10159 = vadd.f32 %v10062, %v10158
      %v10160 = vpop.f32.mrb[0].mxu0
      %v10161 = vpop.f32.mrb[0].mxu0
      %v10162 = vadd.f32 %v10065, %v10161
      %v10163 = vpop.f32.mrb[0].mxu0
      %10164 = vmatprep.mubr.bf16.mxu0 %v9476
      %10165 = vmatmul.mubr.bf16.gmra.mrb[0].mxu0 %v9475
      %v10166 = vpop.f32.mrb[0].mxu0
      %v10167 = vadd.f32 %v10070, %v10166
      %v10168 = vpop.f32.mrb[0].mxu0
      %v10169 = vpop.f32.mrb[0].mxu0
      %v10170 = vadd.f32 %v10073, %v10169
      %v10171 = vpop.f32.mrb[0].mxu0
      %10172 = vdwg.mxu0
      %vm10173 = vcmp.ge.f32.partialorder %v10111, 0.0
      %vm10174 = vcmp.ge.f32.partialorder %v10114, 0.0
      %vm10175 = vcmp.ge.f32.partialorder %v10119, 0.0
      %vm10176 = vcmp.ge.f32.partialorder %v10122, 0.0
      %vm10177 = vcmp.ge.f32.partialorder %v10127, 0.0
      %vm10178 = vcmp.ge.f32.partialorder %v10130, 0.0
      %vm10179 = vcmp.ge.f32.partialorder %v10135, 0.0
      %vm10180 = vcmp.ge.f32.partialorder %v10138, 0.0
      %vm10181 = vcmp.ge.f32.partialorder %v10143, 0.0
      %vm10182 = vcmp.ge.f32.partialorder %v10146, 0.0
      %vm10183 = vcmp.ge.f32.partialorder %v10151, 0.0
      %vm10184 = vcmp.ge.f32.partialorder %v10154, 0.0
      %vm10185 = vcmp.ge.f32.partialorder %v10159, 0.0
      %vm10186 = vcmp.ge.f32.partialorder %v10162, 0.0
      %vm10187 = vcmp.ge.f32.partialorder %v10167, 0.0
      %vm10188 = vcmp.ge.f32.partialorder %v10170, 0.0
      %v10189 = vmul.f32 %v10111, 0.01
      %v10190 = vmul.f32 %v10114, 0.01
      %v10191 = vmul.f32 %v10119, 0.01
      %v10192 = vmul.f32 %v10122, 0.01
      %v10193 = vmul.f32 %v10127, 0.01
      %v10194 = vmul.f32 %v10130, 0.01
      %v10195 = vmul.f32 %v10135, 0.01
      %v10196 = vmul.f32 %v10138, 0.01
      %v10197 = vmul.f32 %v10143, 0.01
      %v10198 = vmul.f32 %v10146, 0.01
      %v10199 = vmul.f32 %v10151, 0.01
      %v10200 = vmul.f32 %v10154, 0.01
      %v10201 = vmul.f32 %v10159, 0.01
      %v10202 = vmul.f32 %v10162, 0.01
      %v10203 = vmul.f32 %v10167, 0.01
      %v10204 = vmul.f32 %v10170, 0.01
      %v10205 = vsel %vm10173, %v10111, %v10189
      %v10206 = vsel %vm10174, %v10114, %v10190
      %v10207 = vsel %vm10175, %v10119, %v10191
      %v10208 = vsel %vm10176, %v10122, %v10192
      %v10209 = vsel %vm10177, %v10127, %v10193
      %v10210 = vsel %vm10178, %v10130, %v10194
      %v10211 = vsel %vm10179, %v10135, %v10195
      %v10212 = vsel %vm10180, %v10138, %v10196
      %v10213 = vsel %vm10181, %v10143, %v10197
      %v10214 = vsel %vm10182, %v10146, %v10198
      %v10215 = vsel %vm10183, %v10151, %v10199
      %v10216 = vsel %vm10184, %v10154, %v10200
      %v10217 = vsel %vm10185, %v10159, %v10201
      %v10218 = vsel %vm10186, %v10162, %v10202
      %v10219 = vsel %vm10187, %v10167, %v10203
      %v10220 = vsel %vm10188, %v10170, %v10204
      %v10221 = vld [vmem:[%s8 + $0x1] sm:$0x1]
      %v10222 = vlaneseq
      %v10223 = vshrl.u32 %v10222, 7
      %v10224 = vsub.s32 0, %v10223
      %v10225 = vrot.slane %v10221, %v10224
      %v10226 = vmul.f32 %v10205, %v10225
      %v10227 = vmul.f32 %v10206, %v10225
      %v10228 = vmul.f32 %v10207, %v10225
      %v10229 = vmul.f32 %v10208, %v10225
      %v10230 = vmul.f32 %v10209, %v10225
      %v10231 = vmul.f32 %v10210, %v10225
      %v10232 = vmul.f32 %v10211, %v10225
      %v10233 = vmul.f32 %v10212, %v10225
      %v10234 = vmul.f32 %v10213, %v10225
      %v10235 = vmul.f32 %v10214, %v10225
      %v10236 = vmul.f32 %v10215, %v10225
      %v10237 = vmul.f32 %v10216, %v10225
      %v10238 = vmul.f32 %v10217, %v10225
      %v10239 = vmul.f32 %v10218, %v10225
      %v10240 = vmul.f32 %v10219, %v10225
      %v10241 = vmul.f32 %v10220, %v10225
      %v10242 = vld [vmem:[%s8 + $0x2] sm:$0x1]
      %v10243 = vlaneseq
      %v10244 = vshrl.u32 %v10243, 7
      %v10245 = vsub.s32 0, %v10244
      %v10246 = vrot.slane %v10242, %v10245
      %v10247 = vadd.f32 %v10226, %v10246
      %v10248 = vadd.f32 %v10227, %v10246
      %v10249 = vadd.f32 %v10228, %v10246
      %v10250 = vadd.f32 %v10229, %v10246
      %v10251 = vadd.f32 %v10230, %v10246
      %v10252 = vadd.f32 %v10231, %v10246
      %v10253 = vadd.f32 %v10232, %v10246
      %v10254 = vadd.f32 %v10233, %v10246
      %v10255 = vadd.f32 %v10234, %v10246
      %v10256 = vadd.f32 %v10235, %v10246
      %v10257 = vadd.f32 %v10236, %v10246
      %v10258 = vadd.f32 %v10237, %v10246
      %v10259 = vadd.f32 %v10238, %v10246
      %v10260 = vadd.f32 %v10239, %v10246
      %v10261 = vadd.f32 %v10240, %v10246
      %v10262 = vadd.f32 %v10241, %v10246
      %v10263 = vrot.slane %v10247, 1
      %v10264 = vrot.slane %v10248, 1
      %v10265 = vrot.slane %v10249, 1
      %v10266 = vrot.slane %v10250, 1
      %v10267 = vrot.slane %v10251, 1
      %v10268 = vrot.slane %v10252, 1
      %v10269 = vrot.slane %v10253, 1
      %v10270 = vrot.slane %v10254, 1
      %v10271 = vrot.slane %v10255, 1
      %v10272 = vrot.slane %v10256, 1
      %v10273 = vrot.slane %v10257, 1
      %v10274 = vrot.slane %v10258, 1
      %v10275 = vrot.slane %v10259, 1
      %v10276 = vrot.slane %v10260, 1
      %v10277 = vrot.slane %v10261, 1
      %v10278 = vrot.slane %v10262, 1
      %v10279 = vsel %vm1602, %v10277, %v10278
      %v10280 = vsel %vm1602, %v10276, %v10277
      %v10281 = vsel %vm1602, %v10275, %v10276
      %v10282 = vsel %vm1602, %v10274, %v10275
      %v10283 = vsel %vm1602, %v10273, %v10274
      %v10284 = vsel %vm1602, %v10272, %v10273
      %v10285 = vsel %vm1602, %v10271, %v10272
      %v10286 = vsel %vm1602, %v10270, %v10271
      %v10287 = vsel %vm1602, %v10269, %v10270
      %v10288 = vsel %vm1602, %v10268, %v10269
      %v10289 = vsel %vm1602, %v10267, %v10268
      %v10290 = vsel %vm1602, %v10266, %v10267
      %v10291 = vsel %vm1602, %v10265, %v10266
      %v10292 = vsel %vm1602, %v10264, %v10265
      %v10293 = vsel %vm1602, %v10263, %v10264
      %v10294 = vsel %vm1602, %v10278, %v10263
      %v10295 = vmax.f32 %v10247, %v10293
      %v10296 = vmax.f32 %v10248, %v10292
      %v10297 = vmax.f32 %v10249, %v10291
      %v10298 = vmax.f32 %v10250, %v10290
      %v10299 = vmax.f32 %v10251, %v10289
      %v10300 = vmax.f32 %v10252, %v10288
      %v10301 = vmax.f32 %v10253, %v10287
      %v10302 = vmax.f32 %v10254, %v10286
      %v10303 = vmax.f32 %v10255, %v10285
      %v10304 = vmax.f32 %v10256, %v10284
      %v10305 = vmax.f32 %v10257, %v10283
      %v10306 = vmax.f32 %v10258, %v10282
      %v10307 = vmax.f32 %v10259, %v10281
      %v10308 = vmax.f32 %v10260, %v10280
      %v10309 = vmax.f32 %v10261, %v10279
      %v10310 = vmax.f32 %v10262, %v10294
      %v10311 = vld [vmem:[%s11] sm:$0xf]
      %v10312 = vld [vmem:[%s11 + $0x4] sm:$0xf]
      %v10313 = vld [vmem:[%s11 + $0x8] sm:$0xf]
      %v10314 = vld [vmem:[%s11 + $0xc] sm:$0xf]
      %v10315 = vld [vmem:[%s11 + $0x10] sm:$0xf]
      %v10316 = vld [vmem:[%s11 + $0x14] sm:$0xf]
      %v10317 = vld [vmem:[%s11 + $0x18] sm:$0xf]
      %v10318 = vld [vmem:[%s11 + $0x1c] sm:$0xf]
      %v10319 = vpack.c.bf16 %v10296, %v10295
      %v10320 = vpack.c.bf16 %v10298, %v10297
      %v10321 = vpack.c.bf16 %v10300, %v10299
      %v10322 = vpack.c.bf16 %v10302, %v10301
      %v10323 = vpack.c.bf16 %v10304, %v10303
      %v10324 = vpack.c.bf16 %v10306, %v10305
      %v10325 = vpack.c.bf16 %v10308, %v10307
      %v10326 = vpack.c.bf16 %v10310, %v10309
      %v10335 = vunpack.c.l.b16 %v10311
      %v10336 = vunpack.c.l.b16 %v10312
      %v10337 = vunpack.c.l.b16 %v10313
      %v10338 = vunpack.c.l.b16 %v10314
      %v10339 = vunpack.c.l.b16 %v10315
      %v10340 = vunpack.c.l.b16 %v10316
      %v10341 = vunpack.c.l.b16 %v10317
      %v10342 = vunpack.c.l.b16 %v10318
      %v10343 = vpack.c.b16 %v10336, %v10335
      %v10344 = vpack.c.b16 %v10338, %v10337
      %v10345 = vpack.c.b16 %v10340, %v10339
      %v10346 = vpack.c.b16 %v10342, %v10341
      %10351 = vmatprep.subr.bf16.mxu0 0
      %10352 = vmatpush1.bf16.msra.mxu0 %v10319
      %10353 = vmatprep.subr.bf16.mxu0 0
      %10354 = vmatpush1.bf16.msra.mxu0 %v10320
      %10355 = vmatprep.subr.bf16.mxu0 0
      %10356 = vmatpush1.bf16.msra.mxu0 %v10321
      %10357 = vmatprep.subr.bf16.mxu0 0
      %10358 = vmatpush1.bf16.msra.mxu0 %v10322
      %10359 = vmatprep.subr.bf16.mxu0 0
      %10360 = vmatpush1.bf16.msra.mxu0 %v10323
      %10361 = vmatprep.subr.bf16.mxu0 0
      %10362 = vmatpush1.bf16.msra.mxu0 %v10324
      %10363 = vmatprep.subr.bf16.mxu0 0
      %10364 = vmatpush1.bf16.msra.mxu0 %v10325
      %10365 = vmatprep.subr.bf16.mxu0 0
      %10366 = vmatpush1.bf16.msra.mxu0 %v10326
      %10367 = vmatprep.subr.bf16.mxu0 0
      %10368 = vmatpush1.bf16.msra.mxu0 0
      %10369 = vmatprep.subr.bf16.mxu0 0
      %10370 = vmatpush1.bf16.msra.mxu0 0
      %10371 = vmatprep.subr.bf16.mxu0 0
      %10372 = vmatpush1.bf16.msra.mxu0 0
      %10373 = vmatprep.subr.bf16.mxu0 0
      %10374 = vmatpush1.bf16.msra.mxu0 0
      %10375 = vmatprep.subr.bf16.mxu0 0
      %10376 = vmatpush1.bf16.msra.mxu0 0
      %10377 = vmatprep.subr.bf16.mxu0 0
      %10378 = vmatpush1.bf16.msra.mxu0 0
      %10379 = vmatprep.subr.bf16.mxu0 0
      %10380 = vmatpush1.bf16.msra.mxu0 0
      %10381 = vmatprep.subr.bf16.mxu0 0
      %10382 = vmatpush1.bf16.msra.mxu0 0
      %10383 = vmatprep.mubr.bf16.mxu0 0
      %10384 = vmatmul.mubr.bf16.gmra.mrb[0].mxu0 %v10343
      %v10385 = vpop.f32.mrb[0].mxu0
      %v10386 = vadd.f32 0.0, %v10385
      %v10387 = vpop.f32.mrb[0].mxu0
      %v10388 = vpop.f32.mrb[0].mxu0
      %v10389 = vadd.f32 0.0, %v10388
      %v10390 = vpop.f32.mrb[0].mxu0
      %10391 = vmatprep.mubr.bf16.mxu0 0
      %10392 = vmatmul.mubr.bf16.gmra.mrb[0].mxu0 %v10344
      %v10393 = vpop.f32.mrb[0].mxu0
      %v10394 = vadd.f32 0.0, %v10393
      %v10395 = vpop.f32.mrb[0].mxu0
      %v10396 = vpop.f32.mrb[0].mxu0
      %v10397 = vadd.f32 0.0, %v10396
      %v10398 = vpop.f32.mrb[0].mxu0
      %10399 = vmatprep.mubr.bf16.mxu0 0
      %10400 = vmatmul.mubr.bf16.gmra.mrb[0].mxu0 %v10345
      %v10401 = vpop.f32.mrb[0].mxu0
      %v10402 = vadd.f32 0.0, %v10401
      %v10403 = vpop.f32.mrb[0].mxu0
      %v10404 = vpop.f32.mrb[0].mxu0
      %v10405 = vadd.f32 0.0, %v10404
      %v10406 = vpop.f32.mrb[0].mxu0
      %10407 = vmatprep.mubr.bf16.mxu0 0
      %10408 = vmatmul.mubr.bf16.gmra.mrb[0].mxu0 %v10346
      %v10409 = vpop.f32.mrb[0].mxu0
      %v10410 = vadd.f32 0.0, %v10409
      %v10411 = vpop.f32.mrb[0].mxu0
      %v10412 = vpop.f32.mrb[0].mxu0
      %v10413 = vadd.f32 0.0, %v10412
      %v10414 = vpop.f32.mrb[0].mxu0
      %10415 = vdwg.mxu0
      %10416 = vrot.lane.b32.xlu0 %v10386, 120
      %v10417 = vpop.permute.xlu0 %10416
      %10418 = vrot.lane.b32.xlu0 %v10389, 120
      %v10419 = vpop.permute.xlu0 %10418
      %10420 = vrot.lane.b32.xlu0 %v10394, 120
      %v10421 = vpop.permute.xlu0 %10420
      %10422 = vrot.lane.b32.xlu0 %v10397, 120
      %v10423 = vpop.permute.xlu0 %10422
      %10424 = vrot.lane.b32.xlu0 %v10402, 120
      %v10425 = vpop.permute.xlu0 %10424
      %10426 = vrot.lane.b32.xlu0 %v10405, 120
      %v10427 = vpop.permute.xlu0 %10426
      %10428 = vrot.lane.b32.xlu0 %v10410, 120
      %v10429 = vpop.permute.xlu0 %10428
      %10430 = vrot.lane.b32.xlu0 %v10413, 120
      %v10431 = vpop.permute.xlu0 %10430
      %v10432 = vmax.f32 %v10386, %v10417
      %v10433 = vmax.f32 %v10389, %v10419
      %v10434 = vmax.f32 %v10394, %v10421
      %v10435 = vmax.f32 %v10397, %v10423
      %v10436 = vmax.f32 %v10402, %v10425
      %v10437 = vmax.f32 %v10405, %v10427
      %v10438 = vmax.f32 %v10410, %v10429
      %v10439 = vmax.f32 %v10413, %v10431
      %v10440 = vpack.c.bf16 %v10433, %v10432
      %v10441 = vpack.c.bf16 %v10435, %v10434
      %v10442 = vpack.c.bf16 %v10437, %v10436
      %v10443 = vpack.c.bf16 %v10439, %v10438
      %v10444 = vld [vmem:[%s12] sm:$0xf]
      %v10445 = vld [vmem:[%s12 + $0x4] sm:$0xf]
      %v10446 = vld [vmem:[%s12 + $0x8] sm:$0xf]
      %v10447 = vld [vmem:[%s12 + $0xc] sm:$0xf]
      %v10448 = vld [vmem:[%s12 + $0x10] sm:$0xf]
      %v10449 = vld [vmem:[%s12 + $0x14] sm:$0xf]
      %v10450 = vld [vmem:[%s12 + $0x18] sm:$0xf]
      %v10451 = vld [vmem:[%s12 + $0x1c] sm:$0xf]
      %v10452 = vld [vmem:[%s12 + $0x20] sm:$0xf]
      %v10453 = vld [vmem:[%s12 + $0x24] sm:$0xf]
      %v10454 = vld [vmem:[%s12 + $0x28] sm:$0xf]
      %v10455 = vld [vmem:[%s12 + $0x2c] sm:$0xf]
      %v10456 = vld [vmem:[%s12 + $0x30] sm:$0xf]
      %v10457 = vld [vmem:[%s12 + $0x34] sm:$0xf]
      %v10458 = vld [vmem:[%s12 + $0x38] sm:$0xf]
      %v10459 = vld [vmem:[%s12 + $0x3c] sm:$0xf]
      %v10476 = vunpack.c.l.b16 %v10444
      %v10477 = vunpack.c.l.b16 %v10445
      %v10478 = vunpack.c.l.b16 %v10446
      %v10479 = vunpack.c.l.b16 %v10447
      %v10480 = vunpack.c.l.b16 %v10448
      %v10481 = vunpack.c.l.b16 %v10449
      %v10482 = vunpack.c.l.b16 %v10450
      %v10483 = vunpack.c.l.b16 %v10451
      %v10484 = vunpack.c.l.b16 %v10452
      %v10485 = vunpack.c.l.b16 %v10453
      %v10486 = vunpack.c.l.b16 %v10454
      %v10487 = vunpack.c.l.b16 %v10455
      %v10488 = vunpack.c.l.b16 %v10456
      %v10489 = vunpack.c.l.b16 %v10457
      %v10490 = vunpack.c.l.b16 %v10458
      %v10491 = vunpack.c.l.b16 %v10459
      %v10492 = vpack.c.b16 %v10477, %v10476
      %v10493 = vpack.c.b16 %v10479, %v10478
      %v10494 = vpack.c.b16 %v10481, %v10480
      %v10495 = vpack.c.b16 %v10483, %v10482
      %v10496 = vpack.c.b16 %v10485, %v10484
      %v10497 = vpack.c.b16 %v10487, %v10486
      %v10498 = vpack.c.b16 %v10489, %v10488
      %v10499 = vpack.c.b16 %v10491, %v10490
      %10508 = vmatprep.subr.bf16.mxu0 0
      %10509 = vmatpush1.bf16.msra.mxu0 %v10492
      %10510 = vmatprep.subr.bf16.mxu0 0
      %10511 = vmatpush1.bf16.msra.mxu0 %v10493
      %10512 = vmatprep.subr.bf16.mxu0 0
      %10513 = vmatpush1.bf16.msra.mxu0 %v10494
      %10514 = vmatprep.subr.bf16.mxu0 0
      %10515 = vmatpush1.bf16.msra.mxu0 %v10495
      %10516 = vmatprep.subr.bf16.mxu0 0
      %10517 = vmatpush1.bf16.msra.mxu0 %v10496
      %10518 = vmatprep.subr.bf16.mxu0 0
      %10519 = vmatpush1.bf16.msra.mxu0 %v10497
      %10520 = vmatprep.subr.bf16.mxu0 0
      %10521 = vmatpush1.bf16.msra.mxu0 %v10498
      %10522 = vmatprep.subr.bf16.mxu0 0
      %10523 = vmatpush1.bf16.msra.mxu0 %v10499
      %10524 = vmatprep.subr.bf16.mxu0 0
      %10525 = vmatpush1.bf16.msra.mxu0 0
      %10526 = vmatprep.subr.bf16.mxu0 0
      %10527 = vmatpush1.bf16.msra.mxu0 0
      %10528 = vmatprep.subr.bf16.mxu0 0
      %10529 = vmatpush1.bf16.msra.mxu0 0
      %10530 = vmatprep.subr.bf16.mxu0 0
      %10531 = vmatpush1.bf16.msra.mxu0 0
      %10532 = vmatprep.subr.bf16.mxu0 0
      %10533 = vmatpush1.bf16.msra.mxu0 0
      %10534 = vmatprep.subr.bf16.mxu0 0
      %10535 = vmatpush1.bf16.msra.mxu0 0
      %10536 = vmatprep.subr.bf16.mxu0 0
      %10537 = vmatpush1.bf16.msra.mxu0 0
      %10538 = vmatprep.subr.bf16.mxu0 0
      %10539 = vmatpush1.bf16.msra.mxu0 0
      %10540 = vmatprep.mubr.bf16.mxu0 0
      %10541 = vmatmul.mubr.bf16.gmra.mrb[0].mxu0 %v10440
      %v10542 = vpop.f32.mrb[0].mxu0
      %v10543 = vadd.f32 0.0, %v10542
      %v10544 = vpop.f32.mrb[0].mxu0
      %v10545 = vpop.f32.mrb[0].mxu0
      %v10546 = vadd.f32 0.0, %v10545
      %v10547 = vpop.f32.mrb[0].mxu0
      %10548 = vmatprep.mubr.bf16.mxu0 0
      %10549 = vmatmul.mubr.bf16.gmra.mrb[0].mxu0 %v10441
      %v10550 = vpop.f32.mrb[0].mxu0
      %v10551 = vadd.f32 0.0, %v10550
      %v10552 = vpop.f32.mrb[0].mxu0
      %v10553 = vpop.f32.mrb[0].mxu0
      %v10554 = vadd.f32 0.0, %v10553
      %v10555 = vpop.f32.mrb[0].mxu0
      %10556 = vmatprep.mubr.bf16.mxu0 0
      %10557 = vmatmul.mubr.bf16.gmra.mrb[0].mxu0 %v10442
      %v10558 = vpop.f32.mrb[0].mxu0
      %v10559 = vadd.f32 0.0, %v10558
      %v10560 = vpop.f32.mrb[0].mxu0
      %v10561 = vpop.f32.mrb[0].mxu0
      %v10562 = vadd.f32 0.0, %v10561
      %v10563 = vpop.f32.mrb[0].mxu0
      %10564 = vmatprep.mubr.bf16.mxu0 0
      %10565 = vmatmul.mubr.bf16.gmra.mrb[0].mxu0 %v10443
      %v10566 = vpop.f32.mrb[0].mxu0
      %v10567 = vadd.f32 0.0, %v10566
      %v10568 = vpop.f32.mrb[0].mxu0
      %v10569 = vpop.f32.mrb[0].mxu0
      %v10570 = vadd.f32 0.0, %v10569
      %v10571 = vpop.f32.mrb[0].mxu0
      %10572 = vdwg.mxu0
      %v10573 = vld [vmem:[%s14] sm:$0xff]
      %v10574 = vld [vmem:[%s14 + $0x8] sm:$0xff]
      %v10575 = vld [vmem:[%s14 + $0x10] sm:$0xff]
      %v10576 = vld [vmem:[%s14 + $0x18] sm:$0xff]
      %v10577 = vld [vmem:[%s14 + $0x20] sm:$0xff]
      %v10578 = vld [vmem:[%s14 + $0x28] sm:$0xff]
      %v10579 = vld [vmem:[%s14 + $0x30] sm:$0xff]
      %v10580 = vld [vmem:[%s14 + $0x38] sm:$0xff]
      %v10581 = vmul.f32 %v10543, %v10573
      %v10582 = vmul.f32 %v10546, %v10574
      %v10583 = vmul.f32 %v10551, %v10575
      %v10584 = vmul.f32 %v10554, %v10576
      %v10585 = vmul.f32 %v10559, %v10577
      %v10586 = vmul.f32 %v10562, %v10578
      %v10587 = vmul.f32 %v10567, %v10579
      %v10588 = vmul.f32 %v10570, %v10580
      %v10589 = vld [vmem:[%s13] sm:$0xff]
      %vm10590 = vcmask 523264
      %v10592 = vsel %vm10590, %v10589, 0
      %10594 = vmatprep.subr.mxu0 0.0
      %10595 = vmatpush1.msra.mxu0 %v10581
      %10596 = vmatprep.subr.mxu0 0.0
      %10597 = vmatpush1.msra.mxu0 %v10582
      %10598 = vmatprep.subr.mxu0 0.0
      %10599 = vmatpush1.msra.mxu0 %v10583
      %10600 = vmatprep.subr.mxu0 0.0
      %10601 = vmatpush1.msra.mxu0 %v10584
      %10602 = vmatprep.subr.mxu0 0.0
      %10603 = vmatpush1.msra.mxu0 %v10585
      %10604 = vmatprep.subr.mxu0 0.0
      %10605 = vmatpush1.msra.mxu0 %v10586
      %10606 = vmatprep.subr.mxu0 0.0
      %10607 = vmatpush1.msra.mxu0 %v10587
      %10608 = vmatprep.subr.mxu0 0.0
      %10609 = vmatpush1.msra.mxu0 %v10588
      %10610 = vmatprep.subr.mxu0 0.0
      %10611 = vmatpush1.msra.mxu0 0.0
      %10612 = vmatprep.subr.mxu0 0.0
      %10613 = vmatpush1.msra.mxu0 0.0
      %10614 = vmatprep.subr.mxu0 0.0
      %10615 = vmatpush1.msra.mxu0 0.0
      %10616 = vmatprep.subr.mxu0 0.0
      %10617 = vmatpush1.msra.mxu0 0.0
      %10618 = vmatprep.subr.mxu0 0.0
      %10619 = vmatpush1.msra.mxu0 0.0
      %10620 = vmatprep.subr.mxu0 0.0
      %10621 = vmatpush1.msra.mxu0 0.0
      %10622 = vmatprep.subr.mxu0 0.0
      %10623 = vmatpush1.msra.mxu0 0.0
      %10624 = vmatprep.subr.mxu0 0.0
      %10625 = vmatpush1.msra.mxu0 0.0
      %10626 = vmatprep.subr.mxu0 0.0
      %10627 = vmatpush1.msra.mxu0 0.0
      %10628 = vmatprep.subr.mxu0 0.0
      %10629 = vmatpush1.msra.mxu0 0.0
      %10630 = vmatprep.subr.mxu0 0.0
      %10631 = vmatpush1.msra.mxu0 0.0
      %10632 = vmatprep.subr.mxu0 0.0
      %10633 = vmatpush1.msra.mxu0 0.0
      %10634 = vmatprep.subr.mxu0 0.0
      %10635 = vmatpush1.msra.mxu0 0.0
      %10636 = vmatprep.subr.mxu0 0.0
      %10637 = vmatpush1.msra.mxu0 0.0
      %10638 = vmatprep.subr.mxu0 0.0
      %10639 = vmatpush1.msra.mxu0 0.0
      %10640 = vmatprep.subr.mxu0 0.0
      %10641 = vmatpush1.msra.mxu0 0.0
      %10642 = vmatprep.subr.mxu0 0.0
      %10643 = vmatpush1.msra.mxu0 0.0
      %10644 = vmatprep.subr.mxu0 0.0
      %10645 = vmatpush1.msra.mxu0 0.0
      %10646 = vmatprep.subr.mxu0 0.0
      %10647 = vmatpush1.msra.mxu0 0.0
      %10648 = vmatprep.subr.mxu0 0.0
      %10649 = vmatpush1.msra.mxu0 0.0
      %10650 = vmatprep.subr.mxu0 0.0
      %10651 = vmatpush1.msra.mxu0 0.0
      %10652 = vmatprep.subr.mxu0 0.0
      %10653 = vmatpush1.msra.mxu0 0.0
      %10654 = vmatprep.subr.mxu0 0.0
      %10655 = vmatpush1.msra.mxu0 0.0
      %10656 = vmatprep.subr.mxu0 0.0
      %10657 = vmatpush1.msra.mxu0 0.0
      %10658 = vmatprep.mubr.f32.mxu0 0.0
      %10659 = vmatmul.mubr.f32.gmra.mrb[0].mxu0 %v10592
      %v10660 = vpop.f32.mrb[0].mxu0
      %v10661 = vadd.f32 0.0, %v10660
      %v10662 = vpop.f32.mrb[0].mxu0
      %10663 = vdwg.mxu0
      %v10664 = vsel %vm10590, %v10661, 0.0
      %10665 = vadd.xlane.f32.xlu0 %v10664
      %v10666 = vpop.xlane.xlu0 %10665
      %v10667 = vld [vmem:[#allocation2] sm:$0x1]
      %v10669 = vlaneseq
      %v10670 = vshrl.u32 %v10669, 7
      %v10671 = vsub.s32 0, %v10670
      %v10672 = vrot.slane %v10667, %v10671
      %v10674 = vadd.f32 %v10666, %v10672
      %vm10675 = vcmask 7168
      %10676 = vst.msk [vmem:[%s526] sm:$0xff] %vm10675, %v10674
      %p10677 = scmp.lt.s32.totalorder %s29, 1
      %s10678 = scalar_select %p10677, %s29, 1
      %s10679 = smul.addr %s10678, 8
      %s10680 = scalar_lea.vmem %s16, %s10679
      // Predicated region
      $region85: #{cnn_encoder_decoder_forward.1} parent=83 // pred_check
        %p10681 = pneg %p388
      $region86: #{cnn_encoder_decoder_forward.1} parent=83 // pred_check_branch
        %10683 = sbr.rel (%p10681) target = $region88
      $region87: #{cnn_encoder_decoder_forward.1} parent=83 // pred_region
        _
      $region88: #{cnn_encoder_decoder_forward.1} parent=83 // pred_fallthru
        _
    $region84: #{cnn_encoder_decoder_forward.1} parent=5 // pred_fallthru
      _
    %p10684 = scmp.le.s32.totalorder 2, %s24
    // Predicated region
    $region89: #{cnn_encoder_decoder_forward.1} parent=5 // pred_check
      %p10685 = pneg %p10684
    $region90: #{cnn_encoder_decoder_forward.1} parent=5 // pred_check_branch
      %10687 = sbr.rel (%p10685) target = $region92
    $region91: #{cnn_encoder_decoder_forward.1} parent=5 // pred_region
      %s10688 = ssub.s32 %s24, 2
      // Predicated region
      $region93: #{cnn_encoder_decoder_forward.1} parent=91 // pred_check
        %p10689 = pneg %p394
      $region94: #{cnn_encoder_decoder_forward.1} parent=91 // pred_check_branch
        %10691 = sbr.rel (%p10689) target = $region96
      $region95: #{cnn_encoder_decoder_forward.1} parent=91 // pred_region
        %p10692 = scmp.lt.s32.totalorder %s30, 1
        %s10693 = scalar_select %p10692, %s30, 1
        %s10694 = smul.addr %s10693, 8
        %s10695 = scalar_lea.vmem %s16, %s10694
      $region96: #{cnn_encoder_decoder_forward.1} parent=91 // pred_fallthru
        _
    $region92: #{cnn_encoder_decoder_forward.1} parent=5 // pred_fallthru
      _
  $region6: #{cnn_encoder_decoder_forward.1} parent=0 // loop_footer
    %s28 = sadd.s32 1, %s24
  $region7: #{cnn_encoder_decoder_forward.1} parent=0 // loop_footer_branch
    %23 = sbr.rel target = $region3
  $region8: #{cnn_encoder_decoder_forward.1} parent=0 // loop_exit
    _

</llo_original>
